<compile_context>
chip_gen: v7x
topology: tpu7x:2x2x1
jax: 0.10.0
libtpu: 0.0.40
codegen_flags: <defaults>
</compile_context>

<pallas_src>
import jax
import jax.numpy as jnp
import numpy as np
from jax.experimental import pallas as pl
from jax.experimental.pallas import tpu as pltpu


# ----------------------------------------------------------------------------
# In-kernel helpers (pure functions on traced values)
# ----------------------------------------------------------------------------

def _pool_channels(row, c):
    """Sum lanes with period `c` (per-channel pooling in the (.., W*C) layout),
    leaving the per-channel total broadcast across every lane.  Uses log2(W)
    XLU lane-rolls instead of a (W*C, W*C) 0/1 matmul."""
    wc = row.shape[-1]
    shift = c
    while shift < wc:
        row = row + pltpu.roll(row, shift=shift, axis=1)
        shift *= 2
    return row


def _bn_scale_shift(s, ss, c, count, gamma_row, beta_row):
    """Training-mode BatchNorm (eps=1e-5) scale/shift rows for (.., W*C) lanes."""
    ps = _pool_channels(s, c)
    pss = _pool_channels(ss, c)
    inv = 1.0 / float(count)
    mean = ps * inv
    var = pss * inv - mean * mean        # biased variance (PyTorch training mode)
    scale = gamma_row * jax.lax.rsqrt(var + 1e-5)
    shift = beta_row - mean * scale
    return scale, shift


# ----------------------------------------------------------------------------
# The fused generator kernel
# ----------------------------------------------------------------------------

def _generator_kernel(x_ref, w0_ref, mc1_ref, mc2_ref, mc3_ref, mc4_ref,
                      gb0_ref, gb_ref, l1_ref, l2_ref, l3_ref, bias_ref,
                      out_ref, xp1, xp2, xp3, xp4):
    f32 = jnp.float32
    bf16 = jnp.bfloat16
    nb = x_ref.shape[0]
    wc = xp1.shape[2]               # 64 * intermediate_channels (= 256 here)
    c0 = gb0_ref.shape[1] // 16     # channels after layer 0

    # Zero only the H-padding rows; data rows are fully overwritten below.
    zrow = jnp.zeros((nb, wc), f32)
    for xp in (xp1, xp2, xp3, xp4):
        xp[:, 0, :] = zrow
        xp[:, xp.shape[1] - 1, :] = zrow

    def tap(xin, n, h, d0, d1):
        # Two H-taps lane-concatenated -> one deep (K = 2*W*C) GEMM operand.
        return jnp.concatenate(
            [xin[n, d0:d0 + h, :], xin[n, d1:d1 + h, :]], axis=1)

    def batched_taps(xin, h, d0, d1):
        # Batch-flatten the GEMM rows: (nb*h, 2*W*C), bf16.
        if nb == 1:
            return tap(xin, 0, h, d0, d1).astype(bf16)
        return jnp.concatenate(
            [tap(xin, n, h, d0, d1) for n in range(nb)], axis=0).astype(bf16)

    # ---- Layer 0: ConvT(Z->C0, k=4, s=1, p=0) + BN + ReLU : 1x1 -> 4x4 -----
    full0 = jnp.dot(x_ref[...].astype(bf16), w0_ref[...],
                    preferred_element_type=f32)                   # (nb, 16*C0)
    s = jnp.sum(full0, axis=0, keepdims=True)
    ss = jnp.sum(full0 * full0, axis=0, keepdims=True)
    scale, shift = _bn_scale_shift(s, ss, c0, nb * 16,
                                   gb0_ref[0:1, :], gb0_ref[1:2, :])
    act0 = jnp.maximum(full0 * scale + shift, 0.0)
    for kh in range(4):
        xp1[:, kh + 1, :] = act0[:, kh * wc:(kh + 1) * wc]

    # ---- Layer 1: ConvT(k4,s2,p1) + BN + ReLU, 4x4 -> 8x8 ------------------
    # TODO(synk): h=4 sublane tiles are unaligned, so this small layer keeps
    # per-sample GEMMs; layers 2/3/final below are fully batch-flattened.
    raw0 = [jnp.dot(tap(xp1, n, 4, 0, 1).astype(bf16), mc1_ref[0],
                    preferred_element_type=f32) for n in range(nb)]
    raw1 = [jnp.dot(tap(xp1, n, 4, 1, 2).astype(bf16), mc1_ref[1],
                    preferred_element_type=f32) for n in range(nb)]
    s = None
    ss = None
    for p in raw0 + raw1:
        ps = jnp.sum(p, axis=0, keepdims=True)
        pss = jnp.sum(p * p, axis=0, keepdims=True)
        s = ps if s is None else s + ps
        ss = pss if ss is None else ss + pss
    g = gb_ref[0]
    scale, shift = _bn_scale_shift(s, ss, c0 // 2, nb * 8 * 8,
                                   g[0:1, :], g[1:2, :])
    sel0 = l1_ref[0]
    sel1 = l1_ref[1]
    for n in range(nb):
        y0 = jnp.maximum(raw0[n] * scale + shift, 0.0).astype(bf16)
        y1 = jnp.maximum(raw1[n] * scale + shift, 0.0).astype(bf16)
        xp2[n, 1:9, :] = (jnp.dot(sel0, y0, preferred_element_type=f32)
                          + jnp.dot(sel1, y1, preferred_element_type=f32))

    # ---- Layers 2-3: batch-flattened conv GEMMs (M = nb*h rows) ------------
    for (xin, xout, mc_ref, l_ref, gidx, h, cch) in (
            (xp2, xp3, mc2_ref, l2_ref, 1, 8, c0 // 4),
            (xp3, xp4, mc3_ref, l3_ref, 2, 16, c0 // 8)):
        hout = 2 * h
        a0 = batched_taps(xin, h, 0, 1)
        a1 = batched_taps(xin, h, 1, 2)
        r0 = jnp.dot(a0, mc_ref[0], preferred_element_type=f32)    # (nb*h, wc)
        r1 = jnp.dot(a1, mc_ref[1], preferred_element_type=f32)
        s = jnp.sum(r0, axis=0, keepdims=True) + jnp.sum(r1, axis=0, keepdims=True)
        ss = (jnp.sum(r0 * r0, axis=0, keepdims=True)
              + jnp.sum(r1 * r1, axis=0, keepdims=True))
        g = gb_ref[gidx]
        scale, shift = _bn_scale_shift(s, ss, cch, nb * hout * hout,
                                       g[0:1, :], g[1:2, :])
        sel0 = l_ref[0]
        sel1 = l_ref[1]
        for n in range(nb):
            y0 = jnp.maximum(r0[n * h:(n + 1) * h, :] * scale + shift,
                             0.0).astype(bf16)
            y1 = jnp.maximum(r1[n * h:(n + 1) * h, :] * scale + shift,
                             0.0).astype(bf16)
            xout[n, 1:hout + 1, :] = (jnp.dot(sel0, y0, preferred_element_type=f32)
                                      + jnp.dot(sel1, y1, preferred_element_type=f32))

    # ---- Final layer: ConvT(k4,s2,p1) + bias + tanh, 32 -> 64 --------------
    # Output is phase-separated (rows 2a | rows 2a+1); the interleave is folded
    # into the wrapper's reshape/transpose.  Kept in f32 end-to-end.
    bias = bias_ref[...]                                           # (1, 64*Cimg)
    a0 = batched_taps(xp4, 32, 0, 1)
    a1 = batched_taps(xp4, 32, 1, 2)
    y0 = jnp.tanh(jnp.dot(a0, mc4_ref[0], preferred_element_type=f32) + bias)
    y1 = jnp.tanh(jnp.dot(a1, mc4_ref[1], preferred_element_type=f32) + bias)
    for n in range(nb):
        out_ref[n, 0, :, :] = y0[n * 32:(n + 1) * 32, :]
        out_ref[n, 1, :, :] = y1[n * 32:(n + 1) * 32, :]


# ----------------------------------------------------------------------------
# One-time parameter re-packing (tiny, outside the kernel)
# ----------------------------------------------------------------------------

def _make_phase_weight_mats_np(w, win):
    """M[kh][(iw, ci), (ow, co)] = w[ci, co, kh, ow + 1 - 2*iw] (0 if kw OOB).

    Folds the W-direction scatter of a stride-2 / k=4 / p=1 ConvTranspose2d plus
    the channel mixing into one GEMM per kernel row."""
    cin, cout, k, _ = w.shape
    wout = 2 * win
    iw = np.arange(win)[:, None]
    ow = np.arange(wout)[None, :]
    kw = ow + 1 - 2 * iw                                  # (win, wout)
    valid = ((kw >= 0) & (kw < k)).astype(np.float32)
    kwc = np.clip(kw, 0, k - 1)
    mats = []
    for kh in range(k):
        g = w[:, :, kh, kwc] * valid[None, None]          # (cin, cout, win, wout)
        g = g.transpose(2, 0, 3, 1).reshape(win * cin, wout * cout)
        mats.append(g)
    return np.stack(mats)


def prepare_generator_params(units, final_w, final_b):
    w0 = np.asarray(units[0][0], np.float32)
    z, c0 = w0.shape[0], w0.shape[1]
    # Layer 0 (1x1 -> 4x4): one GEMM producing all 4 output rows side by side;
    # lane index = kh*(4*C0) + kw*C0 + co.
    w0cat = jnp.asarray(w0.transpose(0, 2, 3, 1).reshape(z, 16 * c0),
                        dtype=jnp.bfloat16)

    wins = (4, 8, 16, 32)
    conv_ws = (units[1][0], units[2][0], units[3][0], final_w)
    mcs = []
    for w, win in zip(conv_ws, wins):
        m = _make_phase_weight_mats_np(np.asarray(w, np.float32), win)
        # K-concatenated per output-row phase:
        #   raw0 = [X[a-1] | X[a]]   @ [M3; M1]
        #   raw1 = [X[a]   | X[a+1]] @ [M2; M0]
        mc = np.stack([np.concatenate([m[3], m[1]], axis=0),
                       np.concatenate([m[2], m[0]], axis=0)])
        mcs.append(jnp.asarray(mc, dtype=jnp.bfloat16))
    mc1, mc2, mc3, mc4 = mcs

    # BatchNorm gamma/beta tiled to the lane layouts.
    gb0 = jnp.asarray(np.stack([np.tile(np.asarray(units[0][1], np.float32), 16),
                                np.tile(np.asarray(units[0][2], np.float32), 16)]))
    gbl = []
    for u, wsp in zip(units[1:4], (8, 16, 32)):
        gbl.append(np.stack([np.tile(np.asarray(u[1], np.float32), wsp),
                             np.tile(np.asarray(u[2], np.float32), wsp)]))
    gb123 = jnp.asarray(np.stack(gbl))

    # Even/odd output-row selection matrices for the hidden layers (bf16 0/1).
    lsels = []
    for h in (4, 8, 16):
        hout = 2 * h
        a = np.arange(h)
        l0 = np.zeros((hout, h), np.float32)
        l1 = np.zeros((hout, h), np.float32)
        l0[2 * a, a] = 1.0
        l1[2 * a + 1, a] = 1.0
        lsels.append(jnp.asarray(np.stack([l0, l1]), dtype=jnp.bfloat16))
    l1p, l2p, l3p = lsels

    cimg = final_w.shape[1]
    bias_row = jnp.asarray(
        np.tile(np.asarray(final_b, np.float32), 64).reshape(1, 64 * cimg))
    return (w0cat, mc1, mc2, mc3, mc4, gb0, gb123, l1p, l2p, l3p, bias_row)


# ----------------------------------------------------------------------------
# Forward pass: one pallas_call for the whole generator
# ----------------------------------------------------------------------------

def generator_forward(x, params):
    """x: (N, noise_dim, 1, 1) -> (N, img_channels, 64, 64) (PyTorch NCHW)."""
    (w0cat, mc1, mc2, mc3, mc4, gb0, gb123, l1p, l2p, l3p, bias_row) = params
    n = x.shape[0]
    cimg = bias_row.shape[1] // 64
    wc = mc1.shape[2]                   # 64 * intermediate_channels (= 256 here)
    x2 = x.reshape(n, -1).astype(jnp.float32)

    # TODO(synk): shard the batch over v7x's two TensorCores (parallel grid /
    # core_map) with a cross-core BN-stat reduction; kept single-invocation so
    # training-mode BatchNorm statistics stay exact over the full batch.
    out = pl.pallas_call(
        _generator_kernel,
        out_shape=jax.ShapeDtypeStruct((n, 2, 32, 64 * cimg), jnp.float32),
        scratch_shapes=[
            pltpu.VMEM((n, 4 + 2, wc), jnp.float32),    # layer-0 output (H-padded)
            pltpu.VMEM((n, 8 + 2, wc), jnp.float32),    # layer-1 output
            pltpu.VMEM((n, 16 + 2, wc), jnp.float32),   # layer-2 output
            pltpu.VMEM((n, 32 + 2, wc), jnp.float32),   # layer-3 output
        ],
        compiler_params=pltpu.CompilerParams(vmem_limit_bytes=32 * 1024 * 1024),
    )(x2, w0cat, mc1, mc2, mc3, mc4, gb0, gb123, l1p, l2p, l3p, bias_row)

    # Phase-separated (n, ph, 32, 64*Cimg) -> NCHW; the even/odd row interleave
    # rides on the single XLA relabel that already existed.
    return (out.reshape(n, 2, 32, 64, cimg)
               .transpose(0, 4, 2, 1, 3)
               .reshape(n, cimg, 64, 64))


# ----------------------------------------------------------------------------
# Pure-JAX reference (PyTorch semantics) for the correctness check
# ----------------------------------------------------------------------------

def ref_conv_transpose2d(x, w, stride, padding):
    k = w.shape[2]
    wr = jnp.flip(w, axis=(2, 3)).transpose(1, 0, 2, 3)       # (Cout, Cin, K, K)
    q = k - 1 - padding
    return jax.lax.conv_general_dilated(
        x, wr, window_strides=(1, 1), padding=[(q, q), (q, q)],
        lhs_dilation=(stride, stride),
        dimension_numbers=('NCHW', 'OIHW', 'NCHW'),
        precision=jax.lax.Precision.HIGHEST)


def ref_bn_relu(x, g, b):
    m = x.mean(axis=(0, 2, 3), keepdims=True)
    v = jnp.mean(jnp.square(x - m), axis=(0, 2, 3), keepdims=True)
    y = (x - m) / jnp.sqrt(v + 1e-5) * g.reshape(1, -1, 1, 1) + b.reshape(1, -1, 1, 1)
    return jnp.maximum(y, 0.0)


if __name__ == "__main__":
    noise_dim, img_channels, ic = 32, 3, 4    # img_dim = 64 (fixed by architecture)
    batch = 2

    cfg = [(noise_dim, ic * 16, 4, 1, 0),
           (ic * 16, ic * 8, 4, 2, 1),
           (ic * 8, ic * 4, 4, 2, 1),
           (ic * 4, ic * 2, 4, 2, 1)]
    final_cfg = (ic * 2, img_channels, 4, 2, 1)

    key = jax.random.PRNGKey(0)
    keys = jax.random.split(key, 2 * len(cfg) + 3)
    ki = 0
    units = []
    for (cin, cout, k, s, p) in cfg:
        w = 0.02 * jax.random.normal(keys[ki], (cin, cout, k, k), jnp.float32); ki += 1
        gbv = 0.1 * jax.random.normal(keys[ki], (2, cout), jnp.float32); ki += 1
        units.append((w, 1.0 + gbv[0], gbv[1], s, p))
    cin, cout, k, fs, fp = final_cfg
    wf = 0.02 * jax.random.normal(keys[ki], (cin, cout, k, k), jnp.float32); ki += 1
    bf = 0.1 * jax.random.normal(keys[ki], (cout,), jnp.float32); ki += 1
    x = jax.random.normal(keys[ki], (batch, noise_dim, 1, 1), jnp.float32)

    # --- Pallas pipeline: one fused kernel for the whole generator ---
    params = prepare_generator_params(units, wf, bf)
    fwd = jax.jit(generator_forward)
    y = jax.block_until_ready(fwd(x, params))
    assert y.shape == (batch, img_channels, 64, 64), y.shape

    # --- reference check (f32, HIGHEST precision) ---
    r = x
    for (w, g, b, s, p) in units:
        r = ref_conv_transpose2d(r, w, s, p)
        r = ref_bn_relu(r, g, b)
    r = ref_conv_transpose2d(r, wf, fs, fp) + bf.reshape(1, -1, 1, 1)
    r = jnp.tanh(r)

    np.testing.assert_allclose(np.asarray(y), np.asarray(r), rtol=2e-2, atol=2e-2)
    print("KERNEL_OK")
</pallas_src>

<mosaic_0001>
module attributes {stable_mosaic.version = 11 : i64} {
  func.func @_generator_kernel(%arg0: memref<2x32xf32, #tpu.memory_space<vmem>>, %arg1: memref<32x1024xbf16, #tpu.memory_space<vmem>>, %arg2: memref<2x512x256xbf16, #tpu.memory_space<vmem>>, %arg3: memref<2x512x256xbf16, #tpu.memory_space<vmem>>, %arg4: memref<2x512x256xbf16, #tpu.memory_space<vmem>>, %arg5: memref<2x512x192xbf16, #tpu.memory_space<vmem>>, %arg6: memref<2x1024xf32, #tpu.memory_space<vmem>>, %arg7: memref<3x2x256xf32, #tpu.memory_space<vmem>>, %arg8: memref<2x8x4xbf16, #tpu.memory_space<vmem>>, %arg9: memref<2x16x8xbf16, #tpu.memory_space<vmem>>, %arg10: memref<2x32x16xbf16, #tpu.memory_space<vmem>>, %arg11: memref<1x192xf32, #tpu.memory_space<vmem>>, %arg12: memref<2x2x32x192xf32, #tpu.memory_space<vmem>>, %arg13: memref<2x6x256xf32, #tpu.memory_space<vmem>>, %arg14: memref<2x10x256xf32, #tpu.memory_space<vmem>>, %arg15: memref<2x18x256xf32, #tpu.memory_space<vmem>>, %arg16: memref<2x34x256xf32, #tpu.memory_space<vmem>>) attributes {dimension_semantics = [], scalar_prefetch = 0 : i64, scratch_operands = 4 : i64, tpu.core_type = #tpu.core_type<tc>} {
    %cst = arith.constant 0.000000e+00 : f32
    %0 = vector.broadcast %cst : f32 to vector<2x256xf32>
    %c0 = arith.constant 0 : index
    %c0_0 = arith.constant 0 : index
    %c0_1 = arith.constant 0 : index
    %1 = vector.load %arg13[%c0, %c0_0, %c0_1] : memref<2x6x256xf32, #tpu.memory_space<vmem>>, vector<2x1x256xf32>
    %2 = vector.shape_cast %1 : vector<2x1x256xf32> to vector<2x256xf32>
    %3 = vector.shape_cast %0 : vector<2x256xf32> to vector<2x1x256xf32>
    tpu.vector_store %arg13[%c0, %c0_0, %c0_1], %3 {strides = array<i32>} : memref<2x6x256xf32, #tpu.memory_space<vmem>>, vector<2x1x256xf32>,
    %c0_2 = arith.constant 0 : index
    %c5 = arith.constant 5 : index
    %c0_3 = arith.constant 0 : index
    %4 = vector.load %arg13[%c0_2, %c5, %c0_3] : memref<2x6x256xf32, #tpu.memory_space<vmem>>, vector<2x1x256xf32>
    %5 = vector.shape_cast %4 : vector<2x1x256xf32> to vector<2x256xf32>
    %6 = vector.shape_cast %0 : vector<2x256xf32> to vector<2x1x256xf32>
    tpu.vector_store %arg13[%c0_2, %c5, %c0_3], %6 {strides = array<i32>} : memref<2x6x256xf32, #tpu.memory_space<vmem>>, vector<2x1x256xf32>,
    %c0_4 = arith.constant 0 : index
    %c0_5 = arith.constant 0 : index
    %c0_6 = arith.constant 0 : index
    %7 = vector.load %arg14[%c0_4, %c0_5, %c0_6] : memref<2x10x256xf32, #tpu.memory_space<vmem>>, vector<2x1x256xf32>
    %8 = vector.shape_cast %7 : vector<2x1x256xf32> to vector<2x256xf32>
    %9 = vector.shape_cast %0 : vector<2x256xf32> to vector<2x1x256xf32>
    tpu.vector_store %arg14[%c0_4, %c0_5, %c0_6], %9 {strides = array<i32>} : memref<2x10x256xf32, #tpu.memory_space<vmem>>, vector<2x1x256xf32>,
    %c0_7 = arith.constant 0 : index
    %c9 = arith.constant 9 : index
    %c0_8 = arith.constant 0 : index
    %10 = vector.load %arg14[%c0_7, %c9, %c0_8] : memref<2x10x256xf32, #tpu.memory_space<vmem>>, vector<2x1x256xf32>
    %11 = vector.shape_cast %10 : vector<2x1x256xf32> to vector<2x256xf32>
    %12 = vector.shape_cast %0 : vector<2x256xf32> to vector<2x1x256xf32>
    tpu.vector_store %arg14[%c0_7, %c9, %c0_8], %12 {strides = array<i32>} : memref<2x10x256xf32, #tpu.memory_space<vmem>>, vector<2x1x256xf32>,
    %c0_9 = arith.constant 0 : index
    %c0_10 = arith.constant 0 : index
    %c0_11 = arith.constant 0 : index
    %13 = vector.load %arg15[%c0_9, %c0_10, %c0_11] : memref<2x18x256xf32, #tpu.memory_space<vmem>>, vector<2x1x256xf32>
    %14 = vector.shape_cast %13 : vector<2x1x256xf32> to vector<2x256xf32>
    %15 = vector.shape_cast %0 : vector<2x256xf32> to vector<2x1x256xf32>
    tpu.vector_store %arg15[%c0_9, %c0_10, %c0_11], %15 {strides = array<i32>} : memref<2x18x256xf32, #tpu.memory_space<vmem>>, vector<2x1x256xf32>,
    %c0_12 = arith.constant 0 : index
    %c17 = arith.constant 17 : index
    %c0_13 = arith.constant 0 : index
    %16 = vector.load %arg15[%c0_12, %c17, %c0_13] : memref<2x18x256xf32, #tpu.memory_space<vmem>>, vector<2x1x256xf32>
    %17 = vector.shape_cast %16 : vector<2x1x256xf32> to vector<2x256xf32>
    %18 = vector.shape_cast %0 : vector<2x256xf32> to vector<2x1x256xf32>
    tpu.vector_store %arg15[%c0_12, %c17, %c0_13], %18 {strides = array<i32>} : memref<2x18x256xf32, #tpu.memory_space<vmem>>, vector<2x1x256xf32>,
    %c0_14 = arith.constant 0 : index
    %c0_15 = arith.constant 0 : index
    %c0_16 = arith.constant 0 : index
    %19 = vector.load %arg16[%c0_14, %c0_15, %c0_16] : memref<2x34x256xf32, #tpu.memory_space<vmem>>, vector<2x1x256xf32>
    %20 = vector.shape_cast %19 : vector<2x1x256xf32> to vector<2x256xf32>
    %21 = vector.shape_cast %0 : vector<2x256xf32> to vector<2x1x256xf32>
    tpu.vector_store %arg16[%c0_14, %c0_15, %c0_16], %21 {strides = array<i32>} : memref<2x34x256xf32, #tpu.memory_space<vmem>>, vector<2x1x256xf32>,
    %c0_17 = arith.constant 0 : index
    %c33 = arith.constant 33 : index
    %c0_18 = arith.constant 0 : index
    %22 = vector.load %arg16[%c0_17, %c33, %c0_18] : memref<2x34x256xf32, #tpu.memory_space<vmem>>, vector<2x1x256xf32>
    %23 = vector.shape_cast %22 : vector<2x1x256xf32> to vector<2x256xf32>
    %24 = vector.shape_cast %0 : vector<2x256xf32> to vector<2x1x256xf32>
    tpu.vector_store %arg16[%c0_17, %c33, %c0_18], %24 {strides = array<i32>} : memref<2x34x256xf32, #tpu.memory_space<vmem>>, vector<2x1x256xf32>,
    %c0_19 = arith.constant 0 : index
    %c0_20 = arith.constant 0 : index
    %25 = vector.load %arg0[%c0_19, %c0_20] : memref<2x32xf32, #tpu.memory_space<vmem>>, vector<2x32xf32>
    %26 = arith.truncf %25 : vector<2x32xf32> to vector<2x32xbf16>
    %c0_21 = arith.constant 0 : index
    %c0_22 = arith.constant 0 : index
    %27 = vector.load %arg1[%c0_21, %c0_22] : memref<32x1024xbf16, #tpu.memory_space<vmem>>, vector<32x1024xbf16>
    %cst_23 = arith.constant dense<0.000000e+00> : vector<2x1024xf32>
    %28 = tpu.matmul %26, %27, %cst_23 {dimension_numbers = #tpu.dot_dimension_numbers<[1], [0], [0], [1], [0, 0, 1, 1], [], []>} : vector<2x32xbf16>, vector<32x1024xbf16>, vector<2x1024xf32> -> vector<2x1024xf32>
    %cst_24 = arith.constant dense<0.000000e+00> : vector<1024xf32>
    %29 = vector.multi_reduction <add>, %28, %cst_24 [0] : vector<2x1024xf32> to vector<1024xf32>
    %30 = vector.shape_cast %29 : vector<1024xf32> to vector<1x1024xf32>
    %31 = arith.mulf %28, %28 : vector<2x1024xf32>
    %cst_25 = arith.constant dense<0.000000e+00> : vector<1024xf32>
    %32 = vector.multi_reduction <add>, %31, %cst_25 [0] : vector<2x1024xf32> to vector<1024xf32>
    %33 = vector.shape_cast %32 : vector<1024xf32> to vector<1x1024xf32>
    %c0_26 = arith.constant 0 : index
    %c0_27 = arith.constant 0 : index
    %34 = vector.load %arg6[%c0_26, %c0_27] : memref<2x1024xf32, #tpu.memory_space<vmem>>, vector<1x1024xf32>
    %c1 = arith.constant 1 : index
    %c0_28 = arith.constant 0 : index
    %35 = vector.load %arg6[%c1, %c0_28] : memref<2x1024xf32, #tpu.memory_space<vmem>>, vector<1x1024xf32>
    %c64_i32 = arith.constant 64 : i32
    %36 = tpu.dynamic_rotate %30 by %c64_i32 dim 1 : vector<1x1024xf32>, i32 -> vector<1x1024xf32>
    %37 = arith.addf %30, %36 : vector<1x1024xf32>
    %c128_i32 = arith.constant 128 : i32
    %38 = tpu.dynamic_rotate %37 by %c128_i32 dim 1 : vector<1x1024xf32>, i32 -> vector<1x1024xf32>
    %39 = arith.addf %37, %38 : vector<1x1024xf32>
    %c256_i32 = arith.constant 256 : i32
    %40 = tpu.dynamic_rotate %39 by %c256_i32 dim 1 : vector<1x1024xf32>, i32 -> vector<1x1024xf32>
    %41 = arith.addf %39, %40 : vector<1x1024xf32>
    %c512_i32 = arith.constant 512 : i32
    %42 = tpu.dynamic_rotate %41 by %c512_i32 dim 1 : vector<1x1024xf32>, i32 -> vector<1x1024xf32>
    %43 = arith.addf %41, %42 : vector<1x1024xf32>
    %c64_i32_29 = arith.constant 64 : i32
    %44 = tpu.dynamic_rotate %33 by %c64_i32_29 dim 1 : vector<1x1024xf32>, i32 -> vector<1x1024xf32>
    %45 = arith.addf %33, %44 : vector<1x1024xf32>
    %c128_i32_30 = arith.constant 128 : i32
    %46 = tpu.dynamic_rotate %45 by %c128_i32_30 dim 1 : vector<1x1024xf32>, i32 -> vector<1x1024xf32>
    %47 = arith.addf %45, %46 : vector<1x1024xf32>
    %c256_i32_31 = arith.constant 256 : i32
    %48 = tpu.dynamic_rotate %47 by %c256_i32_31 dim 1 : vector<1x1024xf32>, i32 -> vector<1x1024xf32>
    %49 = arith.addf %47, %48 : vector<1x1024xf32>
    %c512_i32_32 = arith.constant 512 : i32
    %50 = tpu.dynamic_rotate %49 by %c512_i32_32 dim 1 : vector<1x1024xf32>, i32 -> vector<1x1024xf32>
    %51 = arith.addf %49, %50 : vector<1x1024xf32>
    %cst_33 = arith.constant 3.125000e-02 : f32
    %52 = vector.broadcast %cst_33 : f32 to vector<1x1024xf32>
    %53 = arith.mulf %43, %52 : vector<1x1024xf32>
    %cst_34 = arith.constant 3.125000e-02 : f32
    %54 = vector.broadcast %cst_34 : f32 to vector<1x1024xf32>
    %55 = arith.mulf %51, %54 : vector<1x1024xf32>
    %56 = arith.mulf %53, %53 : vector<1x1024xf32>
    %57 = arith.subf %55, %56 : vector<1x1024xf32>
    %cst_35 = arith.constant 9.99999974E-6 : f32
    %58 = vector.broadcast %cst_35 : f32 to vector<1x1024xf32>
    %59 = arith.addf %57, %58 : vector<1x1024xf32>
    %60 = math.rsqrt %59 : vector<1x1024xf32>
    %61 = arith.mulf %34, %60 : vector<1x1024xf32>
    %62 = arith.mulf %53, %61 : vector<1x1024xf32>
    %63 = arith.subf %35, %62 : vector<1x1024xf32>
    %64 = vector.broadcast %61 : vector<1x1024xf32> to vector<2x1024xf32>
    %65 = arith.mulf %28, %64 : vector<2x1024xf32>
    %66 = vector.broadcast %63 : vector<1x1024xf32> to vector<2x1024xf32>
    %67 = arith.addf %65, %66 : vector<2x1024xf32>
    %cst_36 = arith.constant 0.000000e+00 : f32
    %68 = vector.broadcast %cst_36 : f32 to vector<2x1024xf32>
    %69 = arith.maximumf %67, %68 : vector<2x1024xf32>
    %70 = vector.extract_strided_slice %69 {offsets = [0, 0], sizes = [2, 256], strides = [1, 1]} : vector<2x1024xf32> to vector<2x256xf32>
    %c0_37 = arith.constant 0 : index
    %c1_38 = arith.constant 1 : index
    %c0_39 = arith.constant 0 : index
    %71 = vector.load %arg13[%c0_37, %c1_38, %c0_39] : memref<2x6x256xf32, #tpu.memory_space<vmem>>, vector<2x1x256xf32>
    %72 = vector.shape_cast %71 : vector<2x1x256xf32> to vector<2x256xf32>
    %73 = vector.shape_cast %70 : vector<2x256xf32> to vector<2x1x256xf32>
    tpu.vector_store %arg13[%c0_37, %c1_38, %c0_39], %73 {strides = array<i32>} : memref<2x6x256xf32, #tpu.memory_space<vmem>>, vector<2x1x256xf32>,
    %74 = vector.extract_strided_slice %69 {offsets = [0, 256], sizes = [2, 256], strides = [1, 1]} : vector<2x1024xf32> to vector<2x256xf32>
    %c0_40 = arith.constant 0 : index
    %c2 = arith.constant 2 : index
    %c0_41 = arith.constant 0 : index
    %75 = vector.load %arg13[%c0_40, %c2, %c0_41] : memref<2x6x256xf32, #tpu.memory_space<vmem>>, vector<2x1x256xf32>
    %76 = vector.shape_cast %75 : vector<2x1x256xf32> to vector<2x256xf32>
    %77 = vector.shape_cast %74 : vector<2x256xf32> to vector<2x1x256xf32>
    tpu.vector_store %arg13[%c0_40, %c2, %c0_41], %77 {strides = array<i32>} : memref<2x6x256xf32, #tpu.memory_space<vmem>>, vector<2x1x256xf32>,
    %78 = vector.extract_strided_slice %69 {offsets = [0, 512], sizes = [2, 256], strides = [1, 1]} : vector<2x1024xf32> to vector<2x256xf32>
    %c0_42 = arith.constant 0 : index
    %c3 = arith.constant 3 : index
    %c0_43 = arith.constant 0 : index
    %79 = vector.load %arg13[%c0_42, %c3, %c0_43] : memref<2x6x256xf32, #tpu.memory_space<vmem>>, vector<2x1x256xf32>
    %80 = vector.shape_cast %79 : vector<2x1x256xf32> to vector<2x256xf32>
    %81 = vector.shape_cast %78 : vector<2x256xf32> to vector<2x1x256xf32>
    tpu.vector_store %arg13[%c0_42, %c3, %c0_43], %81 {strides = array<i32>} : memref<2x6x256xf32, #tpu.memory_space<vmem>>, vector<2x1x256xf32>,
    %82 = vector.extract_strided_slice %69 {offsets = [0, 768], sizes = [2, 256], strides = [1, 1]} : vector<2x1024xf32> to vector<2x256xf32>
    %c0_44 = arith.constant 0 : index
    %c4 = arith.constant 4 : index
    %c0_45 = arith.constant 0 : index
    %83 = vector.load %arg13[%c0_44, %c4, %c0_45] : memref<2x6x256xf32, #tpu.memory_space<vmem>>, vector<2x1x256xf32>
    %84 = vector.shape_cast %83 : vector<2x1x256xf32> to vector<2x256xf32>
    %85 = vector.shape_cast %82 : vector<2x256xf32> to vector<2x1x256xf32>
    tpu.vector_store %arg13[%c0_44, %c4, %c0_45], %85 {strides = array<i32>} : memref<2x6x256xf32, #tpu.memory_space<vmem>>, vector<2x1x256xf32>,
    %c0_46 = arith.constant 0 : index
    %c0_47 = arith.constant 0 : index
    %c0_48 = arith.constant 0 : index
    %86 = vector.load %arg13[%c0_46, %c0_47, %c0_48] : memref<2x6x256xf32, #tpu.memory_space<vmem>>, vector<1x4x256xf32>
    %87 = vector.shape_cast %86 : vector<1x4x256xf32> to vector<4x256xf32>
    %c0_49 = arith.constant 0 : index
    %c1_50 = arith.constant 1 : index
    %c0_51 = arith.constant 0 : index
    %88 = vector.load %arg13[%c0_49, %c1_50, %c0_51] : memref<2x6x256xf32, #tpu.memory_space<vmem>>, vector<1x4x256xf32>
    %89 = vector.shape_cast %88 : vector<1x4x256xf32> to vector<4x256xf32>
    %90 = tpu.concatenate %87, %89 in 1 : vector<4x256xf32>, vector<4x256xf32> -> vector<4x512xf32>
    %91 = arith.truncf %90 : vector<4x512xf32> to vector<4x512xbf16>
    %c0_52 = arith.constant 0 : index
    %c0_53 = arith.constant 0 : index
    %c0_54 = arith.constant 0 : index
    %92 = vector.load %arg2[%c0_52, %c0_53, %c0_54] : memref<2x512x256xbf16, #tpu.memory_space<vmem>>, vector<1x512x256xbf16>
    %93 = vector.shape_cast %92 : vector<1x512x256xbf16> to vector<512x256xbf16>
    %cst_55 = arith.constant dense<0.000000e+00> : vector<4x256xf32>
    %94 = tpu.matmul %91, %93, %cst_55 {dimension_numbers = #tpu.dot_dimension_numbers<[1], [0], [0], [1], [0, 0, 1, 1], [], []>} : vector<4x512xbf16>, vector<512x256xbf16>, vector<4x256xf32> -> vector<4x256xf32>
    %c1_56 = arith.constant 1 : index
    %c0_57 = arith.constant 0 : index
    %c0_58 = arith.constant 0 : index
    %95 = vector.load %arg13[%c1_56, %c0_57, %c0_58] : memref<2x6x256xf32, #tpu.memory_space<vmem>>, vector<1x4x256xf32>
    %96 = vector.shape_cast %95 : vector<1x4x256xf32> to vector<4x256xf32>
    %c1_59 = arith.constant 1 : index
    %c1_60 = arith.constant 1 : index
    %c0_61 = arith.constant 0 : index
    %97 = vector.load %arg13[%c1_59, %c1_60, %c0_61] : memref<2x6x256xf32, #tpu.memory_space<vmem>>, vector<1x4x256xf32>
    %98 = vector.shape_cast %97 : vector<1x4x256xf32> to vector<4x256xf32>
    %99 = tpu.concatenate %96, %98 in 1 : vector<4x256xf32>, vector<4x256xf32> -> vector<4x512xf32>
    %100 = arith.truncf %99 : vector<4x512xf32> to vector<4x512xbf16>
    %c0_62 = arith.constant 0 : index
    %c0_63 = arith.constant 0 : index
    %c0_64 = arith.constant 0 : index
    %101 = vector.load %arg2[%c0_62, %c0_63, %c0_64] : memref<2x512x256xbf16, #tpu.memory_space<vmem>>, vector<1x512x256xbf16>
    %102 = vector.shape_cast %101 : vector<1x512x256xbf16> to vector<512x256xbf16>
    %cst_65 = arith.constant dense<0.000000e+00> : vector<4x256xf32>
    %103 = tpu.matmul %100, %102, %cst_65 {dimension_numbers = #tpu.dot_dimension_numbers<[1], [0], [0], [1], [0, 0, 1, 1], [], []>} : vector<4x512xbf16>, vector<512x256xbf16>, vector<4x256xf32> -> vector<4x256xf32>
    %c0_66 = arith.constant 0 : index
    %c1_67 = arith.constant 1 : index
    %c0_68 = arith.constant 0 : index
    %104 = vector.load %arg13[%c0_66, %c1_67, %c0_68] : memref<2x6x256xf32, #tpu.memory_space<vmem>>, vector<1x4x256xf32>
    %105 = vector.shape_cast %104 : vector<1x4x256xf32> to vector<4x256xf32>
    %c0_69 = arith.constant 0 : index
    %c2_70 = arith.constant 2 : index
    %c0_71 = arith.constant 0 : index
    %106 = vector.load %arg13[%c0_69, %c2_70, %c0_71] : memref<2x6x256xf32, #tpu.memory_space<vmem>>, vector<1x4x256xf32>
    %107 = vector.shape_cast %106 : vector<1x4x256xf32> to vector<4x256xf32>
    %108 = tpu.concatenate %105, %107 in 1 : vector<4x256xf32>, vector<4x256xf32> -> vector<4x512xf32>
    %109 = arith.truncf %108 : vector<4x512xf32> to vector<4x512xbf16>
    %c1_72 = arith.constant 1 : index
    %c0_73 = arith.constant 0 : index
    %c0_74 = arith.constant 0 : index
    %110 = vector.load %arg2[%c1_72, %c0_73, %c0_74] : memref<2x512x256xbf16, #tpu.memory_space<vmem>>, vector<1x512x256xbf16>
    %111 = vector.shape_cast %110 : vector<1x512x256xbf16> to vector<512x256xbf16>
    %cst_75 = arith.constant dense<0.000000e+00> : vector<4x256xf32>
    %112 = tpu.matmul %109, %111, %cst_75 {dimension_numbers = #tpu.dot_dimension_numbers<[1], [0], [0], [1], [0, 0, 1, 1], [], []>} : vector<4x512xbf16>, vector<512x256xbf16>, vector<4x256xf32> -> vector<4x256xf32>
    %c1_76 = arith.constant 1 : index
    %c1_77 = arith.constant 1 : index
    %c0_78 = arith.constant 0 : index
    %113 = vector.load %arg13[%c1_76, %c1_77, %c0_78] : memref<2x6x256xf32, #tpu.memory_space<vmem>>, vector<1x4x256xf32>
    %114 = vector.shape_cast %113 : vector<1x4x256xf32> to vector<4x256xf32>
    %c1_79 = arith.constant 1 : index
    %c2_80 = arith.constant 2 : index
    %c0_81 = arith.constant 0 : index
    %115 = vector.load %arg13[%c1_79, %c2_80, %c0_81] : memref<2x6x256xf32, #tpu.memory_space<vmem>>, vector<1x4x256xf32>
    %116 = vector.shape_cast %115 : vector<1x4x256xf32> to vector<4x256xf32>
    %117 = tpu.concatenate %114, %116 in 1 : vector<4x256xf32>, vector<4x256xf32> -> vector<4x512xf32>
    %118 = arith.truncf %117 : vector<4x512xf32> to vector<4x512xbf16>
    %c1_82 = arith.constant 1 : index
    %c0_83 = arith.constant 0 : index
    %c0_84 = arith.constant 0 : index
    %119 = vector.load %arg2[%c1_82, %c0_83, %c0_84] : memref<2x512x256xbf16, #tpu.memory_space<vmem>>, vector<1x512x256xbf16>
    %120 = vector.shape_cast %119 : vector<1x512x256xbf16> to vector<512x256xbf16>
    %cst_85 = arith.constant dense<0.000000e+00> : vector<4x256xf32>
    %121 = tpu.matmul %118, %120, %cst_85 {dimension_numbers = #tpu.dot_dimension_numbers<[1], [0], [0], [1], [0, 0, 1, 1], [], []>} : vector<4x512xbf16>, vector<512x256xbf16>, vector<4x256xf32> -> vector<4x256xf32>
    %cst_86 = arith.constant dense<0.000000e+00> : vector<256xf32>
    %122 = vector.multi_reduction <add>, %94, %cst_86 [0] : vector<4x256xf32> to vector<256xf32>
    %123 = vector.shape_cast %122 : vector<256xf32> to vector<1x256xf32>
    %124 = arith.mulf %94, %94 : vector<4x256xf32>
    %cst_87 = arith.constant dense<0.000000e+00> : vector<256xf32>
    %125 = vector.multi_reduction <add>, %124, %cst_87 [0] : vector<4x256xf32> to vector<256xf32>
    %126 = vector.shape_cast %125 : vector<256xf32> to vector<1x256xf32>
    %cst_88 = arith.constant dense<0.000000e+00> : vector<256xf32>
    %127 = vector.multi_reduction <add>, %103, %cst_88 [0] : vector<4x256xf32> to vector<256xf32>
    %128 = vector.shape_cast %127 : vector<256xf32> to vector<1x256xf32>
    %129 = arith.mulf %103, %103 : vector<4x256xf32>
    %cst_89 = arith.constant dense<0.000000e+00> : vector<256xf32>
    %130 = vector.multi_reduction <add>, %129, %cst_89 [0] : vector<4x256xf32> to vector<256xf32>
    %131 = vector.shape_cast %130 : vector<256xf32> to vector<1x256xf32>
    %132 = arith.addf %123, %128 : vector<1x256xf32>
    %133 = arith.addf %126, %131 : vector<1x256xf32>
    %cst_90 = arith.constant dense<0.000000e+00> : vector<256xf32>
    %134 = vector.multi_reduction <add>, %112, %cst_90 [0] : vector<4x256xf32> to vector<256xf32>
    %135 = vector.shape_cast %134 : vector<256xf32> to vector<1x256xf32>
    %136 = arith.mulf %112, %112 : vector<4x256xf32>
    %cst_91 = arith.constant dense<0.000000e+00> : vector<256xf32>
    %137 = vector.multi_reduction <add>, %136, %cst_91 [0] : vector<4x256xf32> to vector<256xf32>
    %138 = vector.shape_cast %137 : vector<256xf32> to vector<1x256xf32>
    %139 = arith.addf %132, %135 : vector<1x256xf32>
    %140 = arith.addf %133, %138 : vector<1x256xf32>
    %cst_92 = arith.constant dense<0.000000e+00> : vector<256xf32>
    %141 = vector.multi_reduction <add>, %121, %cst_92 [0] : vector<4x256xf32> to vector<256xf32>
    %142 = vector.shape_cast %141 : vector<256xf32> to vector<1x256xf32>
    %143 = arith.mulf %121, %121 : vector<4x256xf32>
    %cst_93 = arith.constant dense<0.000000e+00> : vector<256xf32>
    %144 = vector.multi_reduction <add>, %143, %cst_93 [0] : vector<4x256xf32> to vector<256xf32>
    %145 = vector.shape_cast %144 : vector<256xf32> to vector<1x256xf32>
    %146 = arith.addf %139, %142 : vector<1x256xf32>
    %147 = arith.addf %140, %145 : vector<1x256xf32>
    %c0_94 = arith.constant 0 : index
    %c0_95 = arith.constant 0 : index
    %c0_96 = arith.constant 0 : index
    %148 = vector.load %arg7[%c0_94, %c0_95, %c0_96] : memref<3x2x256xf32, #tpu.memory_space<vmem>>, vector<1x2x256xf32>
    %149 = vector.shape_cast %148 : vector<1x2x256xf32> to vector<2x256xf32>
    %150 = vector.extract_strided_slice %149 {offsets = [0, 0], sizes = [1, 256], strides = [1, 1]} : vector<2x256xf32> to vector<1x256xf32>
    %151 = vector.extract_strided_slice %149 {offsets = [1, 0], sizes = [1, 256], strides = [1, 1]} : vector<2x256xf32> to vector<1x256xf32>
    %c32_i32 = arith.constant 32 : i32
    %152 = tpu.dynamic_rotate %146 by %c32_i32 dim 1 : vector<1x256xf32>, i32 -> vector<1x256xf32>
    %153 = arith.addf %146, %152 : vector<1x256xf32>
    %c64_i32_97 = arith.constant 64 : i32
    %154 = tpu.dynamic_rotate %153 by %c64_i32_97 dim 1 : vector<1x256xf32>, i32 -> vector<1x256xf32>
    %155 = arith.addf %153, %154 : vector<1x256xf32>
    %c128_i32_98 = arith.constant 128 : i32
    %156 = tpu.dynamic_rotate %155 by %c128_i32_98 dim 1 : vector<1x256xf32>, i32 -> vector<1x256xf32>
    %157 = arith.addf %155, %156 : vector<1x256xf32>
    %c32_i32_99 = arith.constant 32 : i32
    %158 = tpu.dynamic_rotate %147 by %c32_i32_99 dim 1 : vector<1x256xf32>, i32 -> vector<1x256xf32>
    %159 = arith.addf %147, %158 : vector<1x256xf32>
    %c64_i32_100 = arith.constant 64 : i32
    %160 = tpu.dynamic_rotate %159 by %c64_i32_100 dim 1 : vector<1x256xf32>, i32 -> vector<1x256xf32>
    %161 = arith.addf %159, %160 : vector<1x256xf32>
    %c128_i32_101 = arith.constant 128 : i32
    %162 = tpu.dynamic_rotate %161 by %c128_i32_101 dim 1 : vector<1x256xf32>, i32 -> vector<1x256xf32>
    %163 = arith.addf %161, %162 : vector<1x256xf32>
    %cst_102 = arith.constant 7.812500e-03 : f32
    %164 = vector.broadcast %cst_102 : f32 to vector<1x256xf32>
    %165 = arith.mulf %157, %164 : vector<1x256xf32>
    %cst_103 = arith.constant 7.812500e-03 : f32
    %166 = vector.broadcast %cst_103 : f32 to vector<1x256xf32>
    %167 = arith.mulf %163, %166 : vector<1x256xf32>
    %168 = arith.mulf %165, %165 : vector<1x256xf32>
    %169 = arith.subf %167, %168 : vector<1x256xf32>
    %cst_104 = arith.constant 9.99999974E-6 : f32
    %170 = vector.broadcast %cst_104 : f32 to vector<1x256xf32>
    %171 = arith.addf %169, %170 : vector<1x256xf32>
    %172 = math.rsqrt %171 : vector<1x256xf32>
    %173 = arith.mulf %150, %172 : vector<1x256xf32>
    %174 = arith.mulf %165, %173 : vector<1x256xf32>
    %175 = arith.subf %151, %174 : vector<1x256xf32>
    %c0_105 = arith.constant 0 : index
    %c0_106 = arith.constant 0 : index
    %c0_107 = arith.constant 0 : index
    %176 = vector.load %arg8[%c0_105, %c0_106, %c0_107] : memref<2x8x4xbf16, #tpu.memory_space<vmem>>, vector<1x8x4xbf16>
    %177 = vector.shape_cast %176 : vector<1x8x4xbf16> to vector<8x4xbf16>
    %c1_108 = arith.constant 1 : index
    %c0_109 = arith.constant 0 : index
    %c0_110 = arith.constant 0 : index
    %178 = vector.load %arg8[%c1_108, %c0_109, %c0_110] : memref<2x8x4xbf16, #tpu.memory_space<vmem>>, vector<1x8x4xbf16>
    %179 = vector.shape_cast %178 : vector<1x8x4xbf16> to vector<8x4xbf16>
    %180 = vector.broadcast %173 : vector<1x256xf32> to vector<4x256xf32>
    %181 = arith.mulf %94, %180 : vector<4x256xf32>
    %182 = vector.broadcast %175 : vector<1x256xf32> to vector<4x256xf32>
    %183 = arith.addf %181, %182 : vector<4x256xf32>
    %cst_111 = arith.constant 0.000000e+00 : f32
    %184 = vector.broadcast %cst_111 : f32 to vector<4x256xf32>
    %185 = arith.maximumf %183, %184 : vector<4x256xf32>
    %186 = arith.truncf %185 : vector<4x256xf32> to vector<4x256xbf16>
    %187 = vector.broadcast %173 : vector<1x256xf32> to vector<4x256xf32>
    %188 = arith.mulf %112, %187 : vector<4x256xf32>
    %189 = vector.broadcast %175 : vector<1x256xf32> to vector<4x256xf32>
    %190 = arith.addf %188, %189 : vector<4x256xf32>
    %cst_112 = arith.constant 0.000000e+00 : f32
    %191 = vector.broadcast %cst_112 : f32 to vector<4x256xf32>
    %192 = arith.maximumf %190, %191 : vector<4x256xf32>
    %193 = arith.truncf %192 : vector<4x256xf32> to vector<4x256xbf16>
    %cst_113 = arith.constant dense<0.000000e+00> : vector<8x256xf32>
    %194 = tpu.matmul %177, %186, %cst_113 {dimension_numbers = #tpu.dot_dimension_numbers<[1], [0], [0], [1], [0, 0, 1, 1], [], []>} : vector<8x4xbf16>, vector<4x256xbf16>, vector<8x256xf32> -> vector<8x256xf32>
    %cst_114 = arith.constant dense<0.000000e+00> : vector<8x256xf32>
    %195 = tpu.matmul %179, %193, %cst_114 {dimension_numbers = #tpu.dot_dimension_numbers<[1], [0], [0], [1], [0, 0, 1, 1], [], []>} : vector<8x4xbf16>, vector<4x256xbf16>, vector<8x256xf32> -> vector<8x256xf32>
    %196 = arith.addf %194, %195 : vector<8x256xf32>
    %c0_115 = arith.constant 0 : index
    %c1_116 = arith.constant 1 : index
    %c0_117 = arith.constant 0 : index
    %197 = vector.load %arg14[%c0_115, %c1_116, %c0_117] : memref<2x10x256xf32, #tpu.memory_space<vmem>>, vector<1x8x256xf32>
    %198 = vector.shape_cast %197 : vector<1x8x256xf32> to vector<8x256xf32>
    %199 = vector.shape_cast %196 : vector<8x256xf32> to vector<1x8x256xf32>
    tpu.vector_store %arg14[%c0_115, %c1_116, %c0_117], %199 {strides = array<i32>} : memref<2x10x256xf32, #tpu.memory_space<vmem>>, vector<1x8x256xf32>,
    %200 = vector.broadcast %173 : vector<1x256xf32> to vector<4x256xf32>
    %201 = arith.mulf %103, %200 : vector<4x256xf32>
    %202 = vector.broadcast %175 : vector<1x256xf32> to vector<4x256xf32>
    %203 = arith.addf %201, %202 : vector<4x256xf32>
    %cst_118 = arith.constant 0.000000e+00 : f32
    %204 = vector.broadcast %cst_118 : f32 to vector<4x256xf32>
    %205 = arith.maximumf %203, %204 : vector<4x256xf32>
    %206 = arith.truncf %205 : vector<4x256xf32> to vector<4x256xbf16>
    %207 = vector.broadcast %173 : vector<1x256xf32> to vector<4x256xf32>
    %208 = arith.mulf %121, %207 : vector<4x256xf32>
    %209 = vector.broadcast %175 : vector<1x256xf32> to vector<4x256xf32>
    %210 = arith.addf %208, %209 : vector<4x256xf32>
    %cst_119 = arith.constant 0.000000e+00 : f32
    %211 = vector.broadcast %cst_119 : f32 to vector<4x256xf32>
    %212 = arith.maximumf %210, %211 : vector<4x256xf32>
    %213 = arith.truncf %212 : vector<4x256xf32> to vector<4x256xbf16>
    %cst_120 = arith.constant dense<0.000000e+00> : vector<8x256xf32>
    %214 = tpu.matmul %177, %206, %cst_120 {dimension_numbers = #tpu.dot_dimension_numbers<[1], [0], [0], [1], [0, 0, 1, 1], [], []>} : vector<8x4xbf16>, vector<4x256xbf16>, vector<8x256xf32> -> vector<8x256xf32>
    %cst_121 = arith.constant dense<0.000000e+00> : vector<8x256xf32>
    %215 = tpu.matmul %179, %213, %cst_121 {dimension_numbers = #tpu.dot_dimension_numbers<[1], [0], [0], [1], [0, 0, 1, 1], [], []>} : vector<8x4xbf16>, vector<4x256xbf16>, vector<8x256xf32> -> vector<8x256xf32>
    %216 = arith.addf %214, %215 : vector<8x256xf32>
    %c1_122 = arith.constant 1 : index
    %c1_123 = arith.constant 1 : index
    %c0_124 = arith.constant 0 : index
    %217 = vector.load %arg14[%c1_122, %c1_123, %c0_124] : memref<2x10x256xf32, #tpu.memory_space<vmem>>, vector<1x8x256xf32>
    %218 = vector.shape_cast %217 : vector<1x8x256xf32> to vector<8x256xf32>
    %219 = vector.shape_cast %216 : vector<8x256xf32> to vector<1x8x256xf32>
    tpu.vector_store %arg14[%c1_122, %c1_123, %c0_124], %219 {strides = array<i32>} : memref<2x10x256xf32, #tpu.memory_space<vmem>>, vector<1x8x256xf32>,
    %c0_125 = arith.constant 0 : index
    %c0_126 = arith.constant 0 : index
    %c0_127 = arith.constant 0 : index
    %220 = vector.load %arg14[%c0_125, %c0_126, %c0_127] : memref<2x10x256xf32, #tpu.memory_space<vmem>>, vector<1x8x256xf32>
    %221 = vector.shape_cast %220 : vector<1x8x256xf32> to vector<8x256xf32>
    %c0_128 = arith.constant 0 : index
    %c1_129 = arith.constant 1 : index
    %c0_130 = arith.constant 0 : index
    %222 = vector.load %arg14[%c0_128, %c1_129, %c0_130] : memref<2x10x256xf32, #tpu.memory_space<vmem>>, vector<1x8x256xf32>
    %223 = vector.shape_cast %222 : vector<1x8x256xf32> to vector<8x256xf32>
    %224 = tpu.concatenate %221, %223 in 1 : vector<8x256xf32>, vector<8x256xf32> -> vector<8x512xf32>
    %c1_131 = arith.constant 1 : index
    %c0_132 = arith.constant 0 : index
    %c0_133 = arith.constant 0 : index
    %225 = vector.load %arg14[%c1_131, %c0_132, %c0_133] : memref<2x10x256xf32, #tpu.memory_space<vmem>>, vector<1x8x256xf32>
    %226 = vector.shape_cast %225 : vector<1x8x256xf32> to vector<8x256xf32>
    %c1_134 = arith.constant 1 : index
    %c1_135 = arith.constant 1 : index
    %c0_136 = arith.constant 0 : index
    %227 = vector.load %arg14[%c1_134, %c1_135, %c0_136] : memref<2x10x256xf32, #tpu.memory_space<vmem>>, vector<1x8x256xf32>
    %228 = vector.shape_cast %227 : vector<1x8x256xf32> to vector<8x256xf32>
    %229 = tpu.concatenate %226, %228 in 1 : vector<8x256xf32>, vector<8x256xf32> -> vector<8x512xf32>
    %230 = tpu.concatenate %224, %229 in 0 : vector<8x512xf32>, vector<8x512xf32> -> vector<16x512xf32>
    %231 = arith.truncf %230 : vector<16x512xf32> to vector<16x512xbf16>
    %c0_137 = arith.constant 0 : index
    %c1_138 = arith.constant 1 : index
    %c0_139 = arith.constant 0 : index
    %232 = vector.load %arg14[%c0_137, %c1_138, %c0_139] : memref<2x10x256xf32, #tpu.memory_space<vmem>>, vector<1x8x256xf32>
    %233 = vector.shape_cast %232 : vector<1x8x256xf32> to vector<8x256xf32>
    %c0_140 = arith.constant 0 : index
    %c2_141 = arith.constant 2 : index
    %c0_142 = arith.constant 0 : index
    %234 = vector.load %arg14[%c0_140, %c2_141, %c0_142] : memref<2x10x256xf32, #tpu.memory_space<vmem>>, vector<1x8x256xf32>
    %235 = vector.shape_cast %234 : vector<1x8x256xf32> to vector<8x256xf32>
    %236 = tpu.concatenate %233, %235 in 1 : vector<8x256xf32>, vector<8x256xf32> -> vector<8x512xf32>
    %c1_143 = arith.constant 1 : index
    %c1_144 = arith.constant 1 : index
    %c0_145 = arith.constant 0 : index
    %237 = vector.load %arg14[%c1_143, %c1_144, %c0_145] : memref<2x10x256xf32, #tpu.memory_space<vmem>>, vector<1x8x256xf32>
    %238 = vector.shape_cast %237 : vector<1x8x256xf32> to vector<8x256xf32>
    %c1_146 = arith.constant 1 : index
    %c2_147 = arith.constant 2 : index
    %c0_148 = arith.constant 0 : index
    %239 = vector.load %arg14[%c1_146, %c2_147, %c0_148] : memref<2x10x256xf32, #tpu.memory_space<vmem>>, vector<1x8x256xf32>
    %240 = vector.shape_cast %239 : vector<1x8x256xf32> to vector<8x256xf32>
    %241 = tpu.concatenate %238, %240 in 1 : vector<8x256xf32>, vector<8x256xf32> -> vector<8x512xf32>
    %242 = tpu.concatenate %236, %241 in 0 : vector<8x512xf32>, vector<8x512xf32> -> vector<16x512xf32>
    %243 = arith.truncf %242 : vector<16x512xf32> to vector<16x512xbf16>
    %c0_149 = arith.constant 0 : index
    %c0_150 = arith.constant 0 : index
    %c0_151 = arith.constant 0 : index
    %244 = vector.load %arg3[%c0_149, %c0_150, %c0_151] : memref<2x512x256xbf16, #tpu.memory_space<vmem>>, vector<1x512x256xbf16>
    %245 = vector.shape_cast %244 : vector<1x512x256xbf16> to vector<512x256xbf16>
    %cst_152 = arith.constant dense<0.000000e+00> : vector<16x256xf32>
    %246 = tpu.matmul %231, %245, %cst_152 {dimension_numbers = #tpu.dot_dimension_numbers<[1], [0], [0], [1], [0, 0, 1, 1], [], []>} : vector<16x512xbf16>, vector<512x256xbf16>, vector<16x256xf32> -> vector<16x256xf32>
    %c1_153 = arith.constant 1 : index
    %c0_154 = arith.constant 0 : index
    %c0_155 = arith.constant 0 : index
    %247 = vector.load %arg3[%c1_153, %c0_154, %c0_155] : memref<2x512x256xbf16, #tpu.memory_space<vmem>>, vector<1x512x256xbf16>
    %248 = vector.shape_cast %247 : vector<1x512x256xbf16> to vector<512x256xbf16>
    %cst_156 = arith.constant dense<0.000000e+00> : vector<16x256xf32>
    %249 = tpu.matmul %243, %248, %cst_156 {dimension_numbers = #tpu.dot_dimension_numbers<[1], [0], [0], [1], [0, 0, 1, 1], [], []>} : vector<16x512xbf16>, vector<512x256xbf16>, vector<16x256xf32> -> vector<16x256xf32>
    %cst_157 = arith.constant dense<0.000000e+00> : vector<256xf32>
    %250 = vector.multi_reduction <add>, %246, %cst_157 [0] : vector<16x256xf32> to vector<256xf32>
    %251 = vector.shape_cast %250 : vector<256xf32> to vector<1x256xf32>
    %cst_158 = arith.constant dense<0.000000e+00> : vector<256xf32>
    %252 = vector.multi_reduction <add>, %249, %cst_158 [0] : vector<16x256xf32> to vector<256xf32>
    %253 = vector.shape_cast %252 : vector<256xf32> to vector<1x256xf32>
    %254 = arith.addf %251, %253 : vector<1x256xf32>
    %255 = arith.mulf %246, %246 : vector<16x256xf32>
    %cst_159 = arith.constant dense<0.000000e+00> : vector<256xf32>
    %256 = vector.multi_reduction <add>, %255, %cst_159 [0] : vector<16x256xf32> to vector<256xf32>
    %257 = vector.shape_cast %256 : vector<256xf32> to vector<1x256xf32>
    %258 = arith.mulf %249, %249 : vector<16x256xf32>
    %cst_160 = arith.constant dense<0.000000e+00> : vector<256xf32>
    %259 = vector.multi_reduction <add>, %258, %cst_160 [0] : vector<16x256xf32> to vector<256xf32>
    %260 = vector.shape_cast %259 : vector<256xf32> to vector<1x256xf32>
    %261 = arith.addf %257, %260 : vector<1x256xf32>
    %c1_161 = arith.constant 1 : index
    %c0_162 = arith.constant 0 : index
    %c0_163 = arith.constant 0 : index
    %262 = vector.load %arg7[%c1_161, %c0_162, %c0_163] : memref<3x2x256xf32, #tpu.memory_space<vmem>>, vector<1x2x256xf32>
    %263 = vector.shape_cast %262 : vector<1x2x256xf32> to vector<2x256xf32>
    %264 = vector.extract_strided_slice %263 {offsets = [0, 0], sizes = [1, 256], strides = [1, 1]} : vector<2x256xf32> to vector<1x256xf32>
    %265 = vector.extract_strided_slice %263 {offsets = [1, 0], sizes = [1, 256], strides = [1, 1]} : vector<2x256xf32> to vector<1x256xf32>
    %c16_i32 = arith.constant 16 : i32
    %266 = tpu.dynamic_rotate %254 by %c16_i32 dim 1 : vector<1x256xf32>, i32 -> vector<1x256xf32>
    %267 = arith.addf %254, %266 : vector<1x256xf32>
    %c32_i32_164 = arith.constant 32 : i32
    %268 = tpu.dynamic_rotate %267 by %c32_i32_164 dim 1 : vector<1x256xf32>, i32 -> vector<1x256xf32>
    %269 = arith.addf %267, %268 : vector<1x256xf32>
    %c64_i32_165 = arith.constant 64 : i32
    %270 = tpu.dynamic_rotate %269 by %c64_i32_165 dim 1 : vector<1x256xf32>, i32 -> vector<1x256xf32>
    %271 = arith.addf %269, %270 : vector<1x256xf32>
    %c128_i32_166 = arith.constant 128 : i32
    %272 = tpu.dynamic_rotate %271 by %c128_i32_166 dim 1 : vector<1x256xf32>, i32 -> vector<1x256xf32>
    %273 = arith.addf %271, %272 : vector<1x256xf32>
    %c16_i32_167 = arith.constant 16 : i32
    %274 = tpu.dynamic_rotate %261 by %c16_i32_167 dim 1 : vector<1x256xf32>, i32 -> vector<1x256xf32>
    %275 = arith.addf %261, %274 : vector<1x256xf32>
    %c32_i32_168 = arith.constant 32 : i32
    %276 = tpu.dynamic_rotate %275 by %c32_i32_168 dim 1 : vector<1x256xf32>, i32 -> vector<1x256xf32>
    %277 = arith.addf %275, %276 : vector<1x256xf32>
    %c64_i32_169 = arith.constant 64 : i32
    %278 = tpu.dynamic_rotate %277 by %c64_i32_169 dim 1 : vector<1x256xf32>, i32 -> vector<1x256xf32>
    %279 = arith.addf %277, %278 : vector<1x256xf32>
    %c128_i32_170 = arith.constant 128 : i32
    %280 = tpu.dynamic_rotate %279 by %c128_i32_170 dim 1 : vector<1x256xf32>, i32 -> vector<1x256xf32>
    %281 = arith.addf %279, %280 : vector<1x256xf32>
    %cst_171 = arith.constant 0.001953125 : f32
    %282 = vector.broadcast %cst_171 : f32 to vector<1x256xf32>
    %283 = arith.mulf %273, %282 : vector<1x256xf32>
    %cst_172 = arith.constant 0.001953125 : f32
    %284 = vector.broadcast %cst_172 : f32 to vector<1x256xf32>
    %285 = arith.mulf %281, %284 : vector<1x256xf32>
    %286 = arith.mulf %283, %283 : vector<1x256xf32>
    %287 = arith.subf %285, %286 : vector<1x256xf32>
    %cst_173 = arith.constant 9.99999974E-6 : f32
    %288 = vector.broadcast %cst_173 : f32 to vector<1x256xf32>
    %289 = arith.addf %287, %288 : vector<1x256xf32>
    %290 = math.rsqrt %289 : vector<1x256xf32>
    %291 = arith.mulf %264, %290 : vector<1x256xf32>
    %292 = arith.mulf %283, %291 : vector<1x256xf32>
    %293 = arith.subf %265, %292 : vector<1x256xf32>
    %c0_174 = arith.constant 0 : index
    %c0_175 = arith.constant 0 : index
    %c0_176 = arith.constant 0 : index
    %294 = vector.load %arg9[%c0_174, %c0_175, %c0_176] : memref<2x16x8xbf16, #tpu.memory_space<vmem>>, vector<1x16x8xbf16>
    %295 = vector.shape_cast %294 : vector<1x16x8xbf16> to vector<16x8xbf16>
    %c1_177 = arith.constant 1 : index
    %c0_178 = arith.constant 0 : index
    %c0_179 = arith.constant 0 : index
    %296 = vector.load %arg9[%c1_177, %c0_178, %c0_179] : memref<2x16x8xbf16, #tpu.memory_space<vmem>>, vector<1x16x8xbf16>
    %297 = vector.shape_cast %296 : vector<1x16x8xbf16> to vector<16x8xbf16>
    %298 = vector.extract_strided_slice %246 {offsets = [0, 0], sizes = [8, 256], strides = [1, 1]} : vector<16x256xf32> to vector<8x256xf32>
    %299 = vector.broadcast %291 : vector<1x256xf32> to vector<8x256xf32>
    %300 = arith.mulf %298, %299 : vector<8x256xf32>
    %301 = vector.broadcast %293 : vector<1x256xf32> to vector<8x256xf32>
    %302 = arith.addf %300, %301 : vector<8x256xf32>
    %cst_180 = arith.constant 0.000000e+00 : f32
    %303 = vector.broadcast %cst_180 : f32 to vector<8x256xf32>
    %304 = arith.maximumf %302, %303 : vector<8x256xf32>
    %305 = arith.truncf %304 : vector<8x256xf32> to vector<8x256xbf16>
    %306 = vector.extract_strided_slice %249 {offsets = [0, 0], sizes = [8, 256], strides = [1, 1]} : vector<16x256xf32> to vector<8x256xf32>
    %307 = vector.broadcast %291 : vector<1x256xf32> to vector<8x256xf32>
    %308 = arith.mulf %306, %307 : vector<8x256xf32>
    %309 = vector.broadcast %293 : vector<1x256xf32> to vector<8x256xf32>
    %310 = arith.addf %308, %309 : vector<8x256xf32>
    %cst_181 = arith.constant 0.000000e+00 : f32
    %311 = vector.broadcast %cst_181 : f32 to vector<8x256xf32>
    %312 = arith.maximumf %310, %311 : vector<8x256xf32>
    %313 = arith.truncf %312 : vector<8x256xf32> to vector<8x256xbf16>
    %cst_182 = arith.constant dense<0.000000e+00> : vector<16x256xf32>
    %314 = tpu.matmul %295, %305, %cst_182 {dimension_numbers = #tpu.dot_dimension_numbers<[1], [0], [0], [1], [0, 0, 1, 1], [], []>} : vector<16x8xbf16>, vector<8x256xbf16>, vector<16x256xf32> -> vector<16x256xf32>
    %cst_183 = arith.constant dense<0.000000e+00> : vector<16x256xf32>
    %315 = tpu.matmul %297, %313, %cst_183 {dimension_numbers = #tpu.dot_dimension_numbers<[1], [0], [0], [1], [0, 0, 1, 1], [], []>} : vector<16x8xbf16>, vector<8x256xbf16>, vector<16x256xf32> -> vector<16x256xf32>
    %316 = arith.addf %314, %315 : vector<16x256xf32>
    %c0_184 = arith.constant 0 : index
    %c1_185 = arith.constant 1 : index
    %c0_186 = arith.constant 0 : index
    %317 = vector.load %arg15[%c0_184, %c1_185, %c0_186] : memref<2x18x256xf32, #tpu.memory_space<vmem>>, vector<1x16x256xf32>
    %318 = vector.shape_cast %317 : vector<1x16x256xf32> to vector<16x256xf32>
    %319 = vector.shape_cast %316 : vector<16x256xf32> to vector<1x16x256xf32>
    tpu.vector_store %arg15[%c0_184, %c1_185, %c0_186], %319 {strides = array<i32>} : memref<2x18x256xf32, #tpu.memory_space<vmem>>, vector<1x16x256xf32>,
    %320 = vector.extract_strided_slice %246 {offsets = [8, 0], sizes = [8, 256], strides = [1, 1]} : vector<16x256xf32> to vector<8x256xf32>
    %321 = vector.broadcast %291 : vector<1x256xf32> to vector<8x256xf32>
    %322 = arith.mulf %320, %321 : vector<8x256xf32>
    %323 = vector.broadcast %293 : vector<1x256xf32> to vector<8x256xf32>
    %324 = arith.addf %322, %323 : vector<8x256xf32>
    %cst_187 = arith.constant 0.000000e+00 : f32
    %325 = vector.broadcast %cst_187 : f32 to vector<8x256xf32>
    %326 = arith.maximumf %324, %325 : vector<8x256xf32>
    %327 = arith.truncf %326 : vector<8x256xf32> to vector<8x256xbf16>
    %328 = vector.extract_strided_slice %249 {offsets = [8, 0], sizes = [8, 256], strides = [1, 1]} : vector<16x256xf32> to vector<8x256xf32>
    %329 = vector.broadcast %291 : vector<1x256xf32> to vector<8x256xf32>
    %330 = arith.mulf %328, %329 : vector<8x256xf32>
    %331 = vector.broadcast %293 : vector<1x256xf32> to vector<8x256xf32>
    %332 = arith.addf %330, %331 : vector<8x256xf32>
    %cst_188 = arith.constant 0.000000e+00 : f32
    %333 = vector.broadcast %cst_188 : f32 to vector<8x256xf32>
    %334 = arith.maximumf %332, %333 : vector<8x256xf32>
    %335 = arith.truncf %334 : vector<8x256xf32> to vector<8x256xbf16>
    %cst_189 = arith.constant dense<0.000000e+00> : vector<16x256xf32>
    %336 = tpu.matmul %295, %327, %cst_189 {dimension_numbers = #tpu.dot_dimension_numbers<[1], [0], [0], [1], [0, 0, 1, 1], [], []>} : vector<16x8xbf16>, vector<8x256xbf16>, vector<16x256xf32> -> vector<16x256xf32>
    %cst_190 = arith.constant dense<0.000000e+00> : vector<16x256xf32>
    %337 = tpu.matmul %297, %335, %cst_190 {dimension_numbers = #tpu.dot_dimension_numbers<[1], [0], [0], [1], [0, 0, 1, 1], [], []>} : vector<16x8xbf16>, vector<8x256xbf16>, vector<16x256xf32> -> vector<16x256xf32>
    %338 = arith.addf %336, %337 : vector<16x256xf32>
    %c1_191 = arith.constant 1 : index
    %c1_192 = arith.constant 1 : index
    %c0_193 = arith.constant 0 : index
    %339 = vector.load %arg15[%c1_191, %c1_192, %c0_193] : memref<2x18x256xf32, #tpu.memory_space<vmem>>, vector<1x16x256xf32>
    %340 = vector.shape_cast %339 : vector<1x16x256xf32> to vector<16x256xf32>
    %341 = vector.shape_cast %338 : vector<16x256xf32> to vector<1x16x256xf32>
    tpu.vector_store %arg15[%c1_191, %c1_192, %c0_193], %341 {strides = array<i32>} : memref<2x18x256xf32, #tpu.memory_space<vmem>>, vector<1x16x256xf32>,
    %c0_194 = arith.constant 0 : index
    %c0_195 = arith.constant 0 : index
    %c0_196 = arith.constant 0 : index
    %342 = vector.load %arg15[%c0_194, %c0_195, %c0_196] : memref<2x18x256xf32, #tpu.memory_space<vmem>>, vector<1x16x256xf32>
    %343 = vector.shape_cast %342 : vector<1x16x256xf32> to vector<16x256xf32>
    %c0_197 = arith.constant 0 : index
    %c1_198 = arith.constant 1 : index
    %c0_199 = arith.constant 0 : index
    %344 = vector.load %arg15[%c0_197, %c1_198, %c0_199] : memref<2x18x256xf32, #tpu.memory_space<vmem>>, vector<1x16x256xf32>
    %345 = vector.shape_cast %344 : vector<1x16x256xf32> to vector<16x256xf32>
    %346 = tpu.concatenate %343, %345 in 1 : vector<16x256xf32>, vector<16x256xf32> -> vector<16x512xf32>
    %c1_200 = arith.constant 1 : index
    %c0_201 = arith.constant 0 : index
    %c0_202 = arith.constant 0 : index
    %347 = vector.load %arg15[%c1_200, %c0_201, %c0_202] : memref<2x18x256xf32, #tpu.memory_space<vmem>>, vector<1x16x256xf32>
    %348 = vector.shape_cast %347 : vector<1x16x256xf32> to vector<16x256xf32>
    %c1_203 = arith.constant 1 : index
    %c1_204 = arith.constant 1 : index
    %c0_205 = arith.constant 0 : index
    %349 = vector.load %arg15[%c1_203, %c1_204, %c0_205] : memref<2x18x256xf32, #tpu.memory_space<vmem>>, vector<1x16x256xf32>
    %350 = vector.shape_cast %349 : vector<1x16x256xf32> to vector<16x256xf32>
    %351 = tpu.concatenate %348, %350 in 1 : vector<16x256xf32>, vector<16x256xf32> -> vector<16x512xf32>
    %352 = tpu.concatenate %346, %351 in 0 : vector<16x512xf32>, vector<16x512xf32> -> vector<32x512xf32>
    %353 = arith.truncf %352 : vector<32x512xf32> to vector<32x512xbf16>
    %c0_206 = arith.constant 0 : index
    %c1_207 = arith.constant 1 : index
    %c0_208 = arith.constant 0 : index
    %354 = vector.load %arg15[%c0_206, %c1_207, %c0_208] : memref<2x18x256xf32, #tpu.memory_space<vmem>>, vector<1x16x256xf32>
    %355 = vector.shape_cast %354 : vector<1x16x256xf32> to vector<16x256xf32>
    %c0_209 = arith.constant 0 : index
    %c2_210 = arith.constant 2 : index
    %c0_211 = arith.constant 0 : index
    %356 = vector.load %arg15[%c0_209, %c2_210, %c0_211] : memref<2x18x256xf32, #tpu.memory_space<vmem>>, vector<1x16x256xf32>
    %357 = vector.shape_cast %356 : vector<1x16x256xf32> to vector<16x256xf32>
    %358 = tpu.concatenate %355, %357 in 1 : vector<16x256xf32>, vector<16x256xf32> -> vector<16x512xf32>
    %c1_212 = arith.constant 1 : index
    %c1_213 = arith.constant 1 : index
    %c0_214 = arith.constant 0 : index
    %359 = vector.load %arg15[%c1_212, %c1_213, %c0_214] : memref<2x18x256xf32, #tpu.memory_space<vmem>>, vector<1x16x256xf32>
    %360 = vector.shape_cast %359 : vector<1x16x256xf32> to vector<16x256xf32>
    %c1_215 = arith.constant 1 : index
    %c2_216 = arith.constant 2 : index
    %c0_217 = arith.constant 0 : index
    %361 = vector.load %arg15[%c1_215, %c2_216, %c0_217] : memref<2x18x256xf32, #tpu.memory_space<vmem>>, vector<1x16x256xf32>
    %362 = vector.shape_cast %361 : vector<1x16x256xf32> to vector<16x256xf32>
    %363 = tpu.concatenate %360, %362 in 1 : vector<16x256xf32>, vector<16x256xf32> -> vector<16x512xf32>
    %364 = tpu.concatenate %358, %363 in 0 : vector<16x512xf32>, vector<16x512xf32> -> vector<32x512xf32>
    %365 = arith.truncf %364 : vector<32x512xf32> to vector<32x512xbf16>
    %c0_218 = arith.constant 0 : index
    %c0_219 = arith.constant 0 : index
    %c0_220 = arith.constant 0 : index
    %366 = vector.load %arg4[%c0_218, %c0_219, %c0_220] : memref<2x512x256xbf16, #tpu.memory_space<vmem>>, vector<1x512x256xbf16>
    %367 = vector.shape_cast %366 : vector<1x512x256xbf16> to vector<512x256xbf16>
    %cst_221 = arith.constant dense<0.000000e+00> : vector<32x256xf32>
    %368 = tpu.matmul %353, %367, %cst_221 {dimension_numbers = #tpu.dot_dimension_numbers<[1], [0], [0], [1], [0, 0, 1, 1], [], []>} : vector<32x512xbf16>, vector<512x256xbf16>, vector<32x256xf32> -> vector<32x256xf32>
    %c1_222 = arith.constant 1 : index
    %c0_223 = arith.constant 0 : index
    %c0_224 = arith.constant 0 : index
    %369 = vector.load %arg4[%c1_222, %c0_223, %c0_224] : memref<2x512x256xbf16, #tpu.memory_space<vmem>>, vector<1x512x256xbf16>
    %370 = vector.shape_cast %369 : vector<1x512x256xbf16> to vector<512x256xbf16>
    %cst_225 = arith.constant dense<0.000000e+00> : vector<32x256xf32>
    %371 = tpu.matmul %365, %370, %cst_225 {dimension_numbers = #tpu.dot_dimension_numbers<[1], [0], [0], [1], [0, 0, 1, 1], [], []>} : vector<32x512xbf16>, vector<512x256xbf16>, vector<32x256xf32> -> vector<32x256xf32>
    %cst_226 = arith.constant dense<0.000000e+00> : vector<256xf32>
    %372 = vector.multi_reduction <add>, %368, %cst_226 [0] : vector<32x256xf32> to vector<256xf32>
    %373 = vector.shape_cast %372 : vector<256xf32> to vector<1x256xf32>
    %cst_227 = arith.constant dense<0.000000e+00> : vector<256xf32>
    %374 = vector.multi_reduction <add>, %371, %cst_227 [0] : vector<32x256xf32> to vector<256xf32>
    %375 = vector.shape_cast %374 : vector<256xf32> to vector<1x256xf32>
    %376 = arith.addf %373, %375 : vector<1x256xf32>
    %377 = arith.mulf %368, %368 : vector<32x256xf32>
    %cst_228 = arith.constant dense<0.000000e+00> : vector<256xf32>
    %378 = vector.multi_reduction <add>, %377, %cst_228 [0] : vector<32x256xf32> to vector<256xf32>
    %379 = vector.shape_cast %378 : vector<256xf32> to vector<1x256xf32>
    %380 = arith.mulf %371, %371 : vector<32x256xf32>
    %cst_229 = arith.constant dense<0.000000e+00> : vector<256xf32>
    %381 = vector.multi_reduction <add>, %380, %cst_229 [0] : vector<32x256xf32> to vector<256xf32>
    %382 = vector.shape_cast %381 : vector<256xf32> to vector<1x256xf32>
    %383 = arith.addf %379, %382 : vector<1x256xf32>
    %c2_230 = arith.constant 2 : index
    %c0_231 = arith.constant 0 : index
    %c0_232 = arith.constant 0 : index
    %384 = vector.load %arg7[%c2_230, %c0_231, %c0_232] : memref<3x2x256xf32, #tpu.memory_space<vmem>>, vector<1x2x256xf32>
    %385 = vector.shape_cast %384 : vector<1x2x256xf32> to vector<2x256xf32>
    %386 = vector.extract_strided_slice %385 {offsets = [0, 0], sizes = [1, 256], strides = [1, 1]} : vector<2x256xf32> to vector<1x256xf32>
    %387 = vector.extract_strided_slice %385 {offsets = [1, 0], sizes = [1, 256], strides = [1, 1]} : vector<2x256xf32> to vector<1x256xf32>
    %c8_i32 = arith.constant 8 : i32
    %388 = tpu.dynamic_rotate %376 by %c8_i32 dim 1 : vector<1x256xf32>, i32 -> vector<1x256xf32>
    %389 = arith.addf %376, %388 : vector<1x256xf32>
    %c16_i32_233 = arith.constant 16 : i32
    %390 = tpu.dynamic_rotate %389 by %c16_i32_233 dim 1 : vector<1x256xf32>, i32 -> vector<1x256xf32>
    %391 = arith.addf %389, %390 : vector<1x256xf32>
    %c32_i32_234 = arith.constant 32 : i32
    %392 = tpu.dynamic_rotate %391 by %c32_i32_234 dim 1 : vector<1x256xf32>, i32 -> vector<1x256xf32>
    %393 = arith.addf %391, %392 : vector<1x256xf32>
    %c64_i32_235 = arith.constant 64 : i32
    %394 = tpu.dynamic_rotate %393 by %c64_i32_235 dim 1 : vector<1x256xf32>, i32 -> vector<1x256xf32>
    %395 = arith.addf %393, %394 : vector<1x256xf32>
    %c128_i32_236 = arith.constant 128 : i32
    %396 = tpu.dynamic_rotate %395 by %c128_i32_236 dim 1 : vector<1x256xf32>, i32 -> vector<1x256xf32>
    %397 = arith.addf %395, %396 : vector<1x256xf32>
    %c8_i32_237 = arith.constant 8 : i32
    %398 = tpu.dynamic_rotate %383 by %c8_i32_237 dim 1 : vector<1x256xf32>, i32 -> vector<1x256xf32>
    %399 = arith.addf %383, %398 : vector<1x256xf32>
    %c16_i32_238 = arith.constant 16 : i32
    %400 = tpu.dynamic_rotate %399 by %c16_i32_238 dim 1 : vector<1x256xf32>, i32 -> vector<1x256xf32>
    %401 = arith.addf %399, %400 : vector<1x256xf32>
    %c32_i32_239 = arith.constant 32 : i32
    %402 = tpu.dynamic_rotate %401 by %c32_i32_239 dim 1 : vector<1x256xf32>, i32 -> vector<1x256xf32>
    %403 = arith.addf %401, %402 : vector<1x256xf32>
    %c64_i32_240 = arith.constant 64 : i32
    %404 = tpu.dynamic_rotate %403 by %c64_i32_240 dim 1 : vector<1x256xf32>, i32 -> vector<1x256xf32>
    %405 = arith.addf %403, %404 : vector<1x256xf32>
    %c128_i32_241 = arith.constant 128 : i32
    %406 = tpu.dynamic_rotate %405 by %c128_i32_241 dim 1 : vector<1x256xf32>, i32 -> vector<1x256xf32>
    %407 = arith.addf %405, %406 : vector<1x256xf32>
    %cst_242 = arith.constant 4.8828125E-4 : f32
    %408 = vector.broadcast %cst_242 : f32 to vector<1x256xf32>
    %409 = arith.mulf %397, %408 : vector<1x256xf32>
    %cst_243 = arith.constant 4.8828125E-4 : f32
    %410 = vector.broadcast %cst_243 : f32 to vector<1x256xf32>
    %411 = arith.mulf %407, %410 : vector<1x256xf32>
    %412 = arith.mulf %409, %409 : vector<1x256xf32>
    %413 = arith.subf %411, %412 : vector<1x256xf32>
    %cst_244 = arith.constant 9.99999974E-6 : f32
    %414 = vector.broadcast %cst_244 : f32 to vector<1x256xf32>
    %415 = arith.addf %413, %414 : vector<1x256xf32>
    %416 = math.rsqrt %415 : vector<1x256xf32>
    %417 = arith.mulf %386, %416 : vector<1x256xf32>
    %418 = arith.mulf %409, %417 : vector<1x256xf32>
    %419 = arith.subf %387, %418 : vector<1x256xf32>
    %c0_245 = arith.constant 0 : index
    %c0_246 = arith.constant 0 : index
    %c0_247 = arith.constant 0 : index
    %420 = vector.load %arg10[%c0_245, %c0_246, %c0_247] : memref<2x32x16xbf16, #tpu.memory_space<vmem>>, vector<1x32x16xbf16>
    %421 = vector.shape_cast %420 : vector<1x32x16xbf16> to vector<32x16xbf16>
    %c1_248 = arith.constant 1 : index
    %c0_249 = arith.constant 0 : index
    %c0_250 = arith.constant 0 : index
    %422 = vector.load %arg10[%c1_248, %c0_249, %c0_250] : memref<2x32x16xbf16, #tpu.memory_space<vmem>>, vector<1x32x16xbf16>
    %423 = vector.shape_cast %422 : vector<1x32x16xbf16> to vector<32x16xbf16>
    %424 = vector.extract_strided_slice %368 {offsets = [0, 0], sizes = [16, 256], strides = [1, 1]} : vector<32x256xf32> to vector<16x256xf32>
    %425 = vector.broadcast %417 : vector<1x256xf32> to vector<16x256xf32>
    %426 = arith.mulf %424, %425 : vector<16x256xf32>
    %427 = vector.broadcast %419 : vector<1x256xf32> to vector<16x256xf32>
    %428 = arith.addf %426, %427 : vector<16x256xf32>
    %cst_251 = arith.constant 0.000000e+00 : f32
    %429 = vector.broadcast %cst_251 : f32 to vector<16x256xf32>
    %430 = arith.maximumf %428, %429 : vector<16x256xf32>
    %431 = arith.truncf %430 : vector<16x256xf32> to vector<16x256xbf16>
    %432 = vector.extract_strided_slice %371 {offsets = [0, 0], sizes = [16, 256], strides = [1, 1]} : vector<32x256xf32> to vector<16x256xf32>
    %433 = vector.broadcast %417 : vector<1x256xf32> to vector<16x256xf32>
    %434 = arith.mulf %432, %433 : vector<16x256xf32>
    %435 = vector.broadcast %419 : vector<1x256xf32> to vector<16x256xf32>
    %436 = arith.addf %434, %435 : vector<16x256xf32>
    %cst_252 = arith.constant 0.000000e+00 : f32
    %437 = vector.broadcast %cst_252 : f32 to vector<16x256xf32>
    %438 = arith.maximumf %436, %437 : vector<16x256xf32>
    %439 = arith.truncf %438 : vector<16x256xf32> to vector<16x256xbf16>
    %cst_253 = arith.constant dense<0.000000e+00> : vector<32x256xf32>
    %440 = tpu.matmul %421, %431, %cst_253 {dimension_numbers = #tpu.dot_dimension_numbers<[1], [0], [0], [1], [0, 0, 1, 1], [], []>} : vector<32x16xbf16>, vector<16x256xbf16>, vector<32x256xf32> -> vector<32x256xf32>
    %cst_254 = arith.constant dense<0.000000e+00> : vector<32x256xf32>
    %441 = tpu.matmul %423, %439, %cst_254 {dimension_numbers = #tpu.dot_dimension_numbers<[1], [0], [0], [1], [0, 0, 1, 1], [], []>} : vector<32x16xbf16>, vector<16x256xbf16>, vector<32x256xf32> -> vector<32x256xf32>
    %442 = arith.addf %440, %441 : vector<32x256xf32>
    %c0_255 = arith.constant 0 : index
    %c1_256 = arith.constant 1 : index
    %c0_257 = arith.constant 0 : index
    %443 = vector.load %arg16[%c0_255, %c1_256, %c0_257] : memref<2x34x256xf32, #tpu.memory_space<vmem>>, vector<1x32x256xf32>
    %444 = vector.shape_cast %443 : vector<1x32x256xf32> to vector<32x256xf32>
    %445 = vector.shape_cast %442 : vector<32x256xf32> to vector<1x32x256xf32>
    tpu.vector_store %arg16[%c0_255, %c1_256, %c0_257], %445 {strides = array<i32>} : memref<2x34x256xf32, #tpu.memory_space<vmem>>, vector<1x32x256xf32>,
    %446 = vector.extract_strided_slice %368 {offsets = [16, 0], sizes = [16, 256], strides = [1, 1]} : vector<32x256xf32> to vector<16x256xf32>
    %447 = vector.broadcast %417 : vector<1x256xf32> to vector<16x256xf32>
    %448 = arith.mulf %446, %447 : vector<16x256xf32>
    %449 = vector.broadcast %419 : vector<1x256xf32> to vector<16x256xf32>
    %450 = arith.addf %448, %449 : vector<16x256xf32>
    %cst_258 = arith.constant 0.000000e+00 : f32
    %451 = vector.broadcast %cst_258 : f32 to vector<16x256xf32>
    %452 = arith.maximumf %450, %451 : vector<16x256xf32>
    %453 = arith.truncf %452 : vector<16x256xf32> to vector<16x256xbf16>
    %454 = vector.extract_strided_slice %371 {offsets = [16, 0], sizes = [16, 256], strides = [1, 1]} : vector<32x256xf32> to vector<16x256xf32>
    %455 = vector.broadcast %417 : vector<1x256xf32> to vector<16x256xf32>
    %456 = arith.mulf %454, %455 : vector<16x256xf32>
    %457 = vector.broadcast %419 : vector<1x256xf32> to vector<16x256xf32>
    %458 = arith.addf %456, %457 : vector<16x256xf32>
    %cst_259 = arith.constant 0.000000e+00 : f32
    %459 = vector.broadcast %cst_259 : f32 to vector<16x256xf32>
    %460 = arith.maximumf %458, %459 : vector<16x256xf32>
    %461 = arith.truncf %460 : vector<16x256xf32> to vector<16x256xbf16>
    %cst_260 = arith.constant dense<0.000000e+00> : vector<32x256xf32>
    %462 = tpu.matmul %421, %453, %cst_260 {dimension_numbers = #tpu.dot_dimension_numbers<[1], [0], [0], [1], [0, 0, 1, 1], [], []>} : vector<32x16xbf16>, vector<16x256xbf16>, vector<32x256xf32> -> vector<32x256xf32>
    %cst_261 = arith.constant dense<0.000000e+00> : vector<32x256xf32>
    %463 = tpu.matmul %423, %461, %cst_261 {dimension_numbers = #tpu.dot_dimension_numbers<[1], [0], [0], [1], [0, 0, 1, 1], [], []>} : vector<32x16xbf16>, vector<16x256xbf16>, vector<32x256xf32> -> vector<32x256xf32>
    %464 = arith.addf %462, %463 : vector<32x256xf32>
    %c1_262 = arith.constant 1 : index
    %c1_263 = arith.constant 1 : index
    %c0_264 = arith.constant 0 : index
    %465 = vector.load %arg16[%c1_262, %c1_263, %c0_264] : memref<2x34x256xf32, #tpu.memory_space<vmem>>, vector<1x32x256xf32>
    %466 = vector.shape_cast %465 : vector<1x32x256xf32> to vector<32x256xf32>
    %467 = vector.shape_cast %464 : vector<32x256xf32> to vector<1x32x256xf32>
    tpu.vector_store %arg16[%c1_262, %c1_263, %c0_264], %467 {strides = array<i32>} : memref<2x34x256xf32, #tpu.memory_space<vmem>>, vector<1x32x256xf32>,
    %c0_265 = arith.constant 0 : index
    %c0_266 = arith.constant 0 : index
    %468 = vector.load %arg11[%c0_265, %c0_266] : memref<1x192xf32, #tpu.memory_space<vmem>>, vector<1x192xf32>
    %c0_267 = arith.constant 0 : index
    %c0_268 = arith.constant 0 : index
    %c0_269 = arith.constant 0 : index
    %469 = vector.load %arg16[%c0_267, %c0_268, %c0_269] : memref<2x34x256xf32, #tpu.memory_space<vmem>>, vector<1x32x256xf32>
    %470 = vector.shape_cast %469 : vector<1x32x256xf32> to vector<32x256xf32>
    %c0_270 = arith.constant 0 : index
    %c1_271 = arith.constant 1 : index
    %c0_272 = arith.constant 0 : index
    %471 = vector.load %arg16[%c0_270, %c1_271, %c0_272] : memref<2x34x256xf32, #tpu.memory_space<vmem>>, vector<1x32x256xf32>
    %472 = vector.shape_cast %471 : vector<1x32x256xf32> to vector<32x256xf32>
    %473 = tpu.concatenate %470, %472 in 1 : vector<32x256xf32>, vector<32x256xf32> -> vector<32x512xf32>
    %c1_273 = arith.constant 1 : index
    %c0_274 = arith.constant 0 : index
    %c0_275 = arith.constant 0 : index
    %474 = vector.load %arg16[%c1_273, %c0_274, %c0_275] : memref<2x34x256xf32, #tpu.memory_space<vmem>>, vector<1x32x256xf32>
    %475 = vector.shape_cast %474 : vector<1x32x256xf32> to vector<32x256xf32>
    %c1_276 = arith.constant 1 : index
    %c1_277 = arith.constant 1 : index
    %c0_278 = arith.constant 0 : index
    %476 = vector.load %arg16[%c1_276, %c1_277, %c0_278] : memref<2x34x256xf32, #tpu.memory_space<vmem>>, vector<1x32x256xf32>
    %477 = vector.shape_cast %476 : vector<1x32x256xf32> to vector<32x256xf32>
    %478 = tpu.concatenate %475, %477 in 1 : vector<32x256xf32>, vector<32x256xf32> -> vector<32x512xf32>
    %479 = tpu.concatenate %473, %478 in 0 : vector<32x512xf32>, vector<32x512xf32> -> vector<64x512xf32>
    %480 = arith.truncf %479 : vector<64x512xf32> to vector<64x512xbf16>
    %c0_279 = arith.constant 0 : index
    %c1_280 = arith.constant 1 : index
    %c0_281 = arith.constant 0 : index
    %481 = vector.load %arg16[%c0_279, %c1_280, %c0_281] : memref<2x34x256xf32, #tpu.memory_space<vmem>>, vector<1x32x256xf32>
    %482 = vector.shape_cast %481 : vector<1x32x256xf32> to vector<32x256xf32>
    %c0_282 = arith.constant 0 : index
    %c2_283 = arith.constant 2 : index
    %c0_284 = arith.constant 0 : index
    %483 = vector.load %arg16[%c0_282, %c2_283, %c0_284] : memref<2x34x256xf32, #tpu.memory_space<vmem>>, vector<1x32x256xf32>
    %484 = vector.shape_cast %483 : vector<1x32x256xf32> to vector<32x256xf32>
    %485 = tpu.concatenate %482, %484 in 1 : vector<32x256xf32>, vector<32x256xf32> -> vector<32x512xf32>
    %c1_285 = arith.constant 1 : index
    %c1_286 = arith.constant 1 : index
    %c0_287 = arith.constant 0 : index
    %486 = vector.load %arg16[%c1_285, %c1_286, %c0_287] : memref<2x34x256xf32, #tpu.memory_space<vmem>>, vector<1x32x256xf32>
    %487 = vector.shape_cast %486 : vector<1x32x256xf32> to vector<32x256xf32>
    %c1_288 = arith.constant 1 : index
    %c2_289 = arith.constant 2 : index
    %c0_290 = arith.constant 0 : index
    %488 = vector.load %arg16[%c1_288, %c2_289, %c0_290] : memref<2x34x256xf32, #tpu.memory_space<vmem>>, vector<1x32x256xf32>
    %489 = vector.shape_cast %488 : vector<1x32x256xf32> to vector<32x256xf32>
    %490 = tpu.concatenate %487, %489 in 1 : vector<32x256xf32>, vector<32x256xf32> -> vector<32x512xf32>
    %491 = tpu.concatenate %485, %490 in 0 : vector<32x512xf32>, vector<32x512xf32> -> vector<64x512xf32>
    %492 = arith.truncf %491 : vector<64x512xf32> to vector<64x512xbf16>
    %c0_291 = arith.constant 0 : index
    %c0_292 = arith.constant 0 : index
    %c0_293 = arith.constant 0 : index
    %493 = vector.load %arg5[%c0_291, %c0_292, %c0_293] : memref<2x512x192xbf16, #tpu.memory_space<vmem>>, vector<1x512x192xbf16>
    %494 = vector.shape_cast %493 : vector<1x512x192xbf16> to vector<512x192xbf16>
    %cst_294 = arith.constant dense<0.000000e+00> : vector<64x192xf32>
    %495 = tpu.matmul %480, %494, %cst_294 {dimension_numbers = #tpu.dot_dimension_numbers<[1], [0], [0], [1], [0, 0, 1, 1], [], []>} : vector<64x512xbf16>, vector<512x192xbf16>, vector<64x192xf32> -> vector<64x192xf32>
    %496 = vector.broadcast %468 : vector<1x192xf32> to vector<64x192xf32>
    %497 = arith.addf %495, %496 : vector<64x192xf32>
    %498 = math.tanh %497 : vector<64x192xf32>
    %c1_295 = arith.constant 1 : index
    %c0_296 = arith.constant 0 : index
    %c0_297 = arith.constant 0 : index
    %499 = vector.load %arg5[%c1_295, %c0_296, %c0_297] : memref<2x512x192xbf16, #tpu.memory_space<vmem>>, vector<1x512x192xbf16>
    %500 = vector.shape_cast %499 : vector<1x512x192xbf16> to vector<512x192xbf16>
    %cst_298 = arith.constant dense<0.000000e+00> : vector<64x192xf32>
    %501 = tpu.matmul %492, %500, %cst_298 {dimension_numbers = #tpu.dot_dimension_numbers<[1], [0], [0], [1], [0, 0, 1, 1], [], []>} : vector<64x512xbf16>, vector<512x192xbf16>, vector<64x192xf32> -> vector<64x192xf32>
    %502 = vector.broadcast %468 : vector<1x192xf32> to vector<64x192xf32>
    %503 = arith.addf %501, %502 : vector<64x192xf32>
    %504 = math.tanh %503 : vector<64x192xf32>
    %505 = vector.extract_strided_slice %498 {offsets = [0, 0], sizes = [32, 192], strides = [1, 1]} : vector<64x192xf32> to vector<32x192xf32>
    %c0_299 = arith.constant 0 : index
    %c0_300 = arith.constant 0 : index
    %c0_301 = arith.constant 0 : index
    %c0_302 = arith.constant 0 : index
    %506 = vector.load %arg12[%c0_299, %c0_300, %c0_301, %c0_302] : memref<2x2x32x192xf32, #tpu.memory_space<vmem>>, vector<1x1x32x192xf32>
    %507 = vector.shape_cast %506 : vector<1x1x32x192xf32> to vector<32x192xf32>
    %508 = vector.shape_cast %505 : vector<32x192xf32> to vector<1x1x32x192xf32>
    tpu.vector_store %arg12[%c0_299, %c0_300, %c0_301, %c0_302], %508 {strides = array<i32>} : memref<2x2x32x192xf32, #tpu.memory_space<vmem>>, vector<1x1x32x192xf32>,
    %509 = vector.extract_strided_slice %504 {offsets = [0, 0], sizes = [32, 192], strides = [1, 1]} : vector<64x192xf32> to vector<32x192xf32>
    %c0_303 = arith.constant 0 : index
    %c1_304 = arith.constant 1 : index
    %c0_305 = arith.constant 0 : index
    %c0_306 = arith.constant 0 : index
    %510 = vector.load %arg12[%c0_303, %c1_304, %c0_305, %c0_306] : memref<2x2x32x192xf32, #tpu.memory_space<vmem>>, vector<1x1x32x192xf32>
    %511 = vector.shape_cast %510 : vector<1x1x32x192xf32> to vector<32x192xf32>
    %512 = vector.shape_cast %509 : vector<32x192xf32> to vector<1x1x32x192xf32>
    tpu.vector_store %arg12[%c0_303, %c1_304, %c0_305, %c0_306], %512 {strides = array<i32>} : memref<2x2x32x192xf32, #tpu.memory_space<vmem>>, vector<1x1x32x192xf32>,
    %513 = vector.extract_strided_slice %498 {offsets = [32, 0], sizes = [32, 192], strides = [1, 1]} : vector<64x192xf32> to vector<32x192xf32>
    %c1_307 = arith.constant 1 : index
    %c0_308 = arith.constant 0 : index
    %c0_309 = arith.constant 0 : index
    %c0_310 = arith.constant 0 : index
    %514 = vector.load %arg12[%c1_307, %c0_308, %c0_309, %c0_310] : memref<2x2x32x192xf32, #tpu.memory_space<vmem>>, vector<1x1x32x192xf32>
    %515 = vector.shape_cast %514 : vector<1x1x32x192xf32> to vector<32x192xf32>
    %516 = vector.shape_cast %513 : vector<32x192xf32> to vector<1x1x32x192xf32>
    tpu.vector_store %arg12[%c1_307, %c0_308, %c0_309, %c0_310], %516 {strides = array<i32>} : memref<2x2x32x192xf32, #tpu.memory_space<vmem>>, vector<1x1x32x192xf32>,
    %517 = vector.extract_strided_slice %504 {offsets = [32, 0], sizes = [32, 192], strides = [1, 1]} : vector<64x192xf32> to vector<32x192xf32>
    %c1_311 = arith.constant 1 : index
    %c1_312 = arith.constant 1 : index
    %c0_313 = arith.constant 0 : index
    %c0_314 = arith.constant 0 : index
    %518 = vector.load %arg12[%c1_311, %c1_312, %c0_313, %c0_314] : memref<2x2x32x192xf32, #tpu.memory_space<vmem>>, vector<1x1x32x192xf32>
    %519 = vector.shape_cast %518 : vector<1x1x32x192xf32> to vector<32x192xf32>
    %520 = vector.shape_cast %517 : vector<32x192xf32> to vector<1x1x32x192xf32>
    tpu.vector_store %arg12[%c1_311, %c1_312, %c0_313, %c0_314], %520 {strides = array<i32>} : memref<2x2x32x192xf32, #tpu.memory_space<vmem>>, vector<1x1x32x192xf32>,
    return
  }
}

</mosaic_0001>

<llo_original>
// kernel: generator_forward.1
$region0: #{generator_forward.1}
  #allocation0 [shape = 'u32[]', space=smem, size = 0x4, offset = 0x4, fixed_abs, tag = 'smem constant byte address 0x4 - core index']
  #allocation1 [shape = 'u32[144,128]{1,0:T(1,128)}', space=vmem, size = 0x12000, scoped, tag = 'internal scratch']
  #allocation2 [shape = 'f32[2,6,256]{2,1,0:T(8,128)}', space=vmem, size = 0x4000, scoped, tag = 'scratch operand']
  #allocation3 [shape = 'f32[2,10,256]{2,1,0:T(8,128)}', space=vmem, size = 0x8000, scoped, tag = 'scratch operand']
  #allocation4 [shape = 'f32[2,18,256]{2,1,0:T(8,128)}', space=vmem, size = 0xc000, scoped, tag = 'scratch operand']
  #allocation5 [shape = 'f32[2,34,256]{2,1,0:T(8,128)}', space=vmem, size = 0x14000, scoped, tag = 'scratch operand']
  %s0 = inlined_call_operand.vmem [shape: f32[2,32], index: 0, kind: input, shape index: {}]
  %s1 = inlined_call_operand.vmem [shape: bf16[32,1024], index: 1, kind: input, shape index: {}]
  %s2 = inlined_call_operand.vmem [shape: bf16[2,512,256], index: 2, kind: input, shape index: {}]
  %s3 = inlined_call_operand.hbm [shape: bf16[2,512,256], index: 3, kind: input, shape index: {}]
  %s4 = inlined_call_operand.hbm [shape: bf16[2,512,256], index: 4, kind: input, shape index: {}]
  %s5 = inlined_call_operand.vmem [shape: bf16[2,512,192], index: 5, kind: input, shape index: {}]
  %s6 = inlined_call_operand.vmem [shape: f32[2,1024], index: 6, kind: input, shape index: {}]
  %s7 = inlined_call_operand.vmem [shape: f32[3,2,256], index: 7, kind: input, shape index: {}]
  %s8 = inlined_call_operand.vmem [shape: bf16[2,8,4], index: 8, kind: input, shape index: {}]
  %s9 = inlined_call_operand.vmem [shape: bf16[2,16,8], index: 9, kind: input, shape index: {}]
  %s10 = inlined_call_operand.vmem [shape: bf16[2,32,16], index: 10, kind: input, shape index: {}]
  %s11 = inlined_call_operand.vmem [shape: f32[1,192], index: 11, kind: input, shape index: {}]
  %s12 = inlined_call_operand.vmem [shape: f32[2,2,32,192], index: 12, kind: output, shape index: {}]
  %s13 = sld [smem:[#allocation0]]
  $region66: #{generator_forward.1} parent=0
    _
  %s15 = ssub.s32 1, %s13
  %s16 = scalar_select 0, %s15, %s13
  $region1: #{generator_forward.1} parent=0
    #allocation6 [shape = 'u8[524288]{0}', space=vmem, size = 0x80000, scoped, tag = 'input window, operand 3, single buffered']
    #allocation7 [shape = 's32[1]{0}', space=sflag, size = 0x4, scoped, tag = 'scoped memory for generator_forward.1']
    #allocation8 [shape = 'u8[524288]{0}', space=vmem, size = 0x80000, scoped, tag = 'input window, operand 4, single buffered']
    #allocation9 [shape = 's32[1]{0}', space=sflag, size = 0x4, scoped, tag = 'scoped memory for generator_forward.1']
    %17 = vsyncpa [#allocation7], 0
    %18 = vsyncpa [#allocation9], 0
    // Predicated region
    $region2: #{generator_forward.1} parent=1 // pred_check
      _
    $region3: #{generator_forward.1} parent=1 // pred_check_branch
      %20 = sbr.rel (0) target = $region5
    $region4: #{generator_forward.1} parent=1 // pred_region
      _
    $region5: #{generator_forward.1} parent=1 // pred_fallthru
      _
    // Predicated region
    $region6: #{generator_forward.1} parent=1 // pred_check
      _
    $region7: #{generator_forward.1} parent=1 // pred_check_branch
      %22 = sbr.rel (0) target = $region9
    $region8: #{generator_forward.1} parent=1 // pred_region
      _
    $region9: #{generator_forward.1} parent=1 // pred_fallthru
      _
    // Predicated region
    $region10: #{generator_forward.1} parent=1 // pred_check
      _
    $region11: #{generator_forward.1} parent=1 // pred_check_branch
      %24 = sbr.rel (0) target = $region13
    $region12: #{generator_forward.1} parent=1 // pred_region
      _
    $region13: #{generator_forward.1} parent=1 // pred_fallthru
      _
    // Predicated region
    $region14: #{generator_forward.1} parent=1 // pred_check
      _
    $region15: #{generator_forward.1} parent=1 // pred_check_branch
      %26 = sbr.rel (0) target = $region17
    $region16: #{generator_forward.1} parent=1 // pred_region
      %s28 = ssub.s32 16384, 16384
      %29 = vsyncadd [#allocation7], %s28
      %s30 = sshll.u32 [#allocation6], 4
      %s31 = int_to_ptr.vmem [resolvable:$true] %s30
      %36 = dma.hbm_to_vmem [thread:$0]  %s3, 16384, %s31, [#allocation7], 128, 128, 8
    $region17: #{generator_forward.1} parent=1 // pred_fallthru
      _
    // Predicated region
    $region18: #{generator_forward.1} parent=1 // pred_check
      _
    $region19: #{generator_forward.1} parent=1 // pred_check_branch
      %38 = sbr.rel (0) target = $region21
    $region20: #{generator_forward.1} parent=1 // pred_region
      %s40 = ssub.s32 16384, 16384
      %41 = vsyncadd [#allocation9], %s40
      %s42 = sshll.u32 [#allocation8], 4
      %s43 = int_to_ptr.vmem [resolvable:$true] %s42
      %48 = dma.hbm_to_vmem [thread:$0]  %s4, 16384, %s43, [#allocation9], 128, 128, 8
    $region21: #{generator_forward.1} parent=1 // pred_fallthru
      _
    // Predicated region
    $region22: #{generator_forward.1} parent=1 // pred_check
      _
    $region23: #{generator_forward.1} parent=1 // pred_check_branch
      %50 = sbr.rel (0) target = $region25
    $region24: #{generator_forward.1} parent=1 // pred_region
      _
    $region25: #{generator_forward.1} parent=1 // pred_fallthru
      _
    // Predicated region
    $region26: #{generator_forward.1} parent=1 // pred_check
      _
    $region27: #{generator_forward.1} parent=1 // pred_check_branch
      %52 = sbr.rel (0) target = $region29
    $region28: #{generator_forward.1} parent=1 // pred_region
      _
    $region29: #{generator_forward.1} parent=1 // pred_fallthru
      _
    // Predicated region
    $region30: #{generator_forward.1} parent=1 // pred_check
      _
    $region31: #{generator_forward.1} parent=1 // pred_check_branch
      %54 = sbr.rel (0) target = $region33
    $region32: #{generator_forward.1} parent=1 // pred_region
      _
    $region33: #{generator_forward.1} parent=1 // pred_fallthru
      _
    // Predicated region
    $region34: #{generator_forward.1} parent=1 // pred_check
      _
    $region35: #{generator_forward.1} parent=1 // pred_check_branch
      %56 = sbr.rel (0) target = $region37
    $region36: #{generator_forward.1} parent=1 // pred_region
      _
    $region37: #{generator_forward.1} parent=1 // pred_fallthru
      _
    // Predicated region
    $region38: #{generator_forward.1} parent=1 // pred_check
      _
    $region39: #{generator_forward.1} parent=1 // pred_check_branch
      %58 = sbr.rel (0) target = $region41
    $region40: #{generator_forward.1} parent=1 // pred_region
      _
    $region41: #{generator_forward.1} parent=1 // pred_fallthru
      _
    // Predicated region
    $region42: #{generator_forward.1} parent=1 // pred_check
      _
    $region43: #{generator_forward.1} parent=1 // pred_check_branch
      %60 = sbr.rel (0) target = $region45
    $region44: #{generator_forward.1} parent=1 // pred_region
      _
    $region45: #{generator_forward.1} parent=1 // pred_fallthru
      _
    // Predicated region
    $region46: #{generator_forward.1} parent=1 // pred_check
      _
    $region47: #{generator_forward.1} parent=1 // pred_check_branch
      %62 = sbr.rel (0) target = $region49
    $region48: #{generator_forward.1} parent=1 // pred_region
      _
    $region49: #{generator_forward.1} parent=1 // pred_fallthru
      _
    // Predicated region
    $region50: #{generator_forward.1} parent=1 // pred_check
      _
    $region51: #{generator_forward.1} parent=1 // pred_check_branch
      %64 = sbr.rel (0) target = $region53
    $region52: #{generator_forward.1} parent=1 // pred_region
      %65 = dma.done [#allocation7], 16384
    $region53: #{generator_forward.1} parent=1 // pred_fallthru
      _
    // Predicated region
    $region54: #{generator_forward.1} parent=1 // pred_check
      _
    $region55: #{generator_forward.1} parent=1 // pred_check_branch
      %67 = sbr.rel (0) target = $region57
    $region56: #{generator_forward.1} parent=1 // pred_region
      %68 = dma.done [#allocation9], 16384
    $region57: #{generator_forward.1} parent=1 // pred_fallthru
      _
    %v70 = vlaneseq
    %vm71 = vcmp.ge.s32.totalorder %v70, 0
    %vm72 = vcmp.lt.s32.totalorder %v70, 256
    %vm73 = vmand %vm71, %vm72
    %74 = vst.msk [vmem:[#allocation2] ss:$8 sm:$0x3] %vm73, 0.0
    %75 = vst.msk [vmem:[#allocation2] ss:$8 sm:$0x0] %vm73, 0.0
    %s76 = scalar_lea.vmem [#allocation2], 16
    %77 = vst.msk [vmem:[%s76] ss:$8 sm:$0x3] %vm73, 0.0
    %78 = vst.msk [vmem:[%s76] ss:$8 sm:$0x0] %vm73, 0.0
    %s79 = scalar_lea.vmem [#allocation2], 5
    %80 = vst.msk [vmem:[%s79] ss:$8 sm:$0x3] %vm73, 0.0
    %81 = vst.msk [vmem:[%s79] ss:$8 sm:$0x0] %vm73, 0.0
    %s82 = scalar_lea.vmem [#allocation2], 21
    %83 = vst.msk [vmem:[%s82] ss:$8 sm:$0x3] %vm73, 0.0
    %84 = vst.msk [vmem:[%s82] ss:$8 sm:$0x0] %vm73, 0.0
    %85 = vst.msk [vmem:[#allocation3] ss:$8 sm:$0x3] %vm73, 0.0
    %86 = vst.msk [vmem:[#allocation3] ss:$8 sm:$0x0] %vm73, 0.0
    %s87 = scalar_lea.vmem [#allocation3], 32
    %88 = vst.msk [vmem:[%s87] ss:$8 sm:$0x3] %vm73, 0.0
    %89 = vst.msk [vmem:[%s87] ss:$8 sm:$0x0] %vm73, 0.0
    %s90 = scalar_lea.vmem [#allocation3], 17
    %91 = vst.msk [vmem:[%s90] ss:$8 sm:$0x3] %vm73, 0.0
    %92 = vst.msk [vmem:[%s90] ss:$8 sm:$0x0] %vm73, 0.0
    %s93 = scalar_lea.vmem [#allocation3], 49
    %94 = vst.msk [vmem:[%s93] ss:$8 sm:$0x3] %vm73, 0.0
    %95 = vst.msk [vmem:[%s93] ss:$8 sm:$0x0] %vm73, 0.0
    %96 = vst.msk [vmem:[#allocation4] ss:$8 sm:$0x3] %vm73, 0.0
    %97 = vst.msk [vmem:[#allocation4] ss:$8 sm:$0x0] %vm73, 0.0
    %s98 = scalar_lea.vmem [#allocation4], 48
    %99 = vst.msk [vmem:[%s98] ss:$8 sm:$0x3] %vm73, 0.0
    %100 = vst.msk [vmem:[%s98] ss:$8 sm:$0x0] %vm73, 0.0
    %s101 = scalar_lea.vmem [#allocation4], 33
    %102 = vst.msk [vmem:[%s101] ss:$8 sm:$0x3] %vm73, 0.0
    %103 = vst.msk [vmem:[%s101] ss:$8 sm:$0x0] %vm73, 0.0
    %s104 = scalar_lea.vmem [#allocation4], 81
    %105 = vst.msk [vmem:[%s104] ss:$8 sm:$0x3] %vm73, 0.0
    %106 = vst.msk [vmem:[%s104] ss:$8 sm:$0x0] %vm73, 0.0
    %107 = vst.msk [vmem:[#allocation5] ss:$8 sm:$0x3] %vm73, 0.0
    %108 = vst.msk [vmem:[#allocation5] ss:$8 sm:$0x0] %vm73, 0.0
    %s109 = scalar_lea.vmem [#allocation5], 80
    %110 = vst.msk [vmem:[%s109] ss:$8 sm:$0x3] %vm73, 0.0
    %111 = vst.msk [vmem:[%s109] ss:$8 sm:$0x0] %vm73, 0.0
    %s112 = scalar_lea.vmem [#allocation5], 65
    %113 = vst.msk [vmem:[%s112] ss:$8 sm:$0x3] %vm73, 0.0
    %114 = vst.msk [vmem:[%s112] ss:$8 sm:$0x0] %vm73, 0.0
    %s115 = scalar_lea.vmem [#allocation5], 145
    %116 = vst.msk [vmem:[%s115] ss:$8 sm:$0x3] %vm73, 0.0
    %117 = vst.msk [vmem:[%s115] ss:$8 sm:$0x0] %vm73, 0.0
    %v118 = vld [vmem:[%s0] sm:$0x3]
    %v119 = vpack.c.bf16 %v118, %v118
    %v120 = vld [vmem:[%s1] sm:$0xff]
    %v121 = vld [vmem:[%s1 + $0x8] sm:$0xff]
    %v122 = vld [vmem:[%s1 + $0x10] sm:$0xff]
    %v123 = vld [vmem:[%s1 + $0x18] sm:$0xff]
    %v124 = vld [vmem:[%s1 + $0x20] sm:$0xff]
    %v125 = vld [vmem:[%s1 + $0x28] sm:$0xff]
    %v126 = vld [vmem:[%s1 + $0x30] sm:$0xff]
    %v127 = vld [vmem:[%s1 + $0x38] sm:$0xff]
    %v128 = vld [vmem:[%s1 + $0x40] sm:$0xff]
    %v129 = vld [vmem:[%s1 + $0x48] sm:$0xff]
    %v130 = vld [vmem:[%s1 + $0x50] sm:$0xff]
    %v131 = vld [vmem:[%s1 + $0x58] sm:$0xff]
    %v132 = vld [vmem:[%s1 + $0x60] sm:$0xff]
    %v133 = vld [vmem:[%s1 + $0x68] sm:$0xff]
    %v134 = vld [vmem:[%s1 + $0x70] sm:$0xff]
    %v135 = vld [vmem:[%s1 + $0x78] sm:$0xff]
    %v152 = vunpack.c.l.b16 %v120
    %v153 = vunpack.c.h.b16 %v120
    %v154 = vunpack.c.l.b16 %v121
    %v155 = vunpack.c.h.b16 %v121
    %v156 = vunpack.c.l.b16 %v122
    %v157 = vunpack.c.h.b16 %v122
    %v158 = vunpack.c.l.b16 %v123
    %v159 = vunpack.c.h.b16 %v123
    %v160 = vunpack.c.l.b16 %v124
    %v161 = vunpack.c.h.b16 %v124
    %v162 = vunpack.c.l.b16 %v125
    %v163 = vunpack.c.h.b16 %v125
    %v164 = vunpack.c.l.b16 %v126
    %v165 = vunpack.c.h.b16 %v126
    %v166 = vunpack.c.l.b16 %v127
    %v167 = vunpack.c.h.b16 %v127
    %v168 = vunpack.c.l.b16 %v128
    %v169 = vunpack.c.h.b16 %v128
    %v170 = vunpack.c.l.b16 %v129
    %v171 = vunpack.c.h.b16 %v129
    %v172 = vunpack.c.l.b16 %v130
    %v173 = vunpack.c.h.b16 %v130
    %v174 = vunpack.c.l.b16 %v131
    %v175 = vunpack.c.h.b16 %v131
    %v176 = vunpack.c.l.b16 %v132
    %v177 = vunpack.c.h.b16 %v132
    %v178 = vunpack.c.l.b16 %v133
    %v179 = vunpack.c.h.b16 %v133
    %v180 = vunpack.c.l.b16 %v134
    %v181 = vunpack.c.h.b16 %v134
    %v182 = vunpack.c.l.b16 %v135
    %v183 = vunpack.c.h.b16 %v135
    %v184 = vpack.c.b16 %v160, %v152
    %v185 = vpack.c.b16 %v161, %v153
    %v186 = vpack.c.b16 %v162, %v154
    %v187 = vpack.c.b16 %v163, %v155
    %v188 = vpack.c.b16 %v164, %v156
    %v189 = vpack.c.b16 %v165, %v157
    %v190 = vpack.c.b16 %v166, %v158
    %v191 = vpack.c.b16 %v167, %v159
    %v192 = vpack.c.b16 %v176, %v168
    %v193 = vpack.c.b16 %v177, %v169
    %v194 = vpack.c.b16 %v178, %v170
    %v195 = vpack.c.b16 %v179, %v171
    %v196 = vpack.c.b16 %v180, %v172
    %v197 = vpack.c.b16 %v181, %v173
    %v198 = vpack.c.b16 %v182, %v174
    %v199 = vpack.c.b16 %v183, %v175
    %vm216 = vcmask 261120
    %v218 = vsel %vm216, %v119, 0
    %220 = vmatprep.subr.bf16.mxu0 %v185
    %221 = vmatpush1.bf16.msra.mxu0 %v184
    %222 = vmatprep.subr.bf16.mxu0 %v193
    %223 = vmatpush1.bf16.msra.mxu0 %v192
    %224 = vmatprep.subr.bf16.mxu0 0
    %225 = vmatpush1.bf16.msra.mxu0 0
    %226 = vmatprep.subr.bf16.mxu0 0
    %227 = vmatpush1.bf16.msra.mxu0 0
    %228 = vmatprep.subr.bf16.mxu0 0
    %229 = vmatpush1.bf16.msra.mxu0 0
    %230 = vmatprep.subr.bf16.mxu0 0
    %231 = vmatpush1.bf16.msra.mxu0 0
    %232 = vmatprep.subr.bf16.mxu0 0
    %233 = vmatpush1.bf16.msra.mxu0 0
    %234 = vmatprep.subr.bf16.mxu0 0
    %235 = vmatpush1.bf16.msra.mxu0 0
    %236 = vmatprep.subr.bf16.mxu0 0
    %237 = vmatpush1.bf16.msra.mxu0 0
    %238 = vmatprep.subr.bf16.mxu0 0
    %239 = vmatpush1.bf16.msra.mxu0 0
    %240 = vmatprep.subr.bf16.mxu0 0
    %241 = vmatpush1.bf16.msra.mxu0 0
    %242 = vmatprep.subr.bf16.mxu0 0
    %243 = vmatpush1.bf16.msra.mxu0 0
    %244 = vmatprep.subr.bf16.mxu0 0
    %245 = vmatpush1.bf16.msra.mxu0 0
    %246 = vmatprep.subr.bf16.mxu0 0
    %247 = vmatpush1.bf16.msra.mxu0 0
    %248 = vmatprep.subr.bf16.mxu0 0
    %249 = vmatpush1.bf16.msra.mxu0 0
    %250 = vmatprep.subr.bf16.mxu0 0
    %251 = vmatpush1.bf16.msra.mxu0 0
    %252 = vmatprep.mubr.bf16.mxu0 0
    %253 = vmatmul.mubr.bf16.gmra.mrb[0].mxu0 %v218
    %v254 = vpop.f32.mrb[0].mxu0
    %v255 = vadd.f32 0.0, %v254
    %v256 = vpop.f32.mrb[0].mxu0
    %v257 = vadd.f32 0.0, %v256
    %v258 = vpop.f32.mrb[0].mxu0
    %v259 = vpop.f32.mrb[0].mxu0
    %260 = vdwg.mxu0
    %261 = vmatprep.subr.bf16.mxu0 %v187
    %262 = vmatpush1.bf16.msra.mxu0 %v186
    %263 = vmatprep.subr.bf16.mxu0 %v195
    %264 = vmatpush1.bf16.msra.mxu0 %v194
    %265 = vmatprep.subr.bf16.mxu0 0
    %266 = vmatpush1.bf16.msra.mxu0 0
    %267 = vmatprep.subr.bf16.mxu0 0
    %268 = vmatpush1.bf16.msra.mxu0 0
    %269 = vmatprep.subr.bf16.mxu0 0
    %270 = vmatpush1.bf16.msra.mxu0 0
    %271 = vmatprep.subr.bf16.mxu0 0
    %272 = vmatpush1.bf16.msra.mxu0 0
    %273 = vmatprep.subr.bf16.mxu0 0
    %274 = vmatpush1.bf16.msra.mxu0 0
    %275 = vmatprep.subr.bf16.mxu0 0
    %276 = vmatpush1.bf16.msra.mxu0 0
    %277 = vmatprep.subr.bf16.mxu0 0
    %278 = vmatpush1.bf16.msra.mxu0 0
    %279 = vmatprep.subr.bf16.mxu0 0
    %280 = vmatpush1.bf16.msra.mxu0 0
    %281 = vmatprep.subr.bf16.mxu0 0
    %282 = vmatpush1.bf16.msra.mxu0 0
    %283 = vmatprep.subr.bf16.mxu0 0
    %284 = vmatpush1.bf16.msra.mxu0 0
    %285 = vmatprep.subr.bf16.mxu0 0
    %286 = vmatpush1.bf16.msra.mxu0 0
    %287 = vmatprep.subr.bf16.mxu0 0
    %288 = vmatpush1.bf16.msra.mxu0 0
    %289 = vmatprep.subr.bf16.mxu0 0
    %290 = vmatpush1.bf16.msra.mxu0 0
    %291 = vmatprep.subr.bf16.mxu0 0
    %292 = vmatpush1.bf16.msra.mxu0 0
    %293 = vmatprep.mubr.bf16.mxu0 0
    %294 = vmatmul.mubr.bf16.gmra.mrb[0].mxu0 %v218
    %v295 = vpop.f32.mrb[0].mxu0
    %v296 = vadd.f32 0.0, %v295
    %v297 = vpop.f32.mrb[0].mxu0
    %v298 = vadd.f32 0.0, %v297
    %v299 = vpop.f32.mrb[0].mxu0
    %v300 = vpop.f32.mrb[0].mxu0
    %301 = vdwg.mxu0
    %302 = vmatprep.subr.bf16.mxu0 %v189
    %303 = vmatpush1.bf16.msra.mxu0 %v188
    %304 = vmatprep.subr.bf16.mxu0 %v197
    %305 = vmatpush1.bf16.msra.mxu0 %v196
    %306 = vmatprep.subr.bf16.mxu0 0
    %307 = vmatpush1.bf16.msra.mxu0 0
    %308 = vmatprep.subr.bf16.mxu0 0
    %309 = vmatpush1.bf16.msra.mxu0 0
    %310 = vmatprep.subr.bf16.mxu0 0
    %311 = vmatpush1.bf16.msra.mxu0 0
    %312 = vmatprep.subr.bf16.mxu0 0
    %313 = vmatpush1.bf16.msra.mxu0 0
    %314 = vmatprep.subr.bf16.mxu0 0
    %315 = vmatpush1.bf16.msra.mxu0 0
    %316 = vmatprep.subr.bf16.mxu0 0
    %317 = vmatpush1.bf16.msra.mxu0 0
    %318 = vmatprep.subr.bf16.mxu0 0
    %319 = vmatpush1.bf16.msra.mxu0 0
    %320 = vmatprep.subr.bf16.mxu0 0
    %321 = vmatpush1.bf16.msra.mxu0 0
    %322 = vmatprep.subr.bf16.mxu0 0
    %323 = vmatpush1.bf16.msra.mxu0 0
    %324 = vmatprep.subr.bf16.mxu0 0
    %325 = vmatpush1.bf16.msra.mxu0 0
    %326 = vmatprep.subr.bf16.mxu0 0
    %327 = vmatpush1.bf16.msra.mxu0 0
    %328 = vmatprep.subr.bf16.mxu0 0
    %329 = vmatpush1.bf16.msra.mxu0 0
    %330 = vmatprep.subr.bf16.mxu0 0
    %331 = vmatpush1.bf16.msra.mxu0 0
    %332 = vmatprep.subr.bf16.mxu0 0
    %333 = vmatpush1.bf16.msra.mxu0 0
    %334 = vmatprep.mubr.bf16.mxu0 0
    %335 = vmatmul.mubr.bf16.gmra.mrb[0].mxu0 %v218
    %v336 = vpop.f32.mrb[0].mxu0
    %v337 = vadd.f32 0.0, %v336
    %v338 = vpop.f32.mrb[0].mxu0
    %v339 = vadd.f32 0.0, %v338
    %v340 = vpop.f32.mrb[0].mxu0
    %v341 = vpop.f32.mrb[0].mxu0
    %342 = vdwg.mxu0
    %343 = vmatprep.subr.bf16.mxu0 %v191
    %344 = vmatpush1.bf16.msra.mxu0 %v190
    %345 = vmatprep.subr.bf16.mxu0 %v199
    %346 = vmatpush1.bf16.msra.mxu0 %v198
    %347 = vmatprep.subr.bf16.mxu0 0
    %348 = vmatpush1.bf16.msra.mxu0 0
    %349 = vmatprep.subr.bf16.mxu0 0
    %350 = vmatpush1.bf16.msra.mxu0 0
    %351 = vmatprep.subr.bf16.mxu0 0
    %352 = vmatpush1.bf16.msra.mxu0 0
    %353 = vmatprep.subr.bf16.mxu0 0
    %354 = vmatpush1.bf16.msra.mxu0 0
    %355 = vmatprep.subr.bf16.mxu0 0
    %356 = vmatpush1.bf16.msra.mxu0 0
    %357 = vmatprep.subr.bf16.mxu0 0
    %358 = vmatpush1.bf16.msra.mxu0 0
    %359 = vmatprep.subr.bf16.mxu0 0
    %360 = vmatpush1.bf16.msra.mxu0 0
    %361 = vmatprep.subr.bf16.mxu0 0
    %362 = vmatpush1.bf16.msra.mxu0 0
    %363 = vmatprep.subr.bf16.mxu0 0
    %364 = vmatpush1.bf16.msra.mxu0 0
    %365 = vmatprep.subr.bf16.mxu0 0
    %366 = vmatpush1.bf16.msra.mxu0 0
    %367 = vmatprep.subr.bf16.mxu0 0
    %368 = vmatpush1.bf16.msra.mxu0 0
    %369 = vmatprep.subr.bf16.mxu0 0
    %370 = vmatpush1.bf16.msra.mxu0 0
    %371 = vmatprep.subr.bf16.mxu0 0
    %372 = vmatpush1.bf16.msra.mxu0 0
    %373 = vmatprep.subr.bf16.mxu0 0
    %374 = vmatpush1.bf16.msra.mxu0 0
    %375 = vmatprep.mubr.bf16.mxu0 0
    %376 = vmatmul.mubr.bf16.gmra.mrb[0].mxu0 %v218
    %v377 = vpop.f32.mrb[0].mxu0
    %v378 = vadd.f32 0.0, %v377
    %v379 = vpop.f32.mrb[0].mxu0
    %v380 = vadd.f32 0.0, %v379
    %v381 = vpop.f32.mrb[0].mxu0
    %v382 = vpop.f32.mrb[0].mxu0
    %383 = vdwg.mxu0
    %vm384 = vcmask 1041408
    %v385 = vsel %vm384, %v255, 0.0
    %v386 = vrot.slane %v385, 4
    %v387 = vadd.f32 %v385, %v386
    %v388 = vrot.slane %v387, 2
    %v389 = vadd.f32 %v387, %v388
    %v390 = vrot.slane %v389, 1
    %v391 = vadd.f32 %v389, %v390
    %v392 = vsel %vm384, %v257, 0.0
    %v393 = vrot.slane %v392, 4
    %v394 = vadd.f32 %v392, %v393
    %v395 = vrot.slane %v394, 2
    %v396 = vadd.f32 %v394, %v395
    %v397 = vrot.slane %v396, 1
    %v398 = vadd.f32 %v396, %v397
    %v399 = vsel %vm384, %v296, 0.0
    %v400 = vrot.slane %v399, 4
    %v401 = vadd.f32 %v399, %v400
    %v402 = vrot.slane %v401, 2
    %v403 = vadd.f32 %v401, %v402
    %v404 = vrot.slane %v403, 1
    %v405 = vadd.f32 %v403, %v404
    %v406 = vsel %vm384, %v298, 0.0
    %v407 = vrot.slane %v406, 4
    %v408 = vadd.f32 %v406, %v407
    %v409 = vrot.slane %v408, 2
    %v410 = vadd.f32 %v408, %v409
    %v411 = vrot.slane %v410, 1
    %v412 = vadd.f32 %v410, %v411
    %v413 = vsel %vm384, %v337, 0.0
    %v414 = vrot.slane %v413, 4
    %v415 = vadd.f32 %v413, %v414
    %v416 = vrot.slane %v415, 2
    %v417 = vadd.f32 %v415, %v416
    %v418 = vrot.slane %v417, 1
    %v419 = vadd.f32 %v417, %v418
    %v420 = vsel %vm384, %v339, 0.0
    %v421 = vrot.slane %v420, 4
    %v422 = vadd.f32 %v420, %v421
    %v423 = vrot.slane %v422, 2
    %v424 = vadd.f32 %v422, %v423
    %v425 = vrot.slane %v424, 1
    %v426 = vadd.f32 %v424, %v425
    %v427 = vsel %vm384, %v378, 0.0
    %v428 = vrot.slane %v427, 4
    %v429 = vadd.f32 %v427, %v428
    %v430 = vrot.slane %v429, 2
    %v431 = vadd.f32 %v429, %v430
    %v432 = vrot.slane %v431, 1
    %v433 = vadd.f32 %v431, %v432
    %v434 = vsel %vm384, %v380, 0.0
    %v435 = vrot.slane %v434, 4
    %v436 = vadd.f32 %v434, %v435
    %v437 = vrot.slane %v436, 2
    %v438 = vadd.f32 %v436, %v437
    %v439 = vrot.slane %v438, 1
    %v440 = vadd.f32 %v438, %v439
    %v441 = vmul.f32 %v255, %v255
    %v442 = vmul.f32 %v257, %v257
    %v443 = vmul.f32 %v296, %v296
    %v444 = vmul.f32 %v298, %v298
    %v445 = vmul.f32 %v337, %v337
    %v446 = vmul.f32 %v339, %v339
    %v447 = vmul.f32 %v378, %v378
    %v448 = vmul.f32 %v380, %v380
    %v449 = vsel %vm384, %v441, 0.0
    %v450 = vrot.slane %v449, 4
    %v451 = vadd.f32 %v449, %v450
    %v452 = vrot.slane %v451, 2
    %v453 = vadd.f32 %v451, %v452
    %v454 = vrot.slane %v453, 1
    %v455 = vadd.f32 %v453, %v454
    %v456 = vsel %vm384, %v442, 0.0
    %v457 = vrot.slane %v456, 4
    %v458 = vadd.f32 %v456, %v457
    %v459 = vrot.slane %v458, 2
    %v460 = vadd.f32 %v458, %v459
    %v461 = vrot.slane %v460, 1
    %v462 = vadd.f32 %v460, %v461
    %v463 = vsel %vm384, %v443, 0.0
    %v464 = vrot.slane %v463, 4
    %v465 = vadd.f32 %v463, %v464
    %v466 = vrot.slane %v465, 2
    %v467 = vadd.f32 %v465, %v466
    %v468 = vrot.slane %v467, 1
    %v469 = vadd.f32 %v467, %v468
    %v470 = vsel %vm384, %v444, 0.0
    %v471 = vrot.slane %v470, 4
    %v472 = vadd.f32 %v470, %v471
    %v473 = vrot.slane %v472, 2
    %v474 = vadd.f32 %v472, %v473
    %v475 = vrot.slane %v474, 1
    %v476 = vadd.f32 %v474, %v475
    %v477 = vsel %vm384, %v445, 0.0
    %v478 = vrot.slane %v477, 4
    %v479 = vadd.f32 %v477, %v478
    %v480 = vrot.slane %v479, 2
    %v481 = vadd.f32 %v479, %v480
    %v482 = vrot.slane %v481, 1
    %v483 = vadd.f32 %v481, %v482
    %v484 = vsel %vm384, %v446, 0.0
    %v485 = vrot.slane %v484, 4
    %v486 = vadd.f32 %v484, %v485
    %v487 = vrot.slane %v486, 2
    %v488 = vadd.f32 %v486, %v487
    %v489 = vrot.slane %v488, 1
    %v490 = vadd.f32 %v488, %v489
    %v491 = vsel %vm384, %v447, 0.0
    %v492 = vrot.slane %v491, 4
    %v493 = vadd.f32 %v491, %v492
    %v494 = vrot.slane %v493, 2
    %v495 = vadd.f32 %v493, %v494
    %v496 = vrot.slane %v495, 1
    %v497 = vadd.f32 %v495, %v496
    %v498 = vsel %vm384, %v448, 0.0
    %v499 = vrot.slane %v498, 4
    %v500 = vadd.f32 %v498, %v499
    %v501 = vrot.slane %v500, 2
    %v502 = vadd.f32 %v500, %v501
    %v503 = vrot.slane %v502, 1
    %v504 = vadd.f32 %v502, %v503
    %v505 = vld [vmem:[%s6] ss:$2 sm:$0xff]
    %s506 = scalar_lea.vmem %s6, 1
    %v507 = vld [vmem:[%s506] ss:$2 sm:$0xff]
    %508 = vrot.lane.b32.xlu0 %v391, 64
    %v509 = vpop.permute.xlu0 %508
    %510 = vrot.lane.b32.xlu0 %v398, 64
    %v511 = vpop.permute.xlu0 %510
    %512 = vrot.lane.b32.xlu0 %v405, 64
    %v513 = vpop.permute.xlu0 %512
    %514 = vrot.lane.b32.xlu0 %v412, 64
    %v515 = vpop.permute.xlu0 %514
    %516 = vrot.lane.b32.xlu0 %v419, 64
    %v517 = vpop.permute.xlu0 %516
    %518 = vrot.lane.b32.xlu0 %v426, 64
    %v519 = vpop.permute.xlu0 %518
    %520 = vrot.lane.b32.xlu0 %v433, 64
    %v521 = vpop.permute.xlu0 %520
    %522 = vrot.lane.b32.xlu0 %v440, 64
    %v523 = vpop.permute.xlu0 %522
    %v524 = vlaneseq
    %v525 = vand.u32 %v524, 127
    %vm526 = vcmp.lt.s32.totalorder %v525, 64
    %v527 = vsel %vm526, %v521, %v523
    %v528 = vsel %vm526, %v519, %v521
    %v529 = vsel %vm526, %v517, %v519
    %v530 = vsel %vm526, %v515, %v517
    %v531 = vsel %vm526, %v513, %v515
    %v532 = vsel %vm526, %v511, %v513
    %v533 = vsel %vm526, %v509, %v511
    %v534 = vsel %vm526, %v523, %v509
    %v535 = vadd.f32 %v391, %v534
    %v536 = vadd.f32 %v398, %v533
    %v537 = vadd.f32 %v405, %v532
    %v538 = vadd.f32 %v412, %v531
    %v539 = vadd.f32 %v419, %v530
    %v540 = vadd.f32 %v426, %v529
    %v541 = vadd.f32 %v433, %v528
    %v542 = vadd.f32 %v440, %v527
    %v543 = vadd.f32 %v535, %v542
    %v544 = vadd.f32 %v536, %v535
    %v545 = vadd.f32 %v537, %v536
    %v546 = vadd.f32 %v538, %v537
    %v547 = vadd.f32 %v539, %v538
    %v548 = vadd.f32 %v540, %v539
    %v549 = vadd.f32 %v541, %v540
    %v550 = vadd.f32 %v542, %v541
    %v551 = vadd.f32 %v543, %v549
    %v552 = vadd.f32 %v544, %v550
    %v553 = vadd.f32 %v545, %v543
    %v554 = vadd.f32 %v546, %v544
    %v555 = vadd.f32 %v547, %v545
    %v556 = vadd.f32 %v548, %v546
    %v557 = vadd.f32 %v549, %v547
    %v558 = vadd.f32 %v550, %v548
    %v559 = vadd.f32 %v551, %v555
    %v560 = vadd.f32 %v552, %v556
    %v561 = vadd.f32 %v553, %v557
    %v562 = vadd.f32 %v554, %v558
    %563 = vrot.lane.b32.xlu0 %v455, 64
    %v564 = vpop.permute.xlu0 %563
    %565 = vrot.lane.b32.xlu0 %v462, 64
    %v566 = vpop.permute.xlu0 %565
    %567 = vrot.lane.b32.xlu0 %v469, 64
    %v568 = vpop.permute.xlu0 %567
    %569 = vrot.lane.b32.xlu0 %v476, 64
    %v570 = vpop.permute.xlu0 %569
    %571 = vrot.lane.b32.xlu0 %v483, 64
    %v572 = vpop.permute.xlu0 %571
    %573 = vrot.lane.b32.xlu0 %v490, 64
    %v574 = vpop.permute.xlu0 %573
    %575 = vrot.lane.b32.xlu0 %v497, 64
    %v576 = vpop.permute.xlu0 %575
    %577 = vrot.lane.b32.xlu0 %v504, 64
    %v578 = vpop.permute.xlu0 %577
    %v579 = vsel %vm526, %v576, %v578
    %v580 = vsel %vm526, %v574, %v576
    %v581 = vsel %vm526, %v572, %v574
    %v582 = vsel %vm526, %v570, %v572
    %v583 = vsel %vm526, %v568, %v570
    %v584 = vsel %vm526, %v566, %v568
    %v585 = vsel %vm526, %v564, %v566
    %v586 = vsel %vm526, %v578, %v564
    %v587 = vadd.f32 %v455, %v586
    %v588 = vadd.f32 %v462, %v585
    %v589 = vadd.f32 %v469, %v584
    %v590 = vadd.f32 %v476, %v583
    %v591 = vadd.f32 %v483, %v582
    %v592 = vadd.f32 %v490, %v581
    %v593 = vadd.f32 %v497, %v580
    %v594 = vadd.f32 %v504, %v579
    %v595 = vadd.f32 %v587, %v594
    %v596 = vadd.f32 %v588, %v587
    %v597 = vadd.f32 %v589, %v588
    %v598 = vadd.f32 %v590, %v589
    %v599 = vadd.f32 %v591, %v590
    %v600 = vadd.f32 %v592, %v591
    %v601 = vadd.f32 %v593, %v592
    %v602 = vadd.f32 %v594, %v593
    %v603 = vadd.f32 %v595, %v601
    %v604 = vadd.f32 %v596, %v602
    %v605 = vadd.f32 %v597, %v595
    %v606 = vadd.f32 %v598, %v596
    %v607 = vadd.f32 %v599, %v597
    %v608 = vadd.f32 %v600, %v598
    %v609 = vadd.f32 %v601, %v599
    %v610 = vadd.f32 %v602, %v600
    %v611 = vadd.f32 %v603, %v607
    %v612 = vadd.f32 %v604, %v608
    %v613 = vadd.f32 %v605, %v609
    %v614 = vadd.f32 %v606, %v610
    %v615 = vmul.f32 %v559, 0.03125
    %v616 = vmul.f32 %v560, 0.03125
    %v617 = vmul.f32 %v561, 0.03125
    %v618 = vmul.f32 %v562, 0.03125
    %v619 = vmul.f32 %v611, 0.03125
    %v620 = vmul.f32 %v612, 0.03125
    %v621 = vmul.f32 %v613, 0.03125
    %v622 = vmul.f32 %v614, 0.03125
    %v623 = vmul.f32 %v615, %v615
    %v624 = vmul.f32 %v616, %v616
    %v625 = vmul.f32 %v617, %v617
    %v626 = vmul.f32 %v618, %v618
    %v627 = vsub.f32 %v619, %v623
    %v628 = vsub.f32 %v620, %v624
    %v629 = vsub.f32 %v621, %v625
    %v630 = vsub.f32 %v622, %v626
    %v631 = vadd.f32 %v627, 1e-05
    %v632 = vadd.f32 %v628, 1e-05
    %v633 = vadd.f32 %v629, 1e-05
    %v634 = vadd.f32 %v630, 1e-05
    %v635 = vrsqrt.pop %v631
    %v636 = vrsqrt.pop %v632
    %v637 = vrsqrt.pop %v633
    %v638 = vrsqrt.pop %v634
    %v643 = vcombine.low %v635, %v636
    %v644 = vcombine.low %v637, %v638
    %v646 = vunpack.c.l.s4 1966171168
    %v647 = vunpack.c.0.s8 %v646
    %v648 = vlaneseq
    %v649 = vshrl.u32 %v648, 7
    %v650 = vsub.s32 %v647, %v649
    %v651 = vrot.slane %v643, %v650
    %v653 = vunpack.c.l.s4 1966171168
    %v654 = vunpack.c.0.s8 %v653
    %v655 = vlaneseq
    %v656 = vshrl.u32 %v655, 7
    %v657 = vsub.s32 %v654, %v656
    %v658 = vrot.slane %v644, %v657
    %v659 = vcombine.low %v651, %v658
    %v661 = vunpack.c.l.s4 1966171168
    %v662 = vunpack.c.0.s8 %v661
    %v663 = vlaneseq
    %v664 = vshrl.u32 %v663, 7
    %v665 = vsub.s32 %v662, %v664
    %v666 = vrot.slane %v659, %v665
    %v667 = vcombine.low %v666, %v666
    %v669 = vmul.f32 %v505, %v667
    %v671 = vlaneseq
    %v672 = vshrl.u32 %v671, 7
    %v673 = vsub.s32 0, %v672
    %v674 = vrot.slane %v669, %v673
    %v675 = vlaneseq
    %v676 = vshrl.u32 %v675, 7
    %v677 = vsub.s32 1, %v676
    %v678 = vrot.slane %v669, %v677
    %v679 = vlaneseq
    %v680 = vshrl.u32 %v679, 7
    %v681 = vsub.s32 2, %v680
    %v682 = vrot.slane %v669, %v681
    %v683 = vlaneseq
    %v684 = vshrl.u32 %v683, 7
    %v685 = vsub.s32 3, %v684
    %v686 = vrot.slane %v669, %v685
    %v687 = vlaneseq
    %v688 = vshrl.u32 %v687, 7
    %v689 = vsub.s32 4, %v688
    %v690 = vrot.slane %v669, %v689
    %v691 = vlaneseq
    %v692 = vshrl.u32 %v691, 7
    %v693 = vsub.s32 5, %v692
    %v694 = vrot.slane %v669, %v693
    %v695 = vlaneseq
    %v696 = vshrl.u32 %v695, 7
    %v697 = vsub.s32 6, %v696
    %v698 = vrot.slane %v669, %v697
    %v699 = vlaneseq
    %v700 = vshrl.u32 %v699, 7
    %v701 = vsub.s32 7, %v700
    %v702 = vrot.slane %v669, %v701
    %v711 = vmul.f32 %v615, %v674
    %v712 = vmul.f32 %v616, %v678
    %v713 = vmul.f32 %v617, %v682
    %v714 = vmul.f32 %v618, %v686
    %v715 = vmul.f32 %v615, %v690
    %v716 = vmul.f32 %v616, %v694
    %v717 = vmul.f32 %v617, %v698
    %v718 = vmul.f32 %v618, %v702
    %v727 = vcombine.low %v711, %v712
    %v728 = vcombine.low %v713, %v714
    %v729 = vcombine.low %v715, %v716
    %v730 = vcombine.low %v717, %v718
    %v732 = vunpack.c.l.s4 1966171168
    %v733 = vunpack.c.0.s8 %v732
    %v734 = vlaneseq
    %v735 = vshrl.u32 %v734, 7
    %v736 = vsub.s32 %v733, %v735
    %v737 = vrot.slane %v727, %v736
    %v739 = vunpack.c.l.s4 1966171168
    %v740 = vunpack.c.0.s8 %v739
    %v741 = vlaneseq
    %v742 = vshrl.u32 %v741, 7
    %v743 = vsub.s32 %v740, %v742
    %v744 = vrot.slane %v728, %v743
    %v746 = vunpack.c.l.s4 1966171168
    %v747 = vunpack.c.0.s8 %v746
    %v748 = vlaneseq
    %v749 = vshrl.u32 %v748, 7
    %v750 = vsub.s32 %v747, %v749
    %v751 = vrot.slane %v729, %v750
    %v753 = vunpack.c.l.s4 1966171168
    %v754 = vunpack.c.0.s8 %v753
    %v755 = vlaneseq
    %v756 = vshrl.u32 %v755, 7
    %v757 = vsub.s32 %v754, %v756
    %v758 = vrot.slane %v730, %v757
    %v759 = vcombine.low %v737, %v744
    %v760 = vcombine.low %v751, %v758
    %v762 = vunpack.c.l.s4 1966171168
    %v763 = vunpack.c.0.s8 %v762
    %v764 = vlaneseq
    %v765 = vshrl.u32 %v764, 7
    %v766 = vsub.s32 %v763, %v765
    %v767 = vrot.slane %v759, %v766
    %v769 = vunpack.c.l.s4 1966171168
    %v770 = vunpack.c.0.s8 %v769
    %v771 = vlaneseq
    %v772 = vshrl.u32 %v771, 7
    %v773 = vsub.s32 %v770, %v772
    %v774 = vrot.slane %v760, %v773
    %v775 = vcombine.low %v767, %v774
    %v777 = vsub.f32 %v507, %v775
    %v778 = vmul.f32 %v255, %v674
    %v779 = vmul.f32 %v257, %v678
    %v780 = vmul.f32 %v296, %v682
    %v781 = vmul.f32 %v298, %v686
    %v782 = vmul.f32 %v337, %v690
    %v783 = vmul.f32 %v339, %v694
    %v784 = vmul.f32 %v378, %v698
    %v785 = vmul.f32 %v380, %v702
    %v787 = vlaneseq
    %v788 = vshrl.u32 %v787, 7
    %v789 = vsub.s32 0, %v788
    %v790 = vrot.slane %v777, %v789
    %v791 = vlaneseq
    %v792 = vshrl.u32 %v791, 7
    %v793 = vsub.s32 1, %v792
    %v794 = vrot.slane %v777, %v793
    %v795 = vlaneseq
    %v796 = vshrl.u32 %v795, 7
    %v797 = vsub.s32 2, %v796
    %v798 = vrot.slane %v777, %v797
    %v799 = vlaneseq
    %v800 = vshrl.u32 %v799, 7
    %v801 = vsub.s32 3, %v800
    %v802 = vrot.slane %v777, %v801
    %v803 = vlaneseq
    %v804 = vshrl.u32 %v803, 7
    %v805 = vsub.s32 4, %v804
    %v806 = vrot.slane %v777, %v805
    %v807 = vlaneseq
    %v808 = vshrl.u32 %v807, 7
    %v809 = vsub.s32 5, %v808
    %v810 = vrot.slane %v777, %v809
    %v811 = vlaneseq
    %v812 = vshrl.u32 %v811, 7
    %v813 = vsub.s32 6, %v812
    %v814 = vrot.slane %v777, %v813
    %v815 = vlaneseq
    %v816 = vshrl.u32 %v815, 7
    %v817 = vsub.s32 7, %v816
    %v818 = vrot.slane %v777, %v817
    %v827 = vadd.f32 %v778, %v790
    %v828 = vadd.f32 %v779, %v794
    %v829 = vadd.f32 %v780, %v798
    %v830 = vadd.f32 %v781, %v802
    %v831 = vadd.f32 %v782, %v806
    %v832 = vadd.f32 %v783, %v810
    %v833 = vadd.f32 %v784, %v814
    %v834 = vadd.f32 %v785, %v818
    %v835 = vmax.f32 %v827, 0.0
    %v836 = vmax.f32 %v828, 0.0
    %v837 = vmax.f32 %v829, 0.0
    %v838 = vmax.f32 %v830, 0.0
    %v839 = vmax.f32 %v831, 0.0
    %v840 = vmax.f32 %v832, 0.0
    %v841 = vmax.f32 %v833, 0.0
    %v842 = vmax.f32 %v834, 0.0
    %v845 = vcombine.low %v835, %v836
    %v847 = vunpack.c.l.s4 1966171168
    %v848 = vunpack.c.0.s8 %v847
    %v849 = vlaneseq
    %v850 = vshrl.u32 %v849, 7
    %v851 = vsub.s32 %v848, %v850
    %v852 = vrot.slane %v845, %v851
    %v853 = vcombine.high %v852, %v852
    %v855 = vunpack.c.l.s4 1966171168
    %v856 = vunpack.c.0.s8 %v855
    %v857 = vlaneseq
    %v858 = vshrl.u32 %v857, 7
    %v859 = vsub.s32 %v856, %v858
    %v860 = vrot.slane %v852, %v859
    %v862 = vunpack.c.l.s4 1966171168
    %v863 = vunpack.c.0.s8 %v862
    %v864 = vlaneseq
    %v865 = vshrl.u32 %v864, 7
    %v866 = vsub.s32 %v863, %v865
    %v867 = vrot.slane %v853, %v866
    %s870 = scalar_lea.vmem [#allocation2], 1
    %871 = vst.msk [vmem:[%s870] ss:$8 sm:$0x3] %vm73, %v860
    %872 = vst.msk [vmem:[%s870] ss:$8 sm:$0x0] %vm73, %v860
    %s873 = scalar_lea.vmem [#allocation2], 17
    %874 = vst.msk [vmem:[%s873] ss:$8 sm:$0x3] %vm73, %v867
    %875 = vst.msk [vmem:[%s873] ss:$8 sm:$0x0] %vm73, %v867
    %v878 = vcombine.low %v837, %v838
    %v880 = vunpack.c.l.s4 1966171168
    %v881 = vunpack.c.0.s8 %v880
    %v882 = vlaneseq
    %v883 = vshrl.u32 %v882, 7
    %v884 = vsub.s32 %v881, %v883
    %v885 = vrot.slane %v878, %v884
    %v886 = vcombine.high %v885, %v885
    %v888 = vunpack.c.l.s4 1966171168
    %v889 = vunpack.c.0.s8 %v888
    %v890 = vlaneseq
    %v891 = vshrl.u32 %v890, 7
    %v892 = vsub.s32 %v889, %v891
    %v893 = vrot.slane %v885, %v892
    %v895 = vunpack.c.l.s4 1966171168
    %v896 = vunpack.c.0.s8 %v895
    %v897 = vlaneseq
    %v898 = vshrl.u32 %v897, 7
    %v899 = vsub.s32 %v896, %v898
    %v900 = vrot.slane %v886, %v899
    %s903 = scalar_lea.vmem [#allocation2], 2
    %904 = vst.msk [vmem:[%s903] ss:$8 sm:$0x3] %vm73, %v893
    %905 = vst.msk [vmem:[%s903] ss:$8 sm:$0x0] %vm73, %v893
    %s906 = scalar_lea.vmem [#allocation2], 18
    %907 = vst.msk [vmem:[%s906] ss:$8 sm:$0x3] %vm73, %v900
    %908 = vst.msk [vmem:[%s906] ss:$8 sm:$0x0] %vm73, %v900
    %v911 = vcombine.low %v839, %v840
    %v913 = vunpack.c.l.s4 1966171168
    %v914 = vunpack.c.0.s8 %v913
    %v915 = vlaneseq
    %v916 = vshrl.u32 %v915, 7
    %v917 = vsub.s32 %v914, %v916
    %v918 = vrot.slane %v911, %v917
    %v919 = vcombine.high %v918, %v918
    %v921 = vunpack.c.l.s4 1966171168
    %v922 = vunpack.c.0.s8 %v921
    %v923 = vlaneseq
    %v924 = vshrl.u32 %v923, 7
    %v925 = vsub.s32 %v922, %v924
    %v926 = vrot.slane %v918, %v925
    %v928 = vunpack.c.l.s4 1966171168
    %v929 = vunpack.c.0.s8 %v928
    %v930 = vlaneseq
    %v931 = vshrl.u32 %v930, 7
    %v932 = vsub.s32 %v929, %v931
    %v933 = vrot.slane %v919, %v932
    %s936 = scalar_lea.vmem [#allocation2], 3
    %937 = vst.msk [vmem:[%s936] ss:$8 sm:$0x3] %vm73, %v926
    %938 = vst.msk [vmem:[%s936] ss:$8 sm:$0x0] %vm73, %v926
    %s939 = scalar_lea.vmem [#allocation2], 19
    %940 = vst.msk [vmem:[%s939] ss:$8 sm:$0x3] %vm73, %v933
    %941 = vst.msk [vmem:[%s939] ss:$8 sm:$0x0] %vm73, %v933
    %v944 = vcombine.low %v841, %v842
    %v946 = vunpack.c.l.s4 1966171168
    %v947 = vunpack.c.0.s8 %v946
    %v948 = vlaneseq
    %v949 = vshrl.u32 %v948, 7
    %v950 = vsub.s32 %v947, %v949
    %v951 = vrot.slane %v944, %v950
    %v952 = vcombine.high %v951, %v951
    %v954 = vunpack.c.l.s4 1966171168
    %v955 = vunpack.c.0.s8 %v954
    %v956 = vlaneseq
    %v957 = vshrl.u32 %v956, 7
    %v958 = vsub.s32 %v955, %v957
    %v959 = vrot.slane %v951, %v958
    %v961 = vunpack.c.l.s4 1966171168
    %v962 = vunpack.c.0.s8 %v961
    %v963 = vlaneseq
    %v964 = vshrl.u32 %v963, 7
    %v965 = vsub.s32 %v962, %v964
    %v966 = vrot.slane %v952, %v965
    %s969 = scalar_lea.vmem [#allocation2], 4
    %970 = vst.msk [vmem:[%s969] ss:$8 sm:$0x3] %vm73, %v959
    %971 = vst.msk [vmem:[%s969] ss:$8 sm:$0x0] %vm73, %v959
    %s972 = scalar_lea.vmem [#allocation2], 20
    %973 = vst.msk [vmem:[%s972] ss:$8 sm:$0x3] %vm73, %v966
    %974 = vst.msk [vmem:[%s972] ss:$8 sm:$0x0] %vm73, %v966
    %v975 = vld [vmem:[#allocation2] sm:$0xf]
    %v976 = vld [vmem:[#allocation2 + $0x8] sm:$0xf]
    %v977 = vld [vmem:[#allocation2] sm:$0x1e]
    %v978 = vld [vmem:[#allocation2 + $0x8] sm:$0x1e]
    %v981 = vrot.slane %v977, 1
    %v982 = vrot.slane %v978, 1
    %v985 = vpack.c.bf16 %v975, %v975
    %v986 = vpack.c.bf16 %v976, %v976
    %v987 = vpack.c.bf16 %v981, %v981
    %v988 = vpack.c.bf16 %v982, %v982
    %v989 = vld [vmem:[%s2] sm:$0xff]
    %v990 = vld [vmem:[%s2 + $0x8] sm:$0xff]
    %v991 = vld [vmem:[%s2 + $0x10] sm:$0xff]
    %v992 = vld [vmem:[%s2 + $0x18] sm:$0xff]
    %v993 = vld [vmem:[%s2 + $0x20] sm:$0xff]
    %v994 = vld [vmem:[%s2 + $0x28] sm:$0xff]
    %v995 = vld [vmem:[%s2 + $0x30] sm:$0xff]
    %v996 = vld [vmem:[%s2 + $0x38] sm:$0xff]
    %v997 = vld [vmem:[%s2 + $0x40] sm:$0xff]
    %v998 = vld [vmem:[%s2 + $0x48] sm:$0xff]
    %v999 = vld [vmem:[%s2 + $0x50] sm:$0xff]
    %v1000 = vld [vmem:[%s2 + $0x58] sm:$0xff]
    %v1001 = vld [vmem:[%s2 + $0x60] sm:$0xff]
    %v1002 = vld [vmem:[%s2 + $0x68] sm:$0xff]
    %v1003 = vld [vmem:[%s2 + $0x70] sm:$0xff]
    %v1004 = vld [vmem:[%s2 + $0x78] sm:$0xff]
    %v1005 = vld [vmem:[%s2 + $0x80] sm:$0xff]
    %v1006 = vld [vmem:[%s2 + $0x88] sm:$0xff]
    %v1007 = vld [vmem:[%s2 + $0x90] sm:$0xff]
    %v1008 = vld [vmem:[%s2 + $0x98] sm:$0xff]
    %v1009 = vld [vmem:[%s2 + $0xa0] sm:$0xff]
    %v1010 = vld [vmem:[%s2 + $0xa8] sm:$0xff]
    %v1011 = vld [vmem:[%s2 + $0xb0] sm:$0xff]
    %v1012 = vld [vmem:[%s2 + $0xb8] sm:$0xff]
    %v1013 = vld [vmem:[%s2 + $0xc0] sm:$0xff]
    %v1014 = vld [vmem:[%s2 + $0xc8] sm:$0xff]
    %v1015 = vld [vmem:[%s2 + $0xd0] sm:$0xff]
    %v1016 = vld [vmem:[%s2 + $0xd8] sm:$0xff]
    %v1017 = vld [vmem:[%s2 + $0xe0] sm:$0xff]
    %v1018 = vld [vmem:[%s2 + $0xe8] sm:$0xff]
    %v1019 = vld [vmem:[%s2 + $0xf0] sm:$0xff]
    %v1020 = vld [vmem:[%s2 + $0xf8] sm:$0xff]
    %v1021 = vld [vmem:[%s2 + $0x100] sm:$0xff]
    %v1022 = vld [vmem:[%s2 + $0x108] sm:$0xff]
    %v1023 = vld [vmem:[%s2 + $0x110] sm:$0xff]
    %v1024 = vld [vmem:[%s2 + $0x118] sm:$0xff]
    %v1025 = vld [vmem:[%s2 + $0x120] sm:$0xff]
    %v1026 = vld [vmem:[%s2 + $0x128] sm:$0xff]
    %v1027 = vld [vmem:[%s2 + $0x130] sm:$0xff]
    %v1028 = vld [vmem:[%s2 + $0x138] sm:$0xff]
    %v1029 = vld [vmem:[%s2 + $0x140] sm:$0xff]
    %v1030 = vld [vmem:[%s2 + $0x148] sm:$0xff]
    %v1031 = vld [vmem:[%s2 + $0x150] sm:$0xff]
    %v1032 = vld [vmem:[%s2 + $0x158] sm:$0xff]
    %v1033 = vld [vmem:[%s2 + $0x160] sm:$0xff]
    %v1034 = vld [vmem:[%s2 + $0x168] sm:$0xff]
    %v1035 = vld [vmem:[%s2 + $0x170] sm:$0xff]
    %v1036 = vld [vmem:[%s2 + $0x178] sm:$0xff]
    %v1037 = vld [vmem:[%s2 + $0x180] sm:$0xff]
    %v1038 = vld [vmem:[%s2 + $0x188] sm:$0xff]
    %v1039 = vld [vmem:[%s2 + $0x190] sm:$0xff]
    %v1040 = vld [vmem:[%s2 + $0x198] sm:$0xff]
    %v1041 = vld [vmem:[%s2 + $0x1a0] sm:$0xff]
    %v1042 = vld [vmem:[%s2 + $0x1a8] sm:$0xff]
    %v1043 = vld [vmem:[%s2 + $0x1b0] sm:$0xff]
    %v1044 = vld [vmem:[%s2 + $0x1b8] sm:$0xff]
    %v1045 = vld [vmem:[%s2 + $0x1c0] sm:$0xff]
    %v1046 = vld [vmem:[%s2 + $0x1c8] sm:$0xff]
    %v1047 = vld [vmem:[%s2 + $0x1d0] sm:$0xff]
    %v1048 = vld [vmem:[%s2 + $0x1d8] sm:$0xff]
    %v1049 = vld [vmem:[%s2 + $0x1e0] sm:$0xff]
    %v1050 = vld [vmem:[%s2 + $0x1e8] sm:$0xff]
    %v1051 = vld [vmem:[%s2 + $0x1f0] sm:$0xff]
    %v1052 = vld [vmem:[%s2 + $0x1f8] sm:$0xff]
    %v1117 = vunpack.c.l.b16 %v989
    %v1118 = vunpack.c.h.b16 %v989
    %v1119 = vunpack.c.l.b16 %v990
    %v1120 = vunpack.c.h.b16 %v990
    %v1121 = vunpack.c.l.b16 %v991
    %v1122 = vunpack.c.h.b16 %v991
    %v1123 = vunpack.c.l.b16 %v992
    %v1124 = vunpack.c.h.b16 %v992
    %v1125 = vunpack.c.l.b16 %v993
    %v1126 = vunpack.c.h.b16 %v993
    %v1127 = vunpack.c.l.b16 %v994
    %v1128 = vunpack.c.h.b16 %v994
    %v1129 = vunpack.c.l.b16 %v995
    %v1130 = vunpack.c.h.b16 %v995
    %v1131 = vunpack.c.l.b16 %v996
    %v1132 = vunpack.c.h.b16 %v996
    %v1133 = vunpack.c.l.b16 %v997
    %v1134 = vunpack.c.h.b16 %v997
    %v1135 = vunpack.c.l.b16 %v998
    %v1136 = vunpack.c.h.b16 %v998
    %v1137 = vunpack.c.l.b16 %v999
    %v1138 = vunpack.c.h.b16 %v999
    %v1139 = vunpack.c.l.b16 %v1000
    %v1140 = vunpack.c.h.b16 %v1000
    %v1141 = vunpack.c.l.b16 %v1001
    %v1142 = vunpack.c.h.b16 %v1001
    %v1143 = vunpack.c.l.b16 %v1002
    %v1144 = vunpack.c.h.b16 %v1002
    %v1145 = vunpack.c.l.b16 %v1003
    %v1146 = vunpack.c.h.b16 %v1003
    %v1147 = vunpack.c.l.b16 %v1004
    %v1148 = vunpack.c.h.b16 %v1004
    %v1149 = vunpack.c.l.b16 %v1005
    %v1150 = vunpack.c.h.b16 %v1005
    %v1151 = vunpack.c.l.b16 %v1006
    %v1152 = vunpack.c.h.b16 %v1006
    %v1153 = vunpack.c.l.b16 %v1007
    %v1154 = vunpack.c.h.b16 %v1007
    %v1155 = vunpack.c.l.b16 %v1008
    %v1156 = vunpack.c.h.b16 %v1008
    %v1157 = vunpack.c.l.b16 %v1009
    %v1158 = vunpack.c.h.b16 %v1009
    %v1159 = vunpack.c.l.b16 %v1010
    %v1160 = vunpack.c.h.b16 %v1010
    %v1161 = vunpack.c.l.b16 %v1011
    %v1162 = vunpack.c.h.b16 %v1011
    %v1163 = vunpack.c.l.b16 %v1012
    %v1164 = vunpack.c.h.b16 %v1012
    %v1165 = vunpack.c.l.b16 %v1013
    %v1166 = vunpack.c.h.b16 %v1013
    %v1167 = vunpack.c.l.b16 %v1014
    %v1168 = vunpack.c.h.b16 %v1014
    %v1169 = vunpack.c.l.b16 %v1015
    %v1170 = vunpack.c.h.b16 %v1015
    %v1171 = vunpack.c.l.b16 %v1016
    %v1172 = vunpack.c.h.b16 %v1016
    %v1173 = vunpack.c.l.b16 %v1017
    %v1174 = vunpack.c.h.b16 %v1017
    %v1175 = vunpack.c.l.b16 %v1018
    %v1176 = vunpack.c.h.b16 %v1018
    %v1177 = vunpack.c.l.b16 %v1019
    %v1178 = vunpack.c.h.b16 %v1019
    %v1179 = vunpack.c.l.b16 %v1020
    %v1180 = vunpack.c.h.b16 %v1020
    %v1181 = vunpack.c.l.b16 %v1021
    %v1182 = vunpack.c.h.b16 %v1021
    %v1183 = vunpack.c.l.b16 %v1022
    %v1184 = vunpack.c.h.b16 %v1022
    %v1185 = vunpack.c.l.b16 %v1023
    %v1186 = vunpack.c.h.b16 %v1023
    %v1187 = vunpack.c.l.b16 %v1024
    %v1188 = vunpack.c.h.b16 %v1024
    %v1189 = vunpack.c.l.b16 %v1025
    %v1190 = vunpack.c.h.b16 %v1025
    %v1191 = vunpack.c.l.b16 %v1026
    %v1192 = vunpack.c.h.b16 %v1026
    %v1193 = vunpack.c.l.b16 %v1027
    %v1194 = vunpack.c.h.b16 %v1027
    %v1195 = vunpack.c.l.b16 %v1028
    %v1196 = vunpack.c.h.b16 %v1028
    %v1197 = vunpack.c.l.b16 %v1029
    %v1198 = vunpack.c.h.b16 %v1029
    %v1199 = vunpack.c.l.b16 %v1030
    %v1200 = vunpack.c.h.b16 %v1030
    %v1201 = vunpack.c.l.b16 %v1031
    %v1202 = vunpack.c.h.b16 %v1031
    %v1203 = vunpack.c.l.b16 %v1032
    %v1204 = vunpack.c.h.b16 %v1032
    %v1205 = vunpack.c.l.b16 %v1033
    %v1206 = vunpack.c.h.b16 %v1033
    %v1207 = vunpack.c.l.b16 %v1034
    %v1208 = vunpack.c.h.b16 %v1034
    %v1209 = vunpack.c.l.b16 %v1035
    %v1210 = vunpack.c.h.b16 %v1035
    %v1211 = vunpack.c.l.b16 %v1036
    %v1212 = vunpack.c.h.b16 %v1036
    %v1213 = vunpack.c.l.b16 %v1037
    %v1214 = vunpack.c.h.b16 %v1037
    %v1215 = vunpack.c.l.b16 %v1038
    %v1216 = vunpack.c.h.b16 %v1038
    %v1217 = vunpack.c.l.b16 %v1039
    %v1218 = vunpack.c.h.b16 %v1039
    %v1219 = vunpack.c.l.b16 %v1040
    %v1220 = vunpack.c.h.b16 %v1040
    %v1221 = vunpack.c.l.b16 %v1041
    %v1222 = vunpack.c.h.b16 %v1041
    %v1223 = vunpack.c.l.b16 %v1042
    %v1224 = vunpack.c.h.b16 %v1042
    %v1225 = vunpack.c.l.b16 %v1043
    %v1226 = vunpack.c.h.b16 %v1043
    %v1227 = vunpack.c.l.b16 %v1044
    %v1228 = vunpack.c.h.b16 %v1044
    %v1229 = vunpack.c.l.b16 %v1045
    %v1230 = vunpack.c.h.b16 %v1045
    %v1231 = vunpack.c.l.b16 %v1046
    %v1232 = vunpack.c.h.b16 %v1046
    %v1233 = vunpack.c.l.b16 %v1047
    %v1234 = vunpack.c.h.b16 %v1047
    %v1235 = vunpack.c.l.b16 %v1048
    %v1236 = vunpack.c.h.b16 %v1048
    %v1237 = vunpack.c.l.b16 %v1049
    %v1238 = vunpack.c.h.b16 %v1049
    %v1239 = vunpack.c.l.b16 %v1050
    %v1240 = vunpack.c.h.b16 %v1050
    %v1241 = vunpack.c.l.b16 %v1051
    %v1242 = vunpack.c.h.b16 %v1051
    %v1243 = vunpack.c.l.b16 %v1052
    %v1244 = vunpack.c.h.b16 %v1052
    %v1245 = vpack.c.b16 %v1119, %v1117
    %v1246 = vpack.c.b16 %v1120, %v1118
    %v1247 = vpack.c.b16 %v1123, %v1121
    %v1248 = vpack.c.b16 %v1124, %v1122
    %v1249 = vpack.c.b16 %v1127, %v1125
    %v1250 = vpack.c.b16 %v1128, %v1126
    %v1251 = vpack.c.b16 %v1131, %v1129
    %v1252 = vpack.c.b16 %v1132, %v1130
    %v1253 = vpack.c.b16 %v1135, %v1133
    %v1254 = vpack.c.b16 %v1136, %v1134
    %v1255 = vpack.c.b16 %v1139, %v1137
    %v1256 = vpack.c.b16 %v1140, %v1138
    %v1257 = vpack.c.b16 %v1143, %v1141
    %v1258 = vpack.c.b16 %v1144, %v1142
    %v1259 = vpack.c.b16 %v1147, %v1145
    %v1260 = vpack.c.b16 %v1148, %v1146
    %v1261 = vpack.c.b16 %v1151, %v1149
    %v1262 = vpack.c.b16 %v1152, %v1150
    %v1263 = vpack.c.b16 %v1155, %v1153
    %v1264 = vpack.c.b16 %v1156, %v1154
    %v1265 = vpack.c.b16 %v1159, %v1157
    %v1266 = vpack.c.b16 %v1160, %v1158
    %v1267 = vpack.c.b16 %v1163, %v1161
    %v1268 = vpack.c.b16 %v1164, %v1162
    %v1269 = vpack.c.b16 %v1167, %v1165
    %v1270 = vpack.c.b16 %v1168, %v1166
    %v1271 = vpack.c.b16 %v1171, %v1169
    %v1272 = vpack.c.b16 %v1172, %v1170
    %v1273 = vpack.c.b16 %v1175, %v1173
    %v1274 = vpack.c.b16 %v1176, %v1174
    %v1275 = vpack.c.b16 %v1179, %v1177
    %v1276 = vpack.c.b16 %v1180, %v1178
    %v1277 = vpack.c.b16 %v1183, %v1181
    %v1278 = vpack.c.b16 %v1184, %v1182
    %v1279 = vpack.c.b16 %v1187, %v1185
    %v1280 = vpack.c.b16 %v1188, %v1186
    %v1281 = vpack.c.b16 %v1191, %v1189
    %v1282 = vpack.c.b16 %v1192, %v1190
    %v1283 = vpack.c.b16 %v1195, %v1193
    %v1284 = vpack.c.b16 %v1196, %v1194
    %v1285 = vpack.c.b16 %v1199, %v1197
    %v1286 = vpack.c.b16 %v1200, %v1198
    %v1287 = vpack.c.b16 %v1203, %v1201
    %v1288 = vpack.c.b16 %v1204, %v1202
    %v1289 = vpack.c.b16 %v1207, %v1205
    %v1290 = vpack.c.b16 %v1208, %v1206
    %v1291 = vpack.c.b16 %v1211, %v1209
    %v1292 = vpack.c.b16 %v1212, %v1210
    %v1293 = vpack.c.b16 %v1215, %v1213
    %v1294 = vpack.c.b16 %v1216, %v1214
    %v1295 = vpack.c.b16 %v1219, %v1217
    %v1296 = vpack.c.b16 %v1220, %v1218
    %v1297 = vpack.c.b16 %v1223, %v1221
    %v1298 = vpack.c.b16 %v1224, %v1222
    %v1299 = vpack.c.b16 %v1227, %v1225
    %v1300 = vpack.c.b16 %v1228, %v1226
    %v1301 = vpack.c.b16 %v1231, %v1229
    %v1302 = vpack.c.b16 %v1232, %v1230
    %v1303 = vpack.c.b16 %v1235, %v1233
    %v1304 = vpack.c.b16 %v1236, %v1234
    %v1305 = vpack.c.b16 %v1239, %v1237
    %v1306 = vpack.c.b16 %v1240, %v1238
    %v1307 = vpack.c.b16 %v1243, %v1241
    %v1308 = vpack.c.b16 %v1244, %v1242
    %1373 = vmatprep.subr.bf16.mxu0 %v1246
    %1374 = vmatpush1.bf16.msra.mxu0 %v1245
    %1375 = vmatprep.subr.bf16.mxu0 %v1248
    %1376 = vmatpush1.bf16.msra.mxu0 %v1247
    %1377 = vmatprep.subr.bf16.mxu0 %v1250
    %1378 = vmatpush1.bf16.msra.mxu0 %v1249
    %1379 = vmatprep.subr.bf16.mxu0 %v1252
    %1380 = vmatpush1.bf16.msra.mxu0 %v1251
    %1381 = vmatprep.subr.bf16.mxu0 %v1254
    %1382 = vmatpush1.bf16.msra.mxu0 %v1253
    %1383 = vmatprep.subr.bf16.mxu0 %v1256
    %1384 = vmatpush1.bf16.msra.mxu0 %v1255
    %1385 = vmatprep.subr.bf16.mxu0 %v1258
    %1386 = vmatpush1.bf16.msra.mxu0 %v1257
    %1387 = vmatprep.subr.bf16.mxu0 %v1260
    %1388 = vmatpush1.bf16.msra.mxu0 %v1259
    %1389 = vmatprep.subr.bf16.mxu0 %v1262
    %1390 = vmatpush1.bf16.msra.mxu0 %v1261
    %1391 = vmatprep.subr.bf16.mxu0 %v1264
    %1392 = vmatpush1.bf16.msra.mxu0 %v1263
    %1393 = vmatprep.subr.bf16.mxu0 %v1266
    %1394 = vmatpush1.bf16.msra.mxu0 %v1265
    %1395 = vmatprep.subr.bf16.mxu0 %v1268
    %1396 = vmatpush1.bf16.msra.mxu0 %v1267
    %1397 = vmatprep.subr.bf16.mxu0 %v1270
    %1398 = vmatpush1.bf16.msra.mxu0 %v1269
    %1399 = vmatprep.subr.bf16.mxu0 %v1272
    %1400 = vmatpush1.bf16.msra.mxu0 %v1271
    %1401 = vmatprep.subr.bf16.mxu0 %v1274
    %1402 = vmatpush1.bf16.msra.mxu0 %v1273
    %1403 = vmatprep.subr.bf16.mxu0 %v1276
    %1404 = vmatpush1.bf16.msra.mxu0 %v1275
    %1405 = vmatprep.mubr.bf16.mxu0 %v986
    %1406 = vmatmul.mubr.bf16.gmra.mrb[0].mxu0 %v985
    %v1407 = vpop.f32.mrb[0].mxu0
    %v1408 = vadd.f32 0.0, %v1407
    %v1409 = vpop.f32.mrb[0].mxu0
    %v1410 = vadd.f32 0.0, %v1409
    %v1411 = vpop.f32.mrb[0].mxu0
    %v1412 = vpop.f32.mrb[0].mxu0
    %1413 = vdwg.mxu0
    %1414 = vmatprep.subr.bf16.mxu0 %v1278
    %1415 = vmatpush1.bf16.msra.mxu0 %v1277
    %1416 = vmatprep.subr.bf16.mxu0 %v1280
    %1417 = vmatpush1.bf16.msra.mxu0 %v1279
    %1418 = vmatprep.subr.bf16.mxu0 %v1282
    %1419 = vmatpush1.bf16.msra.mxu0 %v1281
    %1420 = vmatprep.subr.bf16.mxu0 %v1284
    %1421 = vmatpush1.bf16.msra.mxu0 %v1283
    %1422 = vmatprep.subr.bf16.mxu0 %v1286
    %1423 = vmatpush1.bf16.msra.mxu0 %v1285
    %1424 = vmatprep.subr.bf16.mxu0 %v1288
    %1425 = vmatpush1.bf16.msra.mxu0 %v1287
    %1426 = vmatprep.subr.bf16.mxu0 %v1290
    %1427 = vmatpush1.bf16.msra.mxu0 %v1289
    %1428 = vmatprep.subr.bf16.mxu0 %v1292
    %1429 = vmatpush1.bf16.msra.mxu0 %v1291
    %1430 = vmatprep.subr.bf16.mxu0 %v1294
    %1431 = vmatpush1.bf16.msra.mxu0 %v1293
    %1432 = vmatprep.subr.bf16.mxu0 %v1296
    %1433 = vmatpush1.bf16.msra.mxu0 %v1295
    %1434 = vmatprep.subr.bf16.mxu0 %v1298
    %1435 = vmatpush1.bf16.msra.mxu0 %v1297
    %1436 = vmatprep.subr.bf16.mxu0 %v1300
    %1437 = vmatpush1.bf16.msra.mxu0 %v1299
    %1438 = vmatprep.subr.bf16.mxu0 %v1302
    %1439 = vmatpush1.bf16.msra.mxu0 %v1301
    %1440 = vmatprep.subr.bf16.mxu0 %v1304
    %1441 = vmatpush1.bf16.msra.mxu0 %v1303
    %1442 = vmatprep.subr.bf16.mxu0 %v1306
    %1443 = vmatpush1.bf16.msra.mxu0 %v1305
    %1444 = vmatprep.subr.bf16.mxu0 %v1308
    %1445 = vmatpush1.bf16.msra.mxu0 %v1307
    %1446 = vmatprep.mubr.bf16.mxu0 %v988
    %1447 = vmatmul.mubr.bf16.gmra.mrb[0].mxu0 %v987
    %v1448 = vpop.f32.mrb[0].mxu0
    %v1449 = vadd.f32 %v1408, %v1448
    %v1450 = vpop.f32.mrb[0].mxu0
    %v1451 = vadd.f32 %v1410, %v1450
    %v1452 = vpop.f32.mrb[0].mxu0
    %v1453 = vpop.f32.mrb[0].mxu0
    %1454 = vdwg.mxu0
    %s1455 = scalar_lea.vmem [#allocation2], 16
    %v1456 = vld [vmem:[%s1455] sm:$0xf]
    %v1457 = vld [vmem:[%s1455 + $0x8] sm:$0xf]
    %v1458 = vld [vmem:[%s1455] sm:$0x1e]
    %v1459 = vld [vmem:[%s1455 + $0x8] sm:$0x1e]
    %v1462 = vrot.slane %v1458, 1
    %v1463 = vrot.slane %v1459, 1
    %v1466 = vpack.c.bf16 %v1456, %v1456
    %v1467 = vpack.c.bf16 %v1457, %v1457
    %v1468 = vpack.c.bf16 %v1462, %v1462
    %v1469 = vpack.c.bf16 %v1463, %v1463
    %1470 = vmatprep.subr.bf16.mxu0 %v1246
    %1471 = vmatpush1.bf16.msra.mxu0 %v1245
    %1472 = vmatprep.subr.bf16.mxu0 %v1248
    %1473 = vmatpush1.bf16.msra.mxu0 %v1247
    %1474 = vmatprep.subr.bf16.mxu0 %v1250
    %1475 = vmatpush1.bf16.msra.mxu0 %v1249
    %1476 = vmatprep.subr.bf16.mxu0 %v1252
    %1477 = vmatpush1.bf16.msra.mxu0 %v1251
    %1478 = vmatprep.subr.bf16.mxu0 %v1254
    %1479 = vmatpush1.bf16.msra.mxu0 %v1253
    %1480 = vmatprep.subr.bf16.mxu0 %v1256
    %1481 = vmatpush1.bf16.msra.mxu0 %v1255
    %1482 = vmatprep.subr.bf16.mxu0 %v1258
    %1483 = vmatpush1.bf16.msra.mxu0 %v1257
    %1484 = vmatprep.subr.bf16.mxu0 %v1260
    %1485 = vmatpush1.bf16.msra.mxu0 %v1259
    %1486 = vmatprep.subr.bf16.mxu0 %v1262
    %1487 = vmatpush1.bf16.msra.mxu0 %v1261
    %1488 = vmatprep.subr.bf16.mxu0 %v1264
    %1489 = vmatpush1.bf16.msra.mxu0 %v1263
    %1490 = vmatprep.subr.bf16.mxu0 %v1266
    %1491 = vmatpush1.bf16.msra.mxu0 %v1265
    %1492 = vmatprep.subr.bf16.mxu0 %v1268
    %1493 = vmatpush1.bf16.msra.mxu0 %v1267
    %1494 = vmatprep.subr.bf16.mxu0 %v1270
    %1495 = vmatpush1.bf16.msra.mxu0 %v1269
    %1496 = vmatprep.subr.bf16.mxu0 %v1272
    %1497 = vmatpush1.bf16.msra.mxu0 %v1271
    %1498 = vmatprep.subr.bf16.mxu0 %v1274
    %1499 = vmatpush1.bf16.msra.mxu0 %v1273
    %1500 = vmatprep.subr.bf16.mxu0 %v1276
    %1501 = vmatpush1.bf16.msra.mxu0 %v1275
    %1502 = vmatprep.mubr.bf16.mxu0 %v1467
    %1503 = vmatmul.mubr.bf16.gmra.mrb[0].mxu0 %v1466
    %v1504 = vpop.f32.mrb[0].mxu0
    %v1505 = vadd.f32 0.0, %v1504
    %v1506 = vpop.f32.mrb[0].mxu0
    %v1507 = vadd.f32 0.0, %v1506
    %v1508 = vpop.f32.mrb[0].mxu0
    %v1509 = vpop.f32.mrb[0].mxu0
    %1510 = vdwg.mxu0
    %1511 = vmatprep.subr.bf16.mxu0 %v1278
    %1512 = vmatpush1.bf16.msra.mxu0 %v1277
    %1513 = vmatprep.subr.bf16.mxu0 %v1280
    %1514 = vmatpush1.bf16.msra.mxu0 %v1279
    %1515 = vmatprep.subr.bf16.mxu0 %v1282
    %1516 = vmatpush1.bf16.msra.mxu0 %v1281
    %1517 = vmatprep.subr.bf16.mxu0 %v1284
    %1518 = vmatpush1.bf16.msra.mxu0 %v1283
    %1519 = vmatprep.subr.bf16.mxu0 %v1286
    %1520 = vmatpush1.bf16.msra.mxu0 %v1285
    %1521 = vmatprep.subr.bf16.mxu0 %v1288
    %1522 = vmatpush1.bf16.msra.mxu0 %v1287
    %1523 = vmatprep.subr.bf16.mxu0 %v1290
    %1524 = vmatpush1.bf16.msra.mxu0 %v1289
    %1525 = vmatprep.subr.bf16.mxu0 %v1292
    %1526 = vmatpush1.bf16.msra.mxu0 %v1291
    %1527 = vmatprep.subr.bf16.mxu0 %v1294
    %1528 = vmatpush1.bf16.msra.mxu0 %v1293
    %1529 = vmatprep.subr.bf16.mxu0 %v1296
    %1530 = vmatpush1.bf16.msra.mxu0 %v1295
    %1531 = vmatprep.subr.bf16.mxu0 %v1298
    %1532 = vmatpush1.bf16.msra.mxu0 %v1297
    %1533 = vmatprep.subr.bf16.mxu0 %v1300
    %1534 = vmatpush1.bf16.msra.mxu0 %v1299
    %1535 = vmatprep.subr.bf16.mxu0 %v1302
    %1536 = vmatpush1.bf16.msra.mxu0 %v1301
    %1537 = vmatprep.subr.bf16.mxu0 %v1304
    %1538 = vmatpush1.bf16.msra.mxu0 %v1303
    %1539 = vmatprep.subr.bf16.mxu0 %v1306
    %1540 = vmatpush1.bf16.msra.mxu0 %v1305
    %1541 = vmatprep.subr.bf16.mxu0 %v1308
    %1542 = vmatpush1.bf16.msra.mxu0 %v1307
    %1543 = vmatprep.mubr.bf16.mxu0 %v1469
    %1544 = vmatmul.mubr.bf16.gmra.mrb[0].mxu0 %v1468
    %v1545 = vpop.f32.mrb[0].mxu0
    %v1546 = vadd.f32 %v1505, %v1545
    %v1547 = vpop.f32.mrb[0].mxu0
    %v1548 = vadd.f32 %v1507, %v1547
    %v1549 = vpop.f32.mrb[0].mxu0
    %v1550 = vpop.f32.mrb[0].mxu0
    %1551 = vdwg.mxu0
    %v1552 = vld [vmem:[#allocation2] sm:$0x3c]
    %v1553 = vld [vmem:[#allocation2 + $0x8] sm:$0x3c]
    %v1556 = vrot.slane %v1552, 1
    %v1557 = vrot.slane %v1553, 1
    %v1560 = vpack.c.bf16 %v977, %v977
    %v1561 = vpack.c.bf16 %v978, %v978
    %v1562 = vpack.c.bf16 %v1556, %v1556
    %v1563 = vpack.c.bf16 %v1557, %v1557
    %s1564 = scalar_lea.vmem %s2, 512
    %v1565 = vld [vmem:[%s1564] sm:$0xff]
    %v1566 = vld [vmem:[%s1564 + $0x8] sm:$0xff]
    %v1567 = vld [vmem:[%s1564 + $0x10] sm:$0xff]
    %v1568 = vld [vmem:[%s1564 + $0x18] sm:$0xff]
    %v1569 = vld [vmem:[%s1564 + $0x20] sm:$0xff]
    %v1570 = vld [vmem:[%s1564 + $0x28] sm:$0xff]
    %v1571 = vld [vmem:[%s1564 + $0x30] sm:$0xff]
    %v1572 = vld [vmem:[%s1564 + $0x38] sm:$0xff]
    %v1573 = vld [vmem:[%s1564 + $0x40] sm:$0xff]
    %v1574 = vld [vmem:[%s1564 + $0x48] sm:$0xff]
    %v1575 = vld [vmem:[%s1564 + $0x50] sm:$0xff]
    %v1576 = vld [vmem:[%s1564 + $0x58] sm:$0xff]
    %v1577 = vld [vmem:[%s1564 + $0x60] sm:$0xff]
    %v1578 = vld [vmem:[%s1564 + $0x68] sm:$0xff]
    %v1579 = vld [vmem:[%s1564 + $0x70] sm:$0xff]
    %v1580 = vld [vmem:[%s1564 + $0x78] sm:$0xff]
    %v1581 = vld [vmem:[%s1564 + $0x80] sm:$0xff]
    %v1582 = vld [vmem:[%s1564 + $0x88] sm:$0xff]
    %v1583 = vld [vmem:[%s1564 + $0x90] sm:$0xff]
    %v1584 = vld [vmem:[%s1564 + $0x98] sm:$0xff]
    %v1585 = vld [vmem:[%s1564 + $0xa0] sm:$0xff]
    %v1586 = vld [vmem:[%s1564 + $0xa8] sm:$0xff]
    %v1587 = vld [vmem:[%s1564 + $0xb0] sm:$0xff]
    %v1588 = vld [vmem:[%s1564 + $0xb8] sm:$0xff]
    %v1589 = vld [vmem:[%s1564 + $0xc0] sm:$0xff]
    %v1590 = vld [vmem:[%s1564 + $0xc8] sm:$0xff]
    %v1591 = vld [vmem:[%s1564 + $0xd0] sm:$0xff]
    %v1592 = vld [vmem:[%s1564 + $0xd8] sm:$0xff]
    %v1593 = vld [vmem:[%s1564 + $0xe0] sm:$0xff]
    %v1594 = vld [vmem:[%s1564 + $0xe8] sm:$0xff]
    %v1595 = vld [vmem:[%s1564 + $0xf0] sm:$0xff]
    %v1596 = vld [vmem:[%s1564 + $0xf8] sm:$0xff]
    %v1597 = vld [vmem:[%s1564 + $0x100] sm:$0xff]
    %v1598 = vld [vmem:[%s1564 + $0x108] sm:$0xff]
    %v1599 = vld [vmem:[%s1564 + $0x110] sm:$0xff]
    %v1600 = vld [vmem:[%s1564 + $0x118] sm:$0xff]
    %v1601 = vld [vmem:[%s1564 + $0x120] sm:$0xff]
    %v1602 = vld [vmem:[%s1564 + $0x128] sm:$0xff]
    %v1603 = vld [vmem:[%s1564 + $0x130] sm:$0xff]
    %v1604 = vld [vmem:[%s1564 + $0x138] sm:$0xff]
    %v1605 = vld [vmem:[%s1564 + $0x140] sm:$0xff]
    %v1606 = vld [vmem:[%s1564 + $0x148] sm:$0xff]
    %v1607 = vld [vmem:[%s1564 + $0x150] sm:$0xff]
    %v1608 = vld [vmem:[%s1564 + $0x158] sm:$0xff]
    %v1609 = vld [vmem:[%s1564 + $0x160] sm:$0xff]
    %v1610 = vld [vmem:[%s1564 + $0x168] sm:$0xff]
    %v1611 = vld [vmem:[%s1564 + $0x170] sm:$0xff]
    %v1612 = vld [vmem:[%s1564 + $0x178] sm:$0xff]
    %v1613 = vld [vmem:[%s1564 + $0x180] sm:$0xff]
    %v1614 = vld [vmem:[%s1564 + $0x188] sm:$0xff]
    %v1615 = vld [vmem:[%s1564 + $0x190] sm:$0xff]
    %v1616 = vld [vmem:[%s1564 + $0x198] sm:$0xff]
    %v1617 = vld [vmem:[%s1564 + $0x1a0] sm:$0xff]
    %v1618 = vld [vmem:[%s1564 + $0x1a8] sm:$0xff]
    %v1619 = vld [vmem:[%s1564 + $0x1b0] sm:$0xff]
    %v1620 = vld [vmem:[%s1564 + $0x1b8] sm:$0xff]
    %v1621 = vld [vmem:[%s1564 + $0x1c0] sm:$0xff]
    %v1622 = vld [vmem:[%s1564 + $0x1c8] sm:$0xff]
    %v1623 = vld [vmem:[%s1564 + $0x1d0] sm:$0xff]
    %v1624 = vld [vmem:[%s1564 + $0x1d8] sm:$0xff]
    %v1625 = vld [vmem:[%s1564 + $0x1e0] sm:$0xff]
    %v1626 = vld [vmem:[%s1564 + $0x1e8] sm:$0xff]
    %v1627 = vld [vmem:[%s1564 + $0x1f0] sm:$0xff]
    %v1628 = vld [vmem:[%s1564 + $0x1f8] sm:$0xff]
    %v1630 = vshrl.u32 %v1560, 16
    %v1632 = vshll.u32 %v1560, 16
    %v1634 = vrot.slane %v1632, 1
    %v1635 = vor.u32 %v1630, %v1634
    %v1637 = vshrl.u32 %v1561, 16
    %v1639 = vshll.u32 %v1561, 16
    %v1641 = vrot.slane %v1639, 1
    %v1642 = vor.u32 %v1637, %v1641
    %v1644 = vshrl.u32 %v1562, 16
    %v1646 = vshll.u32 %v1562, 16
    %v1648 = vrot.slane %v1646, 1
    %v1649 = vor.u32 %v1644, %v1648
    %v1651 = vshrl.u32 %v1563, 16
    %v1653 = vshll.u32 %v1563, 16
    %v1655 = vrot.slane %v1653, 1
    %v1656 = vor.u32 %v1651, %v1655
    %v1725 = vunpack.c.l.b16 %v1565
    %v1726 = vunpack.c.h.b16 %v1565
    %v1727 = vunpack.c.l.b16 %v1566
    %v1728 = vunpack.c.h.b16 %v1566
    %v1729 = vunpack.c.l.b16 %v1567
    %v1730 = vunpack.c.h.b16 %v1567
    %v1731 = vunpack.c.l.b16 %v1568
    %v1732 = vunpack.c.h.b16 %v1568
    %v1733 = vunpack.c.l.b16 %v1569
    %v1734 = vunpack.c.h.b16 %v1569
    %v1735 = vunpack.c.l.b16 %v1570
    %v1736 = vunpack.c.h.b16 %v1570
    %v1737 = vunpack.c.l.b16 %v1571
    %v1738 = vunpack.c.h.b16 %v1571
    %v1739 = vunpack.c.l.b16 %v1572
    %v1740 = vunpack.c.h.b16 %v1572
    %v1741 = vunpack.c.l.b16 %v1573
    %v1742 = vunpack.c.h.b16 %v1573
    %v1743 = vunpack.c.l.b16 %v1574
    %v1744 = vunpack.c.h.b16 %v1574
    %v1745 = vunpack.c.l.b16 %v1575
    %v1746 = vunpack.c.h.b16 %v1575
    %v1747 = vunpack.c.l.b16 %v1576
    %v1748 = vunpack.c.h.b16 %v1576
    %v1749 = vunpack.c.l.b16 %v1577
    %v1750 = vunpack.c.h.b16 %v1577
    %v1751 = vunpack.c.l.b16 %v1578
    %v1752 = vunpack.c.h.b16 %v1578
    %v1753 = vunpack.c.l.b16 %v1579
    %v1754 = vunpack.c.h.b16 %v1579
    %v1755 = vunpack.c.l.b16 %v1580
    %v1756 = vunpack.c.h.b16 %v1580
    %v1757 = vunpack.c.l.b16 %v1581
    %v1758 = vunpack.c.h.b16 %v1581
    %v1759 = vunpack.c.l.b16 %v1582
    %v1760 = vunpack.c.h.b16 %v1582
    %v1761 = vunpack.c.l.b16 %v1583
    %v1762 = vunpack.c.h.b16 %v1583
    %v1763 = vunpack.c.l.b16 %v1584
    %v1764 = vunpack.c.h.b16 %v1584
    %v1765 = vunpack.c.l.b16 %v1585
    %v1766 = vunpack.c.h.b16 %v1585
    %v1767 = vunpack.c.l.b16 %v1586
    %v1768 = vunpack.c.h.b16 %v1586
    %v1769 = vunpack.c.l.b16 %v1587
    %v1770 = vunpack.c.h.b16 %v1587
    %v1771 = vunpack.c.l.b16 %v1588
    %v1772 = vunpack.c.h.b16 %v1588
    %v1773 = vunpack.c.l.b16 %v1589
    %v1774 = vunpack.c.h.b16 %v1589
    %v1775 = vunpack.c.l.b16 %v1590
    %v1776 = vunpack.c.h.b16 %v1590
    %v1777 = vunpack.c.l.b16 %v1591
    %v1778 = vunpack.c.h.b16 %v1591
    %v1779 = vunpack.c.l.b16 %v1592
    %v1780 = vunpack.c.h.b16 %v1592
    %v1781 = vunpack.c.l.b16 %v1593
    %v1782 = vunpack.c.h.b16 %v1593
    %v1783 = vunpack.c.l.b16 %v1594
    %v1784 = vunpack.c.h.b16 %v1594
    %v1785 = vunpack.c.l.b16 %v1595
    %v1786 = vunpack.c.h.b16 %v1595
    %v1787 = vunpack.c.l.b16 %v1596
    %v1788 = vunpack.c.h.b16 %v1596
    %v1789 = vunpack.c.l.b16 %v1597
    %v1790 = vunpack.c.h.b16 %v1597
    %v1791 = vunpack.c.l.b16 %v1598
    %v1792 = vunpack.c.h.b16 %v1598
    %v1793 = vunpack.c.l.b16 %v1599
    %v1794 = vunpack.c.h.b16 %v1599
    %v1795 = vunpack.c.l.b16 %v1600
    %v1796 = vunpack.c.h.b16 %v1600
    %v1797 = vunpack.c.l.b16 %v1601
    %v1798 = vunpack.c.h.b16 %v1601
    %v1799 = vunpack.c.l.b16 %v1602
    %v1800 = vunpack.c.h.b16 %v1602
    %v1801 = vunpack.c.l.b16 %v1603
    %v1802 = vunpack.c.h.b16 %v1603
    %v1803 = vunpack.c.l.b16 %v1604
    %v1804 = vunpack.c.h.b16 %v1604
    %v1805 = vunpack.c.l.b16 %v1605
    %v1806 = vunpack.c.h.b16 %v1605
    %v1807 = vunpack.c.l.b16 %v1606
    %v1808 = vunpack.c.h.b16 %v1606
    %v1809 = vunpack.c.l.b16 %v1607
    %v1810 = vunpack.c.h.b16 %v1607
    %v1811 = vunpack.c.l.b16 %v1608
    %v1812 = vunpack.c.h.b16 %v1608
    %v1813 = vunpack.c.l.b16 %v1609
    %v1814 = vunpack.c.h.b16 %v1609
    %v1815 = vunpack.c.l.b16 %v1610
    %v1816 = vunpack.c.h.b16 %v1610
    %v1817 = vunpack.c.l.b16 %v1611
    %v1818 = vunpack.c.h.b16 %v1611
    %v1819 = vunpack.c.l.b16 %v1612
    %v1820 = vunpack.c.h.b16 %v1612
    %v1821 = vunpack.c.l.b16 %v1613
    %v1822 = vunpack.c.h.b16 %v1613
    %v1823 = vunpack.c.l.b16 %v1614
    %v1824 = vunpack.c.h.b16 %v1614
    %v1825 = vunpack.c.l.b16 %v1615
    %v1826 = vunpack.c.h.b16 %v1615
    %v1827 = vunpack.c.l.b16 %v1616
    %v1828 = vunpack.c.h.b16 %v1616
    %v1829 = vunpack.c.l.b16 %v1617
    %v1830 = vunpack.c.h.b16 %v1617
    %v1831 = vunpack.c.l.b16 %v1618
    %v1832 = vunpack.c.h.b16 %v1618
    %v1833 = vunpack.c.l.b16 %v1619
    %v1834 = vunpack.c.h.b16 %v1619
    %v1835 = vunpack.c.l.b16 %v1620
    %v1836 = vunpack.c.h.b16 %v1620
    %v1837 = vunpack.c.l.b16 %v1621
    %v1838 = vunpack.c.h.b16 %v1621
    %v1839 = vunpack.c.l.b16 %v1622
    %v1840 = vunpack.c.h.b16 %v1622
    %v1841 = vunpack.c.l.b16 %v1623
    %v1842 = vunpack.c.h.b16 %v1623
    %v1843 = vunpack.c.l.b16 %v1624
    %v1844 = vunpack.c.h.b16 %v1624
    %v1845 = vunpack.c.l.b16 %v1625
    %v1846 = vunpack.c.h.b16 %v1625
    %v1847 = vunpack.c.l.b16 %v1626
    %v1848 = vunpack.c.h.b16 %v1626
    %v1849 = vunpack.c.l.b16 %v1627
    %v1850 = vunpack.c.h.b16 %v1627
    %v1851 = vunpack.c.l.b16 %v1628
    %v1852 = vunpack.c.h.b16 %v1628
    %v1853 = vpack.c.b16 %v1727, %v1725
    %v1854 = vpack.c.b16 %v1728, %v1726
    %v1855 = vpack.c.b16 %v1731, %v1729
    %v1856 = vpack.c.b16 %v1732, %v1730
    %v1857 = vpack.c.b16 %v1735, %v1733
    %v1858 = vpack.c.b16 %v1736, %v1734
    %v1859 = vpack.c.b16 %v1739, %v1737
    %v1860 = vpack.c.b16 %v1740, %v1738
    %v1861 = vpack.c.b16 %v1743, %v1741
    %v1862 = vpack.c.b16 %v1744, %v1742
    %v1863 = vpack.c.b16 %v1747, %v1745
    %v1864 = vpack.c.b16 %v1748, %v1746
    %v1865 = vpack.c.b16 %v1751, %v1749
    %v1866 = vpack.c.b16 %v1752, %v1750
    %v1867 = vpack.c.b16 %v1755, %v1753
    %v1868 = vpack.c.b16 %v1756, %v1754
    %v1869 = vpack.c.b16 %v1759, %v1757
    %v1870 = vpack.c.b16 %v1760, %v1758
    %v1871 = vpack.c.b16 %v1763, %v1761
    %v1872 = vpack.c.b16 %v1764, %v1762
    %v1873 = vpack.c.b16 %v1767, %v1765
    %v1874 = vpack.c.b16 %v1768, %v1766
    %v1875 = vpack.c.b16 %v1771, %v1769
    %v1876 = vpack.c.b16 %v1772, %v1770
    %v1877 = vpack.c.b16 %v1775, %v1773
    %v1878 = vpack.c.b16 %v1776, %v1774
    %v1879 = vpack.c.b16 %v1779, %v1777
    %v1880 = vpack.c.b16 %v1780, %v1778
    %v1881 = vpack.c.b16 %v1783, %v1781
    %v1882 = vpack.c.b16 %v1784, %v1782
    %v1883 = vpack.c.b16 %v1787, %v1785
    %v1884 = vpack.c.b16 %v1788, %v1786
    %v1885 = vpack.c.b16 %v1791, %v1789
    %v1886 = vpack.c.b16 %v1792, %v1790
    %v1887 = vpack.c.b16 %v1795, %v1793
    %v1888 = vpack.c.b16 %v1796, %v1794
    %v1889 = vpack.c.b16 %v1799, %v1797
    %v1890 = vpack.c.b16 %v1800, %v1798
    %v1891 = vpack.c.b16 %v1803, %v1801
    %v1892 = vpack.c.b16 %v1804, %v1802
    %v1893 = vpack.c.b16 %v1807, %v1805
    %v1894 = vpack.c.b16 %v1808, %v1806
    %v1895 = vpack.c.b16 %v1811, %v1809
    %v1896 = vpack.c.b16 %v1812, %v1810
    %v1897 = vpack.c.b16 %v1815, %v1813
    %v1898 = vpack.c.b16 %v1816, %v1814
    %v1899 = vpack.c.b16 %v1819, %v1817
    %v1900 = vpack.c.b16 %v1820, %v1818
    %v1901 = vpack.c.b16 %v1823, %v1821
    %v1902 = vpack.c.b16 %v1824, %v1822
    %v1903 = vpack.c.b16 %v1827, %v1825
    %v1904 = vpack.c.b16 %v1828, %v1826
    %v1905 = vpack.c.b16 %v1831, %v1829
    %v1906 = vpack.c.b16 %v1832, %v1830
    %v1907 = vpack.c.b16 %v1835, %v1833
    %v1908 = vpack.c.b16 %v1836, %v1834
    %v1909 = vpack.c.b16 %v1839, %v1837
    %v1910 = vpack.c.b16 %v1840, %v1838
    %v1911 = vpack.c.b16 %v1843, %v1841
    %v1912 = vpack.c.b16 %v1844, %v1842
    %v1913 = vpack.c.b16 %v1847, %v1845
    %v1914 = vpack.c.b16 %v1848, %v1846
    %v1915 = vpack.c.b16 %v1851, %v1849
    %v1916 = vpack.c.b16 %v1852, %v1850
    %1981 = vmatprep.subr.bf16.mxu0 %v1854
    %1982 = vmatpush1.bf16.msra.mxu0 %v1853
    %1983 = vmatprep.subr.bf16.mxu0 %v1856
    %1984 = vmatpush1.bf16.msra.mxu0 %v1855
    %1985 = vmatprep.subr.bf16.mxu0 %v1858
    %1986 = vmatpush1.bf16.msra.mxu0 %v1857
    %1987 = vmatprep.subr.bf16.mxu0 %v1860
    %1988 = vmatpush1.bf16.msra.mxu0 %v1859
    %1989 = vmatprep.subr.bf16.mxu0 %v1862
    %1990 = vmatpush1.bf16.msra.mxu0 %v1861
    %1991 = vmatprep.subr.bf16.mxu0 %v1864
    %1992 = vmatpush1.bf16.msra.mxu0 %v1863
    %1993 = vmatprep.subr.bf16.mxu0 %v1866
    %1994 = vmatpush1.bf16.msra.mxu0 %v1865
    %1995 = vmatprep.subr.bf16.mxu0 %v1868
    %1996 = vmatpush1.bf16.msra.mxu0 %v1867
    %1997 = vmatprep.subr.bf16.mxu0 %v1870
    %1998 = vmatpush1.bf16.msra.mxu0 %v1869
    %1999 = vmatprep.subr.bf16.mxu0 %v1872
    %2000 = vmatpush1.bf16.msra.mxu0 %v1871
    %2001 = vmatprep.subr.bf16.mxu0 %v1874
    %2002 = vmatpush1.bf16.msra.mxu0 %v1873
    %2003 = vmatprep.subr.bf16.mxu0 %v1876
    %2004 = vmatpush1.bf16.msra.mxu0 %v1875
    %2005 = vmatprep.subr.bf16.mxu0 %v1878
    %2006 = vmatpush1.bf16.msra.mxu0 %v1877
    %2007 = vmatprep.subr.bf16.mxu0 %v1880
    %2008 = vmatpush1.bf16.msra.mxu0 %v1879
    %2009 = vmatprep.subr.bf16.mxu0 %v1882
    %2010 = vmatpush1.bf16.msra.mxu0 %v1881
    %2011 = vmatprep.subr.bf16.mxu0 %v1884
    %2012 = vmatpush1.bf16.msra.mxu0 %v1883
    %2013 = vmatprep.mubr.bf16.mxu0 %v1642
    %2014 = vmatmul.mubr.bf16.gmra.mrb[0].mxu0 %v1635
    %v2015 = vpop.f32.mrb[0].mxu0
    %v2016 = vadd.f32 0.0, %v2015
    %v2017 = vpop.f32.mrb[0].mxu0
    %v2018 = vadd.f32 0.0, %v2017
    %v2019 = vpop.f32.mrb[0].mxu0
    %v2020 = vpop.f32.mrb[0].mxu0
    %2021 = vdwg.mxu0
    %2022 = vmatprep.subr.bf16.mxu0 %v1886
    %2023 = vmatpush1.bf16.msra.mxu0 %v1885
    %2024 = vmatprep.subr.bf16.mxu0 %v1888
    %2025 = vmatpush1.bf16.msra.mxu0 %v1887
    %2026 = vmatprep.subr.bf16.mxu0 %v1890
    %2027 = vmatpush1.bf16.msra.mxu0 %v1889
    %2028 = vmatprep.subr.bf16.mxu0 %v1892
    %2029 = vmatpush1.bf16.msra.mxu0 %v1891
    %2030 = vmatprep.subr.bf16.mxu0 %v1894
    %2031 = vmatpush1.bf16.msra.mxu0 %v1893
    %2032 = vmatprep.subr.bf16.mxu0 %v1896
    %2033 = vmatpush1.bf16.msra.mxu0 %v1895
    %2034 = vmatprep.subr.bf16.mxu0 %v1898
    %2035 = vmatpush1.bf16.msra.mxu0 %v1897
    %2036 = vmatprep.subr.bf16.mxu0 %v1900
    %2037 = vmatpush1.bf16.msra.mxu0 %v1899
    %2038 = vmatprep.subr.bf16.mxu0 %v1902
    %2039 = vmatpush1.bf16.msra.mxu0 %v1901
    %2040 = vmatprep.subr.bf16.mxu0 %v1904
    %2041 = vmatpush1.bf16.msra.mxu0 %v1903
    %2042 = vmatprep.subr.bf16.mxu0 %v1906
    %2043 = vmatpush1.bf16.msra.mxu0 %v1905
    %2044 = vmatprep.subr.bf16.mxu0 %v1908
    %2045 = vmatpush1.bf16.msra.mxu0 %v1907
    %2046 = vmatprep.subr.bf16.mxu0 %v1910
    %2047 = vmatpush1.bf16.msra.mxu0 %v1909
    %2048 = vmatprep.subr.bf16.mxu0 %v1912
    %2049 = vmatpush1.bf16.msra.mxu0 %v1911
    %2050 = vmatprep.subr.bf16.mxu0 %v1914
    %2051 = vmatpush1.bf16.msra.mxu0 %v1913
    %2052 = vmatprep.subr.bf16.mxu0 %v1916
    %2053 = vmatpush1.bf16.msra.mxu0 %v1915
    %2054 = vmatprep.mubr.bf16.mxu0 %v1656
    %2055 = vmatmul.mubr.bf16.gmra.mrb[0].mxu0 %v1649
    %v2056 = vpop.f32.mrb[0].mxu0
    %v2057 = vadd.f32 %v2016, %v2056
    %v2058 = vpop.f32.mrb[0].mxu0
    %v2059 = vadd.f32 %v2018, %v2058
    %v2060 = vpop.f32.mrb[0].mxu0
    %v2061 = vpop.f32.mrb[0].mxu0
    %2062 = vdwg.mxu0
    %v2063 = vld [vmem:[%s1455] sm:$0x3c]
    %v2064 = vld [vmem:[%s1455 + $0x8] sm:$0x3c]
    %v2067 = vrot.slane %v2063, 1
    %v2068 = vrot.slane %v2064, 1
    %v2071 = vpack.c.bf16 %v1458, %v1458
    %v2072 = vpack.c.bf16 %v1459, %v1459
    %v2073 = vpack.c.bf16 %v2067, %v2067
    %v2074 = vpack.c.bf16 %v2068, %v2068
    %v2076 = vshrl.u32 %v2071, 16
    %v2078 = vshll.u32 %v2071, 16
    %v2080 = vrot.slane %v2078, 1
    %v2081 = vor.u32 %v2076, %v2080
    %v2083 = vshrl.u32 %v2072, 16
    %v2085 = vshll.u32 %v2072, 16
    %v2087 = vrot.slane %v2085, 1
    %v2088 = vor.u32 %v2083, %v2087
    %v2090 = vshrl.u32 %v2073, 16
    %v2092 = vshll.u32 %v2073, 16
    %v2094 = vrot.slane %v2092, 1
    %v2095 = vor.u32 %v2090, %v2094
    %v2097 = vshrl.u32 %v2074, 16
    %v2099 = vshll.u32 %v2074, 16
    %v2101 = vrot.slane %v2099, 1
    %v2102 = vor.u32 %v2097, %v2101
    %2107 = vmatprep.subr.bf16.mxu0 %v1854
    %2108 = vmatpush1.bf16.msra.mxu0 %v1853
    %2109 = vmatprep.subr.bf16.mxu0 %v1856
    %2110 = vmatpush1.bf16.msra.mxu0 %v1855
    %2111 = vmatprep.subr.bf16.mxu0 %v1858
    %2112 = vmatpush1.bf16.msra.mxu0 %v1857
    %2113 = vmatprep.subr.bf16.mxu0 %v1860
    %2114 = vmatpush1.bf16.msra.mxu0 %v1859
    %2115 = vmatprep.subr.bf16.mxu0 %v1862
    %2116 = vmatpush1.bf16.msra.mxu0 %v1861
    %2117 = vmatprep.subr.bf16.mxu0 %v1864
    %2118 = vmatpush1.bf16.msra.mxu0 %v1863
    %2119 = vmatprep.subr.bf16.mxu0 %v1866
    %2120 = vmatpush1.bf16.msra.mxu0 %v1865
    %2121 = vmatprep.subr.bf16.mxu0 %v1868
    %2122 = vmatpush1.bf16.msra.mxu0 %v1867
    %2123 = vmatprep.subr.bf16.mxu0 %v1870
    %2124 = vmatpush1.bf16.msra.mxu0 %v1869
    %2125 = vmatprep.subr.bf16.mxu0 %v1872
    %2126 = vmatpush1.bf16.msra.mxu0 %v1871
    %2127 = vmatprep.subr.bf16.mxu0 %v1874
    %2128 = vmatpush1.bf16.msra.mxu0 %v1873
    %2129 = vmatprep.subr.bf16.mxu0 %v1876
    %2130 = vmatpush1.bf16.msra.mxu0 %v1875
    %2131 = vmatprep.subr.bf16.mxu0 %v1878
    %2132 = vmatpush1.bf16.msra.mxu0 %v1877
    %2133 = vmatprep.subr.bf16.mxu0 %v1880
    %2134 = vmatpush1.bf16.msra.mxu0 %v1879
    %2135 = vmatprep.subr.bf16.mxu0 %v1882
    %2136 = vmatpush1.bf16.msra.mxu0 %v1881
    %2137 = vmatprep.subr.bf16.mxu0 %v1884
    %2138 = vmatpush1.bf16.msra.mxu0 %v1883
    %2139 = vmatprep.mubr.bf16.mxu0 %v2088
    %2140 = vmatmul.mubr.bf16.gmra.mrb[0].mxu0 %v2081
    %v2141 = vpop.f32.mrb[0].mxu0
    %v2142 = vadd.f32 0.0, %v2141
    %v2143 = vpop.f32.mrb[0].mxu0
    %v2144 = vadd.f32 0.0, %v2143
    %v2145 = vpop.f32.mrb[0].mxu0
    %v2146 = vpop.f32.mrb[0].mxu0
    %2147 = vdwg.mxu0
    %2148 = vmatprep.subr.bf16.mxu0 %v1886
    %2149 = vmatpush1.bf16.msra.mxu0 %v1885
    %2150 = vmatprep.subr.bf16.mxu0 %v1888
    %2151 = vmatpush1.bf16.msra.mxu0 %v1887
    %2152 = vmatprep.subr.bf16.mxu0 %v1890
    %2153 = vmatpush1.bf16.msra.mxu0 %v1889
    %2154 = vmatprep.subr.bf16.mxu0 %v1892
    %2155 = vmatpush1.bf16.msra.mxu0 %v1891
    %2156 = vmatprep.subr.bf16.mxu0 %v1894
    %2157 = vmatpush1.bf16.msra.mxu0 %v1893
    %2158 = vmatprep.subr.bf16.mxu0 %v1896
    %2159 = vmatpush1.bf16.msra.mxu0 %v1895
    %2160 = vmatprep.subr.bf16.mxu0 %v1898
    %2161 = vmatpush1.bf16.msra.mxu0 %v1897
    %2162 = vmatprep.subr.bf16.mxu0 %v1900
    %2163 = vmatpush1.bf16.msra.mxu0 %v1899
    %2164 = vmatprep.subr.bf16.mxu0 %v1902
    %2165 = vmatpush1.bf16.msra.mxu0 %v1901
    %2166 = vmatprep.subr.bf16.mxu0 %v1904
    %2167 = vmatpush1.bf16.msra.mxu0 %v1903
    %2168 = vmatprep.subr.bf16.mxu0 %v1906
    %2169 = vmatpush1.bf16.msra.mxu0 %v1905
    %2170 = vmatprep.subr.bf16.mxu0 %v1908
    %2171 = vmatpush1.bf16.msra.mxu0 %v1907
    %2172 = vmatprep.subr.bf16.mxu0 %v1910
    %2173 = vmatpush1.bf16.msra.mxu0 %v1909
    %2174 = vmatprep.subr.bf16.mxu0 %v1912
    %2175 = vmatpush1.bf16.msra.mxu0 %v1911
    %2176 = vmatprep.subr.bf16.mxu0 %v1914
    %2177 = vmatpush1.bf16.msra.mxu0 %v1913
    %2178 = vmatprep.subr.bf16.mxu0 %v1916
    %2179 = vmatpush1.bf16.msra.mxu0 %v1915
    %2180 = vmatprep.mubr.bf16.mxu0 %v2102
    %2181 = vmatmul.mubr.bf16.gmra.mrb[0].mxu0 %v2095
    %v2182 = vpop.f32.mrb[0].mxu0
    %v2183 = vadd.f32 %v2142, %v2182
    %v2184 = vpop.f32.mrb[0].mxu0
    %v2185 = vadd.f32 %v2144, %v2184
    %v2186 = vpop.f32.mrb[0].mxu0
    %v2187 = vpop.f32.mrb[0].mxu0
    %2188 = vdwg.mxu0
    %vm2189 = vcmask 1043456
    %v2190 = vsel %vm2189, %v1449, 0.0
    %v2191 = vrot.slane %v2190, 4
    %v2192 = vadd.f32 %v2190, %v2191
    %v2193 = vrot.slane %v2192, 2
    %v2194 = vadd.f32 %v2192, %v2193
    %v2195 = vrot.slane %v2194, 1
    %v2196 = vadd.f32 %v2194, %v2195
    %v2197 = vsel %vm2189, %v1451, 0.0
    %v2198 = vrot.slane %v2197, 4
    %v2199 = vadd.f32 %v2197, %v2198
    %v2200 = vrot.slane %v2199, 2
    %v2201 = vadd.f32 %v2199, %v2200
    %v2202 = vrot.slane %v2201, 1
    %v2203 = vadd.f32 %v2201, %v2202
    %v2204 = vmul.f32 %v1449, %v1449
    %v2205 = vmul.f32 %v1451, %v1451
    %v2206 = vsel %vm2189, %v2204, 0.0
    %v2207 = vrot.slane %v2206, 4
    %v2208 = vadd.f32 %v2206, %v2207
    %v2209 = vrot.slane %v2208, 2
    %v2210 = vadd.f32 %v2208, %v2209
    %v2211 = vrot.slane %v2210, 1
    %v2212 = vadd.f32 %v2210, %v2211
    %v2213 = vsel %vm2189, %v2205, 0.0
    %v2214 = vrot.slane %v2213, 4
    %v2215 = vadd.f32 %v2213, %v2214
    %v2216 = vrot.slane %v2215, 2
    %v2217 = vadd.f32 %v2215, %v2216
    %v2218 = vrot.slane %v2217, 1
    %v2219 = vadd.f32 %v2217, %v2218
    %v2220 = vsel %vm2189, %v1546, 0.0
    %v2221 = vrot.slane %v2220, 4
    %v2222 = vadd.f32 %v2220, %v2221
    %v2223 = vrot.slane %v2222, 2
    %v2224 = vadd.f32 %v2222, %v2223
    %v2225 = vrot.slane %v2224, 1
    %v2226 = vadd.f32 %v2224, %v2225
    %v2227 = vsel %vm2189, %v1548, 0.0
    %v2228 = vrot.slane %v2227, 4
    %v2229 = vadd.f32 %v2227, %v2228
    %v2230 = vrot.slane %v2229, 2
    %v2231 = vadd.f32 %v2229, %v2230
    %v2232 = vrot.slane %v2231, 1
    %v2233 = vadd.f32 %v2231, %v2232
    %v2234 = vmul.f32 %v1546, %v1546
    %v2235 = vmul.f32 %v1548, %v1548
    %v2236 = vsel %vm2189, %v2234, 0.0
    %v2237 = vrot.slane %v2236, 4
    %v2238 = vadd.f32 %v2236, %v2237
    %v2239 = vrot.slane %v2238, 2
    %v2240 = vadd.f32 %v2238, %v2239
    %v2241 = vrot.slane %v2240, 1
    %v2242 = vadd.f32 %v2240, %v2241
    %v2243 = vsel %vm2189, %v2235, 0.0
    %v2244 = vrot.slane %v2243, 4
    %v2245 = vadd.f32 %v2243, %v2244
    %v2246 = vrot.slane %v2245, 2
    %v2247 = vadd.f32 %v2245, %v2246
    %v2248 = vrot.slane %v2247, 1
    %v2249 = vadd.f32 %v2247, %v2248
    %v2250 = vadd.f32 %v2196, %v2226
    %v2251 = vadd.f32 %v2203, %v2233
    %v2252 = vadd.f32 %v2212, %v2242
    %v2253 = vadd.f32 %v2219, %v2249
    %v2254 = vsel %vm2189, %v2057, 0.0
    %v2255 = vrot.slane %v2254, 4
    %v2256 = vadd.f32 %v2254, %v2255
    %v2257 = vrot.slane %v2256, 2
    %v2258 = vadd.f32 %v2256, %v2257
    %v2259 = vrot.slane %v2258, 1
    %v2260 = vadd.f32 %v2258, %v2259
    %v2261 = vsel %vm2189, %v2059, 0.0
    %v2262 = vrot.slane %v2261, 4
    %v2263 = vadd.f32 %v2261, %v2262
    %v2264 = vrot.slane %v2263, 2
    %v2265 = vadd.f32 %v2263, %v2264
    %v2266 = vrot.slane %v2265, 1
    %v2267 = vadd.f32 %v2265, %v2266
    %v2268 = vmul.f32 %v2057, %v2057
    %v2269 = vmul.f32 %v2059, %v2059
    %v2270 = vsel %vm2189, %v2268, 0.0
    %v2271 = vrot.slane %v2270, 4
    %v2272 = vadd.f32 %v2270, %v2271
    %v2273 = vrot.slane %v2272, 2
    %v2274 = vadd.f32 %v2272, %v2273
    %v2275 = vrot.slane %v2274, 1
    %v2276 = vadd.f32 %v2274, %v2275
    %v2277 = vsel %vm2189, %v2269, 0.0
    %v2278 = vrot.slane %v2277, 4
    %v2279 = vadd.f32 %v2277, %v2278
    %v2280 = vrot.slane %v2279, 2
    %v2281 = vadd.f32 %v2279, %v2280
    %v2282 = vrot.slane %v2281, 1
    %v2283 = vadd.f32 %v2281, %v2282
    %v2284 = vadd.f32 %v2250, %v2260
    %v2285 = vadd.f32 %v2251, %v2267
    %v2286 = vadd.f32 %v2252, %v2276
    %v2287 = vadd.f32 %v2253, %v2283
    %v2288 = vsel %vm2189, %v2183, 0.0
    %v2289 = vrot.slane %v2288, 4
    %v2290 = vadd.f32 %v2288, %v2289
    %v2291 = vrot.slane %v2290, 2
    %v2292 = vadd.f32 %v2290, %v2291
    %v2293 = vrot.slane %v2292, 1
    %v2294 = vadd.f32 %v2292, %v2293
    %v2295 = vsel %vm2189, %v2185, 0.0
    %v2296 = vrot.slane %v2295, 4
    %v2297 = vadd.f32 %v2295, %v2296
    %v2298 = vrot.slane %v2297, 2
    %v2299 = vadd.f32 %v2297, %v2298
    %v2300 = vrot.slane %v2299, 1
    %v2301 = vadd.f32 %v2299, %v2300
    %v2302 = vmul.f32 %v2183, %v2183
    %v2303 = vmul.f32 %v2185, %v2185
    %v2304 = vsel %vm2189, %v2302, 0.0
    %v2305 = vrot.slane %v2304, 4
    %v2306 = vadd.f32 %v2304, %v2305
    %v2307 = vrot.slane %v2306, 2
    %v2308 = vadd.f32 %v2306, %v2307
    %v2309 = vrot.slane %v2308, 1
    %v2310 = vadd.f32 %v2308, %v2309
    %v2311 = vsel %vm2189, %v2303, 0.0
    %v2312 = vrot.slane %v2311, 4
    %v2313 = vadd.f32 %v2311, %v2312
    %v2314 = vrot.slane %v2313, 2
    %v2315 = vadd.f32 %v2313, %v2314
    %v2316 = vrot.slane %v2315, 1
    %v2317 = vadd.f32 %v2315, %v2316
    %v2318 = vadd.f32 %v2284, %v2294
    %v2319 = vadd.f32 %v2285, %v2301
    %v2320 = vadd.f32 %v2286, %v2310
    %v2321 = vadd.f32 %v2287, %v2317
    %v2322 = vld [vmem:[%s7] sm:$0xf]
    %2323 = vrot.lane.b32.xlu0 %v2318, 32
    %v2324 = vpop.permute.xlu0 %2323
    %2325 = vrot.lane.b32.xlu0 %v2319, 32
    %v2326 = vpop.permute.xlu0 %2325
    %vm2327 = vcmp.lt.s32.totalorder %v525, 32
    %v2328 = vsel %vm2327, %v2324, %v2326
    %v2329 = vsel %vm2327, %v2326, %v2324
    %v2330 = vadd.f32 %v2318, %v2329
    %v2331 = vadd.f32 %v2319, %v2328
    %2332 = vrot.lane.b32.xlu0 %v2330, 64
    %v2333 = vpop.permute.xlu0 %2332
    %2334 = vrot.lane.b32.xlu0 %v2331, 64
    %v2335 = vpop.permute.xlu0 %2334
    %v2336 = vsel %vm526, %v2333, %v2335
    %v2337 = vsel %vm526, %v2335, %v2333
    %v2338 = vadd.f32 %v2330, %v2337
    %v2339 = vadd.f32 %v2331, %v2336
    %v2340 = vadd.f32 %v2338, %v2339
    %2341 = vrot.lane.b32.xlu0 %v2320, 32
    %v2342 = vpop.permute.xlu0 %2341
    %2343 = vrot.lane.b32.xlu0 %v2321, 32
    %v2344 = vpop.permute.xlu0 %2343
    %v2345 = vsel %vm2327, %v2342, %v2344
    %v2346 = vsel %vm2327, %v2344, %v2342
    %v2347 = vadd.f32 %v2320, %v2346
    %v2348 = vadd.f32 %v2321, %v2345
    %2349 = vrot.lane.b32.xlu0 %v2347, 64
    %v2350 = vpop.permute.xlu0 %2349
    %2351 = vrot.lane.b32.xlu0 %v2348, 64
    %v2352 = vpop.permute.xlu0 %2351
    %v2353 = vsel %vm526, %v2350, %v2352
    %v2354 = vsel %vm526, %v2352, %v2350
    %v2355 = vadd.f32 %v2347, %v2354
    %v2356 = vadd.f32 %v2348, %v2353
    %v2357 = vadd.f32 %v2355, %v2356
    %v2358 = vmul.f32 %v2340, 0.0078125
    %v2359 = vmul.f32 %v2357, 0.0078125
    %v2360 = vmul.f32 %v2358, %v2358
    %v2361 = vsub.f32 %v2359, %v2360
    %v2362 = vadd.f32 %v2361, 1e-05
    %v2363 = vrsqrt.pop %v2362
    %v2365 = vcombine.low %v2363, %v2363
    %v2367 = vunpack.c.l.s4 1983009808
    %v2368 = vunpack.c.0.s8 %v2367
    %v2369 = vlaneseq
    %v2370 = vshrl.u32 %v2369, 7
    %v2371 = vsub.s32 %v2368, %v2370
    %v2372 = vrot.slane %v2365, %v2371
    %v2374 = vmul.f32 %v2322, %v2372
    %v2376 = vlaneseq
    %v2377 = vshrl.u32 %v2376, 7
    %v2378 = vsub.s32 0, %v2377
    %v2379 = vrot.slane %v2374, %v2378
    %v2380 = vlaneseq
    %v2381 = vshrl.u32 %v2380, 7
    %v2382 = vsub.s32 2, %v2381
    %v2383 = vrot.slane %v2374, %v2382
    %v2386 = vmul.f32 %v2358, %v2379
    %v2387 = vmul.f32 %v2358, %v2383
    %v2390 = vcombine.low %v2386, %v2387
    %v2392 = vunpack.c.l.s4 1983009808
    %v2393 = vunpack.c.0.s8 %v2392
    %v2394 = vlaneseq
    %v2395 = vshrl.u32 %v2394, 7
    %v2396 = vsub.s32 %v2393, %v2395
    %v2397 = vrot.slane %v2390, %v2396
    %v2398 = vrot.slane %v2397, 7
    %v2400 = vsub.f32 %v2322, %v2398
    %v2401 = vld [vmem:[%s8] sm:$0xf]
    %s2402 = scalar_lea.vmem %s8, 4
    %v2403 = vld [vmem:[%s2402] sm:$0xf]
    %v2404 = vlaneseq
    %v2405 = vshrl.u32 %v2404, 7
    %v2406 = vsub.s32 0, %v2405
    %v2407 = vrot.slane %v2379, %v2406
    %v2408 = vlaneseq
    %v2409 = vshrl.u32 %v2408, 7
    %v2410 = vsub.s32 0, %v2409
    %v2411 = vrot.slane %v2383, %v2410
    %v2412 = vmul.f32 %v1449, %v2407
    %v2413 = vmul.f32 %v1451, %v2411
    %v2415 = vlaneseq
    %v2416 = vshrl.u32 %v2415, 7
    %v2417 = vsub.s32 1, %v2416
    %v2418 = vrot.slane %v2400, %v2417
    %v2419 = vlaneseq
    %v2420 = vshrl.u32 %v2419, 7
    %v2421 = vsub.s32 3, %v2420
    %v2422 = vrot.slane %v2400, %v2421
    %v2425 = vlaneseq
    %v2426 = vshrl.u32 %v2425, 7
    %v2427 = vsub.s32 1, %v2426
    %v2428 = vrot.slane %v2418, %v2427
    %v2429 = vlaneseq
    %v2430 = vshrl.u32 %v2429, 7
    %v2431 = vsub.s32 1, %v2430
    %v2432 = vrot.slane %v2422, %v2431
    %v2433 = vadd.f32 %v2412, %v2428
    %v2434 = vadd.f32 %v2413, %v2432
    %v2435 = vmax.f32 %v2433, 0.0
    %v2436 = vmax.f32 %v2434, 0.0
    %v2437 = vpack.c.bf16 %v2435, %v2435
    %v2438 = vpack.c.bf16 %v2436, %v2436
    %v2439 = vmul.f32 %v2057, %v2407
    %v2440 = vmul.f32 %v2059, %v2411
    %v2441 = vadd.f32 %v2439, %v2428
    %v2442 = vadd.f32 %v2440, %v2432
    %v2443 = vmax.f32 %v2441, 0.0
    %v2444 = vmax.f32 %v2442, 0.0
    %v2445 = vpack.c.bf16 %v2443, %v2443
    %v2446 = vpack.c.bf16 %v2444, %v2444
    %vm2447 = vcmask 31744
    %v2449 = vsel %vm2447, %v2403, 0
    %v2452 = vsel %vm384, %v2445, 0
    %v2455 = vsel %vm384, %v2446, 0
    %2457 = vmatprep.subr.bf16.mxu0 %v2455
    %2458 = vmatpush1.bf16.msra.mxu0 %v2452
    %2459 = vmatprep.subr.bf16.mxu0 0
    %2460 = vmatpush1.bf16.msra.mxu0 0
    %2461 = vmatprep.subr.bf16.mxu0 0
    %2462 = vmatpush1.bf16.msra.mxu0 0
    %2463 = vmatprep.subr.bf16.mxu0 0
    %2464 = vmatpush1.bf16.msra.mxu0 0
    %2465 = vmatprep.subr.bf16.mxu0 0
    %2466 = vmatpush1.bf16.msra.mxu0 0
    %2467 = vmatprep.subr.bf16.mxu0 0
    %2468 = vmatpush1.bf16.msra.mxu0 0
    %2469 = vmatprep.subr.bf16.mxu0 0
    %2470 = vmatpush1.bf16.msra.mxu0 0
    %2471 = vmatprep.subr.bf16.mxu0 0
    %2472 = vmatpush1.bf16.msra.mxu0 0
    %2473 = vmatprep.subr.bf16.mxu0 0
    %2474 = vmatpush1.bf16.msra.mxu0 0
    %2475 = vmatprep.subr.bf16.mxu0 0
    %2476 = vmatpush1.bf16.msra.mxu0 0
    %2477 = vmatprep.subr.bf16.mxu0 0
    %2478 = vmatpush1.bf16.msra.mxu0 0
    %2479 = vmatprep.subr.bf16.mxu0 0
    %2480 = vmatpush1.bf16.msra.mxu0 0
    %2481 = vmatprep.subr.bf16.mxu0 0
    %2482 = vmatpush1.bf16.msra.mxu0 0
    %2483 = vmatprep.subr.bf16.mxu0 0
    %2484 = vmatpush1.bf16.msra.mxu0 0
    %2485 = vmatprep.subr.bf16.mxu0 0
    %2486 = vmatpush1.bf16.msra.mxu0 0
    %2487 = vmatprep.subr.bf16.mxu0 0
    %2488 = vmatpush1.bf16.msra.mxu0 0
    %2489 = vmatprep.mubr.bf16.mxu0 0
    %2490 = vmatmul.mubr.bf16.gmra.mrb[0].mxu0 %v2449
    %v2491 = vpop.f32.mrb[0].mxu0
    %v2492 = vadd.f32 0.0, %v2491
    %v2493 = vpop.f32.mrb[0].mxu0
    %v2494 = vadd.f32 0.0, %v2493
    %v2495 = vpop.f32.mrb[0].mxu0
    %v2496 = vpop.f32.mrb[0].mxu0
    %2497 = vdwg.mxu0
    %v2499 = vsel %vm2447, %v2401, 0
    %v2502 = vsel %vm384, %v2437, 0
    %v2505 = vsel %vm384, %v2438, 0
    %2507 = vmatprep.subr.bf16.mxu0 %v2505
    %2508 = vmatpush1.bf16.msra.mxu0 %v2502
    %2509 = vmatprep.subr.bf16.mxu0 0
    %2510 = vmatpush1.bf16.msra.mxu0 0
    %2511 = vmatprep.subr.bf16.mxu0 0
    %2512 = vmatpush1.bf16.msra.mxu0 0
    %2513 = vmatprep.subr.bf16.mxu0 0
    %2514 = vmatpush1.bf16.msra.mxu0 0
    %2515 = vmatprep.subr.bf16.mxu0 0
    %2516 = vmatpush1.bf16.msra.mxu0 0
    %2517 = vmatprep.subr.bf16.mxu0 0
    %2518 = vmatpush1.bf16.msra.mxu0 0
    %2519 = vmatprep.subr.bf16.mxu0 0
    %2520 = vmatpush1.bf16.msra.mxu0 0
    %2521 = vmatprep.subr.bf16.mxu0 0
    %2522 = vmatpush1.bf16.msra.mxu0 0
    %2523 = vmatprep.subr.bf16.mxu0 0
    %2524 = vmatpush1.bf16.msra.mxu0 0
    %2525 = vmatprep.subr.bf16.mxu0 0
    %2526 = vmatpush1.bf16.msra.mxu0 0
    %2527 = vmatprep.subr.bf16.mxu0 0
    %2528 = vmatpush1.bf16.msra.mxu0 0
    %2529 = vmatprep.subr.bf16.mxu0 0
    %2530 = vmatpush1.bf16.msra.mxu0 0
    %2531 = vmatprep.subr.bf16.mxu0 0
    %2532 = vmatpush1.bf16.msra.mxu0 0
    %2533 = vmatprep.subr.bf16.mxu0 0
    %2534 = vmatpush1.bf16.msra.mxu0 0
    %2535 = vmatprep.subr.bf16.mxu0 0
    %2536 = vmatpush1.bf16.msra.mxu0 0
    %2537 = vmatprep.subr.bf16.mxu0 0
    %2538 = vmatpush1.bf16.msra.mxu0 0
    %2539 = vmatprep.mubr.bf16.mxu0 0
    %2540 = vmatmul.mubr.bf16.gmra.mrb[0].mxu0 %v2499
    %v2541 = vpop.f32.mrb[0].mxu0
    %v2542 = vadd.f32 %v2492, %v2541
    %v2543 = vpop.f32.mrb[0].mxu0
    %v2544 = vadd.f32 %v2494, %v2543
    %v2545 = vpop.f32.mrb[0].mxu0
    %v2546 = vpop.f32.mrb[0].mxu0
    %2547 = vdwg.mxu0
    %v2550 = vrot.slane %v2542, 7
    %v2551 = vrot.slane %v2544, 7
    %2554 = vst [vmem:[#allocation3] sm:$0xfe] %v2550
    %2555 = vst [vmem:[#allocation3 + $0x8] sm:$0xfe] %v2551
    %2556 = vst [vmem:[#allocation3 + $0x10] sm:$0x1] %v2550
    %2557 = vst [vmem:[#allocation3 + $0x18] sm:$0x1] %v2551
    %v2558 = vmul.f32 %v1546, %v2407
    %v2559 = vmul.f32 %v1548, %v2411
    %v2560 = vadd.f32 %v2558, %v2428
    %v2561 = vadd.f32 %v2559, %v2432
    %v2562 = vmax.f32 %v2560, 0.0
    %v2563 = vmax.f32 %v2561, 0.0
    %v2564 = vpack.c.bf16 %v2562, %v2562
    %v2565 = vpack.c.bf16 %v2563, %v2563
    %v2566 = vmul.f32 %v2183, %v2407
    %v2567 = vmul.f32 %v2185, %v2411
    %v2568 = vadd.f32 %v2566, %v2428
    %v2569 = vadd.f32 %v2567, %v2432
    %v2570 = vmax.f32 %v2568, 0.0
    %v2571 = vmax.f32 %v2569, 0.0
    %v2572 = vpack.c.bf16 %v2570, %v2570
    %v2573 = vpack.c.bf16 %v2571, %v2571
    %v2575 = vsel %vm384, %v2572, 0
    %v2578 = vsel %vm384, %v2573, 0
    %2580 = vmatprep.subr.bf16.mxu0 %v2578
    %2581 = vmatpush1.bf16.msra.mxu0 %v2575
    %2582 = vmatprep.subr.bf16.mxu0 0
    %2583 = vmatpush1.bf16.msra.mxu0 0
    %2584 = vmatprep.subr.bf16.mxu0 0
    %2585 = vmatpush1.bf16.msra.mxu0 0
    %2586 = vmatprep.subr.bf16.mxu0 0
    %2587 = vmatpush1.bf16.msra.mxu0 0
    %2588 = vmatprep.subr.bf16.mxu0 0
    %2589 = vmatpush1.bf16.msra.mxu0 0
    %2590 = vmatprep.subr.bf16.mxu0 0
    %2591 = vmatpush1.bf16.msra.mxu0 0
    %2592 = vmatprep.subr.bf16.mxu0 0
    %2593 = vmatpush1.bf16.msra.mxu0 0
    %2594 = vmatprep.subr.bf16.mxu0 0
    %2595 = vmatpush1.bf16.msra.mxu0 0
    %2596 = vmatprep.subr.bf16.mxu0 0
    %2597 = vmatpush1.bf16.msra.mxu0 0
    %2598 = vmatprep.subr.bf16.mxu0 0
    %2599 = vmatpush1.bf16.msra.mxu0 0
    %2600 = vmatprep.subr.bf16.mxu0 0
    %2601 = vmatpush1.bf16.msra.mxu0 0
    %2602 = vmatprep.subr.bf16.mxu0 0
    %2603 = vmatpush1.bf16.msra.mxu0 0
    %2604 = vmatprep.subr.bf16.mxu0 0
    %2605 = vmatpush1.bf16.msra.mxu0 0
    %2606 = vmatprep.subr.bf16.mxu0 0
    %2607 = vmatpush1.bf16.msra.mxu0 0
    %2608 = vmatprep.subr.bf16.mxu0 0
    %2609 = vmatpush1.bf16.msra.mxu0 0
    %2610 = vmatprep.subr.bf16.mxu0 0
    %2611 = vmatpush1.bf16.msra.mxu0 0
    %2612 = vmatprep.mubr.bf16.mxu0 0
    %2613 = vmatmul.mubr.bf16.gmra.mrb[0].mxu0 %v2449
    %v2614 = vpop.f32.mrb[0].mxu0
    %v2615 = vadd.f32 0.0, %v2614
    %v2616 = vpop.f32.mrb[0].mxu0
    %v2617 = vadd.f32 0.0, %v2616
    %v2618 = vpop.f32.mrb[0].mxu0
    %v2619 = vpop.f32.mrb[0].mxu0
    %2620 = vdwg.mxu0
    %v2622 = vsel %vm384, %v2564, 0
    %v2625 = vsel %vm384, %v2565, 0
    %2627 = vmatprep.subr.bf16.mxu0 %v2625
    %2628 = vmatpush1.bf16.msra.mxu0 %v2622
    %2629 = vmatprep.subr.bf16.mxu0 0
    %2630 = vmatpush1.bf16.msra.mxu0 0
    %2631 = vmatprep.subr.bf16.mxu0 0
    %2632 = vmatpush1.bf16.msra.mxu0 0
    %2633 = vmatprep.subr.bf16.mxu0 0
    %2634 = vmatpush1.bf16.msra.mxu0 0
    %2635 = vmatprep.subr.bf16.mxu0 0
    %2636 = vmatpush1.bf16.msra.mxu0 0
    %2637 = vmatprep.subr.bf16.mxu0 0
    %2638 = vmatpush1.bf16.msra.mxu0 0
    %2639 = vmatprep.subr.bf16.mxu0 0
    %2640 = vmatpush1.bf16.msra.mxu0 0
    %2641 = vmatprep.subr.bf16.mxu0 0
    %2642 = vmatpush1.bf16.msra.mxu0 0
    %2643 = vmatprep.subr.bf16.mxu0 0
    %2644 = vmatpush1.bf16.msra.mxu0 0
    %2645 = vmatprep.subr.bf16.mxu0 0
    %2646 = vmatpush1.bf16.msra.mxu0 0
    %2647 = vmatprep.subr.bf16.mxu0 0
    %2648 = vmatpush1.bf16.msra.mxu0 0
    %2649 = vmatprep.subr.bf16.mxu0 0
    %2650 = vmatpush1.bf16.msra.mxu0 0
    %2651 = vmatprep.subr.bf16.mxu0 0
    %2652 = vmatpush1.bf16.msra.mxu0 0
    %2653 = vmatprep.subr.bf16.mxu0 0
    %2654 = vmatpush1.bf16.msra.mxu0 0
    %2655 = vmatprep.subr.bf16.mxu0 0
    %2656 = vmatpush1.bf16.msra.mxu0 0
    %2657 = vmatprep.subr.bf16.mxu0 0
    %2658 = vmatpush1.bf16.msra.mxu0 0
    %2659 = vmatprep.mubr.bf16.mxu0 0
    %2660 = vmatmul.mubr.bf16.gmra.mrb[0].mxu0 %v2499
    %v2661 = vpop.f32.mrb[0].mxu0
    %v2662 = vadd.f32 %v2615, %v2661
    %v2663 = vpop.f32.mrb[0].mxu0
    %v2664 = vadd.f32 %v2617, %v2663
    %v2665 = vpop.f32.mrb[0].mxu0
    %v2666 = vpop.f32.mrb[0].mxu0
    %2667 = vdwg.mxu0
    %v2670 = vrot.slane %v2662, 7
    %v2671 = vrot.slane %v2664, 7
    %s2674 = scalar_lea.vmem [#allocation3], 32
    %2675 = vst [vmem:[%s2674] sm:$0xfe] %v2670
    %2676 = vst [vmem:[%s2674 + $0x8] sm:$0xfe] %v2671
    %2677 = vst [vmem:[%s2674 + $0x10] sm:$0x1] %v2670
    %2678 = vst [vmem:[%s2674 + $0x18] sm:$0x1] %v2671
    %v2679 = vld [vmem:[#allocation3] sm:$0xff]
    %v2680 = vld [vmem:[#allocation3 + $0x8] sm:$0xff]
    %v2681 = vld [vmem:[#allocation3] sm:$0xfe]
    %v2682 = vld [vmem:[#allocation3 + $0x8] sm:$0xfe]
    %v2683 = vld [vmem:[#allocation3 + $0x10] sm:$0x1]
    %v2684 = vld [vmem:[#allocation3 + $0x18] sm:$0x1]
    %vm2689 = vcmask 1046528
    %v2690 = vrot.slane %v2681, 1
    %v2691 = vrot.slane %v2683, 1
    %v2692 = vsel %vm2689, %v2690, %v2691
    %v2693 = vrot.slane %v2682, 1
    %v2694 = vrot.slane %v2684, 1
    %v2695 = vsel %vm2689, %v2693, %v2694
    %v2698 = vld [vmem:[%s2674] sm:$0xff]
    %v2699 = vld [vmem:[%s2674 + $0x8] sm:$0xff]
    %v2700 = vld [vmem:[%s2674] sm:$0xfe]
    %v2701 = vld [vmem:[%s2674 + $0x8] sm:$0xfe]
    %v2702 = vld [vmem:[%s2674 + $0x10] sm:$0x1]
    %v2703 = vld [vmem:[%s2674 + $0x18] sm:$0x1]
    %v2708 = vrot.slane %v2700, 1
    %v2709 = vrot.slane %v2702, 1
    %v2710 = vsel %vm2689, %v2708, %v2709
    %v2711 = vrot.slane %v2701, 1
    %v2712 = vrot.slane %v2703, 1
    %v2713 = vsel %vm2689, %v2711, %v2712
    %v2716 = vpack.c.bf16 %v2698, %v2679
    %v2717 = vpack.c.bf16 %v2699, %v2680
    %v2718 = vpack.c.bf16 %v2710, %v2692
    %v2719 = vpack.c.bf16 %v2713, %v2695
    %v2720 = vld [vmem:[#allocation3] sm:$0xfc]
    %v2721 = vld [vmem:[#allocation3 + $0x8] sm:$0xfc]
    %v2722 = vld [vmem:[#allocation3 + $0x10] sm:$0x3]
    %v2723 = vld [vmem:[#allocation3 + $0x18] sm:$0x3]
    %v2728 = vrot.slane %v2720, 1
    %v2729 = vrot.slane %v2722, 1
    %v2730 = vsel %vm2689, %v2728, %v2729
    %v2731 = vrot.slane %v2721, 1
    %v2732 = vrot.slane %v2723, 1
    %v2733 = vsel %vm2689, %v2731, %v2732
    %v2734 = vld [vmem:[%s2674] sm:$0xfc]
    %v2735 = vld [vmem:[%s2674 + $0x8] sm:$0xfc]
    %v2736 = vld [vmem:[%s2674 + $0x10] sm:$0x3]
    %v2737 = vld [vmem:[%s2674 + $0x18] sm:$0x3]
    %v2742 = vrot.slane %v2734, 1
    %v2743 = vrot.slane %v2736, 1
    %v2744 = vsel %vm2689, %v2742, %v2743
    %v2745 = vrot.slane %v2735, 1
    %v2746 = vrot.slane %v2737, 1
    %v2747 = vsel %vm2689, %v2745, %v2746
    %v2748 = vrot.slane %v2730, 1
    %v2749 = vrot.slane %v2729, 1
    %v2750 = vsel %vm2689, %v2748, %v2749
    %v2751 = vrot.slane %v2733, 1
    %v2752 = vrot.slane %v2732, 1
    %v2753 = vsel %vm2689, %v2751, %v2752
    %v2756 = vrot.slane %v2744, 1
    %v2757 = vrot.slane %v2743, 1
    %v2758 = vsel %vm2689, %v2756, %v2757
    %v2759 = vrot.slane %v2747, 1
    %v2760 = vrot.slane %v2746, 1
    %v2761 = vsel %vm2689, %v2759, %v2760
    %v2764 = vpack.c.bf16 %v2758, %v2750
    %v2765 = vpack.c.bf16 %v2761, %v2753
    %v2766 = vld [vmem:[#allocation6] sm:$0xff]
    %v2767 = vld [vmem:[#allocation6 + $0x8] sm:$0xff]
    %v2768 = vld [vmem:[#allocation6 + $0x10] sm:$0xff]
    %v2769 = vld [vmem:[#allocation6 + $0x18] sm:$0xff]
    %v2770 = vld [vmem:[#allocation6 + $0x20] sm:$0xff]
    %v2771 = vld [vmem:[#allocation6 + $0x28] sm:$0xff]
    %v2772 = vld [vmem:[#allocation6 + $0x30] sm:$0xff]
    %v2773 = vld [vmem:[#allocation6 + $0x38] sm:$0xff]
    %v2774 = vld [vmem:[#allocation6 + $0x40] sm:$0xff]
    %v2775 = vld [vmem:[#allocation6 + $0x48] sm:$0xff]
    %v2776 = vld [vmem:[#allocation6 + $0x50] sm:$0xff]
    %v2777 = vld [vmem:[#allocation6 + $0x58] sm:$0xff]
    %v2778 = vld [vmem:[#allocation6 + $0x60] sm:$0xff]
    %v2779 = vld [vmem:[#allocation6 + $0x68] sm:$0xff]
    %v2780 = vld [vmem:[#allocation6 + $0x70] sm:$0xff]
    %v2781 = vld [vmem:[#allocation6 + $0x78] sm:$0xff]
    %v2782 = vld [vmem:[#allocation6 + $0x80] sm:$0xff]
    %v2783 = vld [vmem:[#allocation6 + $0x88] sm:$0xff]
    %v2784 = vld [vmem:[#allocation6 + $0x90] sm:$0xff]
    %v2785 = vld [vmem:[#allocation6 + $0x98] sm:$0xff]
    %v2786 = vld [vmem:[#allocation6 + $0xa0] sm:$0xff]
    %v2787 = vld [vmem:[#allocation6 + $0xa8] sm:$0xff]
    %v2788 = vld [vmem:[#allocation6 + $0xb0] sm:$0xff]
    %v2789 = vld [vmem:[#allocation6 + $0xb8] sm:$0xff]
    %v2790 = vld [vmem:[#allocation6 + $0xc0] sm:$0xff]
    %v2791 = vld [vmem:[#allocation6 + $0xc8] sm:$0xff]
    %v2792 = vld [vmem:[#allocation6 + $0xd0] sm:$0xff]
    %v2793 = vld [vmem:[#allocation6 + $0xd8] sm:$0xff]
    %v2794 = vld [vmem:[#allocation6 + $0xe0] sm:$0xff]
    %v2795 = vld [vmem:[#allocation6 + $0xe8] sm:$0xff]
    %v2796 = vld [vmem:[#allocation6 + $0xf0] sm:$0xff]
    %v2797 = vld [vmem:[#allocation6 + $0xf8] sm:$0xff]
    %v2798 = vld [vmem:[#allocation6 + $0x100] sm:$0xff]
    %v2799 = vld [vmem:[#allocation6 + $0x108] sm:$0xff]
    %v2800 = vld [vmem:[#allocation6 + $0x110] sm:$0xff]
    %v2801 = vld [vmem:[#allocation6 + $0x118] sm:$0xff]
    %v2802 = vld [vmem:[#allocation6 + $0x120] sm:$0xff]
    %v2803 = vld [vmem:[#allocation6 + $0x128] sm:$0xff]
    %v2804 = vld [vmem:[#allocation6 + $0x130] sm:$0xff]
    %v2805 = vld [vmem:[#allocation6 + $0x138] sm:$0xff]
    %v2806 = vld [vmem:[#allocation6 + $0x140] sm:$0xff]
    %v2807 = vld [vmem:[#allocation6 + $0x148] sm:$0xff]
    %v2808 = vld [vmem:[#allocation6 + $0x150] sm:$0xff]
    %v2809 = vld [vmem:[#allocation6 + $0x158] sm:$0xff]
    %v2810 = vld [vmem:[#allocation6 + $0x160] sm:$0xff]
    %v2811 = vld [vmem:[#allocation6 + $0x168] sm:$0xff]
    %v2812 = vld [vmem:[#allocation6 + $0x170] sm:$0xff]
    %v2813 = vld [vmem:[#allocation6 + $0x178] sm:$0xff]
    %v2814 = vld [vmem:[#allocation6 + $0x180] sm:$0xff]
    %v2815 = vld [vmem:[#allocation6 + $0x188] sm:$0xff]
    %v2816 = vld [vmem:[#allocation6 + $0x190] sm:$0xff]
    %v2817 = vld [vmem:[#allocation6 + $0x198] sm:$0xff]
    %v2818 = vld [vmem:[#allocation6 + $0x1a0] sm:$0xff]
    %v2819 = vld [vmem:[#allocation6 + $0x1a8] sm:$0xff]
    %v2820 = vld [vmem:[#allocation6 + $0x1b0] sm:$0xff]
    %v2821 = vld [vmem:[#allocation6 + $0x1b8] sm:$0xff]
    %v2822 = vld [vmem:[#allocation6 + $0x1c0] sm:$0xff]
    %v2823 = vld [vmem:[#allocation6 + $0x1c8] sm:$0xff]
    %v2824 = vld [vmem:[#allocation6 + $0x1d0] sm:$0xff]
    %v2825 = vld [vmem:[#allocation6 + $0x1d8] sm:$0xff]
    %v2826 = vld [vmem:[#allocation6 + $0x1e0] sm:$0xff]
    %v2827 = vld [vmem:[#allocation6 + $0x1e8] sm:$0xff]
    %v2828 = vld [vmem:[#allocation6 + $0x1f0] sm:$0xff]
    %v2829 = vld [vmem:[#allocation6 + $0x1f8] sm:$0xff]
    %v2894 = vunpack.c.l.b16 %v2766
    %v2895 = vunpack.c.h.b16 %v2766
    %v2896 = vunpack.c.l.b16 %v2767
    %v2897 = vunpack.c.h.b16 %v2767
    %v2898 = vunpack.c.l.b16 %v2768
    %v2899 = vunpack.c.h.b16 %v2768
    %v2900 = vunpack.c.l.b16 %v2769
    %v2901 = vunpack.c.h.b16 %v2769
    %v2902 = vunpack.c.l.b16 %v2770
    %v2903 = vunpack.c.h.b16 %v2770
    %v2904 = vunpack.c.l.b16 %v2771
    %v2905 = vunpack.c.h.b16 %v2771
    %v2906 = vunpack.c.l.b16 %v2772
    %v2907 = vunpack.c.h.b16 %v2772
    %v2908 = vunpack.c.l.b16 %v2773
    %v2909 = vunpack.c.h.b16 %v2773
    %v2910 = vunpack.c.l.b16 %v2774
    %v2911 = vunpack.c.h.b16 %v2774
    %v2912 = vunpack.c.l.b16 %v2775
    %v2913 = vunpack.c.h.b16 %v2775
    %v2914 = vunpack.c.l.b16 %v2776
    %v2915 = vunpack.c.h.b16 %v2776
    %v2916 = vunpack.c.l.b16 %v2777
    %v2917 = vunpack.c.h.b16 %v2777
    %v2918 = vunpack.c.l.b16 %v2778
    %v2919 = vunpack.c.h.b16 %v2778
    %v2920 = vunpack.c.l.b16 %v2779
    %v2921 = vunpack.c.h.b16 %v2779
    %v2922 = vunpack.c.l.b16 %v2780
    %v2923 = vunpack.c.h.b16 %v2780
    %v2924 = vunpack.c.l.b16 %v2781
    %v2925 = vunpack.c.h.b16 %v2781
    %v2926 = vunpack.c.l.b16 %v2782
    %v2927 = vunpack.c.h.b16 %v2782
    %v2928 = vunpack.c.l.b16 %v2783
    %v2929 = vunpack.c.h.b16 %v2783
    %v2930 = vunpack.c.l.b16 %v2784
    %v2931 = vunpack.c.h.b16 %v2784
    %v2932 = vunpack.c.l.b16 %v2785
    %v2933 = vunpack.c.h.b16 %v2785
    %v2934 = vunpack.c.l.b16 %v2786
    %v2935 = vunpack.c.h.b16 %v2786
    %v2936 = vunpack.c.l.b16 %v2787
    %v2937 = vunpack.c.h.b16 %v2787
    %v2938 = vunpack.c.l.b16 %v2788
    %v2939 = vunpack.c.h.b16 %v2788
    %v2940 = vunpack.c.l.b16 %v2789
    %v2941 = vunpack.c.h.b16 %v2789
    %v2942 = vunpack.c.l.b16 %v2790
    %v2943 = vunpack.c.h.b16 %v2790
    %v2944 = vunpack.c.l.b16 %v2791
    %v2945 = vunpack.c.h.b16 %v2791
    %v2946 = vunpack.c.l.b16 %v2792
    %v2947 = vunpack.c.h.b16 %v2792
    %v2948 = vunpack.c.l.b16 %v2793
    %v2949 = vunpack.c.h.b16 %v2793
    %v2950 = vunpack.c.l.b16 %v2794
    %v2951 = vunpack.c.h.b16 %v2794
    %v2952 = vunpack.c.l.b16 %v2795
    %v2953 = vunpack.c.h.b16 %v2795
    %v2954 = vunpack.c.l.b16 %v2796
    %v2955 = vunpack.c.h.b16 %v2796
    %v2956 = vunpack.c.l.b16 %v2797
    %v2957 = vunpack.c.h.b16 %v2797
    %v2958 = vunpack.c.l.b16 %v2798
    %v2959 = vunpack.c.h.b16 %v2798
    %v2960 = vunpack.c.l.b16 %v2799
    %v2961 = vunpack.c.h.b16 %v2799
    %v2962 = vunpack.c.l.b16 %v2800
    %v2963 = vunpack.c.h.b16 %v2800
    %v2964 = vunpack.c.l.b16 %v2801
    %v2965 = vunpack.c.h.b16 %v2801
    %v2966 = vunpack.c.l.b16 %v2802
    %v2967 = vunpack.c.h.b16 %v2802
    %v2968 = vunpack.c.l.b16 %v2803
    %v2969 = vunpack.c.h.b16 %v2803
    %v2970 = vunpack.c.l.b16 %v2804
    %v2971 = vunpack.c.h.b16 %v2804
    %v2972 = vunpack.c.l.b16 %v2805
    %v2973 = vunpack.c.h.b16 %v2805
    %v2974 = vunpack.c.l.b16 %v2806
    %v2975 = vunpack.c.h.b16 %v2806
    %v2976 = vunpack.c.l.b16 %v2807
    %v2977 = vunpack.c.h.b16 %v2807
    %v2978 = vunpack.c.l.b16 %v2808
    %v2979 = vunpack.c.h.b16 %v2808
    %v2980 = vunpack.c.l.b16 %v2809
    %v2981 = vunpack.c.h.b16 %v2809
    %v2982 = vunpack.c.l.b16 %v2810
    %v2983 = vunpack.c.h.b16 %v2810
    %v2984 = vunpack.c.l.b16 %v2811
    %v2985 = vunpack.c.h.b16 %v2811
    %v2986 = vunpack.c.l.b16 %v2812
    %v2987 = vunpack.c.h.b16 %v2812
    %v2988 = vunpack.c.l.b16 %v2813
    %v2989 = vunpack.c.h.b16 %v2813
    %v2990 = vunpack.c.l.b16 %v2814
    %v2991 = vunpack.c.h.b16 %v2814
    %v2992 = vunpack.c.l.b16 %v2815
    %v2993 = vunpack.c.h.b16 %v2815
    %v2994 = vunpack.c.l.b16 %v2816
    %v2995 = vunpack.c.h.b16 %v2816
    %v2996 = vunpack.c.l.b16 %v2817
    %v2997 = vunpack.c.h.b16 %v2817
    %v2998 = vunpack.c.l.b16 %v2818
    %v2999 = vunpack.c.h.b16 %v2818
    %v3000 = vunpack.c.l.b16 %v2819
    %v3001 = vunpack.c.h.b16 %v2819
    %v3002 = vunpack.c.l.b16 %v2820
    %v3003 = vunpack.c.h.b16 %v2820
    %v3004 = vunpack.c.l.b16 %v2821
    %v3005 = vunpack.c.h.b16 %v2821
    %v3006 = vunpack.c.l.b16 %v2822
    %v3007 = vunpack.c.h.b16 %v2822
    %v3008 = vunpack.c.l.b16 %v2823
    %v3009 = vunpack.c.h.b16 %v2823
    %v3010 = vunpack.c.l.b16 %v2824
    %v3011 = vunpack.c.h.b16 %v2824
    %v3012 = vunpack.c.l.b16 %v2825
    %v3013 = vunpack.c.h.b16 %v2825
    %v3014 = vunpack.c.l.b16 %v2826
    %v3015 = vunpack.c.h.b16 %v2826
    %v3016 = vunpack.c.l.b16 %v2827
    %v3017 = vunpack.c.h.b16 %v2827
    %v3018 = vunpack.c.l.b16 %v2828
    %v3019 = vunpack.c.h.b16 %v2828
    %v3020 = vunpack.c.l.b16 %v2829
    %v3021 = vunpack.c.h.b16 %v2829
    %v3022 = vpack.c.b16 %v2896, %v2894
    %v3023 = vpack.c.b16 %v2897, %v2895
    %v3024 = vpack.c.b16 %v2900, %v2898
    %v3025 = vpack.c.b16 %v2901, %v2899
    %v3026 = vpack.c.b16 %v2904, %v2902
    %v3027 = vpack.c.b16 %v2905, %v2903
    %v3028 = vpack.c.b16 %v2908, %v2906
    %v3029 = vpack.c.b16 %v2909, %v2907
    %v3030 = vpack.c.b16 %v2912, %v2910
    %v3031 = vpack.c.b16 %v2913, %v2911
    %v3032 = vpack.c.b16 %v2916, %v2914
    %v3033 = vpack.c.b16 %v2917, %v2915
    %v3034 = vpack.c.b16 %v2920, %v2918
    %v3035 = vpack.c.b16 %v2921, %v2919
    %v3036 = vpack.c.b16 %v2924, %v2922
    %v3037 = vpack.c.b16 %v2925, %v2923
    %v3038 = vpack.c.b16 %v2928, %v2926
    %v3039 = vpack.c.b16 %v2929, %v2927
    %v3040 = vpack.c.b16 %v2932, %v2930
    %v3041 = vpack.c.b16 %v2933, %v2931
    %v3042 = vpack.c.b16 %v2936, %v2934
    %v3043 = vpack.c.b16 %v2937, %v2935
    %v3044 = vpack.c.b16 %v2940, %v2938
    %v3045 = vpack.c.b16 %v2941, %v2939
    %v3046 = vpack.c.b16 %v2944, %v2942
    %v3047 = vpack.c.b16 %v2945, %v2943
    %v3048 = vpack.c.b16 %v2948, %v2946
    %v3049 = vpack.c.b16 %v2949, %v2947
    %v3050 = vpack.c.b16 %v2952, %v2950
    %v3051 = vpack.c.b16 %v2953, %v2951
    %v3052 = vpack.c.b16 %v2956, %v2954
    %v3053 = vpack.c.b16 %v2957, %v2955
    %v3054 = vpack.c.b16 %v2960, %v2958
    %v3055 = vpack.c.b16 %v2961, %v2959
    %v3056 = vpack.c.b16 %v2964, %v2962
    %v3057 = vpack.c.b16 %v2965, %v2963
    %v3058 = vpack.c.b16 %v2968, %v2966
    %v3059 = vpack.c.b16 %v2969, %v2967
    %v3060 = vpack.c.b16 %v2972, %v2970
    %v3061 = vpack.c.b16 %v2973, %v2971
    %v3062 = vpack.c.b16 %v2976, %v2974
    %v3063 = vpack.c.b16 %v2977, %v2975
    %v3064 = vpack.c.b16 %v2980, %v2978
    %v3065 = vpack.c.b16 %v2981, %v2979
    %v3066 = vpack.c.b16 %v2984, %v2982
    %v3067 = vpack.c.b16 %v2985, %v2983
    %v3068 = vpack.c.b16 %v2988, %v2986
    %v3069 = vpack.c.b16 %v2989, %v2987
    %v3070 = vpack.c.b16 %v2992, %v2990
    %v3071 = vpack.c.b16 %v2993, %v2991
    %v3072 = vpack.c.b16 %v2996, %v2994
    %v3073 = vpack.c.b16 %v2997, %v2995
    %v3074 = vpack.c.b16 %v3000, %v2998
    %v3075 = vpack.c.b16 %v3001, %v2999
    %v3076 = vpack.c.b16 %v3004, %v3002
    %v3077 = vpack.c.b16 %v3005, %v3003
    %v3078 = vpack.c.b16 %v3008, %v3006
    %v3079 = vpack.c.b16 %v3009, %v3007
    %v3080 = vpack.c.b16 %v3012, %v3010
    %v3081 = vpack.c.b16 %v3013, %v3011
    %v3082 = vpack.c.b16 %v3016, %v3014
    %v3083 = vpack.c.b16 %v3017, %v3015
    %v3084 = vpack.c.b16 %v3020, %v3018
    %v3085 = vpack.c.b16 %v3021, %v3019
    %3150 = vmatprep.subr.bf16.mxu0 %v3023
    %3151 = vmatpush1.bf16.msra.mxu0 %v3022
    %3152 = vmatprep.subr.bf16.mxu0 %v3025
    %3153 = vmatpush1.bf16.msra.mxu0 %v3024
    %3154 = vmatprep.subr.bf16.mxu0 %v3027
    %3155 = vmatpush1.bf16.msra.mxu0 %v3026
    %3156 = vmatprep.subr.bf16.mxu0 %v3029
    %3157 = vmatpush1.bf16.msra.mxu0 %v3028
    %3158 = vmatprep.subr.bf16.mxu0 %v3031
    %3159 = vmatpush1.bf16.msra.mxu0 %v3030
    %3160 = vmatprep.subr.bf16.mxu0 %v3033
    %3161 = vmatpush1.bf16.msra.mxu0 %v3032
    %3162 = vmatprep.subr.bf16.mxu0 %v3035
    %3163 = vmatpush1.bf16.msra.mxu0 %v3034
    %3164 = vmatprep.subr.bf16.mxu0 %v3037
    %3165 = vmatpush1.bf16.msra.mxu0 %v3036
    %3166 = vmatprep.subr.bf16.mxu0 %v3039
    %3167 = vmatpush1.bf16.msra.mxu0 %v3038
    %3168 = vmatprep.subr.bf16.mxu0 %v3041
    %3169 = vmatpush1.bf16.msra.mxu0 %v3040
    %3170 = vmatprep.subr.bf16.mxu0 %v3043
    %3171 = vmatpush1.bf16.msra.mxu0 %v3042
    %3172 = vmatprep.subr.bf16.mxu0 %v3045
    %3173 = vmatpush1.bf16.msra.mxu0 %v3044
    %3174 = vmatprep.subr.bf16.mxu0 %v3047
    %3175 = vmatpush1.bf16.msra.mxu0 %v3046
    %3176 = vmatprep.subr.bf16.mxu0 %v3049
    %3177 = vmatpush1.bf16.msra.mxu0 %v3048
    %3178 = vmatprep.subr.bf16.mxu0 %v3051
    %3179 = vmatpush1.bf16.msra.mxu0 %v3050
    %3180 = vmatprep.subr.bf16.mxu0 %v3053
    %3181 = vmatpush1.bf16.msra.mxu0 %v3052
    %3182 = vmatprep.mubr.bf16.mxu0 %v2717
    %3183 = vmatmul.mubr.bf16.gmra.mrb[0].mxu0 %v2716
    %v3184 = vpop.f32.mrb[0].mxu0
    %v3185 = vadd.f32 0.0, %v3184
    %v3186 = vpop.f32.mrb[0].mxu0
    %v3187 = vadd.f32 0.0, %v3186
    %v3188 = vpop.f32.mrb[0].mxu0
    %v3189 = vadd.f32 0.0, %v3188
    %v3190 = vpop.f32.mrb[0].mxu0
    %v3191 = vadd.f32 0.0, %v3190
    %3192 = vdwg.mxu0
    %3193 = vmatprep.subr.bf16.mxu0 %v3055
    %3194 = vmatpush1.bf16.msra.mxu0 %v3054
    %3195 = vmatprep.subr.bf16.mxu0 %v3057
    %3196 = vmatpush1.bf16.msra.mxu0 %v3056
    %3197 = vmatprep.subr.bf16.mxu0 %v3059
    %3198 = vmatpush1.bf16.msra.mxu0 %v3058
    %3199 = vmatprep.subr.bf16.mxu0 %v3061
    %3200 = vmatpush1.bf16.msra.mxu0 %v3060
    %3201 = vmatprep.subr.bf16.mxu0 %v3063
    %3202 = vmatpush1.bf16.msra.mxu0 %v3062
    %3203 = vmatprep.subr.bf16.mxu0 %v3065
    %3204 = vmatpush1.bf16.msra.mxu0 %v3064
    %3205 = vmatprep.subr.bf16.mxu0 %v3067
    %3206 = vmatpush1.bf16.msra.mxu0 %v3066
    %3207 = vmatprep.subr.bf16.mxu0 %v3069
    %3208 = vmatpush1.bf16.msra.mxu0 %v3068
    %3209 = vmatprep.subr.bf16.mxu0 %v3071
    %3210 = vmatpush1.bf16.msra.mxu0 %v3070
    %3211 = vmatprep.subr.bf16.mxu0 %v3073
    %3212 = vmatpush1.bf16.msra.mxu0 %v3072
    %3213 = vmatprep.subr.bf16.mxu0 %v3075
    %3214 = vmatpush1.bf16.msra.mxu0 %v3074
    %3215 = vmatprep.subr.bf16.mxu0 %v3077
    %3216 = vmatpush1.bf16.msra.mxu0 %v3076
    %3217 = vmatprep.subr.bf16.mxu0 %v3079
    %3218 = vmatpush1.bf16.msra.mxu0 %v3078
    %3219 = vmatprep.subr.bf16.mxu0 %v3081
    %3220 = vmatpush1.bf16.msra.mxu0 %v3080
    %3221 = vmatprep.subr.bf16.mxu0 %v3083
    %3222 = vmatpush1.bf16.msra.mxu0 %v3082
    %3223 = vmatprep.subr.bf16.mxu0 %v3085
    %3224 = vmatpush1.bf16.msra.mxu0 %v3084
    %3225 = vmatprep.mubr.bf16.mxu0 %v2719
    %3226 = vmatmul.mubr.bf16.gmra.mrb[0].mxu0 %v2718
    %v3227 = vpop.f32.mrb[0].mxu0
    %v3228 = vadd.f32 %v3185, %v3227
    %v3229 = vpop.f32.mrb[0].mxu0
    %v3230 = vadd.f32 %v3187, %v3229
    %v3231 = vpop.f32.mrb[0].mxu0
    %v3232 = vadd.f32 %v3189, %v3231
    %v3233 = vpop.f32.mrb[0].mxu0
    %v3234 = vadd.f32 %v3191, %v3233
    %3235 = vdwg.mxu0
    %s3236 = scalar_lea.vmem [#allocation6], 512
    %v3237 = vld [vmem:[%s3236] sm:$0xff]
    %v3238 = vld [vmem:[%s3236 + $0x8] sm:$0xff]
    %v3239 = vld [vmem:[%s3236 + $0x10] sm:$0xff]
    %v3240 = vld [vmem:[%s3236 + $0x18] sm:$0xff]
    %v3241 = vld [vmem:[%s3236 + $0x20] sm:$0xff]
    %v3242 = vld [vmem:[%s3236 + $0x28] sm:$0xff]
    %v3243 = vld [vmem:[%s3236 + $0x30] sm:$0xff]
    %v3244 = vld [vmem:[%s3236 + $0x38] sm:$0xff]
    %v3245 = vld [vmem:[%s3236 + $0x40] sm:$0xff]
    %v3246 = vld [vmem:[%s3236 + $0x48] sm:$0xff]
    %v3247 = vld [vmem:[%s3236 + $0x50] sm:$0xff]
    %v3248 = vld [vmem:[%s3236 + $0x58] sm:$0xff]
    %v3249 = vld [vmem:[%s3236 + $0x60] sm:$0xff]
    %v3250 = vld [vmem:[%s3236 + $0x68] sm:$0xff]
    %v3251 = vld [vmem:[%s3236 + $0x70] sm:$0xff]
    %v3252 = vld [vmem:[%s3236 + $0x78] sm:$0xff]
    %v3253 = vld [vmem:[%s3236 + $0x80] sm:$0xff]
    %v3254 = vld [vmem:[%s3236 + $0x88] sm:$0xff]
    %v3255 = vld [vmem:[%s3236 + $0x90] sm:$0xff]
    %v3256 = vld [vmem:[%s3236 + $0x98] sm:$0xff]
    %v3257 = vld [vmem:[%s3236 + $0xa0] sm:$0xff]
    %v3258 = vld [vmem:[%s3236 + $0xa8] sm:$0xff]
    %v3259 = vld [vmem:[%s3236 + $0xb0] sm:$0xff]
    %v3260 = vld [vmem:[%s3236 + $0xb8] sm:$0xff]
    %v3261 = vld [vmem:[%s3236 + $0xc0] sm:$0xff]
    %v3262 = vld [vmem:[%s3236 + $0xc8] sm:$0xff]
    %v3263 = vld [vmem:[%s3236 + $0xd0] sm:$0xff]
    %v3264 = vld [vmem:[%s3236 + $0xd8] sm:$0xff]
    %v3265 = vld [vmem:[%s3236 + $0xe0] sm:$0xff]
    %v3266 = vld [vmem:[%s3236 + $0xe8] sm:$0xff]
    %v3267 = vld [vmem:[%s3236 + $0xf0] sm:$0xff]
    %v3268 = vld [vmem:[%s3236 + $0xf8] sm:$0xff]
    %v3269 = vld [vmem:[%s3236 + $0x100] sm:$0xff]
    %v3270 = vld [vmem:[%s3236 + $0x108] sm:$0xff]
    %v3271 = vld [vmem:[%s3236 + $0x110] sm:$0xff]
    %v3272 = vld [vmem:[%s3236 + $0x118] sm:$0xff]
    %v3273 = vld [vmem:[%s3236 + $0x120] sm:$0xff]
    %v3274 = vld [vmem:[%s3236 + $0x128] sm:$0xff]
    %v3275 = vld [vmem:[%s3236 + $0x130] sm:$0xff]
    %v3276 = vld [vmem:[%s3236 + $0x138] sm:$0xff]
    %v3277 = vld [vmem:[%s3236 + $0x140] sm:$0xff]
    %v3278 = vld [vmem:[%s3236 + $0x148] sm:$0xff]
    %v3279 = vld [vmem:[%s3236 + $0x150] sm:$0xff]
    %v3280 = vld [vmem:[%s3236 + $0x158] sm:$0xff]
    %v3281 = vld [vmem:[%s3236 + $0x160] sm:$0xff]
    %v3282 = vld [vmem:[%s3236 + $0x168] sm:$0xff]
    %v3283 = vld [vmem:[%s3236 + $0x170] sm:$0xff]
    %v3284 = vld [vmem:[%s3236 + $0x178] sm:$0xff]
    %v3285 = vld [vmem:[%s3236 + $0x180] sm:$0xff]
    %v3286 = vld [vmem:[%s3236 + $0x188] sm:$0xff]
    %v3287 = vld [vmem:[%s3236 + $0x190] sm:$0xff]
    %v3288 = vld [vmem:[%s3236 + $0x198] sm:$0xff]
    %v3289 = vld [vmem:[%s3236 + $0x1a0] sm:$0xff]
    %v3290 = vld [vmem:[%s3236 + $0x1a8] sm:$0xff]
    %v3291 = vld [vmem:[%s3236 + $0x1b0] sm:$0xff]
    %v3292 = vld [vmem:[%s3236 + $0x1b8] sm:$0xff]
    %v3293 = vld [vmem:[%s3236 + $0x1c0] sm:$0xff]
    %v3294 = vld [vmem:[%s3236 + $0x1c8] sm:$0xff]
    %v3295 = vld [vmem:[%s3236 + $0x1d0] sm:$0xff]
    %v3296 = vld [vmem:[%s3236 + $0x1d8] sm:$0xff]
    %v3297 = vld [vmem:[%s3236 + $0x1e0] sm:$0xff]
    %v3298 = vld [vmem:[%s3236 + $0x1e8] sm:$0xff]
    %v3299 = vld [vmem:[%s3236 + $0x1f0] sm:$0xff]
    %v3300 = vld [vmem:[%s3236 + $0x1f8] sm:$0xff]
    %v3365 = vunpack.c.l.b16 %v3237
    %v3366 = vunpack.c.h.b16 %v3237
    %v3367 = vunpack.c.l.b16 %v3238
    %v3368 = vunpack.c.h.b16 %v3238
    %v3369 = vunpack.c.l.b16 %v3239
    %v3370 = vunpack.c.h.b16 %v3239
    %v3371 = vunpack.c.l.b16 %v3240
    %v3372 = vunpack.c.h.b16 %v3240
    %v3373 = vunpack.c.l.b16 %v3241
    %v3374 = vunpack.c.h.b16 %v3241
    %v3375 = vunpack.c.l.b16 %v3242
    %v3376 = vunpack.c.h.b16 %v3242
    %v3377 = vunpack.c.l.b16 %v3243
    %v3378 = vunpack.c.h.b16 %v3243
    %v3379 = vunpack.c.l.b16 %v3244
    %v3380 = vunpack.c.h.b16 %v3244
    %v3381 = vunpack.c.l.b16 %v3245
    %v3382 = vunpack.c.h.b16 %v3245
    %v3383 = vunpack.c.l.b16 %v3246
    %v3384 = vunpack.c.h.b16 %v3246
    %v3385 = vunpack.c.l.b16 %v3247
    %v3386 = vunpack.c.h.b16 %v3247
    %v3387 = vunpack.c.l.b16 %v3248
    %v3388 = vunpack.c.h.b16 %v3248
    %v3389 = vunpack.c.l.b16 %v3249
    %v3390 = vunpack.c.h.b16 %v3249
    %v3391 = vunpack.c.l.b16 %v3250
    %v3392 = vunpack.c.h.b16 %v3250
    %v3393 = vunpack.c.l.b16 %v3251
    %v3394 = vunpack.c.h.b16 %v3251
    %v3395 = vunpack.c.l.b16 %v3252
    %v3396 = vunpack.c.h.b16 %v3252
    %v3397 = vunpack.c.l.b16 %v3253
    %v3398 = vunpack.c.h.b16 %v3253
    %v3399 = vunpack.c.l.b16 %v3254
    %v3400 = vunpack.c.h.b16 %v3254
    %v3401 = vunpack.c.l.b16 %v3255
    %v3402 = vunpack.c.h.b16 %v3255
    %v3403 = vunpack.c.l.b16 %v3256
    %v3404 = vunpack.c.h.b16 %v3256
    %v3405 = vunpack.c.l.b16 %v3257
    %v3406 = vunpack.c.h.b16 %v3257
    %v3407 = vunpack.c.l.b16 %v3258
    %v3408 = vunpack.c.h.b16 %v3258
    %v3409 = vunpack.c.l.b16 %v3259
    %v3410 = vunpack.c.h.b16 %v3259
    %v3411 = vunpack.c.l.b16 %v3260
    %v3412 = vunpack.c.h.b16 %v3260
    %v3413 = vunpack.c.l.b16 %v3261
    %v3414 = vunpack.c.h.b16 %v3261
    %v3415 = vunpack.c.l.b16 %v3262
    %v3416 = vunpack.c.h.b16 %v3262
    %v3417 = vunpack.c.l.b16 %v3263
    %v3418 = vunpack.c.h.b16 %v3263
    %v3419 = vunpack.c.l.b16 %v3264
    %v3420 = vunpack.c.h.b16 %v3264
    %v3421 = vunpack.c.l.b16 %v3265
    %v3422 = vunpack.c.h.b16 %v3265
    %v3423 = vunpack.c.l.b16 %v3266
    %v3424 = vunpack.c.h.b16 %v3266
    %v3425 = vunpack.c.l.b16 %v3267
    %v3426 = vunpack.c.h.b16 %v3267
    %v3427 = vunpack.c.l.b16 %v3268
    %v3428 = vunpack.c.h.b16 %v3268
    %v3429 = vunpack.c.l.b16 %v3269
    %v3430 = vunpack.c.h.b16 %v3269
    %v3431 = vunpack.c.l.b16 %v3270
    %v3432 = vunpack.c.h.b16 %v3270
    %v3433 = vunpack.c.l.b16 %v3271
    %v3434 = vunpack.c.h.b16 %v3271
    %v3435 = vunpack.c.l.b16 %v3272
    %v3436 = vunpack.c.h.b16 %v3272
    %v3437 = vunpack.c.l.b16 %v3273
    %v3438 = vunpack.c.h.b16 %v3273
    %v3439 = vunpack.c.l.b16 %v3274
    %v3440 = vunpack.c.h.b16 %v3274
    %v3441 = vunpack.c.l.b16 %v3275
    %v3442 = vunpack.c.h.b16 %v3275
    %v3443 = vunpack.c.l.b16 %v3276
    %v3444 = vunpack.c.h.b16 %v3276
    %v3445 = vunpack.c.l.b16 %v3277
    %v3446 = vunpack.c.h.b16 %v3277
    %v3447 = vunpack.c.l.b16 %v3278
    %v3448 = vunpack.c.h.b16 %v3278
    %v3449 = vunpack.c.l.b16 %v3279
    %v3450 = vunpack.c.h.b16 %v3279
    %v3451 = vunpack.c.l.b16 %v3280
    %v3452 = vunpack.c.h.b16 %v3280
    %v3453 = vunpack.c.l.b16 %v3281
    %v3454 = vunpack.c.h.b16 %v3281
    %v3455 = vunpack.c.l.b16 %v3282
    %v3456 = vunpack.c.h.b16 %v3282
    %v3457 = vunpack.c.l.b16 %v3283
    %v3458 = vunpack.c.h.b16 %v3283
    %v3459 = vunpack.c.l.b16 %v3284
    %v3460 = vunpack.c.h.b16 %v3284
    %v3461 = vunpack.c.l.b16 %v3285
    %v3462 = vunpack.c.h.b16 %v3285
    %v3463 = vunpack.c.l.b16 %v3286
    %v3464 = vunpack.c.h.b16 %v3286
    %v3465 = vunpack.c.l.b16 %v3287
    %v3466 = vunpack.c.h.b16 %v3287
    %v3467 = vunpack.c.l.b16 %v3288
    %v3468 = vunpack.c.h.b16 %v3288
    %v3469 = vunpack.c.l.b16 %v3289
    %v3470 = vunpack.c.h.b16 %v3289
    %v3471 = vunpack.c.l.b16 %v3290
    %v3472 = vunpack.c.h.b16 %v3290
    %v3473 = vunpack.c.l.b16 %v3291
    %v3474 = vunpack.c.h.b16 %v3291
    %v3475 = vunpack.c.l.b16 %v3292
    %v3476 = vunpack.c.h.b16 %v3292
    %v3477 = vunpack.c.l.b16 %v3293
    %v3478 = vunpack.c.h.b16 %v3293
    %v3479 = vunpack.c.l.b16 %v3294
    %v3480 = vunpack.c.h.b16 %v3294
    %v3481 = vunpack.c.l.b16 %v3295
    %v3482 = vunpack.c.h.b16 %v3295
    %v3483 = vunpack.c.l.b16 %v3296
    %v3484 = vunpack.c.h.b16 %v3296
    %v3485 = vunpack.c.l.b16 %v3297
    %v3486 = vunpack.c.h.b16 %v3297
    %v3487 = vunpack.c.l.b16 %v3298
    %v3488 = vunpack.c.h.b16 %v3298
    %v3489 = vunpack.c.l.b16 %v3299
    %v3490 = vunpack.c.h.b16 %v3299
    %v3491 = vunpack.c.l.b16 %v3300
    %v3492 = vunpack.c.h.b16 %v3300
    %v3493 = vpack.c.b16 %v3367, %v3365
    %v3494 = vpack.c.b16 %v3368, %v3366
    %v3495 = vpack.c.b16 %v3371, %v3369
    %v3496 = vpack.c.b16 %v3372, %v3370
    %v3497 = vpack.c.b16 %v3375, %v3373
    %v3498 = vpack.c.b16 %v3376, %v3374
    %v3499 = vpack.c.b16 %v3379, %v3377
    %v3500 = vpack.c.b16 %v3380, %v3378
    %v3501 = vpack.c.b16 %v3383, %v3381
    %v3502 = vpack.c.b16 %v3384, %v3382
    %v3503 = vpack.c.b16 %v3387, %v3385
    %v3504 = vpack.c.b16 %v3388, %v3386
    %v3505 = vpack.c.b16 %v3391, %v3389
    %v3506 = vpack.c.b16 %v3392, %v3390
    %v3507 = vpack.c.b16 %v3395, %v3393
    %v3508 = vpack.c.b16 %v3396, %v3394
    %v3509 = vpack.c.b16 %v3399, %v3397
    %v3510 = vpack.c.b16 %v3400, %v3398
    %v3511 = vpack.c.b16 %v3403, %v3401
    %v3512 = vpack.c.b16 %v3404, %v3402
    %v3513 = vpack.c.b16 %v3407, %v3405
    %v3514 = vpack.c.b16 %v3408, %v3406
    %v3515 = vpack.c.b16 %v3411, %v3409
    %v3516 = vpack.c.b16 %v3412, %v3410
    %v3517 = vpack.c.b16 %v3415, %v3413
    %v3518 = vpack.c.b16 %v3416, %v3414
    %v3519 = vpack.c.b16 %v3419, %v3417
    %v3520 = vpack.c.b16 %v3420, %v3418
    %v3521 = vpack.c.b16 %v3423, %v3421
    %v3522 = vpack.c.b16 %v3424, %v3422
    %v3523 = vpack.c.b16 %v3427, %v3425
    %v3524 = vpack.c.b16 %v3428, %v3426
    %v3525 = vpack.c.b16 %v3431, %v3429
    %v3526 = vpack.c.b16 %v3432, %v3430
    %v3527 = vpack.c.b16 %v3435, %v3433
    %v3528 = vpack.c.b16 %v3436, %v3434
    %v3529 = vpack.c.b16 %v3439, %v3437
    %v3530 = vpack.c.b16 %v3440, %v3438
    %v3531 = vpack.c.b16 %v3443, %v3441
    %v3532 = vpack.c.b16 %v3444, %v3442
    %v3533 = vpack.c.b16 %v3447, %v3445
    %v3534 = vpack.c.b16 %v3448, %v3446
    %v3535 = vpack.c.b16 %v3451, %v3449
    %v3536 = vpack.c.b16 %v3452, %v3450
    %v3537 = vpack.c.b16 %v3455, %v3453
    %v3538 = vpack.c.b16 %v3456, %v3454
    %v3539 = vpack.c.b16 %v3459, %v3457
    %v3540 = vpack.c.b16 %v3460, %v3458
    %v3541 = vpack.c.b16 %v3463, %v3461
    %v3542 = vpack.c.b16 %v3464, %v3462
    %v3543 = vpack.c.b16 %v3467, %v3465
    %v3544 = vpack.c.b16 %v3468, %v3466
    %v3545 = vpack.c.b16 %v3471, %v3469
    %v3546 = vpack.c.b16 %v3472, %v3470
    %v3547 = vpack.c.b16 %v3475, %v3473
    %v3548 = vpack.c.b16 %v3476, %v3474
    %v3549 = vpack.c.b16 %v3479, %v3477
    %v3550 = vpack.c.b16 %v3480, %v3478
    %v3551 = vpack.c.b16 %v3483, %v3481
    %v3552 = vpack.c.b16 %v3484, %v3482
    %v3553 = vpack.c.b16 %v3487, %v3485
    %v3554 = vpack.c.b16 %v3488, %v3486
    %v3555 = vpack.c.b16 %v3491, %v3489
    %v3556 = vpack.c.b16 %v3492, %v3490
    %3621 = vmatprep.subr.bf16.mxu0 %v3494
    %3622 = vmatpush1.bf16.msra.mxu0 %v3493
    %3623 = vmatprep.subr.bf16.mxu0 %v3496
    %3624 = vmatpush1.bf16.msra.mxu0 %v3495
    %3625 = vmatprep.subr.bf16.mxu0 %v3498
    %3626 = vmatpush1.bf16.msra.mxu0 %v3497
    %3627 = vmatprep.subr.bf16.mxu0 %v3500
    %3628 = vmatpush1.bf16.msra.mxu0 %v3499
    %3629 = vmatprep.subr.bf16.mxu0 %v3502
    %3630 = vmatpush1.bf16.msra.mxu0 %v3501
    %3631 = vmatprep.subr.bf16.mxu0 %v3504
    %3632 = vmatpush1.bf16.msra.mxu0 %v3503
    %3633 = vmatprep.subr.bf16.mxu0 %v3506
    %3634 = vmatpush1.bf16.msra.mxu0 %v3505
    %3635 = vmatprep.subr.bf16.mxu0 %v3508
    %3636 = vmatpush1.bf16.msra.mxu0 %v3507
    %3637 = vmatprep.subr.bf16.mxu0 %v3510
    %3638 = vmatpush1.bf16.msra.mxu0 %v3509
    %3639 = vmatprep.subr.bf16.mxu0 %v3512
    %3640 = vmatpush1.bf16.msra.mxu0 %v3511
    %3641 = vmatprep.subr.bf16.mxu0 %v3514
    %3642 = vmatpush1.bf16.msra.mxu0 %v3513
    %3643 = vmatprep.subr.bf16.mxu0 %v3516
    %3644 = vmatpush1.bf16.msra.mxu0 %v3515
    %3645 = vmatprep.subr.bf16.mxu0 %v3518
    %3646 = vmatpush1.bf16.msra.mxu0 %v3517
    %3647 = vmatprep.subr.bf16.mxu0 %v3520
    %3648 = vmatpush1.bf16.msra.mxu0 %v3519
    %3649 = vmatprep.subr.bf16.mxu0 %v3522
    %3650 = vmatpush1.bf16.msra.mxu0 %v3521
    %3651 = vmatprep.subr.bf16.mxu0 %v3524
    %3652 = vmatpush1.bf16.msra.mxu0 %v3523
    %3653 = vmatprep.mubr.bf16.mxu0 %v2719
    %3654 = vmatmul.mubr.bf16.gmra.mrb[0].mxu0 %v2718
    %v3655 = vpop.f32.mrb[0].mxu0
    %v3656 = vadd.f32 0.0, %v3655
    %v3657 = vpop.f32.mrb[0].mxu0
    %v3658 = vadd.f32 0.0, %v3657
    %v3659 = vpop.f32.mrb[0].mxu0
    %v3660 = vadd.f32 0.0, %v3659
    %v3661 = vpop.f32.mrb[0].mxu0
    %v3662 = vadd.f32 0.0, %v3661
    %3663 = vdwg.mxu0
    %3664 = vmatprep.subr.bf16.mxu0 %v3526
    %3665 = vmatpush1.bf16.msra.mxu0 %v3525
    %3666 = vmatprep.subr.bf16.mxu0 %v3528
    %3667 = vmatpush1.bf16.msra.mxu0 %v3527
    %3668 = vmatprep.subr.bf16.mxu0 %v3530
    %3669 = vmatpush1.bf16.msra.mxu0 %v3529
    %3670 = vmatprep.subr.bf16.mxu0 %v3532
    %3671 = vmatpush1.bf16.msra.mxu0 %v3531
    %3672 = vmatprep.subr.bf16.mxu0 %v3534
    %3673 = vmatpush1.bf16.msra.mxu0 %v3533
    %3674 = vmatprep.subr.bf16.mxu0 %v3536
    %3675 = vmatpush1.bf16.msra.mxu0 %v3535
    %3676 = vmatprep.subr.bf16.mxu0 %v3538
    %3677 = vmatpush1.bf16.msra.mxu0 %v3537
    %3678 = vmatprep.subr.bf16.mxu0 %v3540
    %3679 = vmatpush1.bf16.msra.mxu0 %v3539
    %3680 = vmatprep.subr.bf16.mxu0 %v3542
    %3681 = vmatpush1.bf16.msra.mxu0 %v3541
    %3682 = vmatprep.subr.bf16.mxu0 %v3544
    %3683 = vmatpush1.bf16.msra.mxu0 %v3543
    %3684 = vmatprep.subr.bf16.mxu0 %v3546
    %3685 = vmatpush1.bf16.msra.mxu0 %v3545
    %3686 = vmatprep.subr.bf16.mxu0 %v3548
    %3687 = vmatpush1.bf16.msra.mxu0 %v3547
    %3688 = vmatprep.subr.bf16.mxu0 %v3550
    %3689 = vmatpush1.bf16.msra.mxu0 %v3549
    %3690 = vmatprep.subr.bf16.mxu0 %v3552
    %3691 = vmatpush1.bf16.msra.mxu0 %v3551
    %3692 = vmatprep.subr.bf16.mxu0 %v3554
    %3693 = vmatpush1.bf16.msra.mxu0 %v3553
    %3694 = vmatprep.subr.bf16.mxu0 %v3556
    %3695 = vmatpush1.bf16.msra.mxu0 %v3555
    %3696 = vmatprep.mubr.bf16.mxu0 %v2765
    %3697 = vmatmul.mubr.bf16.gmra.mrb[0].mxu0 %v2764
    %v3698 = vpop.f32.mrb[0].mxu0
    %v3699 = vadd.f32 %v3656, %v3698
    %v3700 = vpop.f32.mrb[0].mxu0
    %v3701 = vadd.f32 %v3658, %v3700
    %v3702 = vpop.f32.mrb[0].mxu0
    %v3703 = vadd.f32 %v3660, %v3702
    %v3704 = vpop.f32.mrb[0].mxu0
    %v3705 = vadd.f32 %v3662, %v3704
    %3706 = vdwg.mxu0
    %v3707 = vadd.f32 %v3228, %v3232
    %v3708 = vrot.slane %v3707, 4
    %v3709 = vadd.f32 %v3707, %v3708
    %v3710 = vrot.slane %v3709, 2
    %v3711 = vadd.f32 %v3709, %v3710
    %v3712 = vrot.slane %v3711, 1
    %v3713 = vadd.f32 %v3711, %v3712
    %v3714 = vadd.f32 %v3230, %v3234
    %v3715 = vrot.slane %v3714, 4
    %v3716 = vadd.f32 %v3714, %v3715
    %v3717 = vrot.slane %v3716, 2
    %v3718 = vadd.f32 %v3716, %v3717
    %v3719 = vrot.slane %v3718, 1
    %v3720 = vadd.f32 %v3718, %v3719
    %v3721 = vadd.f32 %v3699, %v3703
    %v3722 = vrot.slane %v3721, 4
    %v3723 = vadd.f32 %v3721, %v3722
    %v3724 = vrot.slane %v3723, 2
    %v3725 = vadd.f32 %v3723, %v3724
    %v3726 = vrot.slane %v3725, 1
    %v3727 = vadd.f32 %v3725, %v3726
    %v3728 = vadd.f32 %v3701, %v3705
    %v3729 = vrot.slane %v3728, 4
    %v3730 = vadd.f32 %v3728, %v3729
    %v3731 = vrot.slane %v3730, 2
    %v3732 = vadd.f32 %v3730, %v3731
    %v3733 = vrot.slane %v3732, 1
    %v3734 = vadd.f32 %v3732, %v3733
    %v3735 = vadd.f32 %v3713, %v3727
    %v3736 = vadd.f32 %v3720, %v3734
    %v3737 = vmul.f32 %v3228, %v3228
    %v3738 = vmul.f32 %v3230, %v3230
    %v3739 = vmul.f32 %v3232, %v3232
    %v3740 = vmul.f32 %v3234, %v3234
    %v3741 = vadd.f32 %v3737, %v3739
    %v3742 = vrot.slane %v3741, 4
    %v3743 = vadd.f32 %v3741, %v3742
    %v3744 = vrot.slane %v3743, 2
    %v3745 = vadd.f32 %v3743, %v3744
    %v3746 = vrot.slane %v3745, 1
    %v3747 = vadd.f32 %v3745, %v3746
    %v3748 = vadd.f32 %v3738, %v3740
    %v3749 = vrot.slane %v3748, 4
    %v3750 = vadd.f32 %v3748, %v3749
    %v3751 = vrot.slane %v3750, 2
    %v3752 = vadd.f32 %v3750, %v3751
    %v3753 = vrot.slane %v3752, 1
    %v3754 = vadd.f32 %v3752, %v3753
    %v3755 = vmul.f32 %v3699, %v3699
    %v3756 = vmul.f32 %v3701, %v3701
    %v3757 = vmul.f32 %v3703, %v3703
    %v3758 = vmul.f32 %v3705, %v3705
    %v3759 = vadd.f32 %v3755, %v3757
    %v3760 = vrot.slane %v3759, 4
    %v3761 = vadd.f32 %v3759, %v3760
    %v3762 = vrot.slane %v3761, 2
    %v3763 = vadd.f32 %v3761, %v3762
    %v3764 = vrot.slane %v3763, 1
    %v3765 = vadd.f32 %v3763, %v3764
    %v3766 = vadd.f32 %v3756, %v3758
    %v3767 = vrot.slane %v3766, 4
    %v3768 = vadd.f32 %v3766, %v3767
    %v3769 = vrot.slane %v3768, 2
    %v3770 = vadd.f32 %v3768, %v3769
    %v3771 = vrot.slane %v3770, 1
    %v3772 = vadd.f32 %v3770, %v3771
    %v3773 = vadd.f32 %v3747, %v3765
    %v3774 = vadd.f32 %v3754, %v3772
    %s3775 = scalar_lea.vmem %s7, 4
    %v3776 = vld [vmem:[%s3775] sm:$0xf]
    %3777 = vrot.lane.b32.xlu0 %v3735, 16
    %v3778 = vpop.permute.xlu0 %3777
    %3779 = vrot.lane.b32.xlu0 %v3736, 16
    %v3780 = vpop.permute.xlu0 %3779
    %vm3781 = vcmp.lt.s32.totalorder %v525, 16
    %v3782 = vsel %vm3781, %v3778, %v3780
    %v3783 = vsel %vm3781, %v3780, %v3778
    %v3784 = vadd.f32 %v3735, %v3783
    %v3785 = vadd.f32 %v3736, %v3782
    %3786 = vrot.lane.b32.xlu0 %v3784, 32
    %v3787 = vpop.permute.xlu0 %3786
    %3788 = vrot.lane.b32.xlu0 %v3785, 32
    %v3789 = vpop.permute.xlu0 %3788
    %v3790 = vsel %vm2327, %v3787, %v3789
    %v3791 = vsel %vm2327, %v3789, %v3787
    %v3792 = vadd.f32 %v3784, %v3791
    %v3793 = vadd.f32 %v3785, %v3790
    %3794 = vrot.lane.b32.xlu0 %v3792, 64
    %v3795 = vpop.permute.xlu0 %3794
    %3796 = vrot.lane.b32.xlu0 %v3793, 64
    %v3797 = vpop.permute.xlu0 %3796
    %v3798 = vsel %vm526, %v3795, %v3797
    %v3799 = vsel %vm526, %v3797, %v3795
    %v3800 = vadd.f32 %v3792, %v3799
    %v3801 = vadd.f32 %v3793, %v3798
    %v3802 = vadd.f32 %v3800, %v3801
    %3803 = vrot.lane.b32.xlu0 %v3773, 16
    %v3804 = vpop.permute.xlu0 %3803
    %3805 = vrot.lane.b32.xlu0 %v3774, 16
    %v3806 = vpop.permute.xlu0 %3805
    %v3807 = vsel %vm3781, %v3804, %v3806
    %v3808 = vsel %vm3781, %v3806, %v3804
    %v3809 = vadd.f32 %v3773, %v3808
    %v3810 = vadd.f32 %v3774, %v3807
    %3811 = vrot.lane.b32.xlu0 %v3809, 32
    %v3812 = vpop.permute.xlu0 %3811
    %3813 = vrot.lane.b32.xlu0 %v3810, 32
    %v3814 = vpop.permute.xlu0 %3813
    %v3815 = vsel %vm2327, %v3812, %v3814
    %v3816 = vsel %vm2327, %v3814, %v3812
    %v3817 = vadd.f32 %v3809, %v3816
    %v3818 = vadd.f32 %v3810, %v3815
    %3819 = vrot.lane.b32.xlu0 %v3817, 64
    %v3820 = vpop.permute.xlu0 %3819
    %3821 = vrot.lane.b32.xlu0 %v3818, 64
    %v3822 = vpop.permute.xlu0 %3821
    %v3823 = vsel %vm526, %v3820, %v3822
    %v3824 = vsel %vm526, %v3822, %v3820
    %v3825 = vadd.f32 %v3817, %v3824
    %v3826 = vadd.f32 %v3818, %v3823
    %v3827 = vadd.f32 %v3825, %v3826
    %v3828 = vmul.f32 %v3802, 0.001953125
    %v3829 = vmul.f32 %v3827, 0.001953125
    %v3830 = vmul.f32 %v3828, %v3828
    %v3831 = vsub.f32 %v3829, %v3830
    %v3832 = vadd.f32 %v3831, 1e-05
    %v3833 = vrsqrt.pop %v3832
    %v3835 = vcombine.low %v3833, %v3833
    %v3837 = vunpack.c.l.s4 1983009808
    %v3838 = vunpack.c.0.s8 %v3837
    %v3839 = vlaneseq
    %v3840 = vshrl.u32 %v3839, 7
    %v3841 = vsub.s32 %v3838, %v3840
    %v3842 = vrot.slane %v3835, %v3841
    %v3844 = vmul.f32 %v3776, %v3842
    %v3846 = vlaneseq
    %v3847 = vshrl.u32 %v3846, 7
    %v3848 = vsub.s32 0, %v3847
    %v3849 = vrot.slane %v3844, %v3848
    %v3850 = vlaneseq
    %v3851 = vshrl.u32 %v3850, 7
    %v3852 = vsub.s32 2, %v3851
    %v3853 = vrot.slane %v3844, %v3852
    %v3856 = vmul.f32 %v3828, %v3849
    %v3857 = vmul.f32 %v3828, %v3853
    %v3860 = vcombine.low %v3856, %v3857
    %v3862 = vunpack.c.l.s4 1983009808
    %v3863 = vunpack.c.0.s8 %v3862
    %v3864 = vlaneseq
    %v3865 = vshrl.u32 %v3864, 7
    %v3866 = vsub.s32 %v3863, %v3865
    %v3867 = vrot.slane %v3860, %v3866
    %v3868 = vrot.slane %v3867, 7
    %v3870 = vsub.f32 %v3776, %v3868
    %v3871 = vld [vmem:[%s9] sm:$0xf]
    %v3872 = vld [vmem:[%s9 + $0x4] sm:$0xf]
    %s3873 = scalar_lea.vmem %s9, 8
    %v3874 = vld [vmem:[%s3873] sm:$0xf]
    %v3875 = vld [vmem:[%s3873 + $0x4] sm:$0xf]
    %v3876 = vlaneseq
    %v3877 = vshrl.u32 %v3876, 7
    %v3878 = vsub.s32 0, %v3877
    %v3879 = vrot.slane %v3849, %v3878
    %v3880 = vlaneseq
    %v3881 = vshrl.u32 %v3880, 7
    %v3882 = vsub.s32 0, %v3881
    %v3883 = vrot.slane %v3853, %v3882
    %v3884 = vmul.f32 %v3228, %v3879
    %v3885 = vmul.f32 %v3230, %v3883
    %v3887 = vlaneseq
    %v3888 = vshrl.u32 %v3887, 7
    %v3889 = vsub.s32 1, %v3888
    %v3890 = vrot.slane %v3870, %v3889
    %v3891 = vlaneseq
    %v3892 = vshrl.u32 %v3891, 7
    %v3893 = vsub.s32 3, %v3892
    %v3894 = vrot.slane %v3870, %v3893
    %v3897 = vlaneseq
    %v3898 = vshrl.u32 %v3897, 7
    %v3899 = vsub.s32 1, %v3898
    %v3900 = vrot.slane %v3890, %v3899
    %v3901 = vlaneseq
    %v3902 = vshrl.u32 %v3901, 7
    %v3903 = vsub.s32 1, %v3902
    %v3904 = vrot.slane %v3894, %v3903
    %v3905 = vadd.f32 %v3884, %v3900
    %v3906 = vadd.f32 %v3885, %v3904
    %v3907 = vmax.f32 %v3905, 0.0
    %v3908 = vmax.f32 %v3906, 0.0
    %v3909 = vpack.c.bf16 %v3907, %v3907
    %v3910 = vpack.c.bf16 %v3908, %v3908
    %v3911 = vmul.f32 %v3699, %v3879
    %v3912 = vmul.f32 %v3701, %v3883
    %v3913 = vadd.f32 %v3911, %v3900
    %v3914 = vadd.f32 %v3912, %v3904
    %v3915 = vmax.f32 %v3913, 0.0
    %v3916 = vmax.f32 %v3914, 0.0
    %v3917 = vpack.c.bf16 %v3915, %v3915
    %v3918 = vpack.c.bf16 %v3916, %v3916
    %v3921 = vunpack.c.l.b16 %v3874
    %v3922 = vunpack.c.l.b16 %v3875
    %v3923 = vpack.c.b16 %v3922, %v3921
    %vm3924 = vcmask 64512
    %v3926 = vsel %vm3924, %v3923, 0
    %v3929 = vsel %vm2189, %v3917, 0
    %v3932 = vsel %vm2189, %v3918, 0
    %3934 = vmatprep.subr.bf16.mxu0 %v3932
    %3935 = vmatpush1.bf16.msra.mxu0 %v3929
    %3936 = vmatprep.subr.bf16.mxu0 0
    %3937 = vmatpush1.bf16.msra.mxu0 0
    %3938 = vmatprep.subr.bf16.mxu0 0
    %3939 = vmatpush1.bf16.msra.mxu0 0
    %3940 = vmatprep.subr.bf16.mxu0 0
    %3941 = vmatpush1.bf16.msra.mxu0 0
    %3942 = vmatprep.subr.bf16.mxu0 0
    %3943 = vmatpush1.bf16.msra.mxu0 0
    %3944 = vmatprep.subr.bf16.mxu0 0
    %3945 = vmatpush1.bf16.msra.mxu0 0
    %3946 = vmatprep.subr.bf16.mxu0 0
    %3947 = vmatpush1.bf16.msra.mxu0 0
    %3948 = vmatprep.subr.bf16.mxu0 0
    %3949 = vmatpush1.bf16.msra.mxu0 0
    %3950 = vmatprep.subr.bf16.mxu0 0
    %3951 = vmatpush1.bf16.msra.mxu0 0
    %3952 = vmatprep.subr.bf16.mxu0 0
    %3953 = vmatpush1.bf16.msra.mxu0 0
    %3954 = vmatprep.subr.bf16.mxu0 0
    %3955 = vmatpush1.bf16.msra.mxu0 0
    %3956 = vmatprep.subr.bf16.mxu0 0
    %3957 = vmatpush1.bf16.msra.mxu0 0
    %3958 = vmatprep.subr.bf16.mxu0 0
    %3959 = vmatpush1.bf16.msra.mxu0 0
    %3960 = vmatprep.subr.bf16.mxu0 0
    %3961 = vmatpush1.bf16.msra.mxu0 0
    %3962 = vmatprep.subr.bf16.mxu0 0
    %3963 = vmatpush1.bf16.msra.mxu0 0
    %3964 = vmatprep.subr.bf16.mxu0 0
    %3965 = vmatpush1.bf16.msra.mxu0 0
    %3966 = vmatprep.mubr.bf16.mxu0 0
    %3967 = vmatmul.mubr.bf16.gmra.mrb[0].mxu0 %v3926
    %v3968 = vpop.f32.mrb[0].mxu0
    %v3969 = vadd.f32 0.0, %v3968
    %v3970 = vpop.f32.mrb[0].mxu0
    %v3971 = vadd.f32 0.0, %v3970
    %v3972 = vpop.f32.mrb[0].mxu0
    %v3973 = vadd.f32 0.0, %v3972
    %v3974 = vpop.f32.mrb[0].mxu0
    %v3975 = vadd.f32 0.0, %v3974
    %3976 = vdwg.mxu0
    %v3979 = vunpack.c.l.b16 %v3871
    %v3980 = vunpack.c.l.b16 %v3872
    %v3981 = vpack.c.b16 %v3980, %v3979
    %v3983 = vsel %vm3924, %v3981, 0
    %v3986 = vsel %vm2189, %v3909, 0
    %v3989 = vsel %vm2189, %v3910, 0
    %3991 = vmatprep.subr.bf16.mxu0 %v3989
    %3992 = vmatpush1.bf16.msra.mxu0 %v3986
    %3993 = vmatprep.subr.bf16.mxu0 0
    %3994 = vmatpush1.bf16.msra.mxu0 0
    %3995 = vmatprep.subr.bf16.mxu0 0
    %3996 = vmatpush1.bf16.msra.mxu0 0
    %3997 = vmatprep.subr.bf16.mxu0 0
    %3998 = vmatpush1.bf16.msra.mxu0 0
    %3999 = vmatprep.subr.bf16.mxu0 0
    %4000 = vmatpush1.bf16.msra.mxu0 0
    %4001 = vmatprep.subr.bf16.mxu0 0
    %4002 = vmatpush1.bf16.msra.mxu0 0
    %4003 = vmatprep.subr.bf16.mxu0 0
    %4004 = vmatpush1.bf16.msra.mxu0 0
    %4005 = vmatprep.subr.bf16.mxu0 0
    %4006 = vmatpush1.bf16.msra.mxu0 0
    %4007 = vmatprep.subr.bf16.mxu0 0
    %4008 = vmatpush1.bf16.msra.mxu0 0
    %4009 = vmatprep.subr.bf16.mxu0 0
    %4010 = vmatpush1.bf16.msra.mxu0 0
    %4011 = vmatprep.subr.bf16.mxu0 0
    %4012 = vmatpush1.bf16.msra.mxu0 0
    %4013 = vmatprep.subr.bf16.mxu0 0
    %4014 = vmatpush1.bf16.msra.mxu0 0
    %4015 = vmatprep.subr.bf16.mxu0 0
    %4016 = vmatpush1.bf16.msra.mxu0 0
    %4017 = vmatprep.subr.bf16.mxu0 0
    %4018 = vmatpush1.bf16.msra.mxu0 0
    %4019 = vmatprep.subr.bf16.mxu0 0
    %4020 = vmatpush1.bf16.msra.mxu0 0
    %4021 = vmatprep.subr.bf16.mxu0 0
    %4022 = vmatpush1.bf16.msra.mxu0 0
    %4023 = vmatprep.mubr.bf16.mxu0 0
    %4024 = vmatmul.mubr.bf16.gmra.mrb[0].mxu0 %v3983
    %v4025 = vpop.f32.mrb[0].mxu0
    %v4026 = vadd.f32 %v3969, %v4025
    %v4027 = vpop.f32.mrb[0].mxu0
    %v4028 = vadd.f32 %v3971, %v4027
    %v4029 = vpop.f32.mrb[0].mxu0
    %v4030 = vadd.f32 %v3973, %v4029
    %v4031 = vpop.f32.mrb[0].mxu0
    %v4032 = vadd.f32 %v3975, %v4031
    %4033 = vdwg.mxu0
    %vm4038 = vcmask 1040384
    %v4039 = vrot.slane %v4026, 7
    %v4040 = vrot.slane %v4028, 7
    %v4041 = vrot.slane %v4030, 7
    %v4042 = vsel %vm4038, %v4039, %v4041
    %v4043 = vrot.slane %v4032, 7
    %v4044 = vsel %vm4038, %v4040, %v4043
    %4051 = vst [vmem:[#allocation4] sm:$0xfe] %v4039
    %4052 = vst [vmem:[#allocation4 + $0x8] sm:$0xfe] %v4040
    %4053 = vst [vmem:[#allocation4 + $0x10] sm:$0xff] %v4042
    %4054 = vst [vmem:[#allocation4 + $0x18] sm:$0xff] %v4044
    %4055 = vst [vmem:[#allocation4 + $0x20] sm:$0x1] %v4041
    %4056 = vst [vmem:[#allocation4 + $0x28] sm:$0x1] %v4043
    %v4057 = vmul.f32 %v3232, %v3879
    %v4058 = vmul.f32 %v3234, %v3883
    %v4059 = vadd.f32 %v4057, %v3900
    %v4060 = vadd.f32 %v4058, %v3904
    %v4061 = vmax.f32 %v4059, 0.0
    %v4062 = vmax.f32 %v4060, 0.0
    %v4063 = vpack.c.bf16 %v4061, %v4061
    %v4064 = vpack.c.bf16 %v4062, %v4062
    %v4065 = vmul.f32 %v3703, %v3879
    %v4066 = vmul.f32 %v3705, %v3883
    %v4067 = vadd.f32 %v4065, %v3900
    %v4068 = vadd.f32 %v4066, %v3904
    %v4069 = vmax.f32 %v4067, 0.0
    %v4070 = vmax.f32 %v4068, 0.0
    %v4071 = vpack.c.bf16 %v4069, %v4069
    %v4072 = vpack.c.bf16 %v4070, %v4070
    %v4074 = vsel %vm2189, %v4071, 0
    %v4077 = vsel %vm2189, %v4072, 0
    %4079 = vmatprep.subr.bf16.mxu0 %v4077
    %4080 = vmatpush1.bf16.msra.mxu0 %v4074
    %4081 = vmatprep.subr.bf16.mxu0 0
    %4082 = vmatpush1.bf16.msra.mxu0 0
    %4083 = vmatprep.subr.bf16.mxu0 0
    %4084 = vmatpush1.bf16.msra.mxu0 0
    %4085 = vmatprep.subr.bf16.mxu0 0
    %4086 = vmatpush1.bf16.msra.mxu0 0
    %4087 = vmatprep.subr.bf16.mxu0 0
    %4088 = vmatpush1.bf16.msra.mxu0 0
    %4089 = vmatprep.subr.bf16.mxu0 0
    %4090 = vmatpush1.bf16.msra.mxu0 0
    %4091 = vmatprep.subr.bf16.mxu0 0
    %4092 = vmatpush1.bf16.msra.mxu0 0
    %4093 = vmatprep.subr.bf16.mxu0 0
    %4094 = vmatpush1.bf16.msra.mxu0 0
    %4095 = vmatprep.subr.bf16.mxu0 0
    %4096 = vmatpush1.bf16.msra.mxu0 0
    %4097 = vmatprep.subr.bf16.mxu0 0
    %4098 = vmatpush1.bf16.msra.mxu0 0
    %4099 = vmatprep.subr.bf16.mxu0 0
    %4100 = vmatpush1.bf16.msra.mxu0 0
    %4101 = vmatprep.subr.bf16.mxu0 0
    %4102 = vmatpush1.bf16.msra.mxu0 0
    %4103 = vmatprep.subr.bf16.mxu0 0
    %4104 = vmatpush1.bf16.msra.mxu0 0
    %4105 = vmatprep.subr.bf16.mxu0 0
    %4106 = vmatpush1.bf16.msra.mxu0 0
    %4107 = vmatprep.subr.bf16.mxu0 0
    %4108 = vmatpush1.bf16.msra.mxu0 0
    %4109 = vmatprep.subr.bf16.mxu0 0
    %4110 = vmatpush1.bf16.msra.mxu0 0
    %4111 = vmatprep.mubr.bf16.mxu0 0
    %4112 = vmatmul.mubr.bf16.gmra.mrb[0].mxu0 %v3926
    %v4113 = vpop.f32.mrb[0].mxu0
    %v4114 = vadd.f32 0.0, %v4113
    %v4115 = vpop.f32.mrb[0].mxu0
    %v4116 = vadd.f32 0.0, %v4115
    %v4117 = vpop.f32.mrb[0].mxu0
    %v4118 = vadd.f32 0.0, %v4117
    %v4119 = vpop.f32.mrb[0].mxu0
    %v4120 = vadd.f32 0.0, %v4119
    %4121 = vdwg.mxu0
    %v4123 = vsel %vm2189, %v4063, 0
    %v4126 = vsel %vm2189, %v4064, 0
    %4128 = vmatprep.subr.bf16.mxu0 %v4126
    %4129 = vmatpush1.bf16.msra.mxu0 %v4123
    %4130 = vmatprep.subr.bf16.mxu0 0
    %4131 = vmatpush1.bf16.msra.mxu0 0
    %4132 = vmatprep.subr.bf16.mxu0 0
    %4133 = vmatpush1.bf16.msra.mxu0 0
    %4134 = vmatprep.subr.bf16.mxu0 0
    %4135 = vmatpush1.bf16.msra.mxu0 0
    %4136 = vmatprep.subr.bf16.mxu0 0
    %4137 = vmatpush1.bf16.msra.mxu0 0
    %4138 = vmatprep.subr.bf16.mxu0 0
    %4139 = vmatpush1.bf16.msra.mxu0 0
    %4140 = vmatprep.subr.bf16.mxu0 0
    %4141 = vmatpush1.bf16.msra.mxu0 0
    %4142 = vmatprep.subr.bf16.mxu0 0
    %4143 = vmatpush1.bf16.msra.mxu0 0
    %4144 = vmatprep.subr.bf16.mxu0 0
    %4145 = vmatpush1.bf16.msra.mxu0 0
    %4146 = vmatprep.subr.bf16.mxu0 0
    %4147 = vmatpush1.bf16.msra.mxu0 0
    %4148 = vmatprep.subr.bf16.mxu0 0
    %4149 = vmatpush1.bf16.msra.mxu0 0
    %4150 = vmatprep.subr.bf16.mxu0 0
    %4151 = vmatpush1.bf16.msra.mxu0 0
    %4152 = vmatprep.subr.bf16.mxu0 0
    %4153 = vmatpush1.bf16.msra.mxu0 0
    %4154 = vmatprep.subr.bf16.mxu0 0
    %4155 = vmatpush1.bf16.msra.mxu0 0
    %4156 = vmatprep.subr.bf16.mxu0 0
    %4157 = vmatpush1.bf16.msra.mxu0 0
    %4158 = vmatprep.subr.bf16.mxu0 0
    %4159 = vmatpush1.bf16.msra.mxu0 0
    %4160 = vmatprep.mubr.bf16.mxu0 0
    %4161 = vmatmul.mubr.bf16.gmra.mrb[0].mxu0 %v3983
    %v4162 = vpop.f32.mrb[0].mxu0
    %v4163 = vadd.f32 %v4114, %v4162
    %v4164 = vpop.f32.mrb[0].mxu0
    %v4165 = vadd.f32 %v4116, %v4164
    %v4166 = vpop.f32.mrb[0].mxu0
    %v4167 = vadd.f32 %v4118, %v4166
    %v4168 = vpop.f32.mrb[0].mxu0
    %v4169 = vadd.f32 %v4120, %v4168
    %4170 = vdwg.mxu0
    %v4175 = vrot.slane %v4163, 7
    %v4176 = vrot.slane %v4165, 7
    %v4177 = vrot.slane %v4167, 7
    %v4178 = vsel %vm4038, %v4175, %v4177
    %v4179 = vrot.slane %v4169, 7
    %v4180 = vsel %vm4038, %v4176, %v4179
    %s4187 = scalar_lea.vmem [#allocation4], 48
    %4188 = vst [vmem:[%s4187] sm:$0xfe] %v4175
    %4189 = vst [vmem:[%s4187 + $0x8] sm:$0xfe] %v4176
    %4190 = vst [vmem:[%s4187 + $0x10] sm:$0xff] %v4178
    %4191 = vst [vmem:[%s4187 + $0x18] sm:$0xff] %v4180
    %4192 = vst [vmem:[%s4187 + $0x20] sm:$0x1] %v4177
    %4193 = vst [vmem:[%s4187 + $0x28] sm:$0x1] %v4179
    %v4194 = vld [vmem:[#allocation4] sm:$0xff]
    %v4195 = vld [vmem:[#allocation4 + $0x8] sm:$0xff]
    %v4196 = vld [vmem:[#allocation4 + $0x10] sm:$0xff]
    %v4197 = vld [vmem:[#allocation4 + $0x18] sm:$0xff]
    %v4198 = vld [vmem:[#allocation4] sm:$0xfe]
    %v4199 = vld [vmem:[#allocation4 + $0x8] sm:$0xfe]
    %v4200 = vld [vmem:[#allocation4 + $0x20] sm:$0x1]
    %v4201 = vld [vmem:[#allocation4 + $0x28] sm:$0x1]
    %v4208 = vrot.slane %v4198, 1
    %v4209 = vrot.slane %v4196, 1
    %v4210 = vsel %vm2689, %v4208, %v4209
    %v4211 = vrot.slane %v4199, 1
    %v4212 = vrot.slane %v4197, 1
    %v4213 = vsel %vm2689, %v4211, %v4212
    %v4214 = vrot.slane %v4200, 1
    %v4215 = vsel %vm2689, %v4209, %v4214
    %v4216 = vrot.slane %v4201, 1
    %v4217 = vsel %vm2689, %v4212, %v4216
    %v4222 = vld [vmem:[%s4187] sm:$0xff]
    %v4223 = vld [vmem:[%s4187 + $0x8] sm:$0xff]
    %v4224 = vld [vmem:[%s4187 + $0x10] sm:$0xff]
    %v4225 = vld [vmem:[%s4187 + $0x18] sm:$0xff]
    %v4226 = vld [vmem:[%s4187] sm:$0xfe]
    %v4227 = vld [vmem:[%s4187 + $0x8] sm:$0xfe]
    %v4228 = vld [vmem:[%s4187 + $0x20] sm:$0x1]
    %v4229 = vld [vmem:[%s4187 + $0x28] sm:$0x1]
    %v4236 = vrot.slane %v4226, 1
    %v4237 = vrot.slane %v4224, 1
    %v4238 = vsel %vm2689, %v4236, %v4237
    %v4239 = vrot.slane %v4227, 1
    %v4240 = vrot.slane %v4225, 1
    %v4241 = vsel %vm2689, %v4239, %v4240
    %v4242 = vrot.slane %v4228, 1
    %v4243 = vsel %vm2689, %v4237, %v4242
    %v4244 = vrot.slane %v4229, 1
    %v4245 = vsel %vm2689, %v4240, %v4244
    %v4250 = vpack.c.bf16 %v4196, %v4194
    %v4251 = vpack.c.bf16 %v4197, %v4195
    %v4252 = vpack.c.bf16 %v4215, %v4210
    %v4253 = vpack.c.bf16 %v4217, %v4213
    %v4254 = vpack.c.bf16 %v4224, %v4222
    %v4255 = vpack.c.bf16 %v4225, %v4223
    %v4256 = vpack.c.bf16 %v4243, %v4238
    %v4257 = vpack.c.bf16 %v4245, %v4241
    %v4258 = vld [vmem:[#allocation4] sm:$0xfc]
    %v4259 = vld [vmem:[#allocation4 + $0x8] sm:$0xfc]
    %v4260 = vld [vmem:[#allocation4 + $0x20] sm:$0x3]
    %v4261 = vld [vmem:[#allocation4 + $0x28] sm:$0x3]
    %v4266 = vrot.slane %v4258, 1
    %v4267 = vsel %vm2689, %v4266, %v4209
    %v4268 = vrot.slane %v4259, 1
    %v4269 = vsel %vm2689, %v4268, %v4212
    %v4270 = vrot.slane %v4260, 1
    %v4271 = vsel %vm2689, %v4209, %v4270
    %v4272 = vrot.slane %v4261, 1
    %v4273 = vsel %vm2689, %v4212, %v4272
    %v4274 = vld [vmem:[%s4187] sm:$0xfc]
    %v4275 = vld [vmem:[%s4187 + $0x8] sm:$0xfc]
    %v4276 = vld [vmem:[%s4187 + $0x20] sm:$0x3]
    %v4277 = vld [vmem:[%s4187 + $0x28] sm:$0x3]
    %v4282 = vrot.slane %v4274, 1
    %v4283 = vsel %vm2689, %v4282, %v4237
    %v4284 = vrot.slane %v4275, 1
    %v4285 = vsel %vm2689, %v4284, %v4240
    %v4286 = vrot.slane %v4276, 1
    %v4287 = vsel %vm2689, %v4237, %v4286
    %v4288 = vrot.slane %v4277, 1
    %v4289 = vsel %vm2689, %v4240, %v4288
    %v4290 = vrot.slane %v4267, 1
    %v4291 = vrot.slane %v4271, 1
    %v4292 = vsel %vm2689, %v4290, %v4291
    %v4293 = vrot.slane %v4269, 1
    %v4294 = vrot.slane %v4273, 1
    %v4295 = vsel %vm2689, %v4293, %v4294
    %v4296 = vrot.slane %v4270, 1
    %v4297 = vsel %vm2689, %v4291, %v4296
    %v4298 = vrot.slane %v4272, 1
    %v4299 = vsel %vm2689, %v4294, %v4298
    %v4304 = vrot.slane %v4283, 1
    %v4305 = vrot.slane %v4287, 1
    %v4306 = vsel %vm2689, %v4304, %v4305
    %v4307 = vrot.slane %v4285, 1
    %v4308 = vrot.slane %v4289, 1
    %v4309 = vsel %vm2689, %v4307, %v4308
    %v4310 = vrot.slane %v4286, 1
    %v4311 = vsel %vm2689, %v4305, %v4310
    %v4312 = vrot.slane %v4288, 1
    %v4313 = vsel %vm2689, %v4308, %v4312
    %v4318 = vpack.c.bf16 %v4297, %v4292
    %v4319 = vpack.c.bf16 %v4299, %v4295
    %v4320 = vpack.c.bf16 %v4311, %v4306
    %v4321 = vpack.c.bf16 %v4313, %v4309
    %v4322 = vld [vmem:[#allocation8] sm:$0xff]
    %v4323 = vld [vmem:[#allocation8 + $0x8] sm:$0xff]
    %v4324 = vld [vmem:[#allocation8 + $0x10] sm:$0xff]
    %v4325 = vld [vmem:[#allocation8 + $0x18] sm:$0xff]
    %v4326 = vld [vmem:[#allocation8 + $0x20] sm:$0xff]
    %v4327 = vld [vmem:[#allocation8 + $0x28] sm:$0xff]
    %v4328 = vld [vmem:[#allocation8 + $0x30] sm:$0xff]
    %v4329 = vld [vmem:[#allocation8 + $0x38] sm:$0xff]
    %v4330 = vld [vmem:[#allocation8 + $0x40] sm:$0xff]
    %v4331 = vld [vmem:[#allocation8 + $0x48] sm:$0xff]
    %v4332 = vld [vmem:[#allocation8 + $0x50] sm:$0xff]
    %v4333 = vld [vmem:[#allocation8 + $0x58] sm:$0xff]
    %v4334 = vld [vmem:[#allocation8 + $0x60] sm:$0xff]
    %v4335 = vld [vmem:[#allocation8 + $0x68] sm:$0xff]
    %v4336 = vld [vmem:[#allocation8 + $0x70] sm:$0xff]
    %v4337 = vld [vmem:[#allocation8 + $0x78] sm:$0xff]
    %v4338 = vld [vmem:[#allocation8 + $0x80] sm:$0xff]
    %v4339 = vld [vmem:[#allocation8 + $0x88] sm:$0xff]
    %v4340 = vld [vmem:[#allocation8 + $0x90] sm:$0xff]
    %v4341 = vld [vmem:[#allocation8 + $0x98] sm:$0xff]
    %v4342 = vld [vmem:[#allocation8 + $0xa0] sm:$0xff]
    %v4343 = vld [vmem:[#allocation8 + $0xa8] sm:$0xff]
    %v4344 = vld [vmem:[#allocation8 + $0xb0] sm:$0xff]
    %v4345 = vld [vmem:[#allocation8 + $0xb8] sm:$0xff]
    %v4346 = vld [vmem:[#allocation8 + $0xc0] sm:$0xff]
    %v4347 = vld [vmem:[#allocation8 + $0xc8] sm:$0xff]
    %v4348 = vld [vmem:[#allocation8 + $0xd0] sm:$0xff]
    %v4349 = vld [vmem:[#allocation8 + $0xd8] sm:$0xff]
    %v4350 = vld [vmem:[#allocation8 + $0xe0] sm:$0xff]
    %v4351 = vld [vmem:[#allocation8 + $0xe8] sm:$0xff]
    %v4352 = vld [vmem:[#allocation8 + $0xf0] sm:$0xff]
    %v4353 = vld [vmem:[#allocation8 + $0xf8] sm:$0xff]
    %v4354 = vld [vmem:[#allocation8 + $0x100] sm:$0xff]
    %v4355 = vld [vmem:[#allocation8 + $0x108] sm:$0xff]
    %v4356 = vld [vmem:[#allocation8 + $0x110] sm:$0xff]
    %v4357 = vld [vmem:[#allocation8 + $0x118] sm:$0xff]
    %v4358 = vld [vmem:[#allocation8 + $0x120] sm:$0xff]
    %v4359 = vld [vmem:[#allocation8 + $0x128] sm:$0xff]
    %v4360 = vld [vmem:[#allocation8 + $0x130] sm:$0xff]
    %v4361 = vld [vmem:[#allocation8 + $0x138] sm:$0xff]
    %v4362 = vld [vmem:[#allocation8 + $0x140] sm:$0xff]
    %v4363 = vld [vmem:[#allocation8 + $0x148] sm:$0xff]
    %v4364 = vld [vmem:[#allocation8 + $0x150] sm:$0xff]
    %v4365 = vld [vmem:[#allocation8 + $0x158] sm:$0xff]
    %v4366 = vld [vmem:[#allocation8 + $0x160] sm:$0xff]
    %v4367 = vld [vmem:[#allocation8 + $0x168] sm:$0xff]
    %v4368 = vld [vmem:[#allocation8 + $0x170] sm:$0xff]
    %v4369 = vld [vmem:[#allocation8 + $0x178] sm:$0xff]
    %v4370 = vld [vmem:[#allocation8 + $0x180] sm:$0xff]
    %v4371 = vld [vmem:[#allocation8 + $0x188] sm:$0xff]
    %v4372 = vld [vmem:[#allocation8 + $0x190] sm:$0xff]
    %v4373 = vld [vmem:[#allocation8 + $0x198] sm:$0xff]
    %v4374 = vld [vmem:[#allocation8 + $0x1a0] sm:$0xff]
    %v4375 = vld [vmem:[#allocation8 + $0x1a8] sm:$0xff]
    %v4376 = vld [vmem:[#allocation8 + $0x1b0] sm:$0xff]
    %v4377 = vld [vmem:[#allocation8 + $0x1b8] sm:$0xff]
    %v4378 = vld [vmem:[#allocation8 + $0x1c0] sm:$0xff]
    %v4379 = vld [vmem:[#allocation8 + $0x1c8] sm:$0xff]
    %v4380 = vld [vmem:[#allocation8 + $0x1d0] sm:$0xff]
    %v4381 = vld [vmem:[#allocation8 + $0x1d8] sm:$0xff]
    %v4382 = vld [vmem:[#allocation8 + $0x1e0] sm:$0xff]
    %v4383 = vld [vmem:[#allocation8 + $0x1e8] sm:$0xff]
    %v4384 = vld [vmem:[#allocation8 + $0x1f0] sm:$0xff]
    %v4385 = vld [vmem:[#allocation8 + $0x1f8] sm:$0xff]
    %v4450 = vunpack.c.l.b16 %v4322
    %v4451 = vunpack.c.h.b16 %v4322
    %v4452 = vunpack.c.l.b16 %v4323
    %v4453 = vunpack.c.h.b16 %v4323
    %v4454 = vunpack.c.l.b16 %v4324
    %v4455 = vunpack.c.h.b16 %v4324
    %v4456 = vunpack.c.l.b16 %v4325
    %v4457 = vunpack.c.h.b16 %v4325
    %v4458 = vunpack.c.l.b16 %v4326
    %v4459 = vunpack.c.h.b16 %v4326
    %v4460 = vunpack.c.l.b16 %v4327
    %v4461 = vunpack.c.h.b16 %v4327
    %v4462 = vunpack.c.l.b16 %v4328
    %v4463 = vunpack.c.h.b16 %v4328
    %v4464 = vunpack.c.l.b16 %v4329
    %v4465 = vunpack.c.h.b16 %v4329
    %v4466 = vunpack.c.l.b16 %v4330
    %v4467 = vunpack.c.h.b16 %v4330
    %v4468 = vunpack.c.l.b16 %v4331
    %v4469 = vunpack.c.h.b16 %v4331
    %v4470 = vunpack.c.l.b16 %v4332
    %v4471 = vunpack.c.h.b16 %v4332
    %v4472 = vunpack.c.l.b16 %v4333
    %v4473 = vunpack.c.h.b16 %v4333
    %v4474 = vunpack.c.l.b16 %v4334
    %v4475 = vunpack.c.h.b16 %v4334
    %v4476 = vunpack.c.l.b16 %v4335
    %v4477 = vunpack.c.h.b16 %v4335
    %v4478 = vunpack.c.l.b16 %v4336
    %v4479 = vunpack.c.h.b16 %v4336
    %v4480 = vunpack.c.l.b16 %v4337
    %v4481 = vunpack.c.h.b16 %v4337
    %v4482 = vunpack.c.l.b16 %v4338
    %v4483 = vunpack.c.h.b16 %v4338
    %v4484 = vunpack.c.l.b16 %v4339
    %v4485 = vunpack.c.h.b16 %v4339
    %v4486 = vunpack.c.l.b16 %v4340
    %v4487 = vunpack.c.h.b16 %v4340
    %v4488 = vunpack.c.l.b16 %v4341
    %v4489 = vunpack.c.h.b16 %v4341
    %v4490 = vunpack.c.l.b16 %v4342
    %v4491 = vunpack.c.h.b16 %v4342
    %v4492 = vunpack.c.l.b16 %v4343
    %v4493 = vunpack.c.h.b16 %v4343
    %v4494 = vunpack.c.l.b16 %v4344
    %v4495 = vunpack.c.h.b16 %v4344
    %v4496 = vunpack.c.l.b16 %v4345
    %v4497 = vunpack.c.h.b16 %v4345
    %v4498 = vunpack.c.l.b16 %v4346
    %v4499 = vunpack.c.h.b16 %v4346
    %v4500 = vunpack.c.l.b16 %v4347
    %v4501 = vunpack.c.h.b16 %v4347
    %v4502 = vunpack.c.l.b16 %v4348
    %v4503 = vunpack.c.h.b16 %v4348
    %v4504 = vunpack.c.l.b16 %v4349
    %v4505 = vunpack.c.h.b16 %v4349
    %v4506 = vunpack.c.l.b16 %v4350
    %v4507 = vunpack.c.h.b16 %v4350
    %v4508 = vunpack.c.l.b16 %v4351
    %v4509 = vunpack.c.h.b16 %v4351
    %v4510 = vunpack.c.l.b16 %v4352
    %v4511 = vunpack.c.h.b16 %v4352
    %v4512 = vunpack.c.l.b16 %v4353
    %v4513 = vunpack.c.h.b16 %v4353
    %v4514 = vunpack.c.l.b16 %v4354
    %v4515 = vunpack.c.h.b16 %v4354
    %v4516 = vunpack.c.l.b16 %v4355
    %v4517 = vunpack.c.h.b16 %v4355
    %v4518 = vunpack.c.l.b16 %v4356
    %v4519 = vunpack.c.h.b16 %v4356
    %v4520 = vunpack.c.l.b16 %v4357
    %v4521 = vunpack.c.h.b16 %v4357
    %v4522 = vunpack.c.l.b16 %v4358
    %v4523 = vunpack.c.h.b16 %v4358
    %v4524 = vunpack.c.l.b16 %v4359
    %v4525 = vunpack.c.h.b16 %v4359
    %v4526 = vunpack.c.l.b16 %v4360
    %v4527 = vunpack.c.h.b16 %v4360
    %v4528 = vunpack.c.l.b16 %v4361
    %v4529 = vunpack.c.h.b16 %v4361
    %v4530 = vunpack.c.l.b16 %v4362
    %v4531 = vunpack.c.h.b16 %v4362
    %v4532 = vunpack.c.l.b16 %v4363
    %v4533 = vunpack.c.h.b16 %v4363
    %v4534 = vunpack.c.l.b16 %v4364
    %v4535 = vunpack.c.h.b16 %v4364
    %v4536 = vunpack.c.l.b16 %v4365
    %v4537 = vunpack.c.h.b16 %v4365
    %v4538 = vunpack.c.l.b16 %v4366
    %v4539 = vunpack.c.h.b16 %v4366
    %v4540 = vunpack.c.l.b16 %v4367
    %v4541 = vunpack.c.h.b16 %v4367
    %v4542 = vunpack.c.l.b16 %v4368
    %v4543 = vunpack.c.h.b16 %v4368
    %v4544 = vunpack.c.l.b16 %v4369
    %v4545 = vunpack.c.h.b16 %v4369
    %v4546 = vunpack.c.l.b16 %v4370
    %v4547 = vunpack.c.h.b16 %v4370
    %v4548 = vunpack.c.l.b16 %v4371
    %v4549 = vunpack.c.h.b16 %v4371
    %v4550 = vunpack.c.l.b16 %v4372
    %v4551 = vunpack.c.h.b16 %v4372
    %v4552 = vunpack.c.l.b16 %v4373
    %v4553 = vunpack.c.h.b16 %v4373
    %v4554 = vunpack.c.l.b16 %v4374
    %v4555 = vunpack.c.h.b16 %v4374
    %v4556 = vunpack.c.l.b16 %v4375
    %v4557 = vunpack.c.h.b16 %v4375
    %v4558 = vunpack.c.l.b16 %v4376
    %v4559 = vunpack.c.h.b16 %v4376
    %v4560 = vunpack.c.l.b16 %v4377
    %v4561 = vunpack.c.h.b16 %v4377
    %v4562 = vunpack.c.l.b16 %v4378
    %v4563 = vunpack.c.h.b16 %v4378
    %v4564 = vunpack.c.l.b16 %v4379
    %v4565 = vunpack.c.h.b16 %v4379
    %v4566 = vunpack.c.l.b16 %v4380
    %v4567 = vunpack.c.h.b16 %v4380
    %v4568 = vunpack.c.l.b16 %v4381
    %v4569 = vunpack.c.h.b16 %v4381
    %v4570 = vunpack.c.l.b16 %v4382
    %v4571 = vunpack.c.h.b16 %v4382
    %v4572 = vunpack.c.l.b16 %v4383
    %v4573 = vunpack.c.h.b16 %v4383
    %v4574 = vunpack.c.l.b16 %v4384
    %v4575 = vunpack.c.h.b16 %v4384
    %v4576 = vunpack.c.l.b16 %v4385
    %v4577 = vunpack.c.h.b16 %v4385
    %v4578 = vpack.c.b16 %v4452, %v4450
    %v4579 = vpack.c.b16 %v4453, %v4451
    %v4580 = vpack.c.b16 %v4456, %v4454
    %v4581 = vpack.c.b16 %v4457, %v4455
    %v4582 = vpack.c.b16 %v4460, %v4458
    %v4583 = vpack.c.b16 %v4461, %v4459
    %v4584 = vpack.c.b16 %v4464, %v4462
    %v4585 = vpack.c.b16 %v4465, %v4463
    %v4586 = vpack.c.b16 %v4468, %v4466
    %v4587 = vpack.c.b16 %v4469, %v4467
    %v4588 = vpack.c.b16 %v4472, %v4470
    %v4589 = vpack.c.b16 %v4473, %v4471
    %v4590 = vpack.c.b16 %v4476, %v4474
    %v4591 = vpack.c.b16 %v4477, %v4475
    %v4592 = vpack.c.b16 %v4480, %v4478
    %v4593 = vpack.c.b16 %v4481, %v4479
    %v4594 = vpack.c.b16 %v4484, %v4482
    %v4595 = vpack.c.b16 %v4485, %v4483
    %v4596 = vpack.c.b16 %v4488, %v4486
    %v4597 = vpack.c.b16 %v4489, %v4487
    %v4598 = vpack.c.b16 %v4492, %v4490
    %v4599 = vpack.c.b16 %v4493, %v4491
    %v4600 = vpack.c.b16 %v4496, %v4494
    %v4601 = vpack.c.b16 %v4497, %v4495
    %v4602 = vpack.c.b16 %v4500, %v4498
    %v4603 = vpack.c.b16 %v4501, %v4499
    %v4604 = vpack.c.b16 %v4504, %v4502
    %v4605 = vpack.c.b16 %v4505, %v4503
    %v4606 = vpack.c.b16 %v4508, %v4506
    %v4607 = vpack.c.b16 %v4509, %v4507
    %v4608 = vpack.c.b16 %v4512, %v4510
    %v4609 = vpack.c.b16 %v4513, %v4511
    %v4610 = vpack.c.b16 %v4516, %v4514
    %v4611 = vpack.c.b16 %v4517, %v4515
    %v4612 = vpack.c.b16 %v4520, %v4518
    %v4613 = vpack.c.b16 %v4521, %v4519
    %v4614 = vpack.c.b16 %v4524, %v4522
    %v4615 = vpack.c.b16 %v4525, %v4523
    %v4616 = vpack.c.b16 %v4528, %v4526
    %v4617 = vpack.c.b16 %v4529, %v4527
    %v4618 = vpack.c.b16 %v4532, %v4530
    %v4619 = vpack.c.b16 %v4533, %v4531
    %v4620 = vpack.c.b16 %v4536, %v4534
    %v4621 = vpack.c.b16 %v4537, %v4535
    %v4622 = vpack.c.b16 %v4540, %v4538
    %v4623 = vpack.c.b16 %v4541, %v4539
    %v4624 = vpack.c.b16 %v4544, %v4542
    %v4625 = vpack.c.b16 %v4545, %v4543
    %v4626 = vpack.c.b16 %v4548, %v4546
    %v4627 = vpack.c.b16 %v4549, %v4547
    %v4628 = vpack.c.b16 %v4552, %v4550
    %v4629 = vpack.c.b16 %v4553, %v4551
    %v4630 = vpack.c.b16 %v4556, %v4554
    %v4631 = vpack.c.b16 %v4557, %v4555
    %v4632 = vpack.c.b16 %v4560, %v4558
    %v4633 = vpack.c.b16 %v4561, %v4559
    %v4634 = vpack.c.b16 %v4564, %v4562
    %v4635 = vpack.c.b16 %v4565, %v4563
    %v4636 = vpack.c.b16 %v4568, %v4566
    %v4637 = vpack.c.b16 %v4569, %v4567
    %v4638 = vpack.c.b16 %v4572, %v4570
    %v4639 = vpack.c.b16 %v4573, %v4571
    %v4640 = vpack.c.b16 %v4576, %v4574
    %v4641 = vpack.c.b16 %v4577, %v4575
    %4706 = vmatprep.subr.bf16.mxu0 %v4579
    %4707 = vmatpush1.bf16.msra.mxu0 %v4578
    %4708 = vmatprep.subr.bf16.mxu0 %v4581
    %4709 = vmatpush1.bf16.msra.mxu0 %v4580
    %4710 = vmatprep.subr.bf16.mxu0 %v4583
    %4711 = vmatpush1.bf16.msra.mxu0 %v4582
    %4712 = vmatprep.subr.bf16.mxu0 %v4585
    %4713 = vmatpush1.bf16.msra.mxu0 %v4584
    %4714 = vmatprep.subr.bf16.mxu0 %v4587
    %4715 = vmatpush1.bf16.msra.mxu0 %v4586
    %4716 = vmatprep.subr.bf16.mxu0 %v4589
    %4717 = vmatpush1.bf16.msra.mxu0 %v4588
    %4718 = vmatprep.subr.bf16.mxu0 %v4591
    %4719 = vmatpush1.bf16.msra.mxu0 %v4590
    %4720 = vmatprep.subr.bf16.mxu0 %v4593
    %4721 = vmatpush1.bf16.msra.mxu0 %v4592
    %4722 = vmatprep.subr.bf16.mxu0 %v4595
    %4723 = vmatpush1.bf16.msra.mxu0 %v4594
    %4724 = vmatprep.subr.bf16.mxu0 %v4597
    %4725 = vmatpush1.bf16.msra.mxu0 %v4596
    %4726 = vmatprep.subr.bf16.mxu0 %v4599
    %4727 = vmatpush1.bf16.msra.mxu0 %v4598
    %4728 = vmatprep.subr.bf16.mxu0 %v4601
    %4729 = vmatpush1.bf16.msra.mxu0 %v4600
    %4730 = vmatprep.subr.bf16.mxu0 %v4603
    %4731 = vmatpush1.bf16.msra.mxu0 %v4602
    %4732 = vmatprep.subr.bf16.mxu0 %v4605
    %4733 = vmatpush1.bf16.msra.mxu0 %v4604
    %4734 = vmatprep.subr.bf16.mxu0 %v4607
    %4735 = vmatpush1.bf16.msra.mxu0 %v4606
    %4736 = vmatprep.subr.bf16.mxu0 %v4609
    %4737 = vmatpush1.bf16.msra.mxu0 %v4608
    %4738 = vmatprep.mubr.bf16.mxu0 %v4251
    %4739 = vmatmul.mubr.bf16.gmra.mrb[0].mxu0 %v4250
    %v4740 = vpop.f32.mrb[0].mxu0
    %v4741 = vadd.f32 0.0, %v4740
    %v4742 = vpop.f32.mrb[0].mxu0
    %v4743 = vadd.f32 0.0, %v4742
    %v4744 = vpop.f32.mrb[0].mxu0
    %v4745 = vadd.f32 0.0, %v4744
    %v4746 = vpop.f32.mrb[0].mxu0
    %v4747 = vadd.f32 0.0, %v4746
    %4748 = vmatprep.mubr.bf16.mxu0 %v4255
    %4749 = vmatmul.mubr.bf16.gmra.mrb[0].mxu0 %v4254
    %v4750 = vpop.f32.mrb[0].mxu0
    %v4751 = vadd.f32 0.0, %v4750
    %v4752 = vpop.f32.mrb[0].mxu0
    %v4753 = vadd.f32 0.0, %v4752
    %v4754 = vpop.f32.mrb[0].mxu0
    %v4755 = vadd.f32 0.0, %v4754
    %v4756 = vpop.f32.mrb[0].mxu0
    %v4757 = vadd.f32 0.0, %v4756
    %4758 = vdwg.mxu0
    %4759 = vmatprep.subr.bf16.mxu0 %v4611
    %4760 = vmatpush1.bf16.msra.mxu0 %v4610
    %4761 = vmatprep.subr.bf16.mxu0 %v4613
    %4762 = vmatpush1.bf16.msra.mxu0 %v4612
    %4763 = vmatprep.subr.bf16.mxu0 %v4615
    %4764 = vmatpush1.bf16.msra.mxu0 %v4614
    %4765 = vmatprep.subr.bf16.mxu0 %v4617
    %4766 = vmatpush1.bf16.msra.mxu0 %v4616
    %4767 = vmatprep.subr.bf16.mxu0 %v4619
    %4768 = vmatpush1.bf16.msra.mxu0 %v4618
    %4769 = vmatprep.subr.bf16.mxu0 %v4621
    %4770 = vmatpush1.bf16.msra.mxu0 %v4620
    %4771 = vmatprep.subr.bf16.mxu0 %v4623
    %4772 = vmatpush1.bf16.msra.mxu0 %v4622
    %4773 = vmatprep.subr.bf16.mxu0 %v4625
    %4774 = vmatpush1.bf16.msra.mxu0 %v4624
    %4775 = vmatprep.subr.bf16.mxu0 %v4627
    %4776 = vmatpush1.bf16.msra.mxu0 %v4626
    %4777 = vmatprep.subr.bf16.mxu0 %v4629
    %4778 = vmatpush1.bf16.msra.mxu0 %v4628
    %4779 = vmatprep.subr.bf16.mxu0 %v4631
    %4780 = vmatpush1.bf16.msra.mxu0 %v4630
    %4781 = vmatprep.subr.bf16.mxu0 %v4633
    %4782 = vmatpush1.bf16.msra.mxu0 %v4632
    %4783 = vmatprep.subr.bf16.mxu0 %v4635
    %4784 = vmatpush1.bf16.msra.mxu0 %v4634
    %4785 = vmatprep.subr.bf16.mxu0 %v4637
    %4786 = vmatpush1.bf16.msra.mxu0 %v4636
    %4787 = vmatprep.subr.bf16.mxu0 %v4639
    %4788 = vmatpush1.bf16.msra.mxu0 %v4638
    %4789 = vmatprep.subr.bf16.mxu0 %v4641
    %4790 = vmatpush1.bf16.msra.mxu0 %v4640
    %4791 = vmatprep.mubr.bf16.mxu0 %v4253
    %4792 = vmatmul.mubr.bf16.gmra.mrb[0].mxu0 %v4252
    %v4793 = vpop.f32.mrb[0].mxu0
    %v4794 = vadd.f32 %v4741, %v4793
    %v4795 = vpop.f32.mrb[0].mxu0
    %v4796 = vadd.f32 %v4743, %v4795
    %v4797 = vpop.f32.mrb[0].mxu0
    %v4798 = vadd.f32 %v4745, %v4797
    %v4799 = vpop.f32.mrb[0].mxu0
    %v4800 = vadd.f32 %v4747, %v4799
    %4801 = vmatprep.mubr.bf16.mxu0 %v4257
    %4802 = vmatmul.mubr.bf16.gmra.mrb[0].mxu0 %v4256
    %v4803 = vpop.f32.mrb[0].mxu0
    %v4804 = vadd.f32 %v4751, %v4803
    %v4805 = vpop.f32.mrb[0].mxu0
    %v4806 = vadd.f32 %v4753, %v4805
    %v4807 = vpop.f32.mrb[0].mxu0
    %v4808 = vadd.f32 %v4755, %v4807
    %v4809 = vpop.f32.mrb[0].mxu0
    %v4810 = vadd.f32 %v4757, %v4809
    %4811 = vdwg.mxu0
    %s4812 = scalar_lea.vmem [#allocation8], 512
    %v4813 = vld [vmem:[%s4812] sm:$0xff]
    %v4814 = vld [vmem:[%s4812 + $0x8] sm:$0xff]
    %v4815 = vld [vmem:[%s4812 + $0x10] sm:$0xff]
    %v4816 = vld [vmem:[%s4812 + $0x18] sm:$0xff]
    %v4817 = vld [vmem:[%s4812 + $0x20] sm:$0xff]
    %v4818 = vld [vmem:[%s4812 + $0x28] sm:$0xff]
    %v4819 = vld [vmem:[%s4812 + $0x30] sm:$0xff]
    %v4820 = vld [vmem:[%s4812 + $0x38] sm:$0xff]
    %v4821 = vld [vmem:[%s4812 + $0x40] sm:$0xff]
    %v4822 = vld [vmem:[%s4812 + $0x48] sm:$0xff]
    %v4823 = vld [vmem:[%s4812 + $0x50] sm:$0xff]
    %v4824 = vld [vmem:[%s4812 + $0x58] sm:$0xff]
    %v4825 = vld [vmem:[%s4812 + $0x60] sm:$0xff]
    %v4826 = vld [vmem:[%s4812 + $0x68] sm:$0xff]
    %v4827 = vld [vmem:[%s4812 + $0x70] sm:$0xff]
    %v4828 = vld [vmem:[%s4812 + $0x78] sm:$0xff]
    %v4829 = vld [vmem:[%s4812 + $0x80] sm:$0xff]
    %v4830 = vld [vmem:[%s4812 + $0x88] sm:$0xff]
    %v4831 = vld [vmem:[%s4812 + $0x90] sm:$0xff]
    %v4832 = vld [vmem:[%s4812 + $0x98] sm:$0xff]
    %v4833 = vld [vmem:[%s4812 + $0xa0] sm:$0xff]
    %v4834 = vld [vmem:[%s4812 + $0xa8] sm:$0xff]
    %v4835 = vld [vmem:[%s4812 + $0xb0] sm:$0xff]
    %v4836 = vld [vmem:[%s4812 + $0xb8] sm:$0xff]
    %v4837 = vld [vmem:[%s4812 + $0xc0] sm:$0xff]
    %v4838 = vld [vmem:[%s4812 + $0xc8] sm:$0xff]
    %v4839 = vld [vmem:[%s4812 + $0xd0] sm:$0xff]
    %v4840 = vld [vmem:[%s4812 + $0xd8] sm:$0xff]
    %v4841 = vld [vmem:[%s4812 + $0xe0] sm:$0xff]
    %v4842 = vld [vmem:[%s4812 + $0xe8] sm:$0xff]
    %v4843 = vld [vmem:[%s4812 + $0xf0] sm:$0xff]
    %v4844 = vld [vmem:[%s4812 + $0xf8] sm:$0xff]
    %v4845 = vld [vmem:[%s4812 + $0x100] sm:$0xff]
    %v4846 = vld [vmem:[%s4812 + $0x108] sm:$0xff]
    %v4847 = vld [vmem:[%s4812 + $0x110] sm:$0xff]
    %v4848 = vld [vmem:[%s4812 + $0x118] sm:$0xff]
    %v4849 = vld [vmem:[%s4812 + $0x120] sm:$0xff]
    %v4850 = vld [vmem:[%s4812 + $0x128] sm:$0xff]
    %v4851 = vld [vmem:[%s4812 + $0x130] sm:$0xff]
    %v4852 = vld [vmem:[%s4812 + $0x138] sm:$0xff]
    %v4853 = vld [vmem:[%s4812 + $0x140] sm:$0xff]
    %v4854 = vld [vmem:[%s4812 + $0x148] sm:$0xff]
    %v4855 = vld [vmem:[%s4812 + $0x150] sm:$0xff]
    %v4856 = vld [vmem:[%s4812 + $0x158] sm:$0xff]
    %v4857 = vld [vmem:[%s4812 + $0x160] sm:$0xff]
    %v4858 = vld [vmem:[%s4812 + $0x168] sm:$0xff]
    %v4859 = vld [vmem:[%s4812 + $0x170] sm:$0xff]
    %v4860 = vld [vmem:[%s4812 + $0x178] sm:$0xff]
    %v4861 = vld [vmem:[%s4812 + $0x180] sm:$0xff]
    %v4862 = vld [vmem:[%s4812 + $0x188] sm:$0xff]
    %v4863 = vld [vmem:[%s4812 + $0x190] sm:$0xff]
    %v4864 = vld [vmem:[%s4812 + $0x198] sm:$0xff]
    %v4865 = vld [vmem:[%s4812 + $0x1a0] sm:$0xff]
    %v4866 = vld [vmem:[%s4812 + $0x1a8] sm:$0xff]
    %v4867 = vld [vmem:[%s4812 + $0x1b0] sm:$0xff]
    %v4868 = vld [vmem:[%s4812 + $0x1b8] sm:$0xff]
    %v4869 = vld [vmem:[%s4812 + $0x1c0] sm:$0xff]
    %v4870 = vld [vmem:[%s4812 + $0x1c8] sm:$0xff]
    %v4871 = vld [vmem:[%s4812 + $0x1d0] sm:$0xff]
    %v4872 = vld [vmem:[%s4812 + $0x1d8] sm:$0xff]
    %v4873 = vld [vmem:[%s4812 + $0x1e0] sm:$0xff]
    %v4874 = vld [vmem:[%s4812 + $0x1e8] sm:$0xff]
    %v4875 = vld [vmem:[%s4812 + $0x1f0] sm:$0xff]
    %v4876 = vld [vmem:[%s4812 + $0x1f8] sm:$0xff]
    %v4941 = vunpack.c.l.b16 %v4813
    %v4942 = vunpack.c.h.b16 %v4813
    %v4943 = vunpack.c.l.b16 %v4814
    %v4944 = vunpack.c.h.b16 %v4814
    %v4945 = vunpack.c.l.b16 %v4815
    %v4946 = vunpack.c.h.b16 %v4815
    %v4947 = vunpack.c.l.b16 %v4816
    %v4948 = vunpack.c.h.b16 %v4816
    %v4949 = vunpack.c.l.b16 %v4817
    %v4950 = vunpack.c.h.b16 %v4817
    %v4951 = vunpack.c.l.b16 %v4818
    %v4952 = vunpack.c.h.b16 %v4818
    %v4953 = vunpack.c.l.b16 %v4819
    %v4954 = vunpack.c.h.b16 %v4819
    %v4955 = vunpack.c.l.b16 %v4820
    %v4956 = vunpack.c.h.b16 %v4820
    %v4957 = vunpack.c.l.b16 %v4821
    %v4958 = vunpack.c.h.b16 %v4821
    %v4959 = vunpack.c.l.b16 %v4822
    %v4960 = vunpack.c.h.b16 %v4822
    %v4961 = vunpack.c.l.b16 %v4823
    %v4962 = vunpack.c.h.b16 %v4823
    %v4963 = vunpack.c.l.b16 %v4824
    %v4964 = vunpack.c.h.b16 %v4824
    %v4965 = vunpack.c.l.b16 %v4825
    %v4966 = vunpack.c.h.b16 %v4825
    %v4967 = vunpack.c.l.b16 %v4826
    %v4968 = vunpack.c.h.b16 %v4826
    %v4969 = vunpack.c.l.b16 %v4827
    %v4970 = vunpack.c.h.b16 %v4827
    %v4971 = vunpack.c.l.b16 %v4828
    %v4972 = vunpack.c.h.b16 %v4828
    %v4973 = vunpack.c.l.b16 %v4829
    %v4974 = vunpack.c.h.b16 %v4829
    %v4975 = vunpack.c.l.b16 %v4830
    %v4976 = vunpack.c.h.b16 %v4830
    %v4977 = vunpack.c.l.b16 %v4831
    %v4978 = vunpack.c.h.b16 %v4831
    %v4979 = vunpack.c.l.b16 %v4832
    %v4980 = vunpack.c.h.b16 %v4832
    %v4981 = vunpack.c.l.b16 %v4833
    %v4982 = vunpack.c.h.b16 %v4833
    %v4983 = vunpack.c.l.b16 %v4834
    %v4984 = vunpack.c.h.b16 %v4834
    %v4985 = vunpack.c.l.b16 %v4835
    %v4986 = vunpack.c.h.b16 %v4835
    %v4987 = vunpack.c.l.b16 %v4836
    %v4988 = vunpack.c.h.b16 %v4836
    %v4989 = vunpack.c.l.b16 %v4837
    %v4990 = vunpack.c.h.b16 %v4837
    %v4991 = vunpack.c.l.b16 %v4838
    %v4992 = vunpack.c.h.b16 %v4838
    %v4993 = vunpack.c.l.b16 %v4839
    %v4994 = vunpack.c.h.b16 %v4839
    %v4995 = vunpack.c.l.b16 %v4840
    %v4996 = vunpack.c.h.b16 %v4840
    %v4997 = vunpack.c.l.b16 %v4841
    %v4998 = vunpack.c.h.b16 %v4841
    %v4999 = vunpack.c.l.b16 %v4842
    %v5000 = vunpack.c.h.b16 %v4842
    %v5001 = vunpack.c.l.b16 %v4843
    %v5002 = vunpack.c.h.b16 %v4843
    %v5003 = vunpack.c.l.b16 %v4844
    %v5004 = vunpack.c.h.b16 %v4844
    %v5005 = vunpack.c.l.b16 %v4845
    %v5006 = vunpack.c.h.b16 %v4845
    %v5007 = vunpack.c.l.b16 %v4846
    %v5008 = vunpack.c.h.b16 %v4846
    %v5009 = vunpack.c.l.b16 %v4847
    %v5010 = vunpack.c.h.b16 %v4847
    %v5011 = vunpack.c.l.b16 %v4848
    %v5012 = vunpack.c.h.b16 %v4848
    %v5013 = vunpack.c.l.b16 %v4849
    %v5014 = vunpack.c.h.b16 %v4849
    %v5015 = vunpack.c.l.b16 %v4850
    %v5016 = vunpack.c.h.b16 %v4850
    %v5017 = vunpack.c.l.b16 %v4851
    %v5018 = vunpack.c.h.b16 %v4851
    %v5019 = vunpack.c.l.b16 %v4852
    %v5020 = vunpack.c.h.b16 %v4852
    %v5021 = vunpack.c.l.b16 %v4853
    %v5022 = vunpack.c.h.b16 %v4853
    %v5023 = vunpack.c.l.b16 %v4854
    %v5024 = vunpack.c.h.b16 %v4854
    %v5025 = vunpack.c.l.b16 %v4855
    %v5026 = vunpack.c.h.b16 %v4855
    %v5027 = vunpack.c.l.b16 %v4856
    %v5028 = vunpack.c.h.b16 %v4856
    %v5029 = vunpack.c.l.b16 %v4857
    %v5030 = vunpack.c.h.b16 %v4857
    %v5031 = vunpack.c.l.b16 %v4858
    %v5032 = vunpack.c.h.b16 %v4858
    %v5033 = vunpack.c.l.b16 %v4859
    %v5034 = vunpack.c.h.b16 %v4859
    %v5035 = vunpack.c.l.b16 %v4860
    %v5036 = vunpack.c.h.b16 %v4860
    %v5037 = vunpack.c.l.b16 %v4861
    %v5038 = vunpack.c.h.b16 %v4861
    %v5039 = vunpack.c.l.b16 %v4862
    %v5040 = vunpack.c.h.b16 %v4862
    %v5041 = vunpack.c.l.b16 %v4863
    %v5042 = vunpack.c.h.b16 %v4863
    %v5043 = vunpack.c.l.b16 %v4864
    %v5044 = vunpack.c.h.b16 %v4864
    %v5045 = vunpack.c.l.b16 %v4865
    %v5046 = vunpack.c.h.b16 %v4865
    %v5047 = vunpack.c.l.b16 %v4866
    %v5048 = vunpack.c.h.b16 %v4866
    %v5049 = vunpack.c.l.b16 %v4867
    %v5050 = vunpack.c.h.b16 %v4867
    %v5051 = vunpack.c.l.b16 %v4868
    %v5052 = vunpack.c.h.b16 %v4868
    %v5053 = vunpack.c.l.b16 %v4869
    %v5054 = vunpack.c.h.b16 %v4869
    %v5055 = vunpack.c.l.b16 %v4870
    %v5056 = vunpack.c.h.b16 %v4870
    %v5057 = vunpack.c.l.b16 %v4871
    %v5058 = vunpack.c.h.b16 %v4871
    %v5059 = vunpack.c.l.b16 %v4872
    %v5060 = vunpack.c.h.b16 %v4872
    %v5061 = vunpack.c.l.b16 %v4873
    %v5062 = vunpack.c.h.b16 %v4873
    %v5063 = vunpack.c.l.b16 %v4874
    %v5064 = vunpack.c.h.b16 %v4874
    %v5065 = vunpack.c.l.b16 %v4875
    %v5066 = vunpack.c.h.b16 %v4875
    %v5067 = vunpack.c.l.b16 %v4876
    %v5068 = vunpack.c.h.b16 %v4876
    %v5069 = vpack.c.b16 %v4943, %v4941
    %v5070 = vpack.c.b16 %v4944, %v4942
    %v5071 = vpack.c.b16 %v4947, %v4945
    %v5072 = vpack.c.b16 %v4948, %v4946
    %v5073 = vpack.c.b16 %v4951, %v4949
    %v5074 = vpack.c.b16 %v4952, %v4950
    %v5075 = vpack.c.b16 %v4955, %v4953
    %v5076 = vpack.c.b16 %v4956, %v4954
    %v5077 = vpack.c.b16 %v4959, %v4957
    %v5078 = vpack.c.b16 %v4960, %v4958
    %v5079 = vpack.c.b16 %v4963, %v4961
    %v5080 = vpack.c.b16 %v4964, %v4962
    %v5081 = vpack.c.b16 %v4967, %v4965
    %v5082 = vpack.c.b16 %v4968, %v4966
    %v5083 = vpack.c.b16 %v4971, %v4969
    %v5084 = vpack.c.b16 %v4972, %v4970
    %v5085 = vpack.c.b16 %v4975, %v4973
    %v5086 = vpack.c.b16 %v4976, %v4974
    %v5087 = vpack.c.b16 %v4979, %v4977
    %v5088 = vpack.c.b16 %v4980, %v4978
    %v5089 = vpack.c.b16 %v4983, %v4981
    %v5090 = vpack.c.b16 %v4984, %v4982
    %v5091 = vpack.c.b16 %v4987, %v4985
    %v5092 = vpack.c.b16 %v4988, %v4986
    %v5093 = vpack.c.b16 %v4991, %v4989
    %v5094 = vpack.c.b16 %v4992, %v4990
    %v5095 = vpack.c.b16 %v4995, %v4993
    %v5096 = vpack.c.b16 %v4996, %v4994
    %v5097 = vpack.c.b16 %v4999, %v4997
    %v5098 = vpack.c.b16 %v5000, %v4998
    %v5099 = vpack.c.b16 %v5003, %v5001
    %v5100 = vpack.c.b16 %v5004, %v5002
    %v5101 = vpack.c.b16 %v5007, %v5005
    %v5102 = vpack.c.b16 %v5008, %v5006
    %v5103 = vpack.c.b16 %v5011, %v5009
    %v5104 = vpack.c.b16 %v5012, %v5010
    %v5105 = vpack.c.b16 %v5015, %v5013
    %v5106 = vpack.c.b16 %v5016, %v5014
    %v5107 = vpack.c.b16 %v5019, %v5017
    %v5108 = vpack.c.b16 %v5020, %v5018
    %v5109 = vpack.c.b16 %v5023, %v5021
    %v5110 = vpack.c.b16 %v5024, %v5022
    %v5111 = vpack.c.b16 %v5027, %v5025
    %v5112 = vpack.c.b16 %v5028, %v5026
    %v5113 = vpack.c.b16 %v5031, %v5029
    %v5114 = vpack.c.b16 %v5032, %v5030
    %v5115 = vpack.c.b16 %v5035, %v5033
    %v5116 = vpack.c.b16 %v5036, %v5034
    %v5117 = vpack.c.b16 %v5039, %v5037
    %v5118 = vpack.c.b16 %v5040, %v5038
    %v5119 = vpack.c.b16 %v5043, %v5041
    %v5120 = vpack.c.b16 %v5044, %v5042
    %v5121 = vpack.c.b16 %v5047, %v5045
    %v5122 = vpack.c.b16 %v5048, %v5046
    %v5123 = vpack.c.b16 %v5051, %v5049
    %v5124 = vpack.c.b16 %v5052, %v5050
    %v5125 = vpack.c.b16 %v5055, %v5053
    %v5126 = vpack.c.b16 %v5056, %v5054
    %v5127 = vpack.c.b16 %v5059, %v5057
    %v5128 = vpack.c.b16 %v5060, %v5058
    %v5129 = vpack.c.b16 %v5063, %v5061
    %v5130 = vpack.c.b16 %v5064, %v5062
    %v5131 = vpack.c.b16 %v5067, %v5065
    %v5132 = vpack.c.b16 %v5068, %v5066
    %5197 = vmatprep.subr.bf16.mxu0 %v5070
    %5198 = vmatpush1.bf16.msra.mxu0 %v5069
    %5199 = vmatprep.subr.bf16.mxu0 %v5072
    %5200 = vmatpush1.bf16.msra.mxu0 %v5071
    %5201 = vmatprep.subr.bf16.mxu0 %v5074
    %5202 = vmatpush1.bf16.msra.mxu0 %v5073
    %5203 = vmatprep.subr.bf16.mxu0 %v5076
    %5204 = vmatpush1.bf16.msra.mxu0 %v5075
    %5205 = vmatprep.subr.bf16.mxu0 %v5078
    %5206 = vmatpush1.bf16.msra.mxu0 %v5077
    %5207 = vmatprep.subr.bf16.mxu0 %v5080
    %5208 = vmatpush1.bf16.msra.mxu0 %v5079
    %5209 = vmatprep.subr.bf16.mxu0 %v5082
    %5210 = vmatpush1.bf16.msra.mxu0 %v5081
    %5211 = vmatprep.subr.bf16.mxu0 %v5084
    %5212 = vmatpush1.bf16.msra.mxu0 %v5083
    %5213 = vmatprep.subr.bf16.mxu0 %v5086
    %5214 = vmatpush1.bf16.msra.mxu0 %v5085
    %5215 = vmatprep.subr.bf16.mxu0 %v5088
    %5216 = vmatpush1.bf16.msra.mxu0 %v5087
    %5217 = vmatprep.subr.bf16.mxu0 %v5090
    %5218 = vmatpush1.bf16.msra.mxu0 %v5089
    %5219 = vmatprep.subr.bf16.mxu0 %v5092
    %5220 = vmatpush1.bf16.msra.mxu0 %v5091
    %5221 = vmatprep.subr.bf16.mxu0 %v5094
    %5222 = vmatpush1.bf16.msra.mxu0 %v5093
    %5223 = vmatprep.subr.bf16.mxu0 %v5096
    %5224 = vmatpush1.bf16.msra.mxu0 %v5095
    %5225 = vmatprep.subr.bf16.mxu0 %v5098
    %5226 = vmatpush1.bf16.msra.mxu0 %v5097
    %5227 = vmatprep.subr.bf16.mxu0 %v5100
    %5228 = vmatpush1.bf16.msra.mxu0 %v5099
    %5229 = vmatprep.mubr.bf16.mxu0 %v4253
    %5230 = vmatmul.mubr.bf16.gmra.mrb[0].mxu0 %v4252
    %v5231 = vpop.f32.mrb[0].mxu0
    %v5232 = vadd.f32 0.0, %v5231
    %v5233 = vpop.f32.mrb[0].mxu0
    %v5234 = vadd.f32 0.0, %v5233
    %v5235 = vpop.f32.mrb[0].mxu0
    %v5236 = vadd.f32 0.0, %v5235
    %v5237 = vpop.f32.mrb[0].mxu0
    %v5238 = vadd.f32 0.0, %v5237
    %5239 = vmatprep.mubr.bf16.mxu0 %v4257
    %5240 = vmatmul.mubr.bf16.gmra.mrb[0].mxu0 %v4256
    %v5241 = vpop.f32.mrb[0].mxu0
    %v5242 = vadd.f32 0.0, %v5241
    %v5243 = vpop.f32.mrb[0].mxu0
    %v5244 = vadd.f32 0.0, %v5243
    %v5245 = vpop.f32.mrb[0].mxu0
    %v5246 = vadd.f32 0.0, %v5245
    %v5247 = vpop.f32.mrb[0].mxu0
    %v5248 = vadd.f32 0.0, %v5247
    %5249 = vdwg.mxu0
    %5250 = vmatprep.subr.bf16.mxu0 %v5102
    %5251 = vmatpush1.bf16.msra.mxu0 %v5101
    %5252 = vmatprep.subr.bf16.mxu0 %v5104
    %5253 = vmatpush1.bf16.msra.mxu0 %v5103
    %5254 = vmatprep.subr.bf16.mxu0 %v5106
    %5255 = vmatpush1.bf16.msra.mxu0 %v5105
    %5256 = vmatprep.subr.bf16.mxu0 %v5108
    %5257 = vmatpush1.bf16.msra.mxu0 %v5107
    %5258 = vmatprep.subr.bf16.mxu0 %v5110
    %5259 = vmatpush1.bf16.msra.mxu0 %v5109
    %5260 = vmatprep.subr.bf16.mxu0 %v5112
    %5261 = vmatpush1.bf16.msra.mxu0 %v5111
    %5262 = vmatprep.subr.bf16.mxu0 %v5114
    %5263 = vmatpush1.bf16.msra.mxu0 %v5113
    %5264 = vmatprep.subr.bf16.mxu0 %v5116
    %5265 = vmatpush1.bf16.msra.mxu0 %v5115
    %5266 = vmatprep.subr.bf16.mxu0 %v5118
    %5267 = vmatpush1.bf16.msra.mxu0 %v5117
    %5268 = vmatprep.subr.bf16.mxu0 %v5120
    %5269 = vmatpush1.bf16.msra.mxu0 %v5119
    %5270 = vmatprep.subr.bf16.mxu0 %v5122
    %5271 = vmatpush1.bf16.msra.mxu0 %v5121
    %5272 = vmatprep.subr.bf16.mxu0 %v5124
    %5273 = vmatpush1.bf16.msra.mxu0 %v5123
    %5274 = vmatprep.subr.bf16.mxu0 %v5126
    %5275 = vmatpush1.bf16.msra.mxu0 %v5125
    %5276 = vmatprep.subr.bf16.mxu0 %v5128
    %5277 = vmatpush1.bf16.msra.mxu0 %v5127
    %5278 = vmatprep.subr.bf16.mxu0 %v5130
    %5279 = vmatpush1.bf16.msra.mxu0 %v5129
    %5280 = vmatprep.subr.bf16.mxu0 %v5132
    %5281 = vmatpush1.bf16.msra.mxu0 %v5131
    %5282 = vmatprep.mubr.bf16.mxu0 %v4319
    %5283 = vmatmul.mubr.bf16.gmra.mrb[0].mxu0 %v4318
    %v5284 = vpop.f32.mrb[0].mxu0
    %v5285 = vadd.f32 %v5232, %v5284
    %v5286 = vpop.f32.mrb[0].mxu0
    %v5287 = vadd.f32 %v5234, %v5286
    %v5288 = vpop.f32.mrb[0].mxu0
    %v5289 = vadd.f32 %v5236, %v5288
    %v5290 = vpop.f32.mrb[0].mxu0
    %v5291 = vadd.f32 %v5238, %v5290
    %5292 = vmatprep.mubr.bf16.mxu0 %v4321
    %5293 = vmatmul.mubr.bf16.gmra.mrb[0].mxu0 %v4320
    %v5294 = vpop.f32.mrb[0].mxu0
    %v5295 = vadd.f32 %v5242, %v5294
    %v5296 = vpop.f32.mrb[0].mxu0
    %v5297 = vadd.f32 %v5244, %v5296
    %v5298 = vpop.f32.mrb[0].mxu0
    %v5299 = vadd.f32 %v5246, %v5298
    %v5300 = vpop.f32.mrb[0].mxu0
    %v5301 = vadd.f32 %v5248, %v5300
    %5302 = vdwg.mxu0
    %v5303 = vadd.f32 %v4794, %v4798
    %v5304 = vadd.f32 %v5303, %v4804
    %v5305 = vadd.f32 %v5304, %v4808
    %v5306 = vrot.slane %v5305, 4
    %v5307 = vadd.f32 %v5305, %v5306
    %v5308 = vrot.slane %v5307, 2
    %v5309 = vadd.f32 %v5307, %v5308
    %v5310 = vrot.slane %v5309, 1
    %v5311 = vadd.f32 %v5309, %v5310
    %v5312 = vadd.f32 %v4796, %v4800
    %v5313 = vadd.f32 %v5312, %v4806
    %v5314 = vadd.f32 %v5313, %v4810
    %v5315 = vrot.slane %v5314, 4
    %v5316 = vadd.f32 %v5314, %v5315
    %v5317 = vrot.slane %v5316, 2
    %v5318 = vadd.f32 %v5316, %v5317
    %v5319 = vrot.slane %v5318, 1
    %v5320 = vadd.f32 %v5318, %v5319
    %v5321 = vadd.f32 %v5285, %v5289
    %v5322 = vadd.f32 %v5321, %v5295
    %v5323 = vadd.f32 %v5322, %v5299
    %v5324 = vrot.slane %v5323, 4
    %v5325 = vadd.f32 %v5323, %v5324
    %v5326 = vrot.slane %v5325, 2
    %v5327 = vadd.f32 %v5325, %v5326
    %v5328 = vrot.slane %v5327, 1
    %v5329 = vadd.f32 %v5327, %v5328
    %v5330 = vadd.f32 %v5287, %v5291
    %v5331 = vadd.f32 %v5330, %v5297
    %v5332 = vadd.f32 %v5331, %v5301
    %v5333 = vrot.slane %v5332, 4
    %v5334 = vadd.f32 %v5332, %v5333
    %v5335 = vrot.slane %v5334, 2
    %v5336 = vadd.f32 %v5334, %v5335
    %v5337 = vrot.slane %v5336, 1
    %v5338 = vadd.f32 %v5336, %v5337
    %v5339 = vadd.f32 %v5311, %v5329
    %v5340 = vadd.f32 %v5320, %v5338
    %v5341 = vmul.f32 %v4794, %v4794
    %v5342 = vmul.f32 %v4796, %v4796
    %v5343 = vmul.f32 %v4798, %v4798
    %v5344 = vmul.f32 %v4800, %v4800
    %v5345 = vmul.f32 %v4804, %v4804
    %v5346 = vmul.f32 %v4806, %v4806
    %v5347 = vmul.f32 %v4808, %v4808
    %v5348 = vmul.f32 %v4810, %v4810
    %v5349 = vadd.f32 %v5341, %v5343
    %v5350 = vadd.f32 %v5349, %v5345
    %v5351 = vadd.f32 %v5350, %v5347
    %v5352 = vrot.slane %v5351, 4
    %v5353 = vadd.f32 %v5351, %v5352
    %v5354 = vrot.slane %v5353, 2
    %v5355 = vadd.f32 %v5353, %v5354
    %v5356 = vrot.slane %v5355, 1
    %v5357 = vadd.f32 %v5355, %v5356
    %v5358 = vadd.f32 %v5342, %v5344
    %v5359 = vadd.f32 %v5358, %v5346
    %v5360 = vadd.f32 %v5359, %v5348
    %v5361 = vrot.slane %v5360, 4
    %v5362 = vadd.f32 %v5360, %v5361
    %v5363 = vrot.slane %v5362, 2
    %v5364 = vadd.f32 %v5362, %v5363
    %v5365 = vrot.slane %v5364, 1
    %v5366 = vadd.f32 %v5364, %v5365
    %v5367 = vmul.f32 %v5285, %v5285
    %v5368 = vmul.f32 %v5287, %v5287
    %v5369 = vmul.f32 %v5289, %v5289
    %v5370 = vmul.f32 %v5291, %v5291
    %v5371 = vmul.f32 %v5295, %v5295
    %v5372 = vmul.f32 %v5297, %v5297
    %v5373 = vmul.f32 %v5299, %v5299
    %v5374 = vmul.f32 %v5301, %v5301
    %v5375 = vadd.f32 %v5367, %v5369
    %v5376 = vadd.f32 %v5375, %v5371
    %v5377 = vadd.f32 %v5376, %v5373
    %v5378 = vrot.slane %v5377, 4
    %v5379 = vadd.f32 %v5377, %v5378
    %v5380 = vrot.slane %v5379, 2
    %v5381 = vadd.f32 %v5379, %v5380
    %v5382 = vrot.slane %v5381, 1
    %v5383 = vadd.f32 %v5381, %v5382
    %v5384 = vadd.f32 %v5368, %v5370
    %v5385 = vadd.f32 %v5384, %v5372
    %v5386 = vadd.f32 %v5385, %v5374
    %v5387 = vrot.slane %v5386, 4
    %v5388 = vadd.f32 %v5386, %v5387
    %v5389 = vrot.slane %v5388, 2
    %v5390 = vadd.f32 %v5388, %v5389
    %v5391 = vrot.slane %v5390, 1
    %v5392 = vadd.f32 %v5390, %v5391
    %v5393 = vadd.f32 %v5357, %v5383
    %v5394 = vadd.f32 %v5366, %v5392
    %s5395 = scalar_lea.vmem %s7, 8
    %v5396 = vld [vmem:[%s5395] sm:$0xf]
    %5397 = vrot.lane.b32.xlu0 %v5339, 8
    %v5398 = vpop.permute.xlu0 %5397
    %5399 = vrot.lane.b32.xlu0 %v5340, 8
    %v5400 = vpop.permute.xlu0 %5399
    %vm5401 = vcmp.lt.s32.totalorder %v525, 8
    %v5402 = vsel %vm5401, %v5398, %v5400
    %v5403 = vsel %vm5401, %v5400, %v5398
    %v5404 = vadd.f32 %v5339, %v5403
    %v5405 = vadd.f32 %v5340, %v5402
    %5406 = vrot.lane.b32.xlu0 %v5404, 16
    %v5407 = vpop.permute.xlu0 %5406
    %5408 = vrot.lane.b32.xlu0 %v5405, 16
    %v5409 = vpop.permute.xlu0 %5408
    %v5410 = vsel %vm3781, %v5407, %v5409
    %v5411 = vsel %vm3781, %v5409, %v5407
    %v5412 = vadd.f32 %v5404, %v5411
    %v5413 = vadd.f32 %v5405, %v5410
    %5414 = vrot.lane.b32.xlu0 %v5412, 32
    %v5415 = vpop.permute.xlu0 %5414
    %5416 = vrot.lane.b32.xlu0 %v5413, 32
    %v5417 = vpop.permute.xlu0 %5416
    %v5418 = vsel %vm2327, %v5415, %v5417
    %v5419 = vsel %vm2327, %v5417, %v5415
    %v5420 = vadd.f32 %v5412, %v5419
    %v5421 = vadd.f32 %v5413, %v5418
    %5422 = vrot.lane.b32.xlu0 %v5420, 64
    %v5423 = vpop.permute.xlu0 %5422
    %5424 = vrot.lane.b32.xlu0 %v5421, 64
    %v5425 = vpop.permute.xlu0 %5424
    %v5426 = vsel %vm526, %v5423, %v5425
    %v5427 = vsel %vm526, %v5425, %v5423
    %v5428 = vadd.f32 %v5420, %v5427
    %v5429 = vadd.f32 %v5421, %v5426
    %v5430 = vadd.f32 %v5428, %v5429
    %5431 = vrot.lane.b32.xlu0 %v5393, 8
    %v5432 = vpop.permute.xlu0 %5431
    %5433 = vrot.lane.b32.xlu0 %v5394, 8
    %v5434 = vpop.permute.xlu0 %5433
    %v5435 = vsel %vm5401, %v5432, %v5434
    %v5436 = vsel %vm5401, %v5434, %v5432
    %v5437 = vadd.f32 %v5393, %v5436
    %v5438 = vadd.f32 %v5394, %v5435
    %5439 = vrot.lane.b32.xlu0 %v5437, 16
    %v5440 = vpop.permute.xlu0 %5439
    %5441 = vrot.lane.b32.xlu0 %v5438, 16
    %v5442 = vpop.permute.xlu0 %5441
    %v5443 = vsel %vm3781, %v5440, %v5442
    %v5444 = vsel %vm3781, %v5442, %v5440
    %v5445 = vadd.f32 %v5437, %v5444
    %v5446 = vadd.f32 %v5438, %v5443
    %5447 = vrot.lane.b32.xlu0 %v5445, 32
    %v5448 = vpop.permute.xlu0 %5447
    %5449 = vrot.lane.b32.xlu0 %v5446, 32
    %v5450 = vpop.permute.xlu0 %5449
    %v5451 = vsel %vm2327, %v5448, %v5450
    %v5452 = vsel %vm2327, %v5450, %v5448
    %v5453 = vadd.f32 %v5445, %v5452
    %v5454 = vadd.f32 %v5446, %v5451
    %5455 = vrot.lane.b32.xlu0 %v5453, 64
    %v5456 = vpop.permute.xlu0 %5455
    %5457 = vrot.lane.b32.xlu0 %v5454, 64
    %v5458 = vpop.permute.xlu0 %5457
    %v5459 = vsel %vm526, %v5456, %v5458
    %v5460 = vsel %vm526, %v5458, %v5456
    %v5461 = vadd.f32 %v5453, %v5460
    %v5462 = vadd.f32 %v5454, %v5459
    %v5463 = vadd.f32 %v5461, %v5462
    %v5464 = vmul.f32 %v5430, 0.00048828125
    %v5465 = vmul.f32 %v5463, 0.00048828125
    %v5466 = vmul.f32 %v5464, %v5464
    %v5467 = vsub.f32 %v5465, %v5466
    %v5468 = vadd.f32 %v5467, 1e-05
    %v5469 = vrsqrt.pop %v5468
    %v5471 = vcombine.low %v5469, %v5469
    %v5473 = vunpack.c.l.s4 1983009808
    %v5474 = vunpack.c.0.s8 %v5473
    %v5475 = vlaneseq
    %v5476 = vshrl.u32 %v5475, 7
    %v5477 = vsub.s32 %v5474, %v5476
    %v5478 = vrot.slane %v5471, %v5477
    %v5480 = vmul.f32 %v5396, %v5478
    %v5482 = vlaneseq
    %v5483 = vshrl.u32 %v5482, 7
    %v5484 = vsub.s32 0, %v5483
    %v5485 = vrot.slane %v5480, %v5484
    %v5486 = vlaneseq
    %v5487 = vshrl.u32 %v5486, 7
    %v5488 = vsub.s32 2, %v5487
    %v5489 = vrot.slane %v5480, %v5488
    %v5492 = vmul.f32 %v5464, %v5485
    %v5493 = vmul.f32 %v5464, %v5489
    %v5496 = vcombine.low %v5492, %v5493
    %v5498 = vunpack.c.l.s4 1983009808
    %v5499 = vunpack.c.0.s8 %v5498
    %v5500 = vlaneseq
    %v5501 = vshrl.u32 %v5500, 7
    %v5502 = vsub.s32 %v5499, %v5501
    %v5503 = vrot.slane %v5496, %v5502
    %v5504 = vrot.slane %v5503, 7
    %v5506 = vsub.f32 %v5396, %v5504
    %v5507 = vld [vmem:[%s10] sm:$0xf]
    %v5508 = vld [vmem:[%s10 + $0x4] sm:$0xf]
    %v5509 = vld [vmem:[%s10 + $0x8] sm:$0xf]
    %v5510 = vld [vmem:[%s10 + $0xc] sm:$0xf]
    %s5511 = scalar_lea.vmem %s10, 16
    %v5512 = vld [vmem:[%s5511] sm:$0xf]
    %v5513 = vld [vmem:[%s5511 + $0x4] sm:$0xf]
    %v5514 = vld [vmem:[%s5511 + $0x8] sm:$0xf]
    %v5515 = vld [vmem:[%s5511 + $0xc] sm:$0xf]
    %v5516 = vlaneseq
    %v5517 = vshrl.u32 %v5516, 7
    %v5518 = vsub.s32 0, %v5517
    %v5519 = vrot.slane %v5485, %v5518
    %v5520 = vlaneseq
    %v5521 = vshrl.u32 %v5520, 7
    %v5522 = vsub.s32 0, %v5521
    %v5523 = vrot.slane %v5489, %v5522
    %v5524 = vmul.f32 %v4794, %v5519
    %v5525 = vmul.f32 %v4796, %v5523
    %v5526 = vmul.f32 %v4798, %v5519
    %v5527 = vmul.f32 %v4800, %v5523
    %v5529 = vlaneseq
    %v5530 = vshrl.u32 %v5529, 7
    %v5531 = vsub.s32 1, %v5530
    %v5532 = vrot.slane %v5506, %v5531
    %v5533 = vlaneseq
    %v5534 = vshrl.u32 %v5533, 7
    %v5535 = vsub.s32 3, %v5534
    %v5536 = vrot.slane %v5506, %v5535
    %v5539 = vlaneseq
    %v5540 = vshrl.u32 %v5539, 7
    %v5541 = vsub.s32 1, %v5540
    %v5542 = vrot.slane %v5532, %v5541
    %v5543 = vlaneseq
    %v5544 = vshrl.u32 %v5543, 7
    %v5545 = vsub.s32 1, %v5544
    %v5546 = vrot.slane %v5536, %v5545
    %v5547 = vadd.f32 %v5524, %v5542
    %v5548 = vadd.f32 %v5525, %v5546
    %v5549 = vadd.f32 %v5526, %v5542
    %v5550 = vadd.f32 %v5527, %v5546
    %v5551 = vmax.f32 %v5547, 0.0
    %v5552 = vmax.f32 %v5548, 0.0
    %v5553 = vmax.f32 %v5549, 0.0
    %v5554 = vmax.f32 %v5550, 0.0
    %v5555 = vpack.c.bf16 %v5553, %v5551
    %v5556 = vpack.c.bf16 %v5554, %v5552
    %v5557 = vmul.f32 %v5285, %v5519
    %v5558 = vmul.f32 %v5287, %v5523
    %v5559 = vmul.f32 %v5289, %v5519
    %v5560 = vmul.f32 %v5291, %v5523
    %v5561 = vadd.f32 %v5557, %v5542
    %v5562 = vadd.f32 %v5558, %v5546
    %v5563 = vadd.f32 %v5559, %v5542
    %v5564 = vadd.f32 %v5560, %v5546
    %v5565 = vmax.f32 %v5561, 0.0
    %v5566 = vmax.f32 %v5562, 0.0
    %v5567 = vmax.f32 %v5563, 0.0
    %v5568 = vmax.f32 %v5564, 0.0
    %v5569 = vpack.c.bf16 %v5567, %v5565
    %v5570 = vpack.c.bf16 %v5568, %v5566
    %v5575 = vunpack.c.l.b16 %v5512
    %v5576 = vunpack.c.l.b16 %v5513
    %v5577 = vunpack.c.l.b16 %v5514
    %v5578 = vunpack.c.l.b16 %v5515
    %v5579 = vpack.c.b16 %v5576, %v5575
    %v5580 = vpack.c.b16 %v5578, %v5577
    %vm5581 = vcmask 130048
    %v5583 = vsel %vm5581, %v5579, 0
    %v5586 = vsel %vm5581, %v5580, 0
    %5588 = vmatprep.subr.bf16.mxu0 %v5570
    %5589 = vmatpush1.bf16.msra.mxu0 %v5569
    %5590 = vmatprep.subr.bf16.mxu0 0
    %5591 = vmatpush1.bf16.msra.mxu0 0
    %5592 = vmatprep.subr.bf16.mxu0 0
    %5593 = vmatpush1.bf16.msra.mxu0 0
    %5594 = vmatprep.subr.bf16.mxu0 0
    %5595 = vmatpush1.bf16.msra.mxu0 0
    %5596 = vmatprep.subr.bf16.mxu0 0
    %5597 = vmatpush1.bf16.msra.mxu0 0
    %5598 = vmatprep.subr.bf16.mxu0 0
    %5599 = vmatpush1.bf16.msra.mxu0 0
    %5600 = vmatprep.subr.bf16.mxu0 0
    %5601 = vmatpush1.bf16.msra.mxu0 0
    %5602 = vmatprep.subr.bf16.mxu0 0
    %5603 = vmatpush1.bf16.msra.mxu0 0
    %5604 = vmatprep.subr.bf16.mxu0 0
    %5605 = vmatpush1.bf16.msra.mxu0 0
    %5606 = vmatprep.subr.bf16.mxu0 0
    %5607 = vmatpush1.bf16.msra.mxu0 0
    %5608 = vmatprep.subr.bf16.mxu0 0
    %5609 = vmatpush1.bf16.msra.mxu0 0
    %5610 = vmatprep.subr.bf16.mxu0 0
    %5611 = vmatpush1.bf16.msra.mxu0 0
    %5612 = vmatprep.subr.bf16.mxu0 0
    %5613 = vmatpush1.bf16.msra.mxu0 0
    %5614 = vmatprep.subr.bf16.mxu0 0
    %5615 = vmatpush1.bf16.msra.mxu0 0
    %5616 = vmatprep.subr.bf16.mxu0 0
    %5617 = vmatpush1.bf16.msra.mxu0 0
    %5618 = vmatprep.subr.bf16.mxu0 0
    %5619 = vmatpush1.bf16.msra.mxu0 0
    %5620 = vmatprep.mubr.bf16.mxu0 0
    %5621 = vmatmul.mubr.bf16.gmra.mrb[0].mxu0 %v5583
    %v5622 = vpop.f32.mrb[0].mxu0
    %v5623 = vadd.f32 0.0, %v5622
    %v5624 = vpop.f32.mrb[0].mxu0
    %v5625 = vadd.f32 0.0, %v5624
    %v5626 = vpop.f32.mrb[0].mxu0
    %v5627 = vadd.f32 0.0, %v5626
    %v5628 = vpop.f32.mrb[0].mxu0
    %v5629 = vadd.f32 0.0, %v5628
    %5630 = vmatprep.mubr.bf16.mxu0 0
    %5631 = vmatmul.mubr.bf16.gmra.mrb[0].mxu0 %v5586
    %v5632 = vpop.f32.mrb[0].mxu0
    %v5633 = vadd.f32 0.0, %v5632
    %v5634 = vpop.f32.mrb[0].mxu0
    %v5635 = vadd.f32 0.0, %v5634
    %v5636 = vpop.f32.mrb[0].mxu0
    %v5637 = vadd.f32 0.0, %v5636
    %v5638 = vpop.f32.mrb[0].mxu0
    %v5639 = vadd.f32 0.0, %v5638
    %5640 = vdwg.mxu0
    %v5645 = vunpack.c.l.b16 %v5507
    %v5646 = vunpack.c.l.b16 %v5508
    %v5647 = vunpack.c.l.b16 %v5509
    %v5648 = vunpack.c.l.b16 %v5510
    %v5649 = vpack.c.b16 %v5646, %v5645
    %v5650 = vpack.c.b16 %v5648, %v5647
    %v5652 = vsel %vm5581, %v5649, 0
    %v5655 = vsel %vm5581, %v5650, 0
    %5657 = vmatprep.subr.bf16.mxu0 %v5556
    %5658 = vmatpush1.bf16.msra.mxu0 %v5555
    %5659 = vmatprep.subr.bf16.mxu0 0
    %5660 = vmatpush1.bf16.msra.mxu0 0
    %5661 = vmatprep.subr.bf16.mxu0 0
    %5662 = vmatpush1.bf16.msra.mxu0 0
    %5663 = vmatprep.subr.bf16.mxu0 0
    %5664 = vmatpush1.bf16.msra.mxu0 0
    %5665 = vmatprep.subr.bf16.mxu0 0
    %5666 = vmatpush1.bf16.msra.mxu0 0
    %5667 = vmatprep.subr.bf16.mxu0 0
    %5668 = vmatpush1.bf16.msra.mxu0 0
    %5669 = vmatprep.subr.bf16.mxu0 0
    %5670 = vmatpush1.bf16.msra.mxu0 0
    %5671 = vmatprep.subr.bf16.mxu0 0
    %5672 = vmatpush1.bf16.msra.mxu0 0
    %5673 = vmatprep.subr.bf16.mxu0 0
    %5674 = vmatpush1.bf16.msra.mxu0 0
    %5675 = vmatprep.subr.bf16.mxu0 0
    %5676 = vmatpush1.bf16.msra.mxu0 0
    %5677 = vmatprep.subr.bf16.mxu0 0
    %5678 = vmatpush1.bf16.msra.mxu0 0
    %5679 = vmatprep.subr.bf16.mxu0 0
    %5680 = vmatpush1.bf16.msra.mxu0 0
    %5681 = vmatprep.subr.bf16.mxu0 0
    %5682 = vmatpush1.bf16.msra.mxu0 0
    %5683 = vmatprep.subr.bf16.mxu0 0
    %5684 = vmatpush1.bf16.msra.mxu0 0
    %5685 = vmatprep.subr.bf16.mxu0 0
    %5686 = vmatpush1.bf16.msra.mxu0 0
    %5687 = vmatprep.subr.bf16.mxu0 0
    %5688 = vmatpush1.bf16.msra.mxu0 0
    %5689 = vmatprep.mubr.bf16.mxu0 0
    %5690 = vmatmul.mubr.bf16.gmra.mrb[0].mxu0 %v5652
    %v5691 = vpop.f32.mrb[0].mxu0
    %v5692 = vadd.f32 %v5623, %v5691
    %v5693 = vpop.f32.mrb[0].mxu0
    %v5694 = vadd.f32 %v5625, %v5693
    %v5695 = vpop.f32.mrb[0].mxu0
    %v5696 = vadd.f32 %v5627, %v5695
    %v5697 = vpop.f32.mrb[0].mxu0
    %v5698 = vadd.f32 %v5629, %v5697
    %5699 = vmatprep.mubr.bf16.mxu0 0
    %5700 = vmatmul.mubr.bf16.gmra.mrb[0].mxu0 %v5655
    %v5701 = vpop.f32.mrb[0].mxu0
    %v5702 = vadd.f32 %v5633, %v5701
    %v5703 = vpop.f32.mrb[0].mxu0
    %v5704 = vadd.f32 %v5635, %v5703
    %v5705 = vpop.f32.mrb[0].mxu0
    %v5706 = vadd.f32 %v5637, %v5705
    %v5707 = vpop.f32.mrb[0].mxu0
    %v5708 = vadd.f32 %v5639, %v5707
    %5709 = vdwg.mxu0
    %v5718 = vrot.slane %v5692, 7
    %v5719 = vrot.slane %v5694, 7
    %v5720 = vrot.slane %v5696, 7
    %v5721 = vsel %vm4038, %v5718, %v5720
    %v5722 = vrot.slane %v5698, 7
    %v5723 = vsel %vm4038, %v5719, %v5722
    %v5724 = vrot.slane %v5702, 7
    %v5725 = vsel %vm4038, %v5720, %v5724
    %v5726 = vrot.slane %v5704, 7
    %v5727 = vsel %vm4038, %v5722, %v5726
    %v5728 = vrot.slane %v5706, 7
    %v5729 = vsel %vm4038, %v5724, %v5728
    %v5730 = vrot.slane %v5708, 7
    %v5731 = vsel %vm4038, %v5726, %v5730
    %5742 = vst [vmem:[#allocation5] sm:$0xfe] %v5718
    %5743 = vst [vmem:[#allocation5 + $0x8] sm:$0xfe] %v5719
    %5744 = vst [vmem:[#allocation5 + $0x10] sm:$0xff] %v5721
    %5745 = vst [vmem:[#allocation5 + $0x18] sm:$0xff] %v5723
    %5746 = vst [vmem:[#allocation5 + $0x20] sm:$0xff] %v5725
    %5747 = vst [vmem:[#allocation5 + $0x28] sm:$0xff] %v5727
    %5748 = vst [vmem:[#allocation5 + $0x30] sm:$0xff] %v5729
    %5749 = vst [vmem:[#allocation5 + $0x38] sm:$0xff] %v5731
    %5750 = vst [vmem:[#allocation5 + $0x40] sm:$0x1] %v5728
    %5751 = vst [vmem:[#allocation5 + $0x48] sm:$0x1] %v5730
    %v5752 = vmul.f32 %v4804, %v5519
    %v5753 = vmul.f32 %v4806, %v5523
    %v5754 = vmul.f32 %v4808, %v5519
    %v5755 = vmul.f32 %v4810, %v5523
    %v5756 = vadd.f32 %v5752, %v5542
    %v5757 = vadd.f32 %v5753, %v5546
    %v5758 = vadd.f32 %v5754, %v5542
    %v5759 = vadd.f32 %v5755, %v5546
    %v5760 = vmax.f32 %v5756, 0.0
    %v5761 = vmax.f32 %v5757, 0.0
    %v5762 = vmax.f32 %v5758, 0.0
    %v5763 = vmax.f32 %v5759, 0.0
    %v5764 = vpack.c.bf16 %v5762, %v5760
    %v5765 = vpack.c.bf16 %v5763, %v5761
    %v5766 = vmul.f32 %v5295, %v5519
    %v5767 = vmul.f32 %v5297, %v5523
    %v5768 = vmul.f32 %v5299, %v5519
    %v5769 = vmul.f32 %v5301, %v5523
    %v5770 = vadd.f32 %v5766, %v5542
    %v5771 = vadd.f32 %v5767, %v5546
    %v5772 = vadd.f32 %v5768, %v5542
    %v5773 = vadd.f32 %v5769, %v5546
    %v5774 = vmax.f32 %v5770, 0.0
    %v5775 = vmax.f32 %v5771, 0.0
    %v5776 = vmax.f32 %v5772, 0.0
    %v5777 = vmax.f32 %v5773, 0.0
    %v5778 = vpack.c.bf16 %v5776, %v5774
    %v5779 = vpack.c.bf16 %v5777, %v5775
    %5780 = vmatprep.subr.bf16.mxu0 %v5779
    %5781 = vmatpush1.bf16.msra.mxu0 %v5778
    %5782 = vmatprep.subr.bf16.mxu0 0
    %5783 = vmatpush1.bf16.msra.mxu0 0
    %5784 = vmatprep.subr.bf16.mxu0 0
    %5785 = vmatpush1.bf16.msra.mxu0 0
    %5786 = vmatprep.subr.bf16.mxu0 0
    %5787 = vmatpush1.bf16.msra.mxu0 0
    %5788 = vmatprep.subr.bf16.mxu0 0
    %5789 = vmatpush1.bf16.msra.mxu0 0
    %5790 = vmatprep.subr.bf16.mxu0 0
    %5791 = vmatpush1.bf16.msra.mxu0 0
    %5792 = vmatprep.subr.bf16.mxu0 0
    %5793 = vmatpush1.bf16.msra.mxu0 0
    %5794 = vmatprep.subr.bf16.mxu0 0
    %5795 = vmatpush1.bf16.msra.mxu0 0
    %5796 = vmatprep.subr.bf16.mxu0 0
    %5797 = vmatpush1.bf16.msra.mxu0 0
    %5798 = vmatprep.subr.bf16.mxu0 0
    %5799 = vmatpush1.bf16.msra.mxu0 0
    %5800 = vmatprep.subr.bf16.mxu0 0
    %5801 = vmatpush1.bf16.msra.mxu0 0
    %5802 = vmatprep.subr.bf16.mxu0 0
    %5803 = vmatpush1.bf16.msra.mxu0 0
    %5804 = vmatprep.subr.bf16.mxu0 0
    %5805 = vmatpush1.bf16.msra.mxu0 0
    %5806 = vmatprep.subr.bf16.mxu0 0
    %5807 = vmatpush1.bf16.msra.mxu0 0
    %5808 = vmatprep.subr.bf16.mxu0 0
    %5809 = vmatpush1.bf16.msra.mxu0 0
    %5810 = vmatprep.subr.bf16.mxu0 0
    %5811 = vmatpush1.bf16.msra.mxu0 0
    %5812 = vmatprep.mubr.bf16.mxu0 0
    %5813 = vmatmul.mubr.bf16.gmra.mrb[0].mxu0 %v5583
    %v5814 = vpop.f32.mrb[0].mxu0
    %v5815 = vadd.f32 0.0, %v5814
    %v5816 = vpop.f32.mrb[0].mxu0
    %v5817 = vadd.f32 0.0, %v5816
    %v5818 = vpop.f32.mrb[0].mxu0
    %v5819 = vadd.f32 0.0, %v5818
    %v5820 = vpop.f32.mrb[0].mxu0
    %v5821 = vadd.f32 0.0, %v5820
    %5822 = vmatprep.mubr.bf16.mxu0 0
    %5823 = vmatmul.mubr.bf16.gmra.mrb[0].mxu0 %v5586
    %v5824 = vpop.f32.mrb[0].mxu0
    %v5825 = vadd.f32 0.0, %v5824
    %v5826 = vpop.f32.mrb[0].mxu0
    %v5827 = vadd.f32 0.0, %v5826
    %v5828 = vpop.f32.mrb[0].mxu0
    %v5829 = vadd.f32 0.0, %v5828
    %v5830 = vpop.f32.mrb[0].mxu0
    %v5831 = vadd.f32 0.0, %v5830
    %5832 = vdwg.mxu0
    %5833 = vmatprep.subr.bf16.mxu0 %v5765
    %5834 = vmatpush1.bf16.msra.mxu0 %v5764
    %5835 = vmatprep.subr.bf16.mxu0 0
    %5836 = vmatpush1.bf16.msra.mxu0 0
    %5837 = vmatprep.subr.bf16.mxu0 0
    %5838 = vmatpush1.bf16.msra.mxu0 0
    %5839 = vmatprep.subr.bf16.mxu0 0
    %5840 = vmatpush1.bf16.msra.mxu0 0
    %5841 = vmatprep.subr.bf16.mxu0 0
    %5842 = vmatpush1.bf16.msra.mxu0 0
    %5843 = vmatprep.subr.bf16.mxu0 0
    %5844 = vmatpush1.bf16.msra.mxu0 0
    %5845 = vmatprep.subr.bf16.mxu0 0
    %5846 = vmatpush1.bf16.msra.mxu0 0
    %5847 = vmatprep.subr.bf16.mxu0 0
    %5848 = vmatpush1.bf16.msra.mxu0 0
    %5849 = vmatprep.subr.bf16.mxu0 0
    %5850 = vmatpush1.bf16.msra.mxu0 0
    %5851 = vmatprep.subr.bf16.mxu0 0
    %5852 = vmatpush1.bf16.msra.mxu0 0
    %5853 = vmatprep.subr.bf16.mxu0 0
    %5854 = vmatpush1.bf16.msra.mxu0 0
    %5855 = vmatprep.subr.bf16.mxu0 0
    %5856 = vmatpush1.bf16.msra.mxu0 0
    %5857 = vmatprep.subr.bf16.mxu0 0
    %5858 = vmatpush1.bf16.msra.mxu0 0
    %5859 = vmatprep.subr.bf16.mxu0 0
    %5860 = vmatpush1.bf16.msra.mxu0 0
    %5861 = vmatprep.subr.bf16.mxu0 0
    %5862 = vmatpush1.bf16.msra.mxu0 0
    %5863 = vmatprep.subr.bf16.mxu0 0
    %5864 = vmatpush1.bf16.msra.mxu0 0
    %5865 = vmatprep.mubr.bf16.mxu0 0
    %5866 = vmatmul.mubr.bf16.gmra.mrb[0].mxu0 %v5652
    %v5867 = vpop.f32.mrb[0].mxu0
    %v5868 = vadd.f32 %v5815, %v5867
    %v5869 = vpop.f32.mrb[0].mxu0
    %v5870 = vadd.f32 %v5817, %v5869
    %v5871 = vpop.f32.mrb[0].mxu0
    %v5872 = vadd.f32 %v5819, %v5871
    %v5873 = vpop.f32.mrb[0].mxu0
    %v5874 = vadd.f32 %v5821, %v5873
    %5875 = vmatprep.mubr.bf16.mxu0 0
    %5876 = vmatmul.mubr.bf16.gmra.mrb[0].mxu0 %v5655
    %v5877 = vpop.f32.mrb[0].mxu0
    %v5878 = vadd.f32 %v5825, %v5877
    %v5879 = vpop.f32.mrb[0].mxu0
    %v5880 = vadd.f32 %v5827, %v5879
    %v5881 = vpop.f32.mrb[0].mxu0
    %v5882 = vadd.f32 %v5829, %v5881
    %v5883 = vpop.f32.mrb[0].mxu0
    %v5884 = vadd.f32 %v5831, %v5883
    %5885 = vdwg.mxu0
    %v5894 = vrot.slane %v5868, 7
    %v5895 = vrot.slane %v5870, 7
    %v5896 = vrot.slane %v5872, 7
    %v5897 = vsel %vm4038, %v5894, %v5896
    %v5898 = vrot.slane %v5874, 7
    %v5899 = vsel %vm4038, %v5895, %v5898
    %v5900 = vrot.slane %v5878, 7
    %v5901 = vsel %vm4038, %v5896, %v5900
    %v5902 = vrot.slane %v5880, 7
    %v5903 = vsel %vm4038, %v5898, %v5902
    %v5904 = vrot.slane %v5882, 7
    %v5905 = vsel %vm4038, %v5900, %v5904
    %v5906 = vrot.slane %v5884, 7
    %v5907 = vsel %vm4038, %v5902, %v5906
    %s5918 = scalar_lea.vmem [#allocation5], 80
    %5919 = vst [vmem:[%s5918] sm:$0xfe] %v5894
    %5920 = vst [vmem:[%s5918 + $0x8] sm:$0xfe] %v5895
    %5921 = vst [vmem:[%s5918 + $0x10] sm:$0xff] %v5897
    %5922 = vst [vmem:[%s5918 + $0x18] sm:$0xff] %v5899
    %5923 = vst [vmem:[%s5918 + $0x20] sm:$0xff] %v5901
    %5924 = vst [vmem:[%s5918 + $0x28] sm:$0xff] %v5903
    %5925 = vst [vmem:[%s5918 + $0x30] sm:$0xff] %v5905
    %5926 = vst [vmem:[%s5918 + $0x38] sm:$0xff] %v5907
    %5927 = vst [vmem:[%s5918 + $0x40] sm:$0x1] %v5904
    %5928 = vst [vmem:[%s5918 + $0x48] sm:$0x1] %v5906
    %v5929 = vld [vmem:[%s11] sm:$0x3]
    %v5930 = vld [vmem:[#allocation5] sm:$0xff]
    %v5931 = vld [vmem:[#allocation5 + $0x8] sm:$0xff]
    %v5932 = vld [vmem:[#allocation5 + $0x10] sm:$0xff]
    %v5933 = vld [vmem:[#allocation5 + $0x18] sm:$0xff]
    %v5934 = vld [vmem:[#allocation5 + $0x20] sm:$0xff]
    %v5935 = vld [vmem:[#allocation5 + $0x28] sm:$0xff]
    %v5936 = vld [vmem:[#allocation5 + $0x30] sm:$0xff]
    %v5937 = vld [vmem:[#allocation5 + $0x38] sm:$0xff]
    %v5938 = vld [vmem:[#allocation5] sm:$0xfe]
    %v5939 = vld [vmem:[#allocation5 + $0x8] sm:$0xfe]
    %v5940 = vld [vmem:[#allocation5 + $0x40] sm:$0x1]
    %v5941 = vld [vmem:[#allocation5 + $0x48] sm:$0x1]
    %v5952 = vrot.slane %v5938, 1
    %v5953 = vrot.slane %v5932, 1
    %v5954 = vsel %vm2689, %v5952, %v5953
    %v5955 = vrot.slane %v5939, 1
    %v5956 = vrot.slane %v5933, 1
    %v5957 = vsel %vm2689, %v5955, %v5956
    %v5958 = vrot.slane %v5934, 1
    %v5959 = vsel %vm2689, %v5953, %v5958
    %v5960 = vrot.slane %v5935, 1
    %v5961 = vsel %vm2689, %v5956, %v5960
    %v5962 = vrot.slane %v5936, 1
    %v5963 = vsel %vm2689, %v5958, %v5962
    %v5964 = vrot.slane %v5937, 1
    %v5965 = vsel %vm2689, %v5960, %v5964
    %v5966 = vrot.slane %v5940, 1
    %v5967 = vsel %vm2689, %v5962, %v5966
    %v5968 = vrot.slane %v5941, 1
    %v5969 = vsel %vm2689, %v5964, %v5968
    %v5978 = vld [vmem:[%s5918] sm:$0xff]
    %v5979 = vld [vmem:[%s5918 + $0x8] sm:$0xff]
    %v5980 = vld [vmem:[%s5918 + $0x10] sm:$0xff]
    %v5981 = vld [vmem:[%s5918 + $0x18] sm:$0xff]
    %v5982 = vld [vmem:[%s5918 + $0x20] sm:$0xff]
    %v5983 = vld [vmem:[%s5918 + $0x28] sm:$0xff]
    %v5984 = vld [vmem:[%s5918 + $0x30] sm:$0xff]
    %v5985 = vld [vmem:[%s5918 + $0x38] sm:$0xff]
    %v5986 = vld [vmem:[%s5918] sm:$0xfe]
    %v5987 = vld [vmem:[%s5918 + $0x8] sm:$0xfe]
    %v5988 = vld [vmem:[%s5918 + $0x40] sm:$0x1]
    %v5989 = vld [vmem:[%s5918 + $0x48] sm:$0x1]
    %v6000 = vrot.slane %v5986, 1
    %v6001 = vrot.slane %v5980, 1
    %v6002 = vsel %vm2689, %v6000, %v6001
    %v6003 = vrot.slane %v5987, 1
    %v6004 = vrot.slane %v5981, 1
    %v6005 = vsel %vm2689, %v6003, %v6004
    %v6006 = vrot.slane %v5982, 1
    %v6007 = vsel %vm2689, %v6001, %v6006
    %v6008 = vrot.slane %v5983, 1
    %v6009 = vsel %vm2689, %v6004, %v6008
    %v6010 = vrot.slane %v5984, 1
    %v6011 = vsel %vm2689, %v6006, %v6010
    %v6012 = vrot.slane %v5985, 1
    %v6013 = vsel %vm2689, %v6008, %v6012
    %v6014 = vrot.slane %v5988, 1
    %v6015 = vsel %vm2689, %v6010, %v6014
    %v6016 = vrot.slane %v5989, 1
    %v6017 = vsel %vm2689, %v6012, %v6016
    %v6026 = vpack.c.bf16 %v5932, %v5930
    %v6027 = vpack.c.bf16 %v5933, %v5931
    %v6028 = vpack.c.bf16 %v5959, %v5954
    %v6029 = vpack.c.bf16 %v5961, %v5957
    %v6030 = vpack.c.bf16 %v5936, %v5934
    %v6031 = vpack.c.bf16 %v5937, %v5935
    %v6032 = vpack.c.bf16 %v5967, %v5963
    %v6033 = vpack.c.bf16 %v5969, %v5965
    %v6034 = vpack.c.bf16 %v5980, %v5978
    %v6035 = vpack.c.bf16 %v5981, %v5979
    %v6036 = vpack.c.bf16 %v6007, %v6002
    %v6037 = vpack.c.bf16 %v6009, %v6005
    %v6038 = vpack.c.bf16 %v5984, %v5982
    %v6039 = vpack.c.bf16 %v5985, %v5983
    %v6040 = vpack.c.bf16 %v6015, %v6011
    %v6041 = vpack.c.bf16 %v6017, %v6013
    %v6042 = vld [vmem:[#allocation5] sm:$0xfc]
    %v6043 = vld [vmem:[#allocation5 + $0x8] sm:$0xfc]
    %v6044 = vld [vmem:[#allocation5 + $0x40] sm:$0x3]
    %v6045 = vld [vmem:[#allocation5 + $0x48] sm:$0x3]
    %v6050 = vrot.slane %v6042, 1
    %v6051 = vsel %vm2689, %v6050, %v5953
    %v6052 = vrot.slane %v6043, 1
    %v6053 = vsel %vm2689, %v6052, %v5956
    %v6054 = vrot.slane %v6044, 1
    %v6055 = vsel %vm2689, %v5962, %v6054
    %v6056 = vrot.slane %v6045, 1
    %v6057 = vsel %vm2689, %v5964, %v6056
    %v6058 = vld [vmem:[%s5918] sm:$0xfc]
    %v6059 = vld [vmem:[%s5918 + $0x8] sm:$0xfc]
    %v6060 = vld [vmem:[%s5918 + $0x40] sm:$0x3]
    %v6061 = vld [vmem:[%s5918 + $0x48] sm:$0x3]
    %v6066 = vrot.slane %v6058, 1
    %v6067 = vsel %vm2689, %v6066, %v6001
    %v6068 = vrot.slane %v6059, 1
    %v6069 = vsel %vm2689, %v6068, %v6004
    %v6070 = vrot.slane %v6060, 1
    %v6071 = vsel %vm2689, %v6010, %v6070
    %v6072 = vrot.slane %v6061, 1
    %v6073 = vsel %vm2689, %v6012, %v6072
    %v6074 = vrot.slane %v6051, 1
    %v6075 = vrot.slane %v5959, 1
    %v6076 = vsel %vm2689, %v6074, %v6075
    %v6077 = vrot.slane %v6053, 1
    %v6078 = vrot.slane %v5961, 1
    %v6079 = vsel %vm2689, %v6077, %v6078
    %v6080 = vrot.slane %v5963, 1
    %v6081 = vsel %vm2689, %v6075, %v6080
    %v6082 = vrot.slane %v5965, 1
    %v6083 = vsel %vm2689, %v6078, %v6082
    %v6084 = vrot.slane %v6055, 1
    %v6085 = vsel %vm2689, %v6080, %v6084
    %v6086 = vrot.slane %v6057, 1
    %v6087 = vsel %vm2689, %v6082, %v6086
    %v6088 = vrot.slane %v6054, 1
    %v6089 = vsel %vm2689, %v6084, %v6088
    %v6090 = vrot.slane %v6056, 1
    %v6091 = vsel %vm2689, %v6086, %v6090
    %v6100 = vrot.slane %v6067, 1
    %v6101 = vrot.slane %v6007, 1
    %v6102 = vsel %vm2689, %v6100, %v6101
    %v6103 = vrot.slane %v6069, 1
    %v6104 = vrot.slane %v6009, 1
    %v6105 = vsel %vm2689, %v6103, %v6104
    %v6106 = vrot.slane %v6011, 1
    %v6107 = vsel %vm2689, %v6101, %v6106
    %v6108 = vrot.slane %v6013, 1
    %v6109 = vsel %vm2689, %v6104, %v6108
    %v6110 = vrot.slane %v6071, 1
    %v6111 = vsel %vm2689, %v6106, %v6110
    %v6112 = vrot.slane %v6073, 1
    %v6113 = vsel %vm2689, %v6108, %v6112
    %v6114 = vrot.slane %v6070, 1
    %v6115 = vsel %vm2689, %v6110, %v6114
    %v6116 = vrot.slane %v6072, 1
    %v6117 = vsel %vm2689, %v6112, %v6116
    %v6126 = vpack.c.bf16 %v6081, %v6076
    %v6127 = vpack.c.bf16 %v6083, %v6079
    %v6128 = vpack.c.bf16 %v6089, %v6085
    %v6129 = vpack.c.bf16 %v6091, %v6087
    %v6130 = vpack.c.bf16 %v6107, %v6102
    %v6131 = vpack.c.bf16 %v6109, %v6105
    %v6132 = vpack.c.bf16 %v6115, %v6111
    %v6133 = vpack.c.bf16 %v6117, %v6113
    %v6134 = vld [vmem:[%s5] sm:$0xff]
    %v6135 = vld [vmem:[%s5 + $0x8] sm:$0xff]
    %v6136 = vld [vmem:[%s5 + $0x10] sm:$0xff]
    %v6137 = vld [vmem:[%s5 + $0x18] sm:$0xff]
    %v6138 = vld [vmem:[%s5 + $0x20] sm:$0xff]
    %v6139 = vld [vmem:[%s5 + $0x28] sm:$0xff]
    %v6140 = vld [vmem:[%s5 + $0x30] sm:$0xff]
    %v6141 = vld [vmem:[%s5 + $0x38] sm:$0xff]
    %v6142 = vld [vmem:[%s5 + $0x40] sm:$0xff]
    %v6143 = vld [vmem:[%s5 + $0x48] sm:$0xff]
    %v6144 = vld [vmem:[%s5 + $0x50] sm:$0xff]
    %v6145 = vld [vmem:[%s5 + $0x58] sm:$0xff]
    %v6146 = vld [vmem:[%s5 + $0x60] sm:$0xff]
    %v6147 = vld [vmem:[%s5 + $0x68] sm:$0xff]
    %v6148 = vld [vmem:[%s5 + $0x70] sm:$0xff]
    %v6149 = vld [vmem:[%s5 + $0x78] sm:$0xff]
    %v6150 = vld [vmem:[%s5 + $0x80] sm:$0xff]
    %v6151 = vld [vmem:[%s5 + $0x88] sm:$0xff]
    %v6152 = vld [vmem:[%s5 + $0x90] sm:$0xff]
    %v6153 = vld [vmem:[%s5 + $0x98] sm:$0xff]
    %v6154 = vld [vmem:[%s5 + $0xa0] sm:$0xff]
    %v6155 = vld [vmem:[%s5 + $0xa8] sm:$0xff]
    %v6156 = vld [vmem:[%s5 + $0xb0] sm:$0xff]
    %v6157 = vld [vmem:[%s5 + $0xb8] sm:$0xff]
    %v6158 = vld [vmem:[%s5 + $0xc0] sm:$0xff]
    %v6159 = vld [vmem:[%s5 + $0xc8] sm:$0xff]
    %v6160 = vld [vmem:[%s5 + $0xd0] sm:$0xff]
    %v6161 = vld [vmem:[%s5 + $0xd8] sm:$0xff]
    %v6162 = vld [vmem:[%s5 + $0xe0] sm:$0xff]
    %v6163 = vld [vmem:[%s5 + $0xe8] sm:$0xff]
    %v6164 = vld [vmem:[%s5 + $0xf0] sm:$0xff]
    %v6165 = vld [vmem:[%s5 + $0xf8] sm:$0xff]
    %v6166 = vld [vmem:[%s5 + $0x100] sm:$0xff]
    %v6167 = vld [vmem:[%s5 + $0x108] sm:$0xff]
    %v6168 = vld [vmem:[%s5 + $0x110] sm:$0xff]
    %v6169 = vld [vmem:[%s5 + $0x118] sm:$0xff]
    %v6170 = vld [vmem:[%s5 + $0x120] sm:$0xff]
    %v6171 = vld [vmem:[%s5 + $0x128] sm:$0xff]
    %v6172 = vld [vmem:[%s5 + $0x130] sm:$0xff]
    %v6173 = vld [vmem:[%s5 + $0x138] sm:$0xff]
    %v6174 = vld [vmem:[%s5 + $0x140] sm:$0xff]
    %v6175 = vld [vmem:[%s5 + $0x148] sm:$0xff]
    %v6176 = vld [vmem:[%s5 + $0x150] sm:$0xff]
    %v6177 = vld [vmem:[%s5 + $0x158] sm:$0xff]
    %v6178 = vld [vmem:[%s5 + $0x160] sm:$0xff]
    %v6179 = vld [vmem:[%s5 + $0x168] sm:$0xff]
    %v6180 = vld [vmem:[%s5 + $0x170] sm:$0xff]
    %v6181 = vld [vmem:[%s5 + $0x178] sm:$0xff]
    %v6182 = vld [vmem:[%s5 + $0x180] sm:$0xff]
    %v6183 = vld [vmem:[%s5 + $0x188] sm:$0xff]
    %v6184 = vld [vmem:[%s5 + $0x190] sm:$0xff]
    %v6185 = vld [vmem:[%s5 + $0x198] sm:$0xff]
    %v6186 = vld [vmem:[%s5 + $0x1a0] sm:$0xff]
    %v6187 = vld [vmem:[%s5 + $0x1a8] sm:$0xff]
    %v6188 = vld [vmem:[%s5 + $0x1b0] sm:$0xff]
    %v6189 = vld [vmem:[%s5 + $0x1b8] sm:$0xff]
    %v6190 = vld [vmem:[%s5 + $0x1c0] sm:$0xff]
    %v6191 = vld [vmem:[%s5 + $0x1c8] sm:$0xff]
    %v6192 = vld [vmem:[%s5 + $0x1d0] sm:$0xff]
    %v6193 = vld [vmem:[%s5 + $0x1d8] sm:$0xff]
    %v6194 = vld [vmem:[%s5 + $0x1e0] sm:$0xff]
    %v6195 = vld [vmem:[%s5 + $0x1e8] sm:$0xff]
    %v6196 = vld [vmem:[%s5 + $0x1f0] sm:$0xff]
    %v6197 = vld [vmem:[%s5 + $0x1f8] sm:$0xff]
    %v6199 = vlaneseq
    %v6200 = vshrl.u32 %v6199, 7
    %v6201 = vsub.s32 0, %v6200
    %v6202 = vrot.slane %v5929, %v6201
    %v6203 = vlaneseq
    %v6204 = vshrl.u32 %v6203, 7
    %v6205 = vsub.s32 1, %v6204
    %v6206 = vrot.slane %v5929, %v6205
    %v6273 = vunpack.c.l.b16 %v6134
    %v6274 = vunpack.c.h.b16 %v6134
    %v6275 = vunpack.c.l.b16 %v6135
    %v6276 = vunpack.c.h.b16 %v6135
    %v6277 = vunpack.c.l.b16 %v6136
    %v6278 = vunpack.c.h.b16 %v6136
    %v6279 = vunpack.c.l.b16 %v6137
    %v6280 = vunpack.c.h.b16 %v6137
    %v6281 = vunpack.c.l.b16 %v6138
    %v6282 = vunpack.c.h.b16 %v6138
    %v6283 = vunpack.c.l.b16 %v6139
    %v6284 = vunpack.c.h.b16 %v6139
    %v6285 = vunpack.c.l.b16 %v6140
    %v6286 = vunpack.c.h.b16 %v6140
    %v6287 = vunpack.c.l.b16 %v6141
    %v6288 = vunpack.c.h.b16 %v6141
    %v6289 = vunpack.c.l.b16 %v6142
    %v6290 = vunpack.c.h.b16 %v6142
    %v6291 = vunpack.c.l.b16 %v6143
    %v6292 = vunpack.c.h.b16 %v6143
    %v6293 = vunpack.c.l.b16 %v6144
    %v6294 = vunpack.c.h.b16 %v6144
    %v6295 = vunpack.c.l.b16 %v6145
    %v6296 = vunpack.c.h.b16 %v6145
    %v6297 = vunpack.c.l.b16 %v6146
    %v6298 = vunpack.c.h.b16 %v6146
    %v6299 = vunpack.c.l.b16 %v6147
    %v6300 = vunpack.c.h.b16 %v6147
    %v6301 = vunpack.c.l.b16 %v6148
    %v6302 = vunpack.c.h.b16 %v6148
    %v6303 = vunpack.c.l.b16 %v6149
    %v6304 = vunpack.c.h.b16 %v6149
    %v6305 = vunpack.c.l.b16 %v6150
    %v6306 = vunpack.c.h.b16 %v6150
    %v6307 = vunpack.c.l.b16 %v6151
    %v6308 = vunpack.c.h.b16 %v6151
    %v6309 = vunpack.c.l.b16 %v6152
    %v6310 = vunpack.c.h.b16 %v6152
    %v6311 = vunpack.c.l.b16 %v6153
    %v6312 = vunpack.c.h.b16 %v6153
    %v6313 = vunpack.c.l.b16 %v6154
    %v6314 = vunpack.c.h.b16 %v6154
    %v6315 = vunpack.c.l.b16 %v6155
    %v6316 = vunpack.c.h.b16 %v6155
    %v6317 = vunpack.c.l.b16 %v6156
    %v6318 = vunpack.c.h.b16 %v6156
    %v6319 = vunpack.c.l.b16 %v6157
    %v6320 = vunpack.c.h.b16 %v6157
    %v6321 = vunpack.c.l.b16 %v6158
    %v6322 = vunpack.c.h.b16 %v6158
    %v6323 = vunpack.c.l.b16 %v6159
    %v6324 = vunpack.c.h.b16 %v6159
    %v6325 = vunpack.c.l.b16 %v6160
    %v6326 = vunpack.c.h.b16 %v6160
    %v6327 = vunpack.c.l.b16 %v6161
    %v6328 = vunpack.c.h.b16 %v6161
    %v6329 = vunpack.c.l.b16 %v6162
    %v6330 = vunpack.c.h.b16 %v6162
    %v6331 = vunpack.c.l.b16 %v6163
    %v6332 = vunpack.c.h.b16 %v6163
    %v6333 = vunpack.c.l.b16 %v6164
    %v6334 = vunpack.c.h.b16 %v6164
    %v6335 = vunpack.c.l.b16 %v6165
    %v6336 = vunpack.c.h.b16 %v6165
    %v6337 = vunpack.c.l.b16 %v6166
    %v6338 = vunpack.c.h.b16 %v6166
    %v6339 = vunpack.c.l.b16 %v6167
    %v6340 = vunpack.c.h.b16 %v6167
    %v6341 = vunpack.c.l.b16 %v6168
    %v6342 = vunpack.c.h.b16 %v6168
    %v6343 = vunpack.c.l.b16 %v6169
    %v6344 = vunpack.c.h.b16 %v6169
    %v6345 = vunpack.c.l.b16 %v6170
    %v6346 = vunpack.c.h.b16 %v6170
    %v6347 = vunpack.c.l.b16 %v6171
    %v6348 = vunpack.c.h.b16 %v6171
    %v6349 = vunpack.c.l.b16 %v6172
    %v6350 = vunpack.c.h.b16 %v6172
    %v6351 = vunpack.c.l.b16 %v6173
    %v6352 = vunpack.c.h.b16 %v6173
    %v6353 = vunpack.c.l.b16 %v6174
    %v6354 = vunpack.c.h.b16 %v6174
    %v6355 = vunpack.c.l.b16 %v6175
    %v6356 = vunpack.c.h.b16 %v6175
    %v6357 = vunpack.c.l.b16 %v6176
    %v6358 = vunpack.c.h.b16 %v6176
    %v6359 = vunpack.c.l.b16 %v6177
    %v6360 = vunpack.c.h.b16 %v6177
    %v6361 = vunpack.c.l.b16 %v6178
    %v6362 = vunpack.c.h.b16 %v6178
    %v6363 = vunpack.c.l.b16 %v6179
    %v6364 = vunpack.c.h.b16 %v6179
    %v6365 = vunpack.c.l.b16 %v6180
    %v6366 = vunpack.c.h.b16 %v6180
    %v6367 = vunpack.c.l.b16 %v6181
    %v6368 = vunpack.c.h.b16 %v6181
    %v6369 = vunpack.c.l.b16 %v6182
    %v6370 = vunpack.c.h.b16 %v6182
    %v6371 = vunpack.c.l.b16 %v6183
    %v6372 = vunpack.c.h.b16 %v6183
    %v6373 = vunpack.c.l.b16 %v6184
    %v6374 = vunpack.c.h.b16 %v6184
    %v6375 = vunpack.c.l.b16 %v6185
    %v6376 = vunpack.c.h.b16 %v6185
    %v6377 = vunpack.c.l.b16 %v6186
    %v6378 = vunpack.c.h.b16 %v6186
    %v6379 = vunpack.c.l.b16 %v6187
    %v6380 = vunpack.c.h.b16 %v6187
    %v6381 = vunpack.c.l.b16 %v6188
    %v6382 = vunpack.c.h.b16 %v6188
    %v6383 = vunpack.c.l.b16 %v6189
    %v6384 = vunpack.c.h.b16 %v6189
    %v6385 = vunpack.c.l.b16 %v6190
    %v6386 = vunpack.c.h.b16 %v6190
    %v6387 = vunpack.c.l.b16 %v6191
    %v6388 = vunpack.c.h.b16 %v6191
    %v6389 = vunpack.c.l.b16 %v6192
    %v6390 = vunpack.c.h.b16 %v6192
    %v6391 = vunpack.c.l.b16 %v6193
    %v6392 = vunpack.c.h.b16 %v6193
    %v6393 = vunpack.c.l.b16 %v6194
    %v6394 = vunpack.c.h.b16 %v6194
    %v6395 = vunpack.c.l.b16 %v6195
    %v6396 = vunpack.c.h.b16 %v6195
    %v6397 = vunpack.c.l.b16 %v6196
    %v6398 = vunpack.c.h.b16 %v6196
    %v6399 = vunpack.c.l.b16 %v6197
    %v6400 = vunpack.c.h.b16 %v6197
    %v6401 = vpack.c.b16 %v6275, %v6273
    %v6402 = vpack.c.b16 %v6276, %v6274
    %v6403 = vpack.c.b16 %v6279, %v6277
    %v6404 = vpack.c.b16 %v6280, %v6278
    %v6405 = vpack.c.b16 %v6283, %v6281
    %v6406 = vpack.c.b16 %v6284, %v6282
    %v6407 = vpack.c.b16 %v6287, %v6285
    %v6408 = vpack.c.b16 %v6288, %v6286
    %v6409 = vpack.c.b16 %v6291, %v6289
    %v6410 = vpack.c.b16 %v6292, %v6290
    %v6411 = vpack.c.b16 %v6295, %v6293
    %v6412 = vpack.c.b16 %v6296, %v6294
    %v6413 = vpack.c.b16 %v6299, %v6297
    %v6414 = vpack.c.b16 %v6300, %v6298
    %v6415 = vpack.c.b16 %v6303, %v6301
    %v6416 = vpack.c.b16 %v6304, %v6302
    %v6417 = vpack.c.b16 %v6307, %v6305
    %v6418 = vpack.c.b16 %v6308, %v6306
    %v6419 = vpack.c.b16 %v6311, %v6309
    %v6420 = vpack.c.b16 %v6312, %v6310
    %v6421 = vpack.c.b16 %v6315, %v6313
    %v6422 = vpack.c.b16 %v6316, %v6314
    %v6423 = vpack.c.b16 %v6319, %v6317
    %v6424 = vpack.c.b16 %v6320, %v6318
    %v6425 = vpack.c.b16 %v6323, %v6321
    %v6426 = vpack.c.b16 %v6324, %v6322
    %v6427 = vpack.c.b16 %v6327, %v6325
    %v6428 = vpack.c.b16 %v6328, %v6326
    %v6429 = vpack.c.b16 %v6331, %v6329
    %v6430 = vpack.c.b16 %v6332, %v6330
    %v6431 = vpack.c.b16 %v6335, %v6333
    %v6432 = vpack.c.b16 %v6336, %v6334
    %v6433 = vpack.c.b16 %v6339, %v6337
    %v6434 = vpack.c.b16 %v6340, %v6338
    %v6435 = vpack.c.b16 %v6343, %v6341
    %v6436 = vpack.c.b16 %v6344, %v6342
    %v6437 = vpack.c.b16 %v6347, %v6345
    %v6438 = vpack.c.b16 %v6348, %v6346
    %v6439 = vpack.c.b16 %v6351, %v6349
    %v6440 = vpack.c.b16 %v6352, %v6350
    %v6441 = vpack.c.b16 %v6355, %v6353
    %v6442 = vpack.c.b16 %v6356, %v6354
    %v6443 = vpack.c.b16 %v6359, %v6357
    %v6444 = vpack.c.b16 %v6360, %v6358
    %v6445 = vpack.c.b16 %v6363, %v6361
    %v6446 = vpack.c.b16 %v6364, %v6362
    %v6447 = vpack.c.b16 %v6367, %v6365
    %v6448 = vpack.c.b16 %v6368, %v6366
    %v6449 = vpack.c.b16 %v6371, %v6369
    %v6450 = vpack.c.b16 %v6372, %v6370
    %v6451 = vpack.c.b16 %v6375, %v6373
    %v6452 = vpack.c.b16 %v6376, %v6374
    %v6453 = vpack.c.b16 %v6379, %v6377
    %v6454 = vpack.c.b16 %v6380, %v6378
    %v6455 = vpack.c.b16 %v6383, %v6381
    %v6456 = vpack.c.b16 %v6384, %v6382
    %v6457 = vpack.c.b16 %v6387, %v6385
    %v6458 = vpack.c.b16 %v6388, %v6386
    %v6459 = vpack.c.b16 %v6391, %v6389
    %v6460 = vpack.c.b16 %v6392, %v6390
    %v6461 = vpack.c.b16 %v6395, %v6393
    %v6462 = vpack.c.b16 %v6396, %v6394
    %v6463 = vpack.c.b16 %v6399, %v6397
    %v6464 = vpack.c.b16 %v6400, %v6398
    %6529 = vmatprep.subr.bf16.mxu0 %v6402
    %6530 = vmatpush1.bf16.msra.mxu0 %v6401
    %6531 = vmatprep.subr.bf16.mxu0 %v6404
    %6532 = vmatpush1.bf16.msra.mxu0 %v6403
    %6533 = vmatprep.subr.bf16.mxu0 %v6406
    %6534 = vmatpush1.bf16.msra.mxu0 %v6405
    %6535 = vmatprep.subr.bf16.mxu0 %v6408
    %6536 = vmatpush1.bf16.msra.mxu0 %v6407
    %6537 = vmatprep.subr.bf16.mxu0 %v6410
    %6538 = vmatpush1.bf16.msra.mxu0 %v6409
    %6539 = vmatprep.subr.bf16.mxu0 %v6412
    %6540 = vmatpush1.bf16.msra.mxu0 %v6411
    %6541 = vmatprep.subr.bf16.mxu0 %v6414
    %6542 = vmatpush1.bf16.msra.mxu0 %v6413
    %6543 = vmatprep.subr.bf16.mxu0 %v6416
    %6544 = vmatpush1.bf16.msra.mxu0 %v6415
    %6545 = vmatprep.subr.bf16.mxu0 %v6418
    %6546 = vmatpush1.bf16.msra.mxu0 %v6417
    %6547 = vmatprep.subr.bf16.mxu0 %v6420
    %6548 = vmatpush1.bf16.msra.mxu0 %v6419
    %6549 = vmatprep.subr.bf16.mxu0 %v6422
    %6550 = vmatpush1.bf16.msra.mxu0 %v6421
    %6551 = vmatprep.subr.bf16.mxu0 %v6424
    %6552 = vmatpush1.bf16.msra.mxu0 %v6423
    %6553 = vmatprep.subr.bf16.mxu0 %v6426
    %6554 = vmatpush1.bf16.msra.mxu0 %v6425
    %6555 = vmatprep.subr.bf16.mxu0 %v6428
    %6556 = vmatpush1.bf16.msra.mxu0 %v6427
    %6557 = vmatprep.subr.bf16.mxu0 %v6430
    %6558 = vmatpush1.bf16.msra.mxu0 %v6429
    %6559 = vmatprep.subr.bf16.mxu0 %v6432
    %6560 = vmatpush1.bf16.msra.mxu0 %v6431
    %6561 = vmatprep.mubr.bf16.mxu0 %v6027
    %6562 = vmatmul.mubr.bf16.gmra.mrb[0].mxu0 %v6026
    %v6563 = vpop.f32.mrb[0].mxu0
    %v6564 = vadd.f32 %v6202, %v6563
    %v6565 = vpop.f32.mrb[0].mxu0
    %v6566 = vadd.f32 %v6206, %v6565
    %v6567 = vpop.f32.mrb[0].mxu0
    %v6568 = vadd.f32 %v6202, %v6567
    %v6569 = vpop.f32.mrb[0].mxu0
    %v6570 = vadd.f32 %v6206, %v6569
    %6571 = vmatprep.mubr.bf16.mxu0 %v6031
    %6572 = vmatmul.mubr.bf16.gmra.mrb[0].mxu0 %v6030
    %v6573 = vpop.f32.mrb[0].mxu0
    %v6574 = vadd.f32 %v6202, %v6573
    %v6575 = vpop.f32.mrb[0].mxu0
    %v6576 = vadd.f32 %v6206, %v6575
    %v6577 = vpop.f32.mrb[0].mxu0
    %v6578 = vadd.f32 %v6202, %v6577
    %v6579 = vpop.f32.mrb[0].mxu0
    %v6580 = vadd.f32 %v6206, %v6579
    %6581 = vmatprep.mubr.bf16.mxu0 %v6035
    %6582 = vmatmul.mubr.bf16.gmra.mrb[0].mxu0 %v6034
    %v6583 = vpop.f32.mrb[0].mxu0
    %v6584 = vadd.f32 %v6202, %v6583
    %v6585 = vpop.f32.mrb[0].mxu0
    %v6586 = vadd.f32 %v6206, %v6585
    %v6587 = vpop.f32.mrb[0].mxu0
    %v6588 = vadd.f32 %v6202, %v6587
    %v6589 = vpop.f32.mrb[0].mxu0
    %v6590 = vadd.f32 %v6206, %v6589
    %6591 = vmatprep.mubr.bf16.mxu0 %v6039
    %6592 = vmatmul.mubr.bf16.gmra.mrb[0].mxu0 %v6038
    %v6593 = vpop.f32.mrb[0].mxu0
    %v6594 = vadd.f32 %v6202, %v6593
    %v6595 = vpop.f32.mrb[0].mxu0
    %v6596 = vadd.f32 %v6206, %v6595
    %v6597 = vpop.f32.mrb[0].mxu0
    %v6598 = vadd.f32 %v6202, %v6597
    %v6599 = vpop.f32.mrb[0].mxu0
    %v6600 = vadd.f32 %v6206, %v6599
    %6601 = vdwg.mxu0
    %6602 = vmatprep.subr.bf16.mxu0 %v6434
    %6603 = vmatpush1.bf16.msra.mxu0 %v6433
    %6604 = vmatprep.subr.bf16.mxu0 %v6436
    %6605 = vmatpush1.bf16.msra.mxu0 %v6435
    %6606 = vmatprep.subr.bf16.mxu0 %v6438
    %6607 = vmatpush1.bf16.msra.mxu0 %v6437
    %6608 = vmatprep.subr.bf16.mxu0 %v6440
    %6609 = vmatpush1.bf16.msra.mxu0 %v6439
    %6610 = vmatprep.subr.bf16.mxu0 %v6442
    %6611 = vmatpush1.bf16.msra.mxu0 %v6441
    %6612 = vmatprep.subr.bf16.mxu0 %v6444
    %6613 = vmatpush1.bf16.msra.mxu0 %v6443
    %6614 = vmatprep.subr.bf16.mxu0 %v6446
    %6615 = vmatpush1.bf16.msra.mxu0 %v6445
    %6616 = vmatprep.subr.bf16.mxu0 %v6448
    %6617 = vmatpush1.bf16.msra.mxu0 %v6447
    %6618 = vmatprep.subr.bf16.mxu0 %v6450
    %6619 = vmatpush1.bf16.msra.mxu0 %v6449
    %6620 = vmatprep.subr.bf16.mxu0 %v6452
    %6621 = vmatpush1.bf16.msra.mxu0 %v6451
    %6622 = vmatprep.subr.bf16.mxu0 %v6454
    %6623 = vmatpush1.bf16.msra.mxu0 %v6453
    %6624 = vmatprep.subr.bf16.mxu0 %v6456
    %6625 = vmatpush1.bf16.msra.mxu0 %v6455
    %6626 = vmatprep.subr.bf16.mxu0 %v6458
    %6627 = vmatpush1.bf16.msra.mxu0 %v6457
    %6628 = vmatprep.subr.bf16.mxu0 %v6460
    %6629 = vmatpush1.bf16.msra.mxu0 %v6459
    %6630 = vmatprep.subr.bf16.mxu0 %v6462
    %6631 = vmatpush1.bf16.msra.mxu0 %v6461
    %6632 = vmatprep.subr.bf16.mxu0 %v6464
    %6633 = vmatpush1.bf16.msra.mxu0 %v6463
    %6634 = vmatprep.mubr.bf16.mxu0 %v6029
    %6635 = vmatmul.mubr.bf16.gmra.mrb[0].mxu0 %v6028
    %v6636 = vpop.f32.mrb[0].mxu0
    %v6637 = vadd.f32 %v6564, %v6636
    %v6638 = vpop.f32.mrb[0].mxu0
    %v6639 = vadd.f32 %v6566, %v6638
    %v6640 = vpop.f32.mrb[0].mxu0
    %v6641 = vadd.f32 %v6568, %v6640
    %v6642 = vpop.f32.mrb[0].mxu0
    %v6643 = vadd.f32 %v6570, %v6642
    %6644 = vmatprep.mubr.bf16.mxu0 %v6033
    %6645 = vmatmul.mubr.bf16.gmra.mrb[0].mxu0 %v6032
    %v6646 = vpop.f32.mrb[0].mxu0
    %v6647 = vadd.f32 %v6574, %v6646
    %v6648 = vpop.f32.mrb[0].mxu0
    %v6649 = vadd.f32 %v6576, %v6648
    %v6650 = vpop.f32.mrb[0].mxu0
    %v6651 = vadd.f32 %v6578, %v6650
    %v6652 = vpop.f32.mrb[0].mxu0
    %v6653 = vadd.f32 %v6580, %v6652
    %6654 = vmatprep.mubr.bf16.mxu0 %v6037
    %6655 = vmatmul.mubr.bf16.gmra.mrb[0].mxu0 %v6036
    %v6656 = vpop.f32.mrb[0].mxu0
    %v6657 = vadd.f32 %v6584, %v6656
    %v6658 = vpop.f32.mrb[0].mxu0
    %v6659 = vadd.f32 %v6586, %v6658
    %v6660 = vpop.f32.mrb[0].mxu0
    %v6661 = vadd.f32 %v6588, %v6660
    %v6662 = vpop.f32.mrb[0].mxu0
    %v6663 = vadd.f32 %v6590, %v6662
    %6664 = vmatprep.mubr.bf16.mxu0 %v6041
    %6665 = vmatmul.mubr.bf16.gmra.mrb[0].mxu0 %v6040
    %v6666 = vpop.f32.mrb[0].mxu0
    %v6667 = vadd.f32 %v6594, %v6666
    %v6668 = vpop.f32.mrb[0].mxu0
    %v6669 = vadd.f32 %v6596, %v6668
    %v6670 = vpop.f32.mrb[0].mxu0
    %v6671 = vadd.f32 %v6598, %v6670
    %v6672 = vpop.f32.mrb[0].mxu0
    %v6673 = vadd.f32 %v6600, %v6672
    %6674 = vdwg.mxu0
    %v6675 = vtanh.pop %v6637
    %v6676 = vtanh.pop %v6639
    %v6677 = vtanh.pop %v6641
    %v6678 = vtanh.pop %v6643
    %v6679 = vtanh.pop %v6647
    %v6680 = vtanh.pop %v6649
    %v6681 = vtanh.pop %v6651
    %v6682 = vtanh.pop %v6653
    %v6683 = vtanh.pop %v6657
    %v6684 = vtanh.pop %v6659
    %v6685 = vtanh.pop %v6661
    %v6686 = vtanh.pop %v6663
    %v6687 = vtanh.pop %v6667
    %v6688 = vtanh.pop %v6669
    %v6689 = vtanh.pop %v6671
    %v6690 = vtanh.pop %v6673
    %s6691 = scalar_lea.vmem %s5, 512
    %v6692 = vld [vmem:[%s6691] sm:$0xff]
    %v6693 = vld [vmem:[%s6691 + $0x8] sm:$0xff]
    %v6694 = vld [vmem:[%s6691 + $0x10] sm:$0xff]
    %v6695 = vld [vmem:[%s6691 + $0x18] sm:$0xff]
    %v6696 = vld [vmem:[%s6691 + $0x20] sm:$0xff]
    %v6697 = vld [vmem:[%s6691 + $0x28] sm:$0xff]
    %v6698 = vld [vmem:[%s6691 + $0x30] sm:$0xff]
    %v6699 = vld [vmem:[%s6691 + $0x38] sm:$0xff]
    %v6700 = vld [vmem:[%s6691 + $0x40] sm:$0xff]
    %v6701 = vld [vmem:[%s6691 + $0x48] sm:$0xff]
    %v6702 = vld [vmem:[%s6691 + $0x50] sm:$0xff]
    %v6703 = vld [vmem:[%s6691 + $0x58] sm:$0xff]
    %v6704 = vld [vmem:[%s6691 + $0x60] sm:$0xff]
    %v6705 = vld [vmem:[%s6691 + $0x68] sm:$0xff]
    %v6706 = vld [vmem:[%s6691 + $0x70] sm:$0xff]
    %v6707 = vld [vmem:[%s6691 + $0x78] sm:$0xff]
    %v6708 = vld [vmem:[%s6691 + $0x80] sm:$0xff]
    %v6709 = vld [vmem:[%s6691 + $0x88] sm:$0xff]
    %v6710 = vld [vmem:[%s6691 + $0x90] sm:$0xff]
    %v6711 = vld [vmem:[%s6691 + $0x98] sm:$0xff]
    %v6712 = vld [vmem:[%s6691 + $0xa0] sm:$0xff]
    %v6713 = vld [vmem:[%s6691 + $0xa8] sm:$0xff]
    %v6714 = vld [vmem:[%s6691 + $0xb0] sm:$0xff]
    %v6715 = vld [vmem:[%s6691 + $0xb8] sm:$0xff]
    %v6716 = vld [vmem:[%s6691 + $0xc0] sm:$0xff]
    %v6717 = vld [vmem:[%s6691 + $0xc8] sm:$0xff]
    %v6718 = vld [vmem:[%s6691 + $0xd0] sm:$0xff]
    %v6719 = vld [vmem:[%s6691 + $0xd8] sm:$0xff]
    %v6720 = vld [vmem:[%s6691 + $0xe0] sm:$0xff]
    %v6721 = vld [vmem:[%s6691 + $0xe8] sm:$0xff]
    %v6722 = vld [vmem:[%s6691 + $0xf0] sm:$0xff]
    %v6723 = vld [vmem:[%s6691 + $0xf8] sm:$0xff]
    %v6724 = vld [vmem:[%s6691 + $0x100] sm:$0xff]
    %v6725 = vld [vmem:[%s6691 + $0x108] sm:$0xff]
    %v6726 = vld [vmem:[%s6691 + $0x110] sm:$0xff]
    %v6727 = vld [vmem:[%s6691 + $0x118] sm:$0xff]
    %v6728 = vld [vmem:[%s6691 + $0x120] sm:$0xff]
    %v6729 = vld [vmem:[%s6691 + $0x128] sm:$0xff]
    %v6730 = vld [vmem:[%s6691 + $0x130] sm:$0xff]
    %v6731 = vld [vmem:[%s6691 + $0x138] sm:$0xff]
    %v6732 = vld [vmem:[%s6691 + $0x140] sm:$0xff]
    %v6733 = vld [vmem:[%s6691 + $0x148] sm:$0xff]
    %v6734 = vld [vmem:[%s6691 + $0x150] sm:$0xff]
    %v6735 = vld [vmem:[%s6691 + $0x158] sm:$0xff]
    %v6736 = vld [vmem:[%s6691 + $0x160] sm:$0xff]
    %v6737 = vld [vmem:[%s6691 + $0x168] sm:$0xff]
    %v6738 = vld [vmem:[%s6691 + $0x170] sm:$0xff]
    %v6739 = vld [vmem:[%s6691 + $0x178] sm:$0xff]
    %v6740 = vld [vmem:[%s6691 + $0x180] sm:$0xff]
    %v6741 = vld [vmem:[%s6691 + $0x188] sm:$0xff]
    %v6742 = vld [vmem:[%s6691 + $0x190] sm:$0xff]
    %v6743 = vld [vmem:[%s6691 + $0x198] sm:$0xff]
    %v6744 = vld [vmem:[%s6691 + $0x1a0] sm:$0xff]
    %v6745 = vld [vmem:[%s6691 + $0x1a8] sm:$0xff]
    %v6746 = vld [vmem:[%s6691 + $0x1b0] sm:$0xff]
    %v6747 = vld [vmem:[%s6691 + $0x1b8] sm:$0xff]
    %v6748 = vld [vmem:[%s6691 + $0x1c0] sm:$0xff]
    %v6749 = vld [vmem:[%s6691 + $0x1c8] sm:$0xff]
    %v6750 = vld [vmem:[%s6691 + $0x1d0] sm:$0xff]
    %v6751 = vld [vmem:[%s6691 + $0x1d8] sm:$0xff]
    %v6752 = vld [vmem:[%s6691 + $0x1e0] sm:$0xff]
    %v6753 = vld [vmem:[%s6691 + $0x1e8] sm:$0xff]
    %v6754 = vld [vmem:[%s6691 + $0x1f0] sm:$0xff]
    %v6755 = vld [vmem:[%s6691 + $0x1f8] sm:$0xff]
    %v6820 = vunpack.c.l.b16 %v6692
    %v6821 = vunpack.c.h.b16 %v6692
    %v6822 = vunpack.c.l.b16 %v6693
    %v6823 = vunpack.c.h.b16 %v6693
    %v6824 = vunpack.c.l.b16 %v6694
    %v6825 = vunpack.c.h.b16 %v6694
    %v6826 = vunpack.c.l.b16 %v6695
    %v6827 = vunpack.c.h.b16 %v6695
    %v6828 = vunpack.c.l.b16 %v6696
    %v6829 = vunpack.c.h.b16 %v6696
    %v6830 = vunpack.c.l.b16 %v6697
    %v6831 = vunpack.c.h.b16 %v6697
    %v6832 = vunpack.c.l.b16 %v6698
    %v6833 = vunpack.c.h.b16 %v6698
    %v6834 = vunpack.c.l.b16 %v6699
    %v6835 = vunpack.c.h.b16 %v6699
    %v6836 = vunpack.c.l.b16 %v6700
    %v6837 = vunpack.c.h.b16 %v6700
    %v6838 = vunpack.c.l.b16 %v6701
    %v6839 = vunpack.c.h.b16 %v6701
    %v6840 = vunpack.c.l.b16 %v6702
    %v6841 = vunpack.c.h.b16 %v6702
    %v6842 = vunpack.c.l.b16 %v6703
    %v6843 = vunpack.c.h.b16 %v6703
    %v6844 = vunpack.c.l.b16 %v6704
    %v6845 = vunpack.c.h.b16 %v6704
    %v6846 = vunpack.c.l.b16 %v6705
    %v6847 = vunpack.c.h.b16 %v6705
    %v6848 = vunpack.c.l.b16 %v6706
    %v6849 = vunpack.c.h.b16 %v6706
    %v6850 = vunpack.c.l.b16 %v6707
    %v6851 = vunpack.c.h.b16 %v6707
    %v6852 = vunpack.c.l.b16 %v6708
    %v6853 = vunpack.c.h.b16 %v6708
    %v6854 = vunpack.c.l.b16 %v6709
    %v6855 = vunpack.c.h.b16 %v6709
    %v6856 = vunpack.c.l.b16 %v6710
    %v6857 = vunpack.c.h.b16 %v6710
    %v6858 = vunpack.c.l.b16 %v6711
    %v6859 = vunpack.c.h.b16 %v6711
    %v6860 = vunpack.c.l.b16 %v6712
    %v6861 = vunpack.c.h.b16 %v6712
    %v6862 = vunpack.c.l.b16 %v6713
    %v6863 = vunpack.c.h.b16 %v6713
    %v6864 = vunpack.c.l.b16 %v6714
    %v6865 = vunpack.c.h.b16 %v6714
    %v6866 = vunpack.c.l.b16 %v6715
    %v6867 = vunpack.c.h.b16 %v6715
    %v6868 = vunpack.c.l.b16 %v6716
    %v6869 = vunpack.c.h.b16 %v6716
    %v6870 = vunpack.c.l.b16 %v6717
    %v6871 = vunpack.c.h.b16 %v6717
    %v6872 = vunpack.c.l.b16 %v6718
    %v6873 = vunpack.c.h.b16 %v6718
    %v6874 = vunpack.c.l.b16 %v6719
    %v6875 = vunpack.c.h.b16 %v6719
    %v6876 = vunpack.c.l.b16 %v6720
    %v6877 = vunpack.c.h.b16 %v6720
    %v6878 = vunpack.c.l.b16 %v6721
    %v6879 = vunpack.c.h.b16 %v6721
    %v6880 = vunpack.c.l.b16 %v6722
    %v6881 = vunpack.c.h.b16 %v6722
    %v6882 = vunpack.c.l.b16 %v6723
    %v6883 = vunpack.c.h.b16 %v6723
    %v6884 = vunpack.c.l.b16 %v6724
    %v6885 = vunpack.c.h.b16 %v6724
    %v6886 = vunpack.c.l.b16 %v6725
    %v6887 = vunpack.c.h.b16 %v6725
    %v6888 = vunpack.c.l.b16 %v6726
    %v6889 = vunpack.c.h.b16 %v6726
    %v6890 = vunpack.c.l.b16 %v6727
    %v6891 = vunpack.c.h.b16 %v6727
    %v6892 = vunpack.c.l.b16 %v6728
    %v6893 = vunpack.c.h.b16 %v6728
    %v6894 = vunpack.c.l.b16 %v6729
    %v6895 = vunpack.c.h.b16 %v6729
    %v6896 = vunpack.c.l.b16 %v6730
    %v6897 = vunpack.c.h.b16 %v6730
    %v6898 = vunpack.c.l.b16 %v6731
    %v6899 = vunpack.c.h.b16 %v6731
    %v6900 = vunpack.c.l.b16 %v6732
    %v6901 = vunpack.c.h.b16 %v6732
    %v6902 = vunpack.c.l.b16 %v6733
    %v6903 = vunpack.c.h.b16 %v6733
    %v6904 = vunpack.c.l.b16 %v6734
    %v6905 = vunpack.c.h.b16 %v6734
    %v6906 = vunpack.c.l.b16 %v6735
    %v6907 = vunpack.c.h.b16 %v6735
    %v6908 = vunpack.c.l.b16 %v6736
    %v6909 = vunpack.c.h.b16 %v6736
    %v6910 = vunpack.c.l.b16 %v6737
    %v6911 = vunpack.c.h.b16 %v6737
    %v6912 = vunpack.c.l.b16 %v6738
    %v6913 = vunpack.c.h.b16 %v6738
    %v6914 = vunpack.c.l.b16 %v6739
    %v6915 = vunpack.c.h.b16 %v6739
    %v6916 = vunpack.c.l.b16 %v6740
    %v6917 = vunpack.c.h.b16 %v6740
    %v6918 = vunpack.c.l.b16 %v6741
    %v6919 = vunpack.c.h.b16 %v6741
    %v6920 = vunpack.c.l.b16 %v6742
    %v6921 = vunpack.c.h.b16 %v6742
    %v6922 = vunpack.c.l.b16 %v6743
    %v6923 = vunpack.c.h.b16 %v6743
    %v6924 = vunpack.c.l.b16 %v6744
    %v6925 = vunpack.c.h.b16 %v6744
    %v6926 = vunpack.c.l.b16 %v6745
    %v6927 = vunpack.c.h.b16 %v6745
    %v6928 = vunpack.c.l.b16 %v6746
    %v6929 = vunpack.c.h.b16 %v6746
    %v6930 = vunpack.c.l.b16 %v6747
    %v6931 = vunpack.c.h.b16 %v6747
    %v6932 = vunpack.c.l.b16 %v6748
    %v6933 = vunpack.c.h.b16 %v6748
    %v6934 = vunpack.c.l.b16 %v6749
    %v6935 = vunpack.c.h.b16 %v6749
    %v6936 = vunpack.c.l.b16 %v6750
    %v6937 = vunpack.c.h.b16 %v6750
    %v6938 = vunpack.c.l.b16 %v6751
    %v6939 = vunpack.c.h.b16 %v6751
    %v6940 = vunpack.c.l.b16 %v6752
    %v6941 = vunpack.c.h.b16 %v6752
    %v6942 = vunpack.c.l.b16 %v6753
    %v6943 = vunpack.c.h.b16 %v6753
    %v6944 = vunpack.c.l.b16 %v6754
    %v6945 = vunpack.c.h.b16 %v6754
    %v6946 = vunpack.c.l.b16 %v6755
    %v6947 = vunpack.c.h.b16 %v6755
    %v6948 = vpack.c.b16 %v6822, %v6820
    %v6949 = vpack.c.b16 %v6823, %v6821
    %v6950 = vpack.c.b16 %v6826, %v6824
    %v6951 = vpack.c.b16 %v6827, %v6825
    %v6952 = vpack.c.b16 %v6830, %v6828
    %v6953 = vpack.c.b16 %v6831, %v6829
    %v6954 = vpack.c.b16 %v6834, %v6832
    %v6955 = vpack.c.b16 %v6835, %v6833
    %v6956 = vpack.c.b16 %v6838, %v6836
    %v6957 = vpack.c.b16 %v6839, %v6837
    %v6958 = vpack.c.b16 %v6842, %v6840
    %v6959 = vpack.c.b16 %v6843, %v6841
    %v6960 = vpack.c.b16 %v6846, %v6844
    %v6961 = vpack.c.b16 %v6847, %v6845
    %v6962 = vpack.c.b16 %v6850, %v6848
    %v6963 = vpack.c.b16 %v6851, %v6849
    %v6964 = vpack.c.b16 %v6854, %v6852
    %v6965 = vpack.c.b16 %v6855, %v6853
    %v6966 = vpack.c.b16 %v6858, %v6856
    %v6967 = vpack.c.b16 %v6859, %v6857
    %v6968 = vpack.c.b16 %v6862, %v6860
    %v6969 = vpack.c.b16 %v6863, %v6861
    %v6970 = vpack.c.b16 %v6866, %v6864
    %v6971 = vpack.c.b16 %v6867, %v6865
    %v6972 = vpack.c.b16 %v6870, %v6868
    %v6973 = vpack.c.b16 %v6871, %v6869
    %v6974 = vpack.c.b16 %v6874, %v6872
    %v6975 = vpack.c.b16 %v6875, %v6873
    %v6976 = vpack.c.b16 %v6878, %v6876
    %v6977 = vpack.c.b16 %v6879, %v6877
    %v6978 = vpack.c.b16 %v6882, %v6880
    %v6979 = vpack.c.b16 %v6883, %v6881
    %v6980 = vpack.c.b16 %v6886, %v6884
    %v6981 = vpack.c.b16 %v6887, %v6885
    %v6982 = vpack.c.b16 %v6890, %v6888
    %v6983 = vpack.c.b16 %v6891, %v6889
    %v6984 = vpack.c.b16 %v6894, %v6892
    %v6985 = vpack.c.b16 %v6895, %v6893
    %v6986 = vpack.c.b16 %v6898, %v6896
    %v6987 = vpack.c.b16 %v6899, %v6897
    %v6988 = vpack.c.b16 %v6902, %v6900
    %v6989 = vpack.c.b16 %v6903, %v6901
    %v6990 = vpack.c.b16 %v6906, %v6904
    %v6991 = vpack.c.b16 %v6907, %v6905
    %v6992 = vpack.c.b16 %v6910, %v6908
    %v6993 = vpack.c.b16 %v6911, %v6909
    %v6994 = vpack.c.b16 %v6914, %v6912
    %v6995 = vpack.c.b16 %v6915, %v6913
    %v6996 = vpack.c.b16 %v6918, %v6916
    %v6997 = vpack.c.b16 %v6919, %v6917
    %v6998 = vpack.c.b16 %v6922, %v6920
    %v6999 = vpack.c.b16 %v6923, %v6921
    %v7000 = vpack.c.b16 %v6926, %v6924
    %v7001 = vpack.c.b16 %v6927, %v6925
    %v7002 = vpack.c.b16 %v6930, %v6928
    %v7003 = vpack.c.b16 %v6931, %v6929
    %v7004 = vpack.c.b16 %v6934, %v6932
    %v7005 = vpack.c.b16 %v6935, %v6933
    %v7006 = vpack.c.b16 %v6938, %v6936
    %v7007 = vpack.c.b16 %v6939, %v6937
    %v7008 = vpack.c.b16 %v6942, %v6940
    %v7009 = vpack.c.b16 %v6943, %v6941
    %v7010 = vpack.c.b16 %v6946, %v6944
    %v7011 = vpack.c.b16 %v6947, %v6945
    %7076 = vmatprep.subr.bf16.mxu0 %v6949
    %7077 = vmatpush1.bf16.msra.mxu0 %v6948
    %7078 = vmatprep.subr.bf16.mxu0 %v6951
    %7079 = vmatpush1.bf16.msra.mxu0 %v6950
    %7080 = vmatprep.subr.bf16.mxu0 %v6953
    %7081 = vmatpush1.bf16.msra.mxu0 %v6952
    %7082 = vmatprep.subr.bf16.mxu0 %v6955
    %7083 = vmatpush1.bf16.msra.mxu0 %v6954
    %7084 = vmatprep.subr.bf16.mxu0 %v6957
    %7085 = vmatpush1.bf16.msra.mxu0 %v6956
    %7086 = vmatprep.subr.bf16.mxu0 %v6959
    %7087 = vmatpush1.bf16.msra.mxu0 %v6958
    %7088 = vmatprep.subr.bf16.mxu0 %v6961
    %7089 = vmatpush1.bf16.msra.mxu0 %v6960
    %7090 = vmatprep.subr.bf16.mxu0 %v6963
    %7091 = vmatpush1.bf16.msra.mxu0 %v6962
    %7092 = vmatprep.subr.bf16.mxu0 %v6965
    %7093 = vmatpush1.bf16.msra.mxu0 %v6964
    %7094 = vmatprep.subr.bf16.mxu0 %v6967
    %7095 = vmatpush1.bf16.msra.mxu0 %v6966
    %7096 = vmatprep.subr.bf16.mxu0 %v6969
    %7097 = vmatpush1.bf16.msra.mxu0 %v6968
    %7098 = vmatprep.subr.bf16.mxu0 %v6971
    %7099 = vmatpush1.bf16.msra.mxu0 %v6970
    %7100 = vmatprep.subr.bf16.mxu0 %v6973
    %7101 = vmatpush1.bf16.msra.mxu0 %v6972
    %7102 = vmatprep.subr.bf16.mxu0 %v6975
    %7103 = vmatpush1.bf16.msra.mxu0 %v6974
    %7104 = vmatprep.subr.bf16.mxu0 %v6977
    %7105 = vmatpush1.bf16.msra.mxu0 %v6976
    %7106 = vmatprep.subr.bf16.mxu0 %v6979
    %7107 = vmatpush1.bf16.msra.mxu0 %v6978
    %7108 = vmatprep.mubr.bf16.mxu0 %v6029
    %7109 = vmatmul.mubr.bf16.gmra.mrb[0].mxu0 %v6028
    %v7110 = vpop.f32.mrb[0].mxu0
    %v7111 = vadd.f32 %v6202, %v7110
    %v7112 = vpop.f32.mrb[0].mxu0
    %v7113 = vadd.f32 %v6206, %v7112
    %v7114 = vpop.f32.mrb[0].mxu0
    %v7115 = vadd.f32 %v6202, %v7114
    %v7116 = vpop.f32.mrb[0].mxu0
    %v7117 = vadd.f32 %v6206, %v7116
    %7118 = vmatprep.mubr.bf16.mxu0 %v6033
    %7119 = vmatmul.mubr.bf16.gmra.mrb[0].mxu0 %v6032
    %v7120 = vpop.f32.mrb[0].mxu0
    %v7121 = vadd.f32 %v6202, %v7120
    %v7122 = vpop.f32.mrb[0].mxu0
    %v7123 = vadd.f32 %v6206, %v7122
    %v7124 = vpop.f32.mrb[0].mxu0
    %v7125 = vadd.f32 %v6202, %v7124
    %v7126 = vpop.f32.mrb[0].mxu0
    %v7127 = vadd.f32 %v6206, %v7126
    %7128 = vmatprep.mubr.bf16.mxu0 %v6037
    %7129 = vmatmul.mubr.bf16.gmra.mrb[0].mxu0 %v6036
    %v7130 = vpop.f32.mrb[0].mxu0
    %v7131 = vadd.f32 %v6202, %v7130
    %v7132 = vpop.f32.mrb[0].mxu0
    %v7133 = vadd.f32 %v6206, %v7132
    %v7134 = vpop.f32.mrb[0].mxu0
    %v7135 = vadd.f32 %v6202, %v7134
    %v7136 = vpop.f32.mrb[0].mxu0
    %v7137 = vadd.f32 %v6206, %v7136
    %7138 = vmatprep.mubr.bf16.mxu0 %v6041
    %7139 = vmatmul.mubr.bf16.gmra.mrb[0].mxu0 %v6040
    %v7140 = vpop.f32.mrb[0].mxu0
    %v7141 = vadd.f32 %v6202, %v7140
    %v7142 = vpop.f32.mrb[0].mxu0
    %v7143 = vadd.f32 %v6206, %v7142
    %v7144 = vpop.f32.mrb[0].mxu0
    %v7145 = vadd.f32 %v6202, %v7144
    %v7146 = vpop.f32.mrb[0].mxu0
    %v7147 = vadd.f32 %v6206, %v7146
    %7148 = vdwg.mxu0
    %7149 = vmatprep.subr.bf16.mxu0 %v6981
    %7150 = vmatpush1.bf16.msra.mxu0 %v6980
    %7151 = vmatprep.subr.bf16.mxu0 %v6983
    %7152 = vmatpush1.bf16.msra.mxu0 %v6982
    %7153 = vmatprep.subr.bf16.mxu0 %v6985
    %7154 = vmatpush1.bf16.msra.mxu0 %v6984
    %7155 = vmatprep.subr.bf16.mxu0 %v6987
    %7156 = vmatpush1.bf16.msra.mxu0 %v6986
    %7157 = vmatprep.subr.bf16.mxu0 %v6989
    %7158 = vmatpush1.bf16.msra.mxu0 %v6988
    %7159 = vmatprep.subr.bf16.mxu0 %v6991
    %7160 = vmatpush1.bf16.msra.mxu0 %v6990
    %7161 = vmatprep.subr.bf16.mxu0 %v6993
    %7162 = vmatpush1.bf16.msra.mxu0 %v6992
    %7163 = vmatprep.subr.bf16.mxu0 %v6995
    %7164 = vmatpush1.bf16.msra.mxu0 %v6994
    %7165 = vmatprep.subr.bf16.mxu0 %v6997
    %7166 = vmatpush1.bf16.msra.mxu0 %v6996
    %7167 = vmatprep.subr.bf16.mxu0 %v6999
    %7168 = vmatpush1.bf16.msra.mxu0 %v6998
    %7169 = vmatprep.subr.bf16.mxu0 %v7001
    %7170 = vmatpush1.bf16.msra.mxu0 %v7000
    %7171 = vmatprep.subr.bf16.mxu0 %v7003
    %7172 = vmatpush1.bf16.msra.mxu0 %v7002
    %7173 = vmatprep.subr.bf16.mxu0 %v7005
    %7174 = vmatpush1.bf16.msra.mxu0 %v7004
    %7175 = vmatprep.subr.bf16.mxu0 %v7007
    %7176 = vmatpush1.bf16.msra.mxu0 %v7006
    %7177 = vmatprep.subr.bf16.mxu0 %v7009
    %7178 = vmatpush1.bf16.msra.mxu0 %v7008
    %7179 = vmatprep.subr.bf16.mxu0 %v7011
    %7180 = vmatpush1.bf16.msra.mxu0 %v7010
    %7181 = vmatprep.mubr.bf16.mxu0 %v6127
    %7182 = vmatmul.mubr.bf16.gmra.mrb[0].mxu0 %v6126
    %v7183 = vpop.f32.mrb[0].mxu0
    %v7184 = vadd.f32 %v7111, %v7183
    %v7185 = vpop.f32.mrb[0].mxu0
    %v7186 = vadd.f32 %v7113, %v7185
    %v7187 = vpop.f32.mrb[0].mxu0
    %v7188 = vadd.f32 %v7115, %v7187
    %v7189 = vpop.f32.mrb[0].mxu0
    %v7190 = vadd.f32 %v7117, %v7189
    %7191 = vmatprep.mubr.bf16.mxu0 %v6129
    %7192 = vmatmul.mubr.bf16.gmra.mrb[0].mxu0 %v6128
    %v7193 = vpop.f32.mrb[0].mxu0
    %v7194 = vadd.f32 %v7121, %v7193
    %v7195 = vpop.f32.mrb[0].mxu0
    %v7196 = vadd.f32 %v7123, %v7195
    %v7197 = vpop.f32.mrb[0].mxu0
    %v7198 = vadd.f32 %v7125, %v7197
    %v7199 = vpop.f32.mrb[0].mxu0
    %v7200 = vadd.f32 %v7127, %v7199
    %7201 = vmatprep.mubr.bf16.mxu0 %v6131
    %7202 = vmatmul.mubr.bf16.gmra.mrb[0].mxu0 %v6130
    %v7203 = vpop.f32.mrb[0].mxu0
    %v7204 = vadd.f32 %v7131, %v7203
    %v7205 = vpop.f32.mrb[0].mxu0
    %v7206 = vadd.f32 %v7133, %v7205
    %v7207 = vpop.f32.mrb[0].mxu0
    %v7208 = vadd.f32 %v7135, %v7207
    %v7209 = vpop.f32.mrb[0].mxu0
    %v7210 = vadd.f32 %v7137, %v7209
    %7211 = vmatprep.mubr.bf16.mxu0 %v6133
    %7212 = vmatmul.mubr.bf16.gmra.mrb[0].mxu0 %v6132
    %v7213 = vpop.f32.mrb[0].mxu0
    %v7214 = vadd.f32 %v7141, %v7213
    %v7215 = vpop.f32.mrb[0].mxu0
    %v7216 = vadd.f32 %v7143, %v7215
    %v7217 = vpop.f32.mrb[0].mxu0
    %v7218 = vadd.f32 %v7145, %v7217
    %v7219 = vpop.f32.mrb[0].mxu0
    %v7220 = vadd.f32 %v7147, %v7219
    %7221 = vdwg.mxu0
    %v7222 = vtanh.pop %v7184
    %v7223 = vtanh.pop %v7186
    %v7224 = vtanh.pop %v7188
    %v7225 = vtanh.pop %v7190
    %v7226 = vtanh.pop %v7194
    %v7227 = vtanh.pop %v7196
    %v7228 = vtanh.pop %v7198
    %v7229 = vtanh.pop %v7200
    %v7230 = vtanh.pop %v7204
    %v7231 = vtanh.pop %v7206
    %v7232 = vtanh.pop %v7208
    %v7233 = vtanh.pop %v7210
    %v7234 = vtanh.pop %v7214
    %v7235 = vtanh.pop %v7216
    %v7236 = vtanh.pop %v7218
    %v7237 = vtanh.pop %v7220
    %7238 = vst [vmem:[%s12] sm:$0xff] %v6675
    %vm7239 = vcmask 523264
    %7240 = vst.msk [vmem:[%s12 + $0x8] sm:$0xff] %vm7239, %v6676
    %7241 = vst [vmem:[%s12 + $0x10] sm:$0xff] %v6677
    %7242 = vst.msk [vmem:[%s12 + $0x18] sm:$0xff] %vm7239, %v6678
    %7243 = vst [vmem:[%s12 + $0x20] sm:$0xff] %v6679
    %7244 = vst.msk [vmem:[%s12 + $0x28] sm:$0xff] %vm7239, %v6680
    %7245 = vst [vmem:[%s12 + $0x30] sm:$0xff] %v6681
    %7246 = vst.msk [vmem:[%s12 + $0x38] sm:$0xff] %vm7239, %v6682
    %s7247 = scalar_lea.vmem %s12, 64
    %7248 = vst [vmem:[%s7247] sm:$0xff] %v7222
    %7249 = vst.msk [vmem:[%s7247 + $0x8] sm:$0xff] %vm7239, %v7223
    %7250 = vst [vmem:[%s7247 + $0x10] sm:$0xff] %v7224
    %7251 = vst.msk [vmem:[%s7247 + $0x18] sm:$0xff] %vm7239, %v7225
    %7252 = vst [vmem:[%s7247 + $0x20] sm:$0xff] %v7226
    %7253 = vst.msk [vmem:[%s7247 + $0x28] sm:$0xff] %vm7239, %v7227
    %7254 = vst [vmem:[%s7247 + $0x30] sm:$0xff] %v7228
    %7255 = vst.msk [vmem:[%s7247 + $0x38] sm:$0xff] %vm7239, %v7229
    %s7256 = scalar_lea.vmem %s12, 128
    %7257 = vst [vmem:[%s7256] sm:$0xff] %v6683
    %7258 = vst.msk [vmem:[%s7256 + $0x8] sm:$0xff] %vm7239, %v6684
    %7259 = vst [vmem:[%s7256 + $0x10] sm:$0xff] %v6685
    %7260 = vst.msk [vmem:[%s7256 + $0x18] sm:$0xff] %vm7239, %v6686
    %7261 = vst [vmem:[%s7256 + $0x20] sm:$0xff] %v6687
    %7262 = vst.msk [vmem:[%s7256 + $0x28] sm:$0xff] %vm7239, %v6688
    %7263 = vst [vmem:[%s7256 + $0x30] sm:$0xff] %v6689
    %7264 = vst.msk [vmem:[%s7256 + $0x38] sm:$0xff] %vm7239, %v6690
    %s7265 = scalar_lea.vmem %s12, 192
    %7266 = vst [vmem:[%s7265] sm:$0xff] %v7230
    %7267 = vst.msk [vmem:[%s7265 + $0x8] sm:$0xff] %vm7239, %v7231
    %7268 = vst [vmem:[%s7265 + $0x10] sm:$0xff] %v7232
    %7269 = vst.msk [vmem:[%s7265 + $0x18] sm:$0xff] %vm7239, %v7233
    %7270 = vst [vmem:[%s7265 + $0x20] sm:$0xff] %v7234
    %7271 = vst.msk [vmem:[%s7265 + $0x28] sm:$0xff] %vm7239, %v7235
    %7272 = vst [vmem:[%s7265 + $0x30] sm:$0xff] %v7236
    %7273 = vst.msk [vmem:[%s7265 + $0x38] sm:$0xff] %vm7239, %v7237
    // Predicated region
    $region58: #{generator_forward.1} parent=1 // pred_check
      _
    $region59: #{generator_forward.1} parent=1 // pred_check_branch
      %7275 = sbr.rel (0) target = $region61
    $region60: #{generator_forward.1} parent=1 // pred_region
      _
    $region61: #{generator_forward.1} parent=1 // pred_fallthru
      _
    // Predicated region
    $region62: #{generator_forward.1} parent=1 // pred_check
      _
    $region63: #{generator_forward.1} parent=1 // pred_check_branch
      %7277 = sbr.rel (0) target = $region65
    $region64: #{generator_forward.1} parent=1 // pred_region
      _
    $region65: #{generator_forward.1} parent=1 // pred_fallthru
      _
    %7278 = vsyncpa [#allocation7], 1
    %7279 = vsyncpa [#allocation9], 1

</llo_original>
